<compile_context>
chip_gen: v6e
topology: v6e:2x2x1
jax: 0.10.0
libtpu: 0.0.40
codegen_flags: <defaults>
</compile_context>

<pallas_src>
import jax
import jax.numpy as jnp
from jax.experimental import pallas as pl
from jax.experimental.pallas import tpu as pltpu


PROJECTION_DIM = 128       # nn.Linear(768, projection_dim, bias=False)
CLIP_FEAT_DIM = 768        # ViT-L/14 image feature width
NORM_EPS = 1e-12           # F.normalize default eps


# ----------------------------------------------------------------------------
# Fused kernel: (stand-in backbone matmul, K-tiled; gk=1 for this shape)
#               -> +bias -> f32 fc matmul -> L2 normalize, one pallas_call.
# ----------------------------------------------------------------------------
def _image_clip_kernel(x_ref, w1_ref, b1_ref, w2_ref, o_ref, acc_ref):
    k = pl.program_id(0)
    tk = w1_ref.shape[0]

    @pl.when(k == 0)
    def _():
        acc_ref[...] = jnp.zeros_like(acc_ref)

    # Activation is fully VMEM-resident (constant index_map); slice the K
    # chunk in-kernel instead of a host-side reshape/transpose.
    off = pl.multiple_of(k * tk, 128)
    x_blk = x_ref[:, pl.ds(off, tk)]                       # (B, tk) bf16
    acc_ref[...] += jnp.dot(x_blk, w1_ref[...],
                            preferred_element_type=jnp.float32)

    @pl.when(k == pl.num_programs(0) - 1)
    def _():
        # (B, 768) backbone features; accumulator is already f32, so
        # "x.to(torch.float32)" is a no-op here.
        feat = acc_ref[...] + b1_ref[...]
        # fc: Linear(768, projection_dim, bias=False), run in f32 like the
        # PyTorch module (w2 is stored f32; only 384 KiB of HBM).
        y = jnp.dot(feat, w2_ref[...], preferred_element_type=jnp.float32)
        # F.normalize(dim=-1): y / max(||y||_2, eps)
        norm = jnp.sqrt(jnp.sum(y * y, axis=-1, keepdims=True))
        o_ref[...] = (y / jnp.maximum(norm, NORM_EPS)).astype(o_ref.dtype)


def _pick_tk(K, max_tile_bytes=6 * 1024 * 1024):
    """Keep the whole (K, 768) bf16 weight as ONE resident block whenever it
    fits a conservative VMEM budget (gk=1: at tiny batch the pipeline hides
    nothing and each extra grid step only costs ~0.35us of bookkeeping; a
    single contiguous DMA is also more BW-efficient). Only tile K when the
    weight would blow the budget."""
    if K * CLIP_FEAT_DIM * 2 <= max_tile_bytes or K <= 128:
        return K
    for tk in (4096, 3072, 2048, 1536, 1024, 512, 256, 128):
        if K % tk == 0 and tk * CLIP_FEAT_DIM * 2 <= max_tile_bytes:
            return tk
    return K


def image_clip_net_forward(image, params):
    """image: (B, C, H, W) -> (B, PROJECTION_DIM) L2-normalized embeddings.

    params must already hold the frozen weights in their kernel dtypes
    (backbone_w: bf16, backbone_b: f32 (1,768), fc_w: f32); the asarray calls
    below are no-ops in that case, so no per-call weight conversion happens.
    """
    B = image.shape[0]
    x = image.reshape(B, -1).astype(jnp.bfloat16)          # tiny activation cast
    K = x.shape[1]
    tk = _pick_tk(K)
    gk = K // tk

    w1 = jnp.asarray(params["backbone_w"], jnp.bfloat16)   # (K, 768)  bf16, pre-cast
    b1 = jnp.asarray(params["backbone_b"], jnp.float32)    # (1, 768)  f32
    w2 = jnp.asarray(params["fc_w"], jnp.float32)          # (768, 128) f32
    N = w2.shape[1]

    flops = 2 * B * (K * CLIP_FEAT_DIM + CLIP_FEAT_DIM * N)
    bytes_accessed = (x.size * 2 + w1.size * 2 + b1.size * 4
                      + w2.size * 4 + B * N * 4)

    return pl.pallas_call(
        _image_clip_kernel,
        out_shape=jax.ShapeDtypeStruct((B, N), jnp.float32),
        grid_spec=pltpu.PrefetchScalarGridSpec(
            num_scalar_prefetch=0,
            grid=(gk,),
            in_specs=[
                # activation: constant block index -> DMA'd once, VMEM-resident
                pl.BlockSpec((B, K), lambda k: (0, 0)),
                # backbone weight: one resident block (gk=1) / K-tiled stream
                pl.BlockSpec((tk, CLIP_FEAT_DIM), lambda k: (k, 0)),
                # backbone bias: constant -> resident
                pl.BlockSpec((1, CLIP_FEAT_DIM), lambda k: (0, 0)),
                # fc weight: constant -> fetched once, resident
                pl.BlockSpec((CLIP_FEAT_DIM, N), lambda k: (0, 0)),
            ],
            out_specs=pl.BlockSpec((B, N), lambda k: (0, 0)),
            scratch_shapes=[pltpu.VMEM((B, CLIP_FEAT_DIM), jnp.float32)],
        ),
        compiler_params=pltpu.CompilerParams(
            dimension_semantics=("arbitrary",)),
        cost_estimate=pl.CostEstimate(
            flops=flops, transcendentals=B, bytes_accessed=bytes_accessed),
    )(x, w1, b1, w2)


# ----------------------------------------------------------------------------
# Deterministic synthetic parameters, pre-cast ONCE to the kernel dtypes so
# the jitted forward never re-converts frozen weights.
# ----------------------------------------------------------------------------
def make_params(image_feat_in, clip_dim=CLIP_FEAT_DIM,
                projection_dim=PROJECTION_DIM):
    k0, k1, k2 = jax.random.split(jax.random.PRNGKey(42), 3)
    # TODO(synk): clip.load('ViT-L/14').encode_image is an external frozen
    # backbone; replaced by a deterministic flatten+Linear stand-in producing
    # 768-d features.
    backbone_w = (jax.random.normal(k0, (image_feat_in, clip_dim), jnp.float32)
                  / jnp.sqrt(jnp.float32(image_feat_in)))
    backbone_b = jax.random.normal(k1, (clip_dim,), jnp.float32) * 0.01
    # fc = nn.Sequential(nn.Linear(768, projection_dim, bias=False)), kept f32.
    fc_w = (jax.random.normal(k2, (clip_dim, projection_dim), jnp.float32)
            / jnp.sqrt(jnp.float32(clip_dim)))
    return {
        "backbone_w": backbone_w.astype(jnp.bfloat16),           # streamed bf16
        "backbone_b": backbone_b.reshape(1, clip_dim),            # f32
        "fc_w": fc_w,                                              # f32
    }


# ----------------------------------------------------------------------------
if __name__ == "__main__":
    key = jax.random.PRNGKey(0)
    B, C, H, W = 2, 3, 32, 32
    image = jax.random.normal(key, (B, C, H, W), jnp.float32)

    params = make_params(image_feat_in=C * H * W)

    fwd = jax.jit(image_clip_net_forward)
    out = fwd(image, params)
    jax.block_until_ready(out)

    # Pure-JAX reference using the same pre-cast frozen weights.
    x = image.reshape(B, -1).astype(jnp.bfloat16)
    feat = jnp.dot(x, params["backbone_w"],
                   preferred_element_type=jnp.float32) + params["backbone_b"]
    y = jnp.dot(feat, params["fc_w"], preferred_element_type=jnp.float32)
    ref = y / jnp.maximum(jnp.linalg.norm(y, axis=-1, keepdims=True), NORM_EPS)

    assert out.shape == (B, PROJECTION_DIM)
    assert bool(jnp.all(jnp.isfinite(out)))
    assert bool(jnp.allclose(jnp.linalg.norm(out, axis=-1), 1.0, atol=1e-3))
    assert bool(jnp.allclose(out, ref, rtol=1e-2, atol=1e-2))
    print("KERNEL_OK")
</pallas_src>

<mosaic_0001>
module attributes {stable_mosaic.version = 11 : i64} {
  func.func @_image_clip_kernel(%arg0: i32, %arg1: memref<2x3072xbf16, #tpu.memory_space<vmem>>, %arg2: memref<3072x768xbf16, #tpu.memory_space<vmem>>, %arg3: memref<1x768xf32, #tpu.memory_space<vmem>>, %arg4: memref<768x128xf32, #tpu.memory_space<vmem>>, %arg5: memref<2x128xf32, #tpu.memory_space<vmem>>, %arg6: memref<2x768xf32, #tpu.memory_space<vmem>>) attributes {dimension_semantics = [#tpu.dimension_semantics<arbitrary>], iteration_bounds = array<i64: 1>, scalar_prefetch = 0 : i64, scratch_operands = 1 : i64, tpu.core_type = #tpu.core_type<tc>, window_params = [{pipeline_mode = #tpu.pipeline_mode<synchronous>, transform_indices = @transform_0, window_bounds = array<i64: 2, 3072>}, {transform_indices = @transform_1, window_bounds = array<i64: 3072, 768>}, {pipeline_mode = #tpu.pipeline_mode<synchronous>, transform_indices = @transform_2, window_bounds = array<i64: 1, 768>}, {pipeline_mode = #tpu.pipeline_mode<synchronous>, transform_indices = @transform_3, window_bounds = array<i64: 768, 128>}, {pipeline_mode = #tpu.pipeline_mode<synchronous>, transform_indices = @transform_4, window_bounds = array<i64: 2, 128>}]} {
    %c0_i32 = arith.constant 0 : i32
    %0 = arith.cmpi eq, %arg0, %c0_i32 : i32
    %1 = arith.extui %0 : i1 to i32
    %c0_i32_0 = arith.constant 0 : i32
    %2 = arith.cmpi ne, %1, %c0_i32_0 : i32
    scf.if %2 {
      %cst_9 = arith.constant 0.000000e+00 : f32
      %15 = vector.broadcast %cst_9 : f32 to vector<2x768xf32>
      %c0_10 = arith.constant 0 : index
      %c0_11 = arith.constant 0 : index
      %16 = vector.load %arg6[%c0_10, %c0_11] : memref<2x768xf32, #tpu.memory_space<vmem>>, vector<2x768xf32>
      tpu.vector_store %arg6[%c0_10, %c0_11], %15 {strides = array<i32>} : memref<2x768xf32, #tpu.memory_space<vmem>>, vector<2x768xf32>,
    } else {
    }
    %c3072_i32 = arith.constant 3072 : i32
    %3 = arith.muli %arg0, %c3072_i32 : i32
    %4 = tpu.assume_multiple %3, 128 : i32
    %c0 = arith.constant 0 : index
    %5 = arith.index_cast %4 : i32 to index
    %6 = vector.load %arg1[%c0, %5] : memref<2x3072xbf16, #tpu.memory_space<vmem>>, vector<2x3072xbf16>
    %c0_1 = arith.constant 0 : index
    %c0_2 = arith.constant 0 : index
    %7 = vector.load %arg6[%c0_1, %c0_2] : memref<2x768xf32, #tpu.memory_space<vmem>>, vector<2x768xf32>
    %c0_3 = arith.constant 0 : index
    %c0_4 = arith.constant 0 : index
    %8 = vector.load %arg2[%c0_3, %c0_4] : memref<3072x768xbf16, #tpu.memory_space<vmem>>, vector<3072x768xbf16>
    %cst = arith.constant dense<0.000000e+00> : vector<2x768xf32>
    %9 = tpu.matmul %6, %8, %cst {dimension_numbers = #tpu.dot_dimension_numbers<[1], [0], [0], [1], [0, 0, 1, 1], [], []>} : vector<2x3072xbf16>, vector<3072x768xbf16>, vector<2x768xf32> -> vector<2x768xf32>
    %10 = arith.addf %7, %9 : vector<2x768xf32>
    %c0_5 = arith.constant 0 : index
    %c0_6 = arith.constant 0 : index
    %11 = vector.load %arg6[%c0_5, %c0_6] : memref<2x768xf32, #tpu.memory_space<vmem>>, vector<2x768xf32>
    tpu.vector_store %arg6[%c0_5, %c0_6], %10 {strides = array<i32>} : memref<2x768xf32, #tpu.memory_space<vmem>>, vector<2x768xf32>,
    %c0_i32_7 = arith.constant 0 : i32
    %12 = arith.cmpi eq, %arg0, %c0_i32_7 : i32
    %13 = arith.extui %12 : i1 to i32
    %c0_i32_8 = arith.constant 0 : i32
    %14 = arith.cmpi ne, %13, %c0_i32_8 : i32
    scf.if %14 {
      %c0_9 = arith.constant 0 : index
      %c0_10 = arith.constant 0 : index
      %15 = vector.load %arg6[%c0_9, %c0_10] : memref<2x768xf32, #tpu.memory_space<vmem>>, vector<2x768xf32>
      %c0_11 = arith.constant 0 : index
      %c0_12 = arith.constant 0 : index
      %16 = vector.load %arg3[%c0_11, %c0_12] : memref<1x768xf32, #tpu.memory_space<vmem>>, vector<1x768xf32>
      %17 = vector.broadcast %16 : vector<1x768xf32> to vector<2x768xf32>
      %18 = arith.addf %15, %17 : vector<2x768xf32>
      %c0_13 = arith.constant 0 : index
      %c0_14 = arith.constant 0 : index
      %19 = vector.load %arg4[%c0_13, %c0_14] : memref<768x128xf32, #tpu.memory_space<vmem>>, vector<768x128xf32>
      %cst_15 = arith.constant dense<0.000000e+00> : vector<2x128xf32>
      %20 = tpu.matmul %18, %19, %cst_15 {dimension_numbers = #tpu.dot_dimension_numbers<[1], [0], [0], [1], [0, 0, 1, 1], [], []>} : vector<2x768xf32>, vector<768x128xf32>, vector<2x128xf32> -> vector<2x128xf32>
      %21 = arith.mulf %20, %20 : vector<2x128xf32>
      %cst_16 = arith.constant dense<0.000000e+00> : vector<2xf32>
      %22 = vector.multi_reduction <add>, %21, %cst_16 [1] : vector<2x128xf32> to vector<2xf32>
      %23 = vector.shape_cast %22 : vector<2xf32> to vector<2x1xf32>
      %24 = math.sqrt %23 : vector<2x1xf32>
      %cst_17 = arith.constant 9.99999996E-13 : f32
      %25 = vector.broadcast %cst_17 : f32 to vector<2x1xf32>
      %26 = arith.maximumf %24, %25 : vector<2x1xf32>
      %27 = vector.broadcast %26 : vector<2x1xf32> to vector<2x128xf32>
      %28 = arith.divf %20, %27 : vector<2x128xf32>
      %c0_18 = arith.constant 0 : index
      %c0_19 = arith.constant 0 : index
      %29 = vector.load %arg5[%c0_18, %c0_19] : memref<2x128xf32, #tpu.memory_space<vmem>>, vector<2x128xf32>
      tpu.vector_store %arg5[%c0_18, %c0_19], %28 {strides = array<i32>} : memref<2x128xf32, #tpu.memory_space<vmem>>, vector<2x128xf32>,
    } else {
    }
    return
  }
  func.func @transform_0(%arg0: i32) -> (i32, i32) {
    %c0_i32 = arith.constant 0 : i32
    %c0_i32_0 = arith.constant 0 : i32
    %c0_i32_1 = arith.constant 0 : i32
    return %c0_i32, %c0_i32_0 : i32, i32
  }
  func.func @transform_1(%arg0: i32) -> (i32, i32) {
    %c0_i32 = arith.constant 0 : i32
    %c0_i32_0 = arith.constant 0 : i32
    return %arg0, %c0_i32 : i32, i32
  }
  func.func @transform_2(%arg0: i32) -> (i32, i32) {
    %c0_i32 = arith.constant 0 : i32
    %c0_i32_0 = arith.constant 0 : i32
    %c0_i32_1 = arith.constant 0 : i32
    return %c0_i32, %c0_i32_0 : i32, i32
  }
  func.func @transform_3(%arg0: i32) -> (i32, i32) {
    %c0_i32 = arith.constant 0 : i32
    %c0_i32_0 = arith.constant 0 : i32
    %c0_i32_1 = arith.constant 0 : i32
    return %c0_i32, %c0_i32_0 : i32, i32
  }
  func.func @transform_4(%arg0: i32) -> (i32, i32) {
    %c0_i32 = arith.constant 0 : i32
    %c0_i32_0 = arith.constant 0 : i32
    %c0_i32_1 = arith.constant 0 : i32
    return %c0_i32, %c0_i32_0 : i32, i32
  }
}

</mosaic_0001>

<llo_original>
// kernel: image_clip_net_forward.1
$region0: #{image_clip_net_forward.1}
  #allocation0 [shape = 'u32[]', space=smem, size = 0x4, offset = 0x4, fixed_abs, tag = 'smem constant byte address 0x4 - core index']
  #allocation1 [shape = 'u32[144,128]{1,0:T(1,128)}', space=vmem, size = 0x12000, scoped, tag = 'internal scratch']
  #allocation2 [shape = 'f32[2,768]{1,0:T(2,128)}', space=vmem, size = 0x1800, scoped, tag = 'scratch operand']
  %s0 = inlined_call_operand.vmem [shape: bf16[2,3072], index: 0, kind: input, shape index: {}]
  %s1 = inlined_call_operand.hbm [shape: bf16[3072,768], index: 1, kind: input, shape index: {}]
  %s2 = inlined_call_operand.hbm [shape: f32[1,768], index: 2, kind: input, shape index: {}]
  %s3 = inlined_call_operand.hbm [shape: f32[768,128], index: 3, kind: input, shape index: {}]
  %s4 = inlined_call_operand.hbm [shape: f32[2,128], index: 4, kind: output, shape index: {}]
  %s5 = sld [smem:[#allocation0]]
  $region46: #{image_clip_net_forward.1} parent=0
    _
  %s7 = ssub.s32 1, %s5
  %s8 = scalar_select 0, %s7, %s5
  $region1: #{image_clip_net_forward.1} parent=0
    #allocation3 [shape = 'u8[4718592]{0}', space=vmem, size = 0x480000, scoped, tag = 'input window, operand 1, single buffered']
    #allocation4 [shape = 's32[1]{0}', space=sflag, size = 0x4, scoped, tag = 'scoped memory for image_clip_net_forward.1']
    #allocation5 [shape = 's32[1]{0}', space=sflag, size = 0x4, scoped, tag = 'scoped memory for image_clip_net_forward.1']
    #allocation6 [shape = 'u8[3072]{0}', space=vmem, size = 0xc00, scoped, tag = 'input window, operand 2, single buffered']
    #allocation7 [shape = 's32[1]{0}', space=sflag, size = 0x4, scoped, tag = 'scoped memory for image_clip_net_forward.1']
    #allocation8 [shape = 'u8[393216]{0}', space=vmem, size = 0x60000, scoped, tag = 'input window, operand 3, single buffered']
    #allocation9 [shape = 'u8[1024]{0}', space=vmem, size = 0x400, scoped, tag = 'output window, operand 0, single buffered']
    %9 = vsyncpa [#allocation4], 0
    %10 = vsyncpa [#allocation7], 0
    %11 = vsyncpa [#allocation5], 0
    // Predicated region
    $region2: #{image_clip_net_forward.1} parent=1 // pred_check
      _
    $region3: #{image_clip_net_forward.1} parent=1 // pred_check_branch
      %13 = sbr.rel (0) target = $region5
    $region4: #{image_clip_net_forward.1} parent=1 // pred_region
      _
    $region5: #{image_clip_net_forward.1} parent=1 // pred_fallthru
      _
    // Predicated region
    $region6: #{image_clip_net_forward.1} parent=1 // pred_check
      _
    $region7: #{image_clip_net_forward.1} parent=1 // pred_check_branch
      %15 = sbr.rel (0) target = $region9
    $region8: #{image_clip_net_forward.1} parent=1 // pred_region
      %s17 = ssub.s32 147456, 147456
      %18 = vsyncadd [#allocation4], %s17
      %s19 = sshll.u32 [#allocation3], 4
      %s20 = int_to_ptr.vmem [resolvable:$true] %s19
      %25 = dma.hbm_to_vmem [thread:$0]  %s1, 147456, %s20, [#allocation4], 384, 384, 24
    $region9: #{image_clip_net_forward.1} parent=1 // pred_fallthru
      _
    // Predicated region
    $region10: #{image_clip_net_forward.1} parent=1 // pred_check
      _
    $region11: #{image_clip_net_forward.1} parent=1 // pred_check_branch
      %27 = sbr.rel (0) target = $region13
    $region12: #{image_clip_net_forward.1} parent=1 // pred_region
      %s29 = ssub.s32 96, 96
      %30 = vsyncadd [#allocation7], %s29
      %s32 = sshll.u32 [#allocation6], 4
      %s33 = int_to_ptr.vmem [resolvable:$true] %s32
      %35 = dma.hbm_to_vmem [thread:$0]  %s2, 96, %s33, [#allocation7]
    $region13: #{image_clip_net_forward.1} parent=1 // pred_fallthru
      _
    // Predicated region
    $region14: #{image_clip_net_forward.1} parent=1 // pred_check
      _
    $region15: #{image_clip_net_forward.1} parent=1 // pred_check_branch
      %37 = sbr.rel (0) target = $region17
    $region16: #{image_clip_net_forward.1} parent=1 // pred_region
      %s39 = ssub.s32 12288, 12288
      %40 = vsyncadd [#allocation7], %s39
      %s41 = sshll.u32 [#allocation8], 4
      %s42 = int_to_ptr.vmem [resolvable:$true] %s41
      %47 = dma.hbm_to_vmem [thread:$0]  %s3, 12288, %s42, [#allocation7], 128, 128, 8
    $region17: #{image_clip_net_forward.1} parent=1 // pred_fallthru
      _
    // Predicated region
    $region18: #{image_clip_net_forward.1} parent=1 // pred_check
      _
    $region19: #{image_clip_net_forward.1} parent=1 // pred_check_branch
      %49 = sbr.rel (0) target = $region21
    $region20: #{image_clip_net_forward.1} parent=1 // pred_region
      %50 = dma.done [#allocation4], 147456
    $region21: #{image_clip_net_forward.1} parent=1 // pred_fallthru
      _
    // Predicated region
    $region22: #{image_clip_net_forward.1} parent=1 // pred_check
      _
    $region23: #{image_clip_net_forward.1} parent=1 // pred_check_branch
      %52 = sbr.rel (0) target = $region25
    $region24: #{image_clip_net_forward.1} parent=1 // pred_region
      %53 = dma.done [#allocation7], 96
    $region25: #{image_clip_net_forward.1} parent=1 // pred_fallthru
      _
    // Predicated region
    $region26: #{image_clip_net_forward.1} parent=1 // pred_check
      _
    $region27: #{image_clip_net_forward.1} parent=1 // pred_check_branch
      %55 = sbr.rel (0) target = $region29
    $region28: #{image_clip_net_forward.1} parent=1 // pred_region
      %56 = dma.done [#allocation7], 12288
    $region29: #{image_clip_net_forward.1} parent=1 // pred_fallthru
      _
    %p57 = scmp.eq.s32.totalorder 0, 0
    // Predicated region
    $region30: #{image_clip_net_forward.1} parent=1 // pred_check
      %p58 = pneg %p57
    $region31: #{image_clip_net_forward.1} parent=1 // pred_check_branch
      %60 = sbr.rel (%p58) target = $region33
    $region32: #{image_clip_net_forward.1} parent=1 // pred_region
      %61 = vst [vmem:[#allocation2] sm:$0xff] 0.0
      %62 = vst [vmem:[#allocation2 + $0x8] sm:$0xf] 0.0
    $region33: #{image_clip_net_forward.1} parent=1 // pred_fallthru
      _
    %s63 = smul.u32 0, 3072
    %s64 = sshra.s32 %s63, 7
    %s65 = sand.u32 %s63, 127
    %s66 = scalar_lea.vmem %s0, %s64
    %v67 = vld [vmem:[%s66] sm:$0xff]
    %v68 = vld [vmem:[%s66 + $0x8] sm:$0xff]
    %v69 = vld [vmem:[%s66 + $0x10] sm:$0xff]
    %v70 = vld [vmem:[#allocation2] sm:$0xff]
    %v71 = vld [vmem:[#allocation2 + $0x8] sm:$0xf]
    %v72 = vld [vmem:[#allocation3] sm:$0xff]
    %v73 = vld [vmem:[#allocation3 + $0x8] sm:$0xff]
    %v74 = vld [vmem:[#allocation3 + $0x10] sm:$0xff]
    %v75 = vld [vmem:[#allocation3 + $0x18] sm:$0xff]
    %v76 = vld [vmem:[#allocation3 + $0x20] sm:$0xff]
    %v77 = vld [vmem:[#allocation3 + $0x28] sm:$0xff]
    %v78 = vld [vmem:[#allocation3 + $0x30] sm:$0xff]
    %v79 = vld [vmem:[#allocation3 + $0x38] sm:$0xff]
    %v80 = vld [vmem:[#allocation3 + $0x40] sm:$0xff]
    %v81 = vld [vmem:[#allocation3 + $0x48] sm:$0xff]
    %v82 = vld [vmem:[#allocation3 + $0x50] sm:$0xff]
    %v83 = vld [vmem:[#allocation3 + $0x58] sm:$0xff]
    %v84 = vld [vmem:[#allocation3 + $0x60] sm:$0xff]
    %v85 = vld [vmem:[#allocation3 + $0x68] sm:$0xff]
    %v86 = vld [vmem:[#allocation3 + $0x70] sm:$0xff]
    %v87 = vld [vmem:[#allocation3 + $0x78] sm:$0xff]
    %v88 = vld [vmem:[#allocation3 + $0x80] sm:$0xff]
    %v89 = vld [vmem:[#allocation3 + $0x88] sm:$0xff]
    %v90 = vld [vmem:[#allocation3 + $0x90] sm:$0xff]
    %v91 = vld [vmem:[#allocation3 + $0x98] sm:$0xff]
    %v92 = vld [vmem:[#allocation3 + $0xa0] sm:$0xff]
    %v93 = vld [vmem:[#allocation3 + $0xa8] sm:$0xff]
    %v94 = vld [vmem:[#allocation3 + $0xb0] sm:$0xff]
    %v95 = vld [vmem:[#allocation3 + $0xb8] sm:$0xff]
    %v96 = vld [vmem:[#allocation3 + $0xc0] sm:$0xff]
    %v97 = vld [vmem:[#allocation3 + $0xc8] sm:$0xff]
    %v98 = vld [vmem:[#allocation3 + $0xd0] sm:$0xff]
    %v99 = vld [vmem:[#allocation3 + $0xd8] sm:$0xff]
    %v100 = vld [vmem:[#allocation3 + $0xe0] sm:$0xff]
    %v101 = vld [vmem:[#allocation3 + $0xe8] sm:$0xff]
    %v102 = vld [vmem:[#allocation3 + $0xf0] sm:$0xff]
    %v103 = vld [vmem:[#allocation3 + $0xf8] sm:$0xff]
    %v104 = vld [vmem:[#allocation3 + $0x100] sm:$0xff]
    %v105 = vld [vmem:[#allocation3 + $0x108] sm:$0xff]
    %v106 = vld [vmem:[#allocation3 + $0x110] sm:$0xff]
    %v107 = vld [vmem:[#allocation3 + $0x118] sm:$0xff]
    %v108 = vld [vmem:[#allocation3 + $0x120] sm:$0xff]
    %v109 = vld [vmem:[#allocation3 + $0x128] sm:$0xff]
    %v110 = vld [vmem:[#allocation3 + $0x130] sm:$0xff]
    %v111 = vld [vmem:[#allocation3 + $0x138] sm:$0xff]
    %v112 = vld [vmem:[#allocation3 + $0x140] sm:$0xff]
    %v113 = vld [vmem:[#allocation3 + $0x148] sm:$0xff]
    %v114 = vld [vmem:[#allocation3 + $0x150] sm:$0xff]
    %v115 = vld [vmem:[#allocation3 + $0x158] sm:$0xff]
    %v116 = vld [vmem:[#allocation3 + $0x160] sm:$0xff]
    %v117 = vld [vmem:[#allocation3 + $0x168] sm:$0xff]
    %v118 = vld [vmem:[#allocation3 + $0x170] sm:$0xff]
    %v119 = vld [vmem:[#allocation3 + $0x178] sm:$0xff]
    %v120 = vld [vmem:[#allocation3 + $0x180] sm:$0xff]
    %v121 = vld [vmem:[#allocation3 + $0x188] sm:$0xff]
    %v122 = vld [vmem:[#allocation3 + $0x190] sm:$0xff]
    %v123 = vld [vmem:[#allocation3 + $0x198] sm:$0xff]
    %v124 = vld [vmem:[#allocation3 + $0x1a0] sm:$0xff]
    %v125 = vld [vmem:[#allocation3 + $0x1a8] sm:$0xff]
    %v126 = vld [vmem:[#allocation3 + $0x1b0] sm:$0xff]
    %v127 = vld [vmem:[#allocation3 + $0x1b8] sm:$0xff]
    %v128 = vld [vmem:[#allocation3 + $0x1c0] sm:$0xff]
    %v129 = vld [vmem:[#allocation3 + $0x1c8] sm:$0xff]
    %v130 = vld [vmem:[#allocation3 + $0x1d0] sm:$0xff]
    %v131 = vld [vmem:[#allocation3 + $0x1d8] sm:$0xff]
    %v132 = vld [vmem:[#allocation3 + $0x1e0] sm:$0xff]
    %v133 = vld [vmem:[#allocation3 + $0x1e8] sm:$0xff]
    %v134 = vld [vmem:[#allocation3 + $0x1f0] sm:$0xff]
    %v135 = vld [vmem:[#allocation3 + $0x1f8] sm:$0xff]
    %v136 = vld [vmem:[#allocation3 + $0x200] sm:$0xff]
    %v137 = vld [vmem:[#allocation3 + $0x208] sm:$0xff]
    %v138 = vld [vmem:[#allocation3 + $0x210] sm:$0xff]
    %v139 = vld [vmem:[#allocation3 + $0x218] sm:$0xff]
    %v140 = vld [vmem:[#allocation3 + $0x220] sm:$0xff]
    %v141 = vld [vmem:[#allocation3 + $0x228] sm:$0xff]
    %v142 = vld [vmem:[#allocation3 + $0x230] sm:$0xff]
    %v143 = vld [vmem:[#allocation3 + $0x238] sm:$0xff]
    %v144 = vld [vmem:[#allocation3 + $0x240] sm:$0xff]
    %v145 = vld [vmem:[#allocation3 + $0x248] sm:$0xff]
    %v146 = vld [vmem:[#allocation3 + $0x250] sm:$0xff]
    %v147 = vld [vmem:[#allocation3 + $0x258] sm:$0xff]
    %v148 = vld [vmem:[#allocation3 + $0x260] sm:$0xff]
    %v149 = vld [vmem:[#allocation3 + $0x268] sm:$0xff]
    %v150 = vld [vmem:[#allocation3 + $0x270] sm:$0xff]
    %v151 = vld [vmem:[#allocation3 + $0x278] sm:$0xff]
    %v152 = vld [vmem:[#allocation3 + $0x280] sm:$0xff]
    %v153 = vld [vmem:[#allocation3 + $0x288] sm:$0xff]
    %v154 = vld [vmem:[#allocation3 + $0x290] sm:$0xff]
    %v155 = vld [vmem:[#allocation3 + $0x298] sm:$0xff]
    %v156 = vld [vmem:[#allocation3 + $0x2a0] sm:$0xff]
    %v157 = vld [vmem:[#allocation3 + $0x2a8] sm:$0xff]
    %v158 = vld [vmem:[#allocation3 + $0x2b0] sm:$0xff]
    %v159 = vld [vmem:[#allocation3 + $0x2b8] sm:$0xff]
    %v160 = vld [vmem:[#allocation3 + $0x2c0] sm:$0xff]
    %v161 = vld [vmem:[#allocation3 + $0x2c8] sm:$0xff]
    %v162 = vld [vmem:[#allocation3 + $0x2d0] sm:$0xff]
    %v163 = vld [vmem:[#allocation3 + $0x2d8] sm:$0xff]
    %v164 = vld [vmem:[#allocation3 + $0x2e0] sm:$0xff]
    %v165 = vld [vmem:[#allocation3 + $0x2e8] sm:$0xff]
    %v166 = vld [vmem:[#allocation3 + $0x2f0] sm:$0xff]
    %v167 = vld [vmem:[#allocation3 + $0x2f8] sm:$0xff]
    %v168 = vld [vmem:[#allocation3 + $0x300] sm:$0xff]
    %v169 = vld [vmem:[#allocation3 + $0x308] sm:$0xff]
    %v170 = vld [vmem:[#allocation3 + $0x310] sm:$0xff]
    %v171 = vld [vmem:[#allocation3 + $0x318] sm:$0xff]
    %v172 = vld [vmem:[#allocation3 + $0x320] sm:$0xff]
    %v173 = vld [vmem:[#allocation3 + $0x328] sm:$0xff]
    %v174 = vld [vmem:[#allocation3 + $0x330] sm:$0xff]
    %v175 = vld [vmem:[#allocation3 + $0x338] sm:$0xff]
    %v176 = vld [vmem:[#allocation3 + $0x340] sm:$0xff]
    %v177 = vld [vmem:[#allocation3 + $0x348] sm:$0xff]
    %v178 = vld [vmem:[#allocation3 + $0x350] sm:$0xff]
    %v179 = vld [vmem:[#allocation3 + $0x358] sm:$0xff]
    %v180 = vld [vmem:[#allocation3 + $0x360] sm:$0xff]
    %v181 = vld [vmem:[#allocation3 + $0x368] sm:$0xff]
    %v182 = vld [vmem:[#allocation3 + $0x370] sm:$0xff]
    %v183 = vld [vmem:[#allocation3 + $0x378] sm:$0xff]
    %v184 = vld [vmem:[#allocation3 + $0x380] sm:$0xff]
    %v185 = vld [vmem:[#allocation3 + $0x388] sm:$0xff]
    %v186 = vld [vmem:[#allocation3 + $0x390] sm:$0xff]
    %v187 = vld [vmem:[#allocation3 + $0x398] sm:$0xff]
    %v188 = vld [vmem:[#allocation3 + $0x3a0] sm:$0xff]
    %v189 = vld [vmem:[#allocation3 + $0x3a8] sm:$0xff]
    %v190 = vld [vmem:[#allocation3 + $0x3b0] sm:$0xff]
    %v191 = vld [vmem:[#allocation3 + $0x3b8] sm:$0xff]
    %v192 = vld [vmem:[#allocation3 + $0x3c0] sm:$0xff]
    %v193 = vld [vmem:[#allocation3 + $0x3c8] sm:$0xff]
    %v194 = vld [vmem:[#allocation3 + $0x3d0] sm:$0xff]
    %v195 = vld [vmem:[#allocation3 + $0x3d8] sm:$0xff]
    %v196 = vld [vmem:[#allocation3 + $0x3e0] sm:$0xff]
    %v197 = vld [vmem:[#allocation3 + $0x3e8] sm:$0xff]
    %v198 = vld [vmem:[#allocation3 + $0x3f0] sm:$0xff]
    %v199 = vld [vmem:[#allocation3 + $0x3f8] sm:$0xff]
    %v200 = vld [vmem:[#allocation3 + $0x400] sm:$0xff]
    %v201 = vld [vmem:[#allocation3 + $0x408] sm:$0xff]
    %v202 = vld [vmem:[#allocation3 + $0x410] sm:$0xff]
    %v203 = vld [vmem:[#allocation3 + $0x418] sm:$0xff]
    %v204 = vld [vmem:[#allocation3 + $0x420] sm:$0xff]
    %v205 = vld [vmem:[#allocation3 + $0x428] sm:$0xff]
    %v206 = vld [vmem:[#allocation3 + $0x430] sm:$0xff]
    %v207 = vld [vmem:[#allocation3 + $0x438] sm:$0xff]
    %v208 = vld [vmem:[#allocation3 + $0x440] sm:$0xff]
    %v209 = vld [vmem:[#allocation3 + $0x448] sm:$0xff]
    %v210 = vld [vmem:[#allocation3 + $0x450] sm:$0xff]
    %v211 = vld [vmem:[#allocation3 + $0x458] sm:$0xff]
    %v212 = vld [vmem:[#allocation3 + $0x460] sm:$0xff]
    %v213 = vld [vmem:[#allocation3 + $0x468] sm:$0xff]
    %v214 = vld [vmem:[#allocation3 + $0x470] sm:$0xff]
    %v215 = vld [vmem:[#allocation3 + $0x478] sm:$0xff]
    %v216 = vld [vmem:[#allocation3 + $0x480] sm:$0xff]
    %v217 = vld [vmem:[#allocation3 + $0x488] sm:$0xff]
    %v218 = vld [vmem:[#allocation3 + $0x490] sm:$0xff]
    %v219 = vld [vmem:[#allocation3 + $0x498] sm:$0xff]
    %v220 = vld [vmem:[#allocation3 + $0x4a0] sm:$0xff]
    %v221 = vld [vmem:[#allocation3 + $0x4a8] sm:$0xff]
    %v222 = vld [vmem:[#allocation3 + $0x4b0] sm:$0xff]
    %v223 = vld [vmem:[#allocation3 + $0x4b8] sm:$0xff]
    %v224 = vld [vmem:[#allocation3 + $0x4c0] sm:$0xff]
    %v225 = vld [vmem:[#allocation3 + $0x4c8] sm:$0xff]
    %v226 = vld [vmem:[#allocation3 + $0x4d0] sm:$0xff]
    %v227 = vld [vmem:[#allocation3 + $0x4d8] sm:$0xff]
    %v228 = vld [vmem:[#allocation3 + $0x4e0] sm:$0xff]
    %v229 = vld [vmem:[#allocation3 + $0x4e8] sm:$0xff]
    %v230 = vld [vmem:[#allocation3 + $0x4f0] sm:$0xff]
    %v231 = vld [vmem:[#allocation3 + $0x4f8] sm:$0xff]
    %v232 = vld [vmem:[#allocation3 + $0x500] sm:$0xff]
    %v233 = vld [vmem:[#allocation3 + $0x508] sm:$0xff]
    %v234 = vld [vmem:[#allocation3 + $0x510] sm:$0xff]
    %v235 = vld [vmem:[#allocation3 + $0x518] sm:$0xff]
    %v236 = vld [vmem:[#allocation3 + $0x520] sm:$0xff]
    %v237 = vld [vmem:[#allocation3 + $0x528] sm:$0xff]
    %v238 = vld [vmem:[#allocation3 + $0x530] sm:$0xff]
    %v239 = vld [vmem:[#allocation3 + $0x538] sm:$0xff]
    %v240 = vld [vmem:[#allocation3 + $0x540] sm:$0xff]
    %v241 = vld [vmem:[#allocation3 + $0x548] sm:$0xff]
    %v242 = vld [vmem:[#allocation3 + $0x550] sm:$0xff]
    %v243 = vld [vmem:[#allocation3 + $0x558] sm:$0xff]
    %v244 = vld [vmem:[#allocation3 + $0x560] sm:$0xff]
    %v245 = vld [vmem:[#allocation3 + $0x568] sm:$0xff]
    %v246 = vld [vmem:[#allocation3 + $0x570] sm:$0xff]
    %v247 = vld [vmem:[#allocation3 + $0x578] sm:$0xff]
    %v248 = vld [vmem:[#allocation3 + $0x580] sm:$0xff]
    %v249 = vld [vmem:[#allocation3 + $0x588] sm:$0xff]
    %v250 = vld [vmem:[#allocation3 + $0x590] sm:$0xff]
    %v251 = vld [vmem:[#allocation3 + $0x598] sm:$0xff]
    %v252 = vld [vmem:[#allocation3 + $0x5a0] sm:$0xff]
    %v253 = vld [vmem:[#allocation3 + $0x5a8] sm:$0xff]
    %v254 = vld [vmem:[#allocation3 + $0x5b0] sm:$0xff]
    %v255 = vld [vmem:[#allocation3 + $0x5b8] sm:$0xff]
    %v256 = vld [vmem:[#allocation3 + $0x5c0] sm:$0xff]
    %v257 = vld [vmem:[#allocation3 + $0x5c8] sm:$0xff]
    %v258 = vld [vmem:[#allocation3 + $0x5d0] sm:$0xff]
    %v259 = vld [vmem:[#allocation3 + $0x5d8] sm:$0xff]
    %v260 = vld [vmem:[#allocation3 + $0x5e0] sm:$0xff]
    %v261 = vld [vmem:[#allocation3 + $0x5e8] sm:$0xff]
    %v262 = vld [vmem:[#allocation3 + $0x5f0] sm:$0xff]
    %v263 = vld [vmem:[#allocation3 + $0x5f8] sm:$0xff]
    %v264 = vld [vmem:[#allocation3 + $0x600] sm:$0xff]
    %v265 = vld [vmem:[#allocation3 + $0x608] sm:$0xff]
    %v266 = vld [vmem:[#allocation3 + $0x610] sm:$0xff]
    %v267 = vld [vmem:[#allocation3 + $0x618] sm:$0xff]
    %v268 = vld [vmem:[#allocation3 + $0x620] sm:$0xff]
    %v269 = vld [vmem:[#allocation3 + $0x628] sm:$0xff]
    %v270 = vld [vmem:[#allocation3 + $0x630] sm:$0xff]
    %v271 = vld [vmem:[#allocation3 + $0x638] sm:$0xff]
    %v272 = vld [vmem:[#allocation3 + $0x640] sm:$0xff]
    %v273 = vld [vmem:[#allocation3 + $0x648] sm:$0xff]
    %v274 = vld [vmem:[#allocation3 + $0x650] sm:$0xff]
    %v275 = vld [vmem:[#allocation3 + $0x658] sm:$0xff]
    %v276 = vld [vmem:[#allocation3 + $0x660] sm:$0xff]
    %v277 = vld [vmem:[#allocation3 + $0x668] sm:$0xff]
    %v278 = vld [vmem:[#allocation3 + $0x670] sm:$0xff]
    %v279 = vld [vmem:[#allocation3 + $0x678] sm:$0xff]
    %v280 = vld [vmem:[#allocation3 + $0x680] sm:$0xff]
    %v281 = vld [vmem:[#allocation3 + $0x688] sm:$0xff]
    %v282 = vld [vmem:[#allocation3 + $0x690] sm:$0xff]
    %v283 = vld [vmem:[#allocation3 + $0x698] sm:$0xff]
    %v284 = vld [vmem:[#allocation3 + $0x6a0] sm:$0xff]
    %v285 = vld [vmem:[#allocation3 + $0x6a8] sm:$0xff]
    %v286 = vld [vmem:[#allocation3 + $0x6b0] sm:$0xff]
    %v287 = vld [vmem:[#allocation3 + $0x6b8] sm:$0xff]
    %v288 = vld [vmem:[#allocation3 + $0x6c0] sm:$0xff]
    %v289 = vld [vmem:[#allocation3 + $0x6c8] sm:$0xff]
    %v290 = vld [vmem:[#allocation3 + $0x6d0] sm:$0xff]
    %v291 = vld [vmem:[#allocation3 + $0x6d8] sm:$0xff]
    %v292 = vld [vmem:[#allocation3 + $0x6e0] sm:$0xff]
    %v293 = vld [vmem:[#allocation3 + $0x6e8] sm:$0xff]
    %v294 = vld [vmem:[#allocation3 + $0x6f0] sm:$0xff]
    %v295 = vld [vmem:[#allocation3 + $0x6f8] sm:$0xff]
    %v296 = vld [vmem:[#allocation3 + $0x700] sm:$0xff]
    %v297 = vld [vmem:[#allocation3 + $0x708] sm:$0xff]
    %v298 = vld [vmem:[#allocation3 + $0x710] sm:$0xff]
    %v299 = vld [vmem:[#allocation3 + $0x718] sm:$0xff]
    %v300 = vld [vmem:[#allocation3 + $0x720] sm:$0xff]
    %v301 = vld [vmem:[#allocation3 + $0x728] sm:$0xff]
    %v302 = vld [vmem:[#allocation3 + $0x730] sm:$0xff]
    %v303 = vld [vmem:[#allocation3 + $0x738] sm:$0xff]
    %v304 = vld [vmem:[#allocation3 + $0x740] sm:$0xff]
    %v305 = vld [vmem:[#allocation3 + $0x748] sm:$0xff]
    %v306 = vld [vmem:[#allocation3 + $0x750] sm:$0xff]
    %v307 = vld [vmem:[#allocation3 + $0x758] sm:$0xff]
    %v308 = vld [vmem:[#allocation3 + $0x760] sm:$0xff]
    %v309 = vld [vmem:[#allocation3 + $0x768] sm:$0xff]
    %v310 = vld [vmem:[#allocation3 + $0x770] sm:$0xff]
    %v311 = vld [vmem:[#allocation3 + $0x778] sm:$0xff]
    %v312 = vld [vmem:[#allocation3 + $0x780] sm:$0xff]
    %v313 = vld [vmem:[#allocation3 + $0x788] sm:$0xff]
    %v314 = vld [vmem:[#allocation3 + $0x790] sm:$0xff]
    %v315 = vld [vmem:[#allocation3 + $0x798] sm:$0xff]
    %v316 = vld [vmem:[#allocation3 + $0x7a0] sm:$0xff]
    %v317 = vld [vmem:[#allocation3 + $0x7a8] sm:$0xff]
    %v318 = vld [vmem:[#allocation3 + $0x7b0] sm:$0xff]
    %v319 = vld [vmem:[#allocation3 + $0x7b8] sm:$0xff]
    %v320 = vld [vmem:[#allocation3 + $0x7c0] sm:$0xff]
    %v321 = vld [vmem:[#allocation3 + $0x7c8] sm:$0xff]
    %v322 = vld [vmem:[#allocation3 + $0x7d0] sm:$0xff]
    %v323 = vld [vmem:[#allocation3 + $0x7d8] sm:$0xff]
    %v324 = vld [vmem:[#allocation3 + $0x7e0] sm:$0xff]
    %v325 = vld [vmem:[#allocation3 + $0x7e8] sm:$0xff]
    %v326 = vld [vmem:[#allocation3 + $0x7f0] sm:$0xff]
    %v327 = vld [vmem:[#allocation3 + $0x7f8] sm:$0xff]
    %v328 = vld [vmem:[#allocation3 + $0x800] sm:$0xff]
    %v329 = vld [vmem:[#allocation3 + $0x808] sm:$0xff]
    %v330 = vld [vmem:[#allocation3 + $0x810] sm:$0xff]
    %v331 = vld [vmem:[#allocation3 + $0x818] sm:$0xff]
    %v332 = vld [vmem:[#allocation3 + $0x820] sm:$0xff]
    %v333 = vld [vmem:[#allocation3 + $0x828] sm:$0xff]
    %v334 = vld [vmem:[#allocation3 + $0x830] sm:$0xff]
    %v335 = vld [vmem:[#allocation3 + $0x838] sm:$0xff]
    %v336 = vld [vmem:[#allocation3 + $0x840] sm:$0xff]
    %v337 = vld [vmem:[#allocation3 + $0x848] sm:$0xff]
    %v338 = vld [vmem:[#allocation3 + $0x850] sm:$0xff]
    %v339 = vld [vmem:[#allocation3 + $0x858] sm:$0xff]
    %v340 = vld [vmem:[#allocation3 + $0x860] sm:$0xff]
    %v341 = vld [vmem:[#allocation3 + $0x868] sm:$0xff]
    %v342 = vld [vmem:[#allocation3 + $0x870] sm:$0xff]
    %v343 = vld [vmem:[#allocation3 + $0x878] sm:$0xff]
    %v344 = vld [vmem:[#allocation3 + $0x880] sm:$0xff]
    %v345 = vld [vmem:[#allocation3 + $0x888] sm:$0xff]
    %v346 = vld [vmem:[#allocation3 + $0x890] sm:$0xff]
    %v347 = vld [vmem:[#allocation3 + $0x898] sm:$0xff]
    %v348 = vld [vmem:[#allocation3 + $0x8a0] sm:$0xff]
    %v349 = vld [vmem:[#allocation3 + $0x8a8] sm:$0xff]
    %v350 = vld [vmem:[#allocation3 + $0x8b0] sm:$0xff]
    %v351 = vld [vmem:[#allocation3 + $0x8b8] sm:$0xff]
    %v352 = vld [vmem:[#allocation3 + $0x8c0] sm:$0xff]
    %v353 = vld [vmem:[#allocation3 + $0x8c8] sm:$0xff]
    %v354 = vld [vmem:[#allocation3 + $0x8d0] sm:$0xff]
    %v355 = vld [vmem:[#allocation3 + $0x8d8] sm:$0xff]
    %v356 = vld [vmem:[#allocation3 + $0x8e0] sm:$0xff]
    %v357 = vld [vmem:[#allocation3 + $0x8e8] sm:$0xff]
    %v358 = vld [vmem:[#allocation3 + $0x8f0] sm:$0xff]
    %v359 = vld [vmem:[#allocation3 + $0x8f8] sm:$0xff]
    %v360 = vld [vmem:[#allocation3 + $0x900] sm:$0xff]
    %v361 = vld [vmem:[#allocation3 + $0x908] sm:$0xff]
    %v362 = vld [vmem:[#allocation3 + $0x910] sm:$0xff]
    %v363 = vld [vmem:[#allocation3 + $0x918] sm:$0xff]
    %v364 = vld [vmem:[#allocation3 + $0x920] sm:$0xff]
    %v365 = vld [vmem:[#allocation3 + $0x928] sm:$0xff]
    %v366 = vld [vmem:[#allocation3 + $0x930] sm:$0xff]
    %v367 = vld [vmem:[#allocation3 + $0x938] sm:$0xff]
    %v368 = vld [vmem:[#allocation3 + $0x940] sm:$0xff]
    %v369 = vld [vmem:[#allocation3 + $0x948] sm:$0xff]
    %v370 = vld [vmem:[#allocation3 + $0x950] sm:$0xff]
    %v371 = vld [vmem:[#allocation3 + $0x958] sm:$0xff]
    %v372 = vld [vmem:[#allocation3 + $0x960] sm:$0xff]
    %v373 = vld [vmem:[#allocation3 + $0x968] sm:$0xff]
    %v374 = vld [vmem:[#allocation3 + $0x970] sm:$0xff]
    %v375 = vld [vmem:[#allocation3 + $0x978] sm:$0xff]
    %v376 = vld [vmem:[#allocation3 + $0x980] sm:$0xff]
    %v377 = vld [vmem:[#allocation3 + $0x988] sm:$0xff]
    %v378 = vld [vmem:[#allocation3 + $0x990] sm:$0xff]
    %v379 = vld [vmem:[#allocation3 + $0x998] sm:$0xff]
    %v380 = vld [vmem:[#allocation3 + $0x9a0] sm:$0xff]
    %v381 = vld [vmem:[#allocation3 + $0x9a8] sm:$0xff]
    %v382 = vld [vmem:[#allocation3 + $0x9b0] sm:$0xff]
    %v383 = vld [vmem:[#allocation3 + $0x9b8] sm:$0xff]
    %v384 = vld [vmem:[#allocation3 + $0x9c0] sm:$0xff]
    %v385 = vld [vmem:[#allocation3 + $0x9c8] sm:$0xff]
    %v386 = vld [vmem:[#allocation3 + $0x9d0] sm:$0xff]
    %v387 = vld [vmem:[#allocation3 + $0x9d8] sm:$0xff]
    %v388 = vld [vmem:[#allocation3 + $0x9e0] sm:$0xff]
    %v389 = vld [vmem:[#allocation3 + $0x9e8] sm:$0xff]
    %v390 = vld [vmem:[#allocation3 + $0x9f0] sm:$0xff]
    %v391 = vld [vmem:[#allocation3 + $0x9f8] sm:$0xff]
    %v392 = vld [vmem:[#allocation3 + $0xa00] sm:$0xff]
    %v393 = vld [vmem:[#allocation3 + $0xa08] sm:$0xff]
    %v394 = vld [vmem:[#allocation3 + $0xa10] sm:$0xff]
    %v395 = vld [vmem:[#allocation3 + $0xa18] sm:$0xff]
    %v396 = vld [vmem:[#allocation3 + $0xa20] sm:$0xff]
    %v397 = vld [vmem:[#allocation3 + $0xa28] sm:$0xff]
    %v398 = vld [vmem:[#allocation3 + $0xa30] sm:$0xff]
    %v399 = vld [vmem:[#allocation3 + $0xa38] sm:$0xff]
    %v400 = vld [vmem:[#allocation3 + $0xa40] sm:$0xff]
    %v401 = vld [vmem:[#allocation3 + $0xa48] sm:$0xff]
    %v402 = vld [vmem:[#allocation3 + $0xa50] sm:$0xff]
    %v403 = vld [vmem:[#allocation3 + $0xa58] sm:$0xff]
    %v404 = vld [vmem:[#allocation3 + $0xa60] sm:$0xff]
    %v405 = vld [vmem:[#allocation3 + $0xa68] sm:$0xff]
    %v406 = vld [vmem:[#allocation3 + $0xa70] sm:$0xff]
    %v407 = vld [vmem:[#allocation3 + $0xa78] sm:$0xff]
    %v408 = vld [vmem:[#allocation3 + $0xa80] sm:$0xff]
    %v409 = vld [vmem:[#allocation3 + $0xa88] sm:$0xff]
    %v410 = vld [vmem:[#allocation3 + $0xa90] sm:$0xff]
    %v411 = vld [vmem:[#allocation3 + $0xa98] sm:$0xff]
    %v412 = vld [vmem:[#allocation3 + $0xaa0] sm:$0xff]
    %v413 = vld [vmem:[#allocation3 + $0xaa8] sm:$0xff]
    %v414 = vld [vmem:[#allocation3 + $0xab0] sm:$0xff]
    %v415 = vld [vmem:[#allocation3 + $0xab8] sm:$0xff]
    %v416 = vld [vmem:[#allocation3 + $0xac0] sm:$0xff]
    %v417 = vld [vmem:[#allocation3 + $0xac8] sm:$0xff]
    %v418 = vld [vmem:[#allocation3 + $0xad0] sm:$0xff]
    %v419 = vld [vmem:[#allocation3 + $0xad8] sm:$0xff]
    %v420 = vld [vmem:[#allocation3 + $0xae0] sm:$0xff]
    %v421 = vld [vmem:[#allocation3 + $0xae8] sm:$0xff]
    %v422 = vld [vmem:[#allocation3 + $0xaf0] sm:$0xff]
    %v423 = vld [vmem:[#allocation3 + $0xaf8] sm:$0xff]
    %v424 = vld [vmem:[#allocation3 + $0xb00] sm:$0xff]
    %v425 = vld [vmem:[#allocation3 + $0xb08] sm:$0xff]
    %v426 = vld [vmem:[#allocation3 + $0xb10] sm:$0xff]
    %v427 = vld [vmem:[#allocation3 + $0xb18] sm:$0xff]
    %v428 = vld [vmem:[#allocation3 + $0xb20] sm:$0xff]
    %v429 = vld [vmem:[#allocation3 + $0xb28] sm:$0xff]
    %v430 = vld [vmem:[#allocation3 + $0xb30] sm:$0xff]
    %v431 = vld [vmem:[#allocation3 + $0xb38] sm:$0xff]
    %v432 = vld [vmem:[#allocation3 + $0xb40] sm:$0xff]
    %v433 = vld [vmem:[#allocation3 + $0xb48] sm:$0xff]
    %v434 = vld [vmem:[#allocation3 + $0xb50] sm:$0xff]
    %v435 = vld [vmem:[#allocation3 + $0xb58] sm:$0xff]
    %v436 = vld [vmem:[#allocation3 + $0xb60] sm:$0xff]
    %v437 = vld [vmem:[#allocation3 + $0xb68] sm:$0xff]
    %v438 = vld [vmem:[#allocation3 + $0xb70] sm:$0xff]
    %v439 = vld [vmem:[#allocation3 + $0xb78] sm:$0xff]
    %v440 = vld [vmem:[#allocation3 + $0xb80] sm:$0xff]
    %v441 = vld [vmem:[#allocation3 + $0xb88] sm:$0xff]
    %v442 = vld [vmem:[#allocation3 + $0xb90] sm:$0xff]
    %v443 = vld [vmem:[#allocation3 + $0xb98] sm:$0xff]
    %v444 = vld [vmem:[#allocation3 + $0xba0] sm:$0xff]
    %v445 = vld [vmem:[#allocation3 + $0xba8] sm:$0xff]
    %v446 = vld [vmem:[#allocation3 + $0xbb0] sm:$0xff]
    %v447 = vld [vmem:[#allocation3 + $0xbb8] sm:$0xff]
    %v448 = vld [vmem:[#allocation3 + $0xbc0] sm:$0xff]
    %v449 = vld [vmem:[#allocation3 + $0xbc8] sm:$0xff]
    %v450 = vld [vmem:[#allocation3 + $0xbd0] sm:$0xff]
    %v451 = vld [vmem:[#allocation3 + $0xbd8] sm:$0xff]
    %v452 = vld [vmem:[#allocation3 + $0xbe0] sm:$0xff]
    %v453 = vld [vmem:[#allocation3 + $0xbe8] sm:$0xff]
    %v454 = vld [vmem:[#allocation3 + $0xbf0] sm:$0xff]
    %v455 = vld [vmem:[#allocation3 + $0xbf8] sm:$0xff]
    %v456 = vld [vmem:[#allocation3 + $0xc00] sm:$0xff]
    %v457 = vld [vmem:[#allocation3 + $0xc08] sm:$0xff]
    %v458 = vld [vmem:[#allocation3 + $0xc10] sm:$0xff]
    %v459 = vld [vmem:[#allocation3 + $0xc18] sm:$0xff]
    %v460 = vld [vmem:[#allocation3 + $0xc20] sm:$0xff]
    %v461 = vld [vmem:[#allocation3 + $0xc28] sm:$0xff]
    %v462 = vld [vmem:[#allocation3 + $0xc30] sm:$0xff]
    %v463 = vld [vmem:[#allocation3 + $0xc38] sm:$0xff]
    %v464 = vld [vmem:[#allocation3 + $0xc40] sm:$0xff]
    %v465 = vld [vmem:[#allocation3 + $0xc48] sm:$0xff]
    %v466 = vld [vmem:[#allocation3 + $0xc50] sm:$0xff]
    %v467 = vld [vmem:[#allocation3 + $0xc58] sm:$0xff]
    %v468 = vld [vmem:[#allocation3 + $0xc60] sm:$0xff]
    %v469 = vld [vmem:[#allocation3 + $0xc68] sm:$0xff]
    %v470 = vld [vmem:[#allocation3 + $0xc70] sm:$0xff]
    %v471 = vld [vmem:[#allocation3 + $0xc78] sm:$0xff]
    %v472 = vld [vmem:[#allocation3 + $0xc80] sm:$0xff]
    %v473 = vld [vmem:[#allocation3 + $0xc88] sm:$0xff]
    %v474 = vld [vmem:[#allocation3 + $0xc90] sm:$0xff]
    %v475 = vld [vmem:[#allocation3 + $0xc98] sm:$0xff]
    %v476 = vld [vmem:[#allocation3 + $0xca0] sm:$0xff]
    %v477 = vld [vmem:[#allocation3 + $0xca8] sm:$0xff]
    %v478 = vld [vmem:[#allocation3 + $0xcb0] sm:$0xff]
    %v479 = vld [vmem:[#allocation3 + $0xcb8] sm:$0xff]
    %v480 = vld [vmem:[#allocation3 + $0xcc0] sm:$0xff]
    %v481 = vld [vmem:[#allocation3 + $0xcc8] sm:$0xff]
    %v482 = vld [vmem:[#allocation3 + $0xcd0] sm:$0xff]
    %v483 = vld [vmem:[#allocation3 + $0xcd8] sm:$0xff]
    %v484 = vld [vmem:[#allocation3 + $0xce0] sm:$0xff]
    %v485 = vld [vmem:[#allocation3 + $0xce8] sm:$0xff]
    %v486 = vld [vmem:[#allocation3 + $0xcf0] sm:$0xff]
    %v487 = vld [vmem:[#allocation3 + $0xcf8] sm:$0xff]
    %v488 = vld [vmem:[#allocation3 + $0xd00] sm:$0xff]
    %v489 = vld [vmem:[#allocation3 + $0xd08] sm:$0xff]
    %v490 = vld [vmem:[#allocation3 + $0xd10] sm:$0xff]
    %v491 = vld [vmem:[#allocation3 + $0xd18] sm:$0xff]
    %v492 = vld [vmem:[#allocation3 + $0xd20] sm:$0xff]
    %v493 = vld [vmem:[#allocation3 + $0xd28] sm:$0xff]
    %v494 = vld [vmem:[#allocation3 + $0xd30] sm:$0xff]
    %v495 = vld [vmem:[#allocation3 + $0xd38] sm:$0xff]
    %v496 = vld [vmem:[#allocation3 + $0xd40] sm:$0xff]
    %v497 = vld [vmem:[#allocation3 + $0xd48] sm:$0xff]
    %v498 = vld [vmem:[#allocation3 + $0xd50] sm:$0xff]
    %v499 = vld [vmem:[#allocation3 + $0xd58] sm:$0xff]
    %v500 = vld [vmem:[#allocation3 + $0xd60] sm:$0xff]
    %v501 = vld [vmem:[#allocation3 + $0xd68] sm:$0xff]
    %v502 = vld [vmem:[#allocation3 + $0xd70] sm:$0xff]
    %v503 = vld [vmem:[#allocation3 + $0xd78] sm:$0xff]
    %v504 = vld [vmem:[#allocation3 + $0xd80] sm:$0xff]
    %v505 = vld [vmem:[#allocation3 + $0xd88] sm:$0xff]
    %v506 = vld [vmem:[#allocation3 + $0xd90] sm:$0xff]
    %v507 = vld [vmem:[#allocation3 + $0xd98] sm:$0xff]
    %v508 = vld [vmem:[#allocation3 + $0xda0] sm:$0xff]
    %v509 = vld [vmem:[#allocation3 + $0xda8] sm:$0xff]
    %v510 = vld [vmem:[#allocation3 + $0xdb0] sm:$0xff]
    %v511 = vld [vmem:[#allocation3 + $0xdb8] sm:$0xff]
    %v512 = vld [vmem:[#allocation3 + $0xdc0] sm:$0xff]
    %v513 = vld [vmem:[#allocation3 + $0xdc8] sm:$0xff]
    %v514 = vld [vmem:[#allocation3 + $0xdd0] sm:$0xff]
    %v515 = vld [vmem:[#allocation3 + $0xdd8] sm:$0xff]
    %v516 = vld [vmem:[#allocation3 + $0xde0] sm:$0xff]
    %v517 = vld [vmem:[#allocation3 + $0xde8] sm:$0xff]
    %v518 = vld [vmem:[#allocation3 + $0xdf0] sm:$0xff]
    %v519 = vld [vmem:[#allocation3 + $0xdf8] sm:$0xff]
    %v520 = vld [vmem:[#allocation3 + $0xe00] sm:$0xff]
    %v521 = vld [vmem:[#allocation3 + $0xe08] sm:$0xff]
    %v522 = vld [vmem:[#allocation3 + $0xe10] sm:$0xff]
    %v523 = vld [vmem:[#allocation3 + $0xe18] sm:$0xff]
    %v524 = vld [vmem:[#allocation3 + $0xe20] sm:$0xff]
    %v525 = vld [vmem:[#allocation3 + $0xe28] sm:$0xff]
    %v526 = vld [vmem:[#allocation3 + $0xe30] sm:$0xff]
    %v527 = vld [vmem:[#allocation3 + $0xe38] sm:$0xff]
    %v528 = vld [vmem:[#allocation3 + $0xe40] sm:$0xff]
    %v529 = vld [vmem:[#allocation3 + $0xe48] sm:$0xff]
    %v530 = vld [vmem:[#allocation3 + $0xe50] sm:$0xff]
    %v531 = vld [vmem:[#allocation3 + $0xe58] sm:$0xff]
    %v532 = vld [vmem:[#allocation3 + $0xe60] sm:$0xff]
    %v533 = vld [vmem:[#allocation3 + $0xe68] sm:$0xff]
    %v534 = vld [vmem:[#allocation3 + $0xe70] sm:$0xff]
    %v535 = vld [vmem:[#allocation3 + $0xe78] sm:$0xff]
    %v536 = vld [vmem:[#allocation3 + $0xe80] sm:$0xff]
    %v537 = vld [vmem:[#allocation3 + $0xe88] sm:$0xff]
    %v538 = vld [vmem:[#allocation3 + $0xe90] sm:$0xff]
    %v539 = vld [vmem:[#allocation3 + $0xe98] sm:$0xff]
    %v540 = vld [vmem:[#allocation3 + $0xea0] sm:$0xff]
    %v541 = vld [vmem:[#allocation3 + $0xea8] sm:$0xff]
    %v542 = vld [vmem:[#allocation3 + $0xeb0] sm:$0xff]
    %v543 = vld [vmem:[#allocation3 + $0xeb8] sm:$0xff]
    %v544 = vld [vmem:[#allocation3 + $0xec0] sm:$0xff]
    %v545 = vld [vmem:[#allocation3 + $0xec8] sm:$0xff]
    %v546 = vld [vmem:[#allocation3 + $0xed0] sm:$0xff]
    %v547 = vld [vmem:[#allocation3 + $0xed8] sm:$0xff]
    %v548 = vld [vmem:[#allocation3 + $0xee0] sm:$0xff]
    %v549 = vld [vmem:[#allocation3 + $0xee8] sm:$0xff]
    %v550 = vld [vmem:[#allocation3 + $0xef0] sm:$0xff]
    %v551 = vld [vmem:[#allocation3 + $0xef8] sm:$0xff]
    %v552 = vld [vmem:[#allocation3 + $0xf00] sm:$0xff]
    %v553 = vld [vmem:[#allocation3 + $0xf08] sm:$0xff]
    %v554 = vld [vmem:[#allocation3 + $0xf10] sm:$0xff]
    %v555 = vld [vmem:[#allocation3 + $0xf18] sm:$0xff]
    %v556 = vld [vmem:[#allocation3 + $0xf20] sm:$0xff]
    %v557 = vld [vmem:[#allocation3 + $0xf28] sm:$0xff]
    %v558 = vld [vmem:[#allocation3 + $0xf30] sm:$0xff]
    %v559 = vld [vmem:[#allocation3 + $0xf38] sm:$0xff]
    %v560 = vld [vmem:[#allocation3 + $0xf40] sm:$0xff]
    %v561 = vld [vmem:[#allocation3 + $0xf48] sm:$0xff]
    %v562 = vld [vmem:[#allocation3 + $0xf50] sm:$0xff]
    %v563 = vld [vmem:[#allocation3 + $0xf58] sm:$0xff]
    %v564 = vld [vmem:[#allocation3 + $0xf60] sm:$0xff]
    %v565 = vld [vmem:[#allocation3 + $0xf68] sm:$0xff]
    %v566 = vld [vmem:[#allocation3 + $0xf70] sm:$0xff]
    %v567 = vld [vmem:[#allocation3 + $0xf78] sm:$0xff]
    %v568 = vld [vmem:[#allocation3 + $0xf80] sm:$0xff]
    %v569 = vld [vmem:[#allocation3 + $0xf88] sm:$0xff]
    %v570 = vld [vmem:[#allocation3 + $0xf90] sm:$0xff]
    %v571 = vld [vmem:[#allocation3 + $0xf98] sm:$0xff]
    %v572 = vld [vmem:[#allocation3 + $0xfa0] sm:$0xff]
    %v573 = vld [vmem:[#allocation3 + $0xfa8] sm:$0xff]
    %v574 = vld [vmem:[#allocation3 + $0xfb0] sm:$0xff]
    %v575 = vld [vmem:[#allocation3 + $0xfb8] sm:$0xff]
    %v576 = vld [vmem:[#allocation3 + $0xfc0] sm:$0xff]
    %v577 = vld [vmem:[#allocation3 + $0xfc8] sm:$0xff]
    %v578 = vld [vmem:[#allocation3 + $0xfd0] sm:$0xff]
    %v579 = vld [vmem:[#allocation3 + $0xfd8] sm:$0xff]
    %v580 = vld [vmem:[#allocation3 + $0xfe0] sm:$0xff]
    %v581 = vld [vmem:[#allocation3 + $0xfe8] sm:$0xff]
    %v582 = vld [vmem:[#allocation3 + $0xff0] sm:$0xff]
    %v583 = vld [vmem:[#allocation3 + $0xff8] sm:$0xff]
    %v584 = vld [vmem:[#allocation3 + $0x1000] sm:$0xff]
    %v585 = vld [vmem:[#allocation3 + $0x1008] sm:$0xff]
    %v586 = vld [vmem:[#allocation3 + $0x1010] sm:$0xff]
    %v587 = vld [vmem:[#allocation3 + $0x1018] sm:$0xff]
    %v588 = vld [vmem:[#allocation3 + $0x1020] sm:$0xff]
    %v589 = vld [vmem:[#allocation3 + $0x1028] sm:$0xff]
    %v590 = vld [vmem:[#allocation3 + $0x1030] sm:$0xff]
    %v591 = vld [vmem:[#allocation3 + $0x1038] sm:$0xff]
    %v592 = vld [vmem:[#allocation3 + $0x1040] sm:$0xff]
    %v593 = vld [vmem:[#allocation3 + $0x1048] sm:$0xff]
    %v594 = vld [vmem:[#allocation3 + $0x1050] sm:$0xff]
    %v595 = vld [vmem:[#allocation3 + $0x1058] sm:$0xff]
    %v596 = vld [vmem:[#allocation3 + $0x1060] sm:$0xff]
    %v597 = vld [vmem:[#allocation3 + $0x1068] sm:$0xff]
    %v598 = vld [vmem:[#allocation3 + $0x1070] sm:$0xff]
    %v599 = vld [vmem:[#allocation3 + $0x1078] sm:$0xff]
    %v600 = vld [vmem:[#allocation3 + $0x1080] sm:$0xff]
    %v601 = vld [vmem:[#allocation3 + $0x1088] sm:$0xff]
    %v602 = vld [vmem:[#allocation3 + $0x1090] sm:$0xff]
    %v603 = vld [vmem:[#allocation3 + $0x1098] sm:$0xff]
    %v604 = vld [vmem:[#allocation3 + $0x10a0] sm:$0xff]
    %v605 = vld [vmem:[#allocation3 + $0x10a8] sm:$0xff]
    %v606 = vld [vmem:[#allocation3 + $0x10b0] sm:$0xff]
    %v607 = vld [vmem:[#allocation3 + $0x10b8] sm:$0xff]
    %v608 = vld [vmem:[#allocation3 + $0x10c0] sm:$0xff]
    %v609 = vld [vmem:[#allocation3 + $0x10c8] sm:$0xff]
    %v610 = vld [vmem:[#allocation3 + $0x10d0] sm:$0xff]
    %v611 = vld [vmem:[#allocation3 + $0x10d8] sm:$0xff]
    %v612 = vld [vmem:[#allocation3 + $0x10e0] sm:$0xff]
    %v613 = vld [vmem:[#allocation3 + $0x10e8] sm:$0xff]
    %v614 = vld [vmem:[#allocation3 + $0x10f0] sm:$0xff]
    %v615 = vld [vmem:[#allocation3 + $0x10f8] sm:$0xff]
    %v616 = vld [vmem:[#allocation3 + $0x1100] sm:$0xff]
    %v617 = vld [vmem:[#allocation3 + $0x1108] sm:$0xff]
    %v618 = vld [vmem:[#allocation3 + $0x1110] sm:$0xff]
    %v619 = vld [vmem:[#allocation3 + $0x1118] sm:$0xff]
    %v620 = vld [vmem:[#allocation3 + $0x1120] sm:$0xff]
    %v621 = vld [vmem:[#allocation3 + $0x1128] sm:$0xff]
    %v622 = vld [vmem:[#allocation3 + $0x1130] sm:$0xff]
    %v623 = vld [vmem:[#allocation3 + $0x1138] sm:$0xff]
    %v624 = vld [vmem:[#allocation3 + $0x1140] sm:$0xff]
    %v625 = vld [vmem:[#allocation3 + $0x1148] sm:$0xff]
    %v626 = vld [vmem:[#allocation3 + $0x1150] sm:$0xff]
    %v627 = vld [vmem:[#allocation3 + $0x1158] sm:$0xff]
    %v628 = vld [vmem:[#allocation3 + $0x1160] sm:$0xff]
    %v629 = vld [vmem:[#allocation3 + $0x1168] sm:$0xff]
    %v630 = vld [vmem:[#allocation3 + $0x1170] sm:$0xff]
    %v631 = vld [vmem:[#allocation3 + $0x1178] sm:$0xff]
    %v632 = vld [vmem:[#allocation3 + $0x1180] sm:$0xff]
    %v633 = vld [vmem:[#allocation3 + $0x1188] sm:$0xff]
    %v634 = vld [vmem:[#allocation3 + $0x1190] sm:$0xff]
    %v635 = vld [vmem:[#allocation3 + $0x1198] sm:$0xff]
    %v636 = vld [vmem:[#allocation3 + $0x11a0] sm:$0xff]
    %v637 = vld [vmem:[#allocation3 + $0x11a8] sm:$0xff]
    %v638 = vld [vmem:[#allocation3 + $0x11b0] sm:$0xff]
    %v639 = vld [vmem:[#allocation3 + $0x11b8] sm:$0xff]
    %v640 = vld [vmem:[#allocation3 + $0x11c0] sm:$0xff]
    %v641 = vld [vmem:[#allocation3 + $0x11c8] sm:$0xff]
    %v642 = vld [vmem:[#allocation3 + $0x11d0] sm:$0xff]
    %v643 = vld [vmem:[#allocation3 + $0x11d8] sm:$0xff]
    %v644 = vld [vmem:[#allocation3 + $0x11e0] sm:$0xff]
    %v645 = vld [vmem:[#allocation3 + $0x11e8] sm:$0xff]
    %v646 = vld [vmem:[#allocation3 + $0x11f0] sm:$0xff]
    %v647 = vld [vmem:[#allocation3 + $0x11f8] sm:$0xff]
    %v648 = vld [vmem:[#allocation3 + $0x1200] sm:$0xff]
    %v649 = vld [vmem:[#allocation3 + $0x1208] sm:$0xff]
    %v650 = vld [vmem:[#allocation3 + $0x1210] sm:$0xff]
    %v651 = vld [vmem:[#allocation3 + $0x1218] sm:$0xff]
    %v652 = vld [vmem:[#allocation3 + $0x1220] sm:$0xff]
    %v653 = vld [vmem:[#allocation3 + $0x1228] sm:$0xff]
    %v654 = vld [vmem:[#allocation3 + $0x1230] sm:$0xff]
    %v655 = vld [vmem:[#allocation3 + $0x1238] sm:$0xff]
    %v656 = vld [vmem:[#allocation3 + $0x1240] sm:$0xff]
    %v657 = vld [vmem:[#allocation3 + $0x1248] sm:$0xff]
    %v658 = vld [vmem:[#allocation3 + $0x1250] sm:$0xff]
    %v659 = vld [vmem:[#allocation3 + $0x1258] sm:$0xff]
    %v660 = vld [vmem:[#allocation3 + $0x1260] sm:$0xff]
    %v661 = vld [vmem:[#allocation3 + $0x1268] sm:$0xff]
    %v662 = vld [vmem:[#allocation3 + $0x1270] sm:$0xff]
    %v663 = vld [vmem:[#allocation3 + $0x1278] sm:$0xff]
    %v664 = vld [vmem:[#allocation3 + $0x1280] sm:$0xff]
    %v665 = vld [vmem:[#allocation3 + $0x1288] sm:$0xff]
    %v666 = vld [vmem:[#allocation3 + $0x1290] sm:$0xff]
    %v667 = vld [vmem:[#allocation3 + $0x1298] sm:$0xff]
    %v668 = vld [vmem:[#allocation3 + $0x12a0] sm:$0xff]
    %v669 = vld [vmem:[#allocation3 + $0x12a8] sm:$0xff]
    %v670 = vld [vmem:[#allocation3 + $0x12b0] sm:$0xff]
    %v671 = vld [vmem:[#allocation3 + $0x12b8] sm:$0xff]
    %v672 = vld [vmem:[#allocation3 + $0x12c0] sm:$0xff]
    %v673 = vld [vmem:[#allocation3 + $0x12c8] sm:$0xff]
    %v674 = vld [vmem:[#allocation3 + $0x12d0] sm:$0xff]
    %v675 = vld [vmem:[#allocation3 + $0x12d8] sm:$0xff]
    %v676 = vld [vmem:[#allocation3 + $0x12e0] sm:$0xff]
    %v677 = vld [vmem:[#allocation3 + $0x12e8] sm:$0xff]
    %v678 = vld [vmem:[#allocation3 + $0x12f0] sm:$0xff]
    %v679 = vld [vmem:[#allocation3 + $0x12f8] sm:$0xff]
    %v680 = vld [vmem:[#allocation3 + $0x1300] sm:$0xff]
    %v681 = vld [vmem:[#allocation3 + $0x1308] sm:$0xff]
    %v682 = vld [vmem:[#allocation3 + $0x1310] sm:$0xff]
    %v683 = vld [vmem:[#allocation3 + $0x1318] sm:$0xff]
    %v684 = vld [vmem:[#allocation3 + $0x1320] sm:$0xff]
    %v685 = vld [vmem:[#allocation3 + $0x1328] sm:$0xff]
    %v686 = vld [vmem:[#allocation3 + $0x1330] sm:$0xff]
    %v687 = vld [vmem:[#allocation3 + $0x1338] sm:$0xff]
    %v688 = vld [vmem:[#allocation3 + $0x1340] sm:$0xff]
    %v689 = vld [vmem:[#allocation3 + $0x1348] sm:$0xff]
    %v690 = vld [vmem:[#allocation3 + $0x1350] sm:$0xff]
    %v691 = vld [vmem:[#allocation3 + $0x1358] sm:$0xff]
    %v692 = vld [vmem:[#allocation3 + $0x1360] sm:$0xff]
    %v693 = vld [vmem:[#allocation3 + $0x1368] sm:$0xff]
    %v694 = vld [vmem:[#allocation3 + $0x1370] sm:$0xff]
    %v695 = vld [vmem:[#allocation3 + $0x1378] sm:$0xff]
    %v696 = vld [vmem:[#allocation3 + $0x1380] sm:$0xff]
    %v697 = vld [vmem:[#allocation3 + $0x1388] sm:$0xff]
    %v698 = vld [vmem:[#allocation3 + $0x1390] sm:$0xff]
    %v699 = vld [vmem:[#allocation3 + $0x1398] sm:$0xff]
    %v700 = vld [vmem:[#allocation3 + $0x13a0] sm:$0xff]
    %v701 = vld [vmem:[#allocation3 + $0x13a8] sm:$0xff]
    %v702 = vld [vmem:[#allocation3 + $0x13b0] sm:$0xff]
    %v703 = vld [vmem:[#allocation3 + $0x13b8] sm:$0xff]
    %v704 = vld [vmem:[#allocation3 + $0x13c0] sm:$0xff]
    %v705 = vld [vmem:[#allocation3 + $0x13c8] sm:$0xff]
    %v706 = vld [vmem:[#allocation3 + $0x13d0] sm:$0xff]
    %v707 = vld [vmem:[#allocation3 + $0x13d8] sm:$0xff]
    %v708 = vld [vmem:[#allocation3 + $0x13e0] sm:$0xff]
    %v709 = vld [vmem:[#allocation3 + $0x13e8] sm:$0xff]
    %v710 = vld [vmem:[#allocation3 + $0x13f0] sm:$0xff]
    %v711 = vld [vmem:[#allocation3 + $0x13f8] sm:$0xff]
    %v712 = vld [vmem:[#allocation3 + $0x1400] sm:$0xff]
    %v713 = vld [vmem:[#allocation3 + $0x1408] sm:$0xff]
    %v714 = vld [vmem:[#allocation3 + $0x1410] sm:$0xff]
    %v715 = vld [vmem:[#allocation3 + $0x1418] sm:$0xff]
    %v716 = vld [vmem:[#allocation3 + $0x1420] sm:$0xff]
    %v717 = vld [vmem:[#allocation3 + $0x1428] sm:$0xff]
    %v718 = vld [vmem:[#allocation3 + $0x1430] sm:$0xff]
    %v719 = vld [vmem:[#allocation3 + $0x1438] sm:$0xff]
    %v720 = vld [vmem:[#allocation3 + $0x1440] sm:$0xff]
    %v721 = vld [vmem:[#allocation3 + $0x1448] sm:$0xff]
    %v722 = vld [vmem:[#allocation3 + $0x1450] sm:$0xff]
    %v723 = vld [vmem:[#allocation3 + $0x1458] sm:$0xff]
    %v724 = vld [vmem:[#allocation3 + $0x1460] sm:$0xff]
    %v725 = vld [vmem:[#allocation3 + $0x1468] sm:$0xff]
    %v726 = vld [vmem:[#allocation3 + $0x1470] sm:$0xff]
    %v727 = vld [vmem:[#allocation3 + $0x1478] sm:$0xff]
    %v728 = vld [vmem:[#allocation3 + $0x1480] sm:$0xff]
    %v729 = vld [vmem:[#allocation3 + $0x1488] sm:$0xff]
    %v730 = vld [vmem:[#allocation3 + $0x1490] sm:$0xff]
    %v731 = vld [vmem:[#allocation3 + $0x1498] sm:$0xff]
    %v732 = vld [vmem:[#allocation3 + $0x14a0] sm:$0xff]
    %v733 = vld [vmem:[#allocation3 + $0x14a8] sm:$0xff]
    %v734 = vld [vmem:[#allocation3 + $0x14b0] sm:$0xff]
    %v735 = vld [vmem:[#allocation3 + $0x14b8] sm:$0xff]
    %v736 = vld [vmem:[#allocation3 + $0x14c0] sm:$0xff]
    %v737 = vld [vmem:[#allocation3 + $0x14c8] sm:$0xff]
    %v738 = vld [vmem:[#allocation3 + $0x14d0] sm:$0xff]
    %v739 = vld [vmem:[#allocation3 + $0x14d8] sm:$0xff]
    %v740 = vld [vmem:[#allocation3 + $0x14e0] sm:$0xff]
    %v741 = vld [vmem:[#allocation3 + $0x14e8] sm:$0xff]
    %v742 = vld [vmem:[#allocation3 + $0x14f0] sm:$0xff]
    %v743 = vld [vmem:[#allocation3 + $0x14f8] sm:$0xff]
    %v744 = vld [vmem:[#allocation3 + $0x1500] sm:$0xff]
    %v745 = vld [vmem:[#allocation3 + $0x1508] sm:$0xff]
    %v746 = vld [vmem:[#allocation3 + $0x1510] sm:$0xff]
    %v747 = vld [vmem:[#allocation3 + $0x1518] sm:$0xff]
    %v748 = vld [vmem:[#allocation3 + $0x1520] sm:$0xff]
    %v749 = vld [vmem:[#allocation3 + $0x1528] sm:$0xff]
    %v750 = vld [vmem:[#allocation3 + $0x1530] sm:$0xff]
    %v751 = vld [vmem:[#allocation3 + $0x1538] sm:$0xff]
    %v752 = vld [vmem:[#allocation3 + $0x1540] sm:$0xff]
    %v753 = vld [vmem:[#allocation3 + $0x1548] sm:$0xff]
    %v754 = vld [vmem:[#allocation3 + $0x1550] sm:$0xff]
    %v755 = vld [vmem:[#allocation3 + $0x1558] sm:$0xff]
    %v756 = vld [vmem:[#allocation3 + $0x1560] sm:$0xff]
    %v757 = vld [vmem:[#allocation3 + $0x1568] sm:$0xff]
    %v758 = vld [vmem:[#allocation3 + $0x1570] sm:$0xff]
    %v759 = vld [vmem:[#allocation3 + $0x1578] sm:$0xff]
    %v760 = vld [vmem:[#allocation3 + $0x1580] sm:$0xff]
    %v761 = vld [vmem:[#allocation3 + $0x1588] sm:$0xff]
    %v762 = vld [vmem:[#allocation3 + $0x1590] sm:$0xff]
    %v763 = vld [vmem:[#allocation3 + $0x1598] sm:$0xff]
    %v764 = vld [vmem:[#allocation3 + $0x15a0] sm:$0xff]
    %v765 = vld [vmem:[#allocation3 + $0x15a8] sm:$0xff]
    %v766 = vld [vmem:[#allocation3 + $0x15b0] sm:$0xff]
    %v767 = vld [vmem:[#allocation3 + $0x15b8] sm:$0xff]
    %v768 = vld [vmem:[#allocation3 + $0x15c0] sm:$0xff]
    %v769 = vld [vmem:[#allocation3 + $0x15c8] sm:$0xff]
    %v770 = vld [vmem:[#allocation3 + $0x15d0] sm:$0xff]
    %v771 = vld [vmem:[#allocation3 + $0x15d8] sm:$0xff]
    %v772 = vld [vmem:[#allocation3 + $0x15e0] sm:$0xff]
    %v773 = vld [vmem:[#allocation3 + $0x15e8] sm:$0xff]
    %v774 = vld [vmem:[#allocation3 + $0x15f0] sm:$0xff]
    %v775 = vld [vmem:[#allocation3 + $0x15f8] sm:$0xff]
    %v776 = vld [vmem:[#allocation3 + $0x1600] sm:$0xff]
    %v777 = vld [vmem:[#allocation3 + $0x1608] sm:$0xff]
    %v778 = vld [vmem:[#allocation3 + $0x1610] sm:$0xff]
    %v779 = vld [vmem:[#allocation3 + $0x1618] sm:$0xff]
    %v780 = vld [vmem:[#allocation3 + $0x1620] sm:$0xff]
    %v781 = vld [vmem:[#allocation3 + $0x1628] sm:$0xff]
    %v782 = vld [vmem:[#allocation3 + $0x1630] sm:$0xff]
    %v783 = vld [vmem:[#allocation3 + $0x1638] sm:$0xff]
    %v784 = vld [vmem:[#allocation3 + $0x1640] sm:$0xff]
    %v785 = vld [vmem:[#allocation3 + $0x1648] sm:$0xff]
    %v786 = vld [vmem:[#allocation3 + $0x1650] sm:$0xff]
    %v787 = vld [vmem:[#allocation3 + $0x1658] sm:$0xff]
    %v788 = vld [vmem:[#allocation3 + $0x1660] sm:$0xff]
    %v789 = vld [vmem:[#allocation3 + $0x1668] sm:$0xff]
    %v790 = vld [vmem:[#allocation3 + $0x1670] sm:$0xff]
    %v791 = vld [vmem:[#allocation3 + $0x1678] sm:$0xff]
    %v792 = vld [vmem:[#allocation3 + $0x1680] sm:$0xff]
    %v793 = vld [vmem:[#allocation3 + $0x1688] sm:$0xff]
    %v794 = vld [vmem:[#allocation3 + $0x1690] sm:$0xff]
    %v795 = vld [vmem:[#allocation3 + $0x1698] sm:$0xff]
    %v796 = vld [vmem:[#allocation3 + $0x16a0] sm:$0xff]
    %v797 = vld [vmem:[#allocation3 + $0x16a8] sm:$0xff]
    %v798 = vld [vmem:[#allocation3 + $0x16b0] sm:$0xff]
    %v799 = vld [vmem:[#allocation3 + $0x16b8] sm:$0xff]
    %v800 = vld [vmem:[#allocation3 + $0x16c0] sm:$0xff]
    %v801 = vld [vmem:[#allocation3 + $0x16c8] sm:$0xff]
    %v802 = vld [vmem:[#allocation3 + $0x16d0] sm:$0xff]
    %v803 = vld [vmem:[#allocation3 + $0x16d8] sm:$0xff]
    %v804 = vld [vmem:[#allocation3 + $0x16e0] sm:$0xff]
    %v805 = vld [vmem:[#allocation3 + $0x16e8] sm:$0xff]
    %v806 = vld [vmem:[#allocation3 + $0x16f0] sm:$0xff]
    %v807 = vld [vmem:[#allocation3 + $0x16f8] sm:$0xff]
    %v808 = vld [vmem:[#allocation3 + $0x1700] sm:$0xff]
    %v809 = vld [vmem:[#allocation3 + $0x1708] sm:$0xff]
    %v810 = vld [vmem:[#allocation3 + $0x1710] sm:$0xff]
    %v811 = vld [vmem:[#allocation3 + $0x1718] sm:$0xff]
    %v812 = vld [vmem:[#allocation3 + $0x1720] sm:$0xff]
    %v813 = vld [vmem:[#allocation3 + $0x1728] sm:$0xff]
    %v814 = vld [vmem:[#allocation3 + $0x1730] sm:$0xff]
    %v815 = vld [vmem:[#allocation3 + $0x1738] sm:$0xff]
    %v816 = vld [vmem:[#allocation3 + $0x1740] sm:$0xff]
    %v817 = vld [vmem:[#allocation3 + $0x1748] sm:$0xff]
    %v818 = vld [vmem:[#allocation3 + $0x1750] sm:$0xff]
    %v819 = vld [vmem:[#allocation3 + $0x1758] sm:$0xff]
    %v820 = vld [vmem:[#allocation3 + $0x1760] sm:$0xff]
    %v821 = vld [vmem:[#allocation3 + $0x1768] sm:$0xff]
    %v822 = vld [vmem:[#allocation3 + $0x1770] sm:$0xff]
    %v823 = vld [vmem:[#allocation3 + $0x1778] sm:$0xff]
    %v824 = vld [vmem:[#allocation3 + $0x1780] sm:$0xff]
    %v825 = vld [vmem:[#allocation3 + $0x1788] sm:$0xff]
    %v826 = vld [vmem:[#allocation3 + $0x1790] sm:$0xff]
    %v827 = vld [vmem:[#allocation3 + $0x1798] sm:$0xff]
    %v828 = vld [vmem:[#allocation3 + $0x17a0] sm:$0xff]
    %v829 = vld [vmem:[#allocation3 + $0x17a8] sm:$0xff]
    %v830 = vld [vmem:[#allocation3 + $0x17b0] sm:$0xff]
    %v831 = vld [vmem:[#allocation3 + $0x17b8] sm:$0xff]
    %v832 = vld [vmem:[#allocation3 + $0x17c0] sm:$0xff]
    %v833 = vld [vmem:[#allocation3 + $0x17c8] sm:$0xff]
    %v834 = vld [vmem:[#allocation3 + $0x17d0] sm:$0xff]
    %v835 = vld [vmem:[#allocation3 + $0x17d8] sm:$0xff]
    %v836 = vld [vmem:[#allocation3 + $0x17e0] sm:$0xff]
    %v837 = vld [vmem:[#allocation3 + $0x17e8] sm:$0xff]
    %v838 = vld [vmem:[#allocation3 + $0x17f0] sm:$0xff]
    %v839 = vld [vmem:[#allocation3 + $0x17f8] sm:$0xff]
    %v840 = vld [vmem:[#allocation3 + $0x1800] sm:$0xff]
    %v841 = vld [vmem:[#allocation3 + $0x1808] sm:$0xff]
    %v842 = vld [vmem:[#allocation3 + $0x1810] sm:$0xff]
    %v843 = vld [vmem:[#allocation3 + $0x1818] sm:$0xff]
    %v844 = vld [vmem:[#allocation3 + $0x1820] sm:$0xff]
    %v845 = vld [vmem:[#allocation3 + $0x1828] sm:$0xff]
    %v846 = vld [vmem:[#allocation3 + $0x1830] sm:$0xff]
    %v847 = vld [vmem:[#allocation3 + $0x1838] sm:$0xff]
    %v848 = vld [vmem:[#allocation3 + $0x1840] sm:$0xff]
    %v849 = vld [vmem:[#allocation3 + $0x1848] sm:$0xff]
    %v850 = vld [vmem:[#allocation3 + $0x1850] sm:$0xff]
    %v851 = vld [vmem:[#allocation3 + $0x1858] sm:$0xff]
    %v852 = vld [vmem:[#allocation3 + $0x1860] sm:$0xff]
    %v853 = vld [vmem:[#allocation3 + $0x1868] sm:$0xff]
    %v854 = vld [vmem:[#allocation3 + $0x1870] sm:$0xff]
    %v855 = vld [vmem:[#allocation3 + $0x1878] sm:$0xff]
    %v856 = vld [vmem:[#allocation3 + $0x1880] sm:$0xff]
    %v857 = vld [vmem:[#allocation3 + $0x1888] sm:$0xff]
    %v858 = vld [vmem:[#allocation3 + $0x1890] sm:$0xff]
    %v859 = vld [vmem:[#allocation3 + $0x1898] sm:$0xff]
    %v860 = vld [vmem:[#allocation3 + $0x18a0] sm:$0xff]
    %v861 = vld [vmem:[#allocation3 + $0x18a8] sm:$0xff]
    %v862 = vld [vmem:[#allocation3 + $0x18b0] sm:$0xff]
    %v863 = vld [vmem:[#allocation3 + $0x18b8] sm:$0xff]
    %v864 = vld [vmem:[#allocation3 + $0x18c0] sm:$0xff]
    %v865 = vld [vmem:[#allocation3 + $0x18c8] sm:$0xff]
    %v866 = vld [vmem:[#allocation3 + $0x18d0] sm:$0xff]
    %v867 = vld [vmem:[#allocation3 + $0x18d8] sm:$0xff]
    %v868 = vld [vmem:[#allocation3 + $0x18e0] sm:$0xff]
    %v869 = vld [vmem:[#allocation3 + $0x18e8] sm:$0xff]
    %v870 = vld [vmem:[#allocation3 + $0x18f0] sm:$0xff]
    %v871 = vld [vmem:[#allocation3 + $0x18f8] sm:$0xff]
    %v872 = vld [vmem:[#allocation3 + $0x1900] sm:$0xff]
    %v873 = vld [vmem:[#allocation3 + $0x1908] sm:$0xff]
    %v874 = vld [vmem:[#allocation3 + $0x1910] sm:$0xff]
    %v875 = vld [vmem:[#allocation3 + $0x1918] sm:$0xff]
    %v876 = vld [vmem:[#allocation3 + $0x1920] sm:$0xff]
    %v877 = vld [vmem:[#allocation3 + $0x1928] sm:$0xff]
    %v878 = vld [vmem:[#allocation3 + $0x1930] sm:$0xff]
    %v879 = vld [vmem:[#allocation3 + $0x1938] sm:$0xff]
    %v880 = vld [vmem:[#allocation3 + $0x1940] sm:$0xff]
    %v881 = vld [vmem:[#allocation3 + $0x1948] sm:$0xff]
    %v882 = vld [vmem:[#allocation3 + $0x1950] sm:$0xff]
    %v883 = vld [vmem:[#allocation3 + $0x1958] sm:$0xff]
    %v884 = vld [vmem:[#allocation3 + $0x1960] sm:$0xff]
    %v885 = vld [vmem:[#allocation3 + $0x1968] sm:$0xff]
    %v886 = vld [vmem:[#allocation3 + $0x1970] sm:$0xff]
    %v887 = vld [vmem:[#allocation3 + $0x1978] sm:$0xff]
    %v888 = vld [vmem:[#allocation3 + $0x1980] sm:$0xff]
    %v889 = vld [vmem:[#allocation3 + $0x1988] sm:$0xff]
    %v890 = vld [vmem:[#allocation3 + $0x1990] sm:$0xff]
    %v891 = vld [vmem:[#allocation3 + $0x1998] sm:$0xff]
    %v892 = vld [vmem:[#allocation3 + $0x19a0] sm:$0xff]
    %v893 = vld [vmem:[#allocation3 + $0x19a8] sm:$0xff]
    %v894 = vld [vmem:[#allocation3 + $0x19b0] sm:$0xff]
    %v895 = vld [vmem:[#allocation3 + $0x19b8] sm:$0xff]
    %v896 = vld [vmem:[#allocation3 + $0x19c0] sm:$0xff]
    %v897 = vld [vmem:[#allocation3 + $0x19c8] sm:$0xff]
    %v898 = vld [vmem:[#allocation3 + $0x19d0] sm:$0xff]
    %v899 = vld [vmem:[#allocation3 + $0x19d8] sm:$0xff]
    %v900 = vld [vmem:[#allocation3 + $0x19e0] sm:$0xff]
    %v901 = vld [vmem:[#allocation3 + $0x19e8] sm:$0xff]
    %v902 = vld [vmem:[#allocation3 + $0x19f0] sm:$0xff]
    %v903 = vld [vmem:[#allocation3 + $0x19f8] sm:$0xff]
    %v904 = vld [vmem:[#allocation3 + $0x1a00] sm:$0xff]
    %v905 = vld [vmem:[#allocation3 + $0x1a08] sm:$0xff]
    %v906 = vld [vmem:[#allocation3 + $0x1a10] sm:$0xff]
    %v907 = vld [vmem:[#allocation3 + $0x1a18] sm:$0xff]
    %v908 = vld [vmem:[#allocation3 + $0x1a20] sm:$0xff]
    %v909 = vld [vmem:[#allocation3 + $0x1a28] sm:$0xff]
    %v910 = vld [vmem:[#allocation3 + $0x1a30] sm:$0xff]
    %v911 = vld [vmem:[#allocation3 + $0x1a38] sm:$0xff]
    %v912 = vld [vmem:[#allocation3 + $0x1a40] sm:$0xff]
    %v913 = vld [vmem:[#allocation3 + $0x1a48] sm:$0xff]
    %v914 = vld [vmem:[#allocation3 + $0x1a50] sm:$0xff]
    %v915 = vld [vmem:[#allocation3 + $0x1a58] sm:$0xff]
    %v916 = vld [vmem:[#allocation3 + $0x1a60] sm:$0xff]
    %v917 = vld [vmem:[#allocation3 + $0x1a68] sm:$0xff]
    %v918 = vld [vmem:[#allocation3 + $0x1a70] sm:$0xff]
    %v919 = vld [vmem:[#allocation3 + $0x1a78] sm:$0xff]
    %v920 = vld [vmem:[#allocation3 + $0x1a80] sm:$0xff]
    %v921 = vld [vmem:[#allocation3 + $0x1a88] sm:$0xff]
    %v922 = vld [vmem:[#allocation3 + $0x1a90] sm:$0xff]
    %v923 = vld [vmem:[#allocation3 + $0x1a98] sm:$0xff]
    %v924 = vld [vmem:[#allocation3 + $0x1aa0] sm:$0xff]
    %v925 = vld [vmem:[#allocation3 + $0x1aa8] sm:$0xff]
    %v926 = vld [vmem:[#allocation3 + $0x1ab0] sm:$0xff]
    %v927 = vld [vmem:[#allocation3 + $0x1ab8] sm:$0xff]
    %v928 = vld [vmem:[#allocation3 + $0x1ac0] sm:$0xff]
    %v929 = vld [vmem:[#allocation3 + $0x1ac8] sm:$0xff]
    %v930 = vld [vmem:[#allocation3 + $0x1ad0] sm:$0xff]
    %v931 = vld [vmem:[#allocation3 + $0x1ad8] sm:$0xff]
    %v932 = vld [vmem:[#allocation3 + $0x1ae0] sm:$0xff]
    %v933 = vld [vmem:[#allocation3 + $0x1ae8] sm:$0xff]
    %v934 = vld [vmem:[#allocation3 + $0x1af0] sm:$0xff]
    %v935 = vld [vmem:[#allocation3 + $0x1af8] sm:$0xff]
    %v936 = vld [vmem:[#allocation3 + $0x1b00] sm:$0xff]
    %v937 = vld [vmem:[#allocation3 + $0x1b08] sm:$0xff]
    %v938 = vld [vmem:[#allocation3 + $0x1b10] sm:$0xff]
    %v939 = vld [vmem:[#allocation3 + $0x1b18] sm:$0xff]
    %v940 = vld [vmem:[#allocation3 + $0x1b20] sm:$0xff]
    %v941 = vld [vmem:[#allocation3 + $0x1b28] sm:$0xff]
    %v942 = vld [vmem:[#allocation3 + $0x1b30] sm:$0xff]
    %v943 = vld [vmem:[#allocation3 + $0x1b38] sm:$0xff]
    %v944 = vld [vmem:[#allocation3 + $0x1b40] sm:$0xff]
    %v945 = vld [vmem:[#allocation3 + $0x1b48] sm:$0xff]
    %v946 = vld [vmem:[#allocation3 + $0x1b50] sm:$0xff]
    %v947 = vld [vmem:[#allocation3 + $0x1b58] sm:$0xff]
    %v948 = vld [vmem:[#allocation3 + $0x1b60] sm:$0xff]
    %v949 = vld [vmem:[#allocation3 + $0x1b68] sm:$0xff]
    %v950 = vld [vmem:[#allocation3 + $0x1b70] sm:$0xff]
    %v951 = vld [vmem:[#allocation3 + $0x1b78] sm:$0xff]
    %v952 = vld [vmem:[#allocation3 + $0x1b80] sm:$0xff]
    %v953 = vld [vmem:[#allocation3 + $0x1b88] sm:$0xff]
    %v954 = vld [vmem:[#allocation3 + $0x1b90] sm:$0xff]
    %v955 = vld [vmem:[#allocation3 + $0x1b98] sm:$0xff]
    %v956 = vld [vmem:[#allocation3 + $0x1ba0] sm:$0xff]
    %v957 = vld [vmem:[#allocation3 + $0x1ba8] sm:$0xff]
    %v958 = vld [vmem:[#allocation3 + $0x1bb0] sm:$0xff]
    %v959 = vld [vmem:[#allocation3 + $0x1bb8] sm:$0xff]
    %v960 = vld [vmem:[#allocation3 + $0x1bc0] sm:$0xff]
    %v961 = vld [vmem:[#allocation3 + $0x1bc8] sm:$0xff]
    %v962 = vld [vmem:[#allocation3 + $0x1bd0] sm:$0xff]
    %v963 = vld [vmem:[#allocation3 + $0x1bd8] sm:$0xff]
    %v964 = vld [vmem:[#allocation3 + $0x1be0] sm:$0xff]
    %v965 = vld [vmem:[#allocation3 + $0x1be8] sm:$0xff]
    %v966 = vld [vmem:[#allocation3 + $0x1bf0] sm:$0xff]
    %v967 = vld [vmem:[#allocation3 + $0x1bf8] sm:$0xff]
    %v968 = vld [vmem:[#allocation3 + $0x1c00] sm:$0xff]
    %v969 = vld [vmem:[#allocation3 + $0x1c08] sm:$0xff]
    %v970 = vld [vmem:[#allocation3 + $0x1c10] sm:$0xff]
    %v971 = vld [vmem:[#allocation3 + $0x1c18] sm:$0xff]
    %v972 = vld [vmem:[#allocation3 + $0x1c20] sm:$0xff]
    %v973 = vld [vmem:[#allocation3 + $0x1c28] sm:$0xff]
    %v974 = vld [vmem:[#allocation3 + $0x1c30] sm:$0xff]
    %v975 = vld [vmem:[#allocation3 + $0x1c38] sm:$0xff]
    %v976 = vld [vmem:[#allocation3 + $0x1c40] sm:$0xff]
    %v977 = vld [vmem:[#allocation3 + $0x1c48] sm:$0xff]
    %v978 = vld [vmem:[#allocation3 + $0x1c50] sm:$0xff]
    %v979 = vld [vmem:[#allocation3 + $0x1c58] sm:$0xff]
    %v980 = vld [vmem:[#allocation3 + $0x1c60] sm:$0xff]
    %v981 = vld [vmem:[#allocation3 + $0x1c68] sm:$0xff]
    %v982 = vld [vmem:[#allocation3 + $0x1c70] sm:$0xff]
    %v983 = vld [vmem:[#allocation3 + $0x1c78] sm:$0xff]
    %v984 = vld [vmem:[#allocation3 + $0x1c80] sm:$0xff]
    %v985 = vld [vmem:[#allocation3 + $0x1c88] sm:$0xff]
    %v986 = vld [vmem:[#allocation3 + $0x1c90] sm:$0xff]
    %v987 = vld [vmem:[#allocation3 + $0x1c98] sm:$0xff]
    %v988 = vld [vmem:[#allocation3 + $0x1ca0] sm:$0xff]
    %v989 = vld [vmem:[#allocation3 + $0x1ca8] sm:$0xff]
    %v990 = vld [vmem:[#allocation3 + $0x1cb0] sm:$0xff]
    %v991 = vld [vmem:[#allocation3 + $0x1cb8] sm:$0xff]
    %v992 = vld [vmem:[#allocation3 + $0x1cc0] sm:$0xff]
    %v993 = vld [vmem:[#allocation3 + $0x1cc8] sm:$0xff]
    %v994 = vld [vmem:[#allocation3 + $0x1cd0] sm:$0xff]
    %v995 = vld [vmem:[#allocation3 + $0x1cd8] sm:$0xff]
    %v996 = vld [vmem:[#allocation3 + $0x1ce0] sm:$0xff]
    %v997 = vld [vmem:[#allocation3 + $0x1ce8] sm:$0xff]
    %v998 = vld [vmem:[#allocation3 + $0x1cf0] sm:$0xff]
    %v999 = vld [vmem:[#allocation3 + $0x1cf8] sm:$0xff]
    %v1000 = vld [vmem:[#allocation3 + $0x1d00] sm:$0xff]
    %v1001 = vld [vmem:[#allocation3 + $0x1d08] sm:$0xff]
    %v1002 = vld [vmem:[#allocation3 + $0x1d10] sm:$0xff]
    %v1003 = vld [vmem:[#allocation3 + $0x1d18] sm:$0xff]
    %v1004 = vld [vmem:[#allocation3 + $0x1d20] sm:$0xff]
    %v1005 = vld [vmem:[#allocation3 + $0x1d28] sm:$0xff]
    %v1006 = vld [vmem:[#allocation3 + $0x1d30] sm:$0xff]
    %v1007 = vld [vmem:[#allocation3 + $0x1d38] sm:$0xff]
    %v1008 = vld [vmem:[#allocation3 + $0x1d40] sm:$0xff]
    %v1009 = vld [vmem:[#allocation3 + $0x1d48] sm:$0xff]
    %v1010 = vld [vmem:[#allocation3 + $0x1d50] sm:$0xff]
    %v1011 = vld [vmem:[#allocation3 + $0x1d58] sm:$0xff]
    %v1012 = vld [vmem:[#allocation3 + $0x1d60] sm:$0xff]
    %v1013 = vld [vmem:[#allocation3 + $0x1d68] sm:$0xff]
    %v1014 = vld [vmem:[#allocation3 + $0x1d70] sm:$0xff]
    %v1015 = vld [vmem:[#allocation3 + $0x1d78] sm:$0xff]
    %v1016 = vld [vmem:[#allocation3 + $0x1d80] sm:$0xff]
    %v1017 = vld [vmem:[#allocation3 + $0x1d88] sm:$0xff]
    %v1018 = vld [vmem:[#allocation3 + $0x1d90] sm:$0xff]
    %v1019 = vld [vmem:[#allocation3 + $0x1d98] sm:$0xff]
    %v1020 = vld [vmem:[#allocation3 + $0x1da0] sm:$0xff]
    %v1021 = vld [vmem:[#allocation3 + $0x1da8] sm:$0xff]
    %v1022 = vld [vmem:[#allocation3 + $0x1db0] sm:$0xff]
    %v1023 = vld [vmem:[#allocation3 + $0x1db8] sm:$0xff]
    %v1024 = vld [vmem:[#allocation3 + $0x1dc0] sm:$0xff]
    %v1025 = vld [vmem:[#allocation3 + $0x1dc8] sm:$0xff]
    %v1026 = vld [vmem:[#allocation3 + $0x1dd0] sm:$0xff]
    %v1027 = vld [vmem:[#allocation3 + $0x1dd8] sm:$0xff]
    %v1028 = vld [vmem:[#allocation3 + $0x1de0] sm:$0xff]
    %v1029 = vld [vmem:[#allocation3 + $0x1de8] sm:$0xff]
    %v1030 = vld [vmem:[#allocation3 + $0x1df0] sm:$0xff]
    %v1031 = vld [vmem:[#allocation3 + $0x1df8] sm:$0xff]
    %v1032 = vld [vmem:[#allocation3 + $0x1e00] sm:$0xff]
    %v1033 = vld [vmem:[#allocation3 + $0x1e08] sm:$0xff]
    %v1034 = vld [vmem:[#allocation3 + $0x1e10] sm:$0xff]
    %v1035 = vld [vmem:[#allocation3 + $0x1e18] sm:$0xff]
    %v1036 = vld [vmem:[#allocation3 + $0x1e20] sm:$0xff]
    %v1037 = vld [vmem:[#allocation3 + $0x1e28] sm:$0xff]
    %v1038 = vld [vmem:[#allocation3 + $0x1e30] sm:$0xff]
    %v1039 = vld [vmem:[#allocation3 + $0x1e38] sm:$0xff]
    %v1040 = vld [vmem:[#allocation3 + $0x1e40] sm:$0xff]
    %v1041 = vld [vmem:[#allocation3 + $0x1e48] sm:$0xff]
    %v1042 = vld [vmem:[#allocation3 + $0x1e50] sm:$0xff]
    %v1043 = vld [vmem:[#allocation3 + $0x1e58] sm:$0xff]
    %v1044 = vld [vmem:[#allocation3 + $0x1e60] sm:$0xff]
    %v1045 = vld [vmem:[#allocation3 + $0x1e68] sm:$0xff]
    %v1046 = vld [vmem:[#allocation3 + $0x1e70] sm:$0xff]
    %v1047 = vld [vmem:[#allocation3 + $0x1e78] sm:$0xff]
    %v1048 = vld [vmem:[#allocation3 + $0x1e80] sm:$0xff]
    %v1049 = vld [vmem:[#allocation3 + $0x1e88] sm:$0xff]
    %v1050 = vld [vmem:[#allocation3 + $0x1e90] sm:$0xff]
    %v1051 = vld [vmem:[#allocation3 + $0x1e98] sm:$0xff]
    %v1052 = vld [vmem:[#allocation3 + $0x1ea0] sm:$0xff]
    %v1053 = vld [vmem:[#allocation3 + $0x1ea8] sm:$0xff]
    %v1054 = vld [vmem:[#allocation3 + $0x1eb0] sm:$0xff]
    %v1055 = vld [vmem:[#allocation3 + $0x1eb8] sm:$0xff]
    %v1056 = vld [vmem:[#allocation3 + $0x1ec0] sm:$0xff]
    %v1057 = vld [vmem:[#allocation3 + $0x1ec8] sm:$0xff]
    %v1058 = vld [vmem:[#allocation3 + $0x1ed0] sm:$0xff]
    %v1059 = vld [vmem:[#allocation3 + $0x1ed8] sm:$0xff]
    %v1060 = vld [vmem:[#allocation3 + $0x1ee0] sm:$0xff]
    %v1061 = vld [vmem:[#allocation3 + $0x1ee8] sm:$0xff]
    %v1062 = vld [vmem:[#allocation3 + $0x1ef0] sm:$0xff]
    %v1063 = vld [vmem:[#allocation3 + $0x1ef8] sm:$0xff]
    %v1064 = vld [vmem:[#allocation3 + $0x1f00] sm:$0xff]
    %v1065 = vld [vmem:[#allocation3 + $0x1f08] sm:$0xff]
    %v1066 = vld [vmem:[#allocation3 + $0x1f10] sm:$0xff]
    %v1067 = vld [vmem:[#allocation3 + $0x1f18] sm:$0xff]
    %v1068 = vld [vmem:[#allocation3 + $0x1f20] sm:$0xff]
    %v1069 = vld [vmem:[#allocation3 + $0x1f28] sm:$0xff]
    %v1070 = vld [vmem:[#allocation3 + $0x1f30] sm:$0xff]
    %v1071 = vld [vmem:[#allocation3 + $0x1f38] sm:$0xff]
    %v1072 = vld [vmem:[#allocation3 + $0x1f40] sm:$0xff]
    %v1073 = vld [vmem:[#allocation3 + $0x1f48] sm:$0xff]
    %v1074 = vld [vmem:[#allocation3 + $0x1f50] sm:$0xff]
    %v1075 = vld [vmem:[#allocation3 + $0x1f58] sm:$0xff]
    %v1076 = vld [vmem:[#allocation3 + $0x1f60] sm:$0xff]
    %v1077 = vld [vmem:[#allocation3 + $0x1f68] sm:$0xff]
    %v1078 = vld [vmem:[#allocation3 + $0x1f70] sm:$0xff]
    %v1079 = vld [vmem:[#allocation3 + $0x1f78] sm:$0xff]
    %v1080 = vld [vmem:[#allocation3 + $0x1f80] sm:$0xff]
    %v1081 = vld [vmem:[#allocation3 + $0x1f88] sm:$0xff]
    %v1082 = vld [vmem:[#allocation3 + $0x1f90] sm:$0xff]
    %v1083 = vld [vmem:[#allocation3 + $0x1f98] sm:$0xff]
    %v1084 = vld [vmem:[#allocation3 + $0x1fa0] sm:$0xff]
    %v1085 = vld [vmem:[#allocation3 + $0x1fa8] sm:$0xff]
    %v1086 = vld [vmem:[#allocation3 + $0x1fb0] sm:$0xff]
    %v1087 = vld [vmem:[#allocation3 + $0x1fb8] sm:$0xff]
    %v1088 = vld [vmem:[#allocation3 + $0x1fc0] sm:$0xff]
    %v1089 = vld [vmem:[#allocation3 + $0x1fc8] sm:$0xff]
    %v1090 = vld [vmem:[#allocation3 + $0x1fd0] sm:$0xff]
    %v1091 = vld [vmem:[#allocation3 + $0x1fd8] sm:$0xff]
    %v1092 = vld [vmem:[#allocation3 + $0x1fe0] sm:$0xff]
    %v1093 = vld [vmem:[#allocation3 + $0x1fe8] sm:$0xff]
    %v1094 = vld [vmem:[#allocation3 + $0x1ff0] sm:$0xff]
    %v1095 = vld [vmem:[#allocation3 + $0x1ff8] sm:$0xff]
    %v1096 = vld [vmem:[#allocation3 + $0x2000] sm:$0xff]
    %v1097 = vld [vmem:[#allocation3 + $0x2008] sm:$0xff]
    %v1098 = vld [vmem:[#allocation3 + $0x2010] sm:$0xff]
    %v1099 = vld [vmem:[#allocation3 + $0x2018] sm:$0xff]
    %v1100 = vld [vmem:[#allocation3 + $0x2020] sm:$0xff]
    %v1101 = vld [vmem:[#allocation3 + $0x2028] sm:$0xff]
    %v1102 = vld [vmem:[#allocation3 + $0x2030] sm:$0xff]
    %v1103 = vld [vmem:[#allocation3 + $0x2038] sm:$0xff]
    %v1104 = vld [vmem:[#allocation3 + $0x2040] sm:$0xff]
    %v1105 = vld [vmem:[#allocation3 + $0x2048] sm:$0xff]
    %v1106 = vld [vmem:[#allocation3 + $0x2050] sm:$0xff]
    %v1107 = vld [vmem:[#allocation3 + $0x2058] sm:$0xff]
    %v1108 = vld [vmem:[#allocation3 + $0x2060] sm:$0xff]
    %v1109 = vld [vmem:[#allocation3 + $0x2068] sm:$0xff]
    %v1110 = vld [vmem:[#allocation3 + $0x2070] sm:$0xff]
    %v1111 = vld [vmem:[#allocation3 + $0x2078] sm:$0xff]
    %v1112 = vld [vmem:[#allocation3 + $0x2080] sm:$0xff]
    %v1113 = vld [vmem:[#allocation3 + $0x2088] sm:$0xff]
    %v1114 = vld [vmem:[#allocation3 + $0x2090] sm:$0xff]
    %v1115 = vld [vmem:[#allocation3 + $0x2098] sm:$0xff]
    %v1116 = vld [vmem:[#allocation3 + $0x20a0] sm:$0xff]
    %v1117 = vld [vmem:[#allocation3 + $0x20a8] sm:$0xff]
    %v1118 = vld [vmem:[#allocation3 + $0x20b0] sm:$0xff]
    %v1119 = vld [vmem:[#allocation3 + $0x20b8] sm:$0xff]
    %v1120 = vld [vmem:[#allocation3 + $0x20c0] sm:$0xff]
    %v1121 = vld [vmem:[#allocation3 + $0x20c8] sm:$0xff]
    %v1122 = vld [vmem:[#allocation3 + $0x20d0] sm:$0xff]
    %v1123 = vld [vmem:[#allocation3 + $0x20d8] sm:$0xff]
    %v1124 = vld [vmem:[#allocation3 + $0x20e0] sm:$0xff]
    %v1125 = vld [vmem:[#allocation3 + $0x20e8] sm:$0xff]
    %v1126 = vld [vmem:[#allocation3 + $0x20f0] sm:$0xff]
    %v1127 = vld [vmem:[#allocation3 + $0x20f8] sm:$0xff]
    %v1128 = vld [vmem:[#allocation3 + $0x2100] sm:$0xff]
    %v1129 = vld [vmem:[#allocation3 + $0x2108] sm:$0xff]
    %v1130 = vld [vmem:[#allocation3 + $0x2110] sm:$0xff]
    %v1131 = vld [vmem:[#allocation3 + $0x2118] sm:$0xff]
    %v1132 = vld [vmem:[#allocation3 + $0x2120] sm:$0xff]
    %v1133 = vld [vmem:[#allocation3 + $0x2128] sm:$0xff]
    %v1134 = vld [vmem:[#allocation3 + $0x2130] sm:$0xff]
    %v1135 = vld [vmem:[#allocation3 + $0x2138] sm:$0xff]
    %v1136 = vld [vmem:[#allocation3 + $0x2140] sm:$0xff]
    %v1137 = vld [vmem:[#allocation3 + $0x2148] sm:$0xff]
    %v1138 = vld [vmem:[#allocation3 + $0x2150] sm:$0xff]
    %v1139 = vld [vmem:[#allocation3 + $0x2158] sm:$0xff]
    %v1140 = vld [vmem:[#allocation3 + $0x2160] sm:$0xff]
    %v1141 = vld [vmem:[#allocation3 + $0x2168] sm:$0xff]
    %v1142 = vld [vmem:[#allocation3 + $0x2170] sm:$0xff]
    %v1143 = vld [vmem:[#allocation3 + $0x2178] sm:$0xff]
    %v1144 = vld [vmem:[#allocation3 + $0x2180] sm:$0xff]
    %v1145 = vld [vmem:[#allocation3 + $0x2188] sm:$0xff]
    %v1146 = vld [vmem:[#allocation3 + $0x2190] sm:$0xff]
    %v1147 = vld [vmem:[#allocation3 + $0x2198] sm:$0xff]
    %v1148 = vld [vmem:[#allocation3 + $0x21a0] sm:$0xff]
    %v1149 = vld [vmem:[#allocation3 + $0x21a8] sm:$0xff]
    %v1150 = vld [vmem:[#allocation3 + $0x21b0] sm:$0xff]
    %v1151 = vld [vmem:[#allocation3 + $0x21b8] sm:$0xff]
    %v1152 = vld [vmem:[#allocation3 + $0x21c0] sm:$0xff]
    %v1153 = vld [vmem:[#allocation3 + $0x21c8] sm:$0xff]
    %v1154 = vld [vmem:[#allocation3 + $0x21d0] sm:$0xff]
    %v1155 = vld [vmem:[#allocation3 + $0x21d8] sm:$0xff]
    %v1156 = vld [vmem:[#allocation3 + $0x21e0] sm:$0xff]
    %v1157 = vld [vmem:[#allocation3 + $0x21e8] sm:$0xff]
    %v1158 = vld [vmem:[#allocation3 + $0x21f0] sm:$0xff]
    %v1159 = vld [vmem:[#allocation3 + $0x21f8] sm:$0xff]
    %v1160 = vld [vmem:[#allocation3 + $0x2200] sm:$0xff]
    %v1161 = vld [vmem:[#allocation3 + $0x2208] sm:$0xff]
    %v1162 = vld [vmem:[#allocation3 + $0x2210] sm:$0xff]
    %v1163 = vld [vmem:[#allocation3 + $0x2218] sm:$0xff]
    %v1164 = vld [vmem:[#allocation3 + $0x2220] sm:$0xff]
    %v1165 = vld [vmem:[#allocation3 + $0x2228] sm:$0xff]
    %v1166 = vld [vmem:[#allocation3 + $0x2230] sm:$0xff]
    %v1167 = vld [vmem:[#allocation3 + $0x2238] sm:$0xff]
    %v1168 = vld [vmem:[#allocation3 + $0x2240] sm:$0xff]
    %v1169 = vld [vmem:[#allocation3 + $0x2248] sm:$0xff]
    %v1170 = vld [vmem:[#allocation3 + $0x2250] sm:$0xff]
    %v1171 = vld [vmem:[#allocation3 + $0x2258] sm:$0xff]
    %v1172 = vld [vmem:[#allocation3 + $0x2260] sm:$0xff]
    %v1173 = vld [vmem:[#allocation3 + $0x2268] sm:$0xff]
    %v1174 = vld [vmem:[#allocation3 + $0x2270] sm:$0xff]
    %v1175 = vld [vmem:[#allocation3 + $0x2278] sm:$0xff]
    %v1176 = vld [vmem:[#allocation3 + $0x2280] sm:$0xff]
    %v1177 = vld [vmem:[#allocation3 + $0x2288] sm:$0xff]
    %v1178 = vld [vmem:[#allocation3 + $0x2290] sm:$0xff]
    %v1179 = vld [vmem:[#allocation3 + $0x2298] sm:$0xff]
    %v1180 = vld [vmem:[#allocation3 + $0x22a0] sm:$0xff]
    %v1181 = vld [vmem:[#allocation3 + $0x22a8] sm:$0xff]
    %v1182 = vld [vmem:[#allocation3 + $0x22b0] sm:$0xff]
    %v1183 = vld [vmem:[#allocation3 + $0x22b8] sm:$0xff]
    %v1184 = vld [vmem:[#allocation3 + $0x22c0] sm:$0xff]
    %v1185 = vld [vmem:[#allocation3 + $0x22c8] sm:$0xff]
    %v1186 = vld [vmem:[#allocation3 + $0x22d0] sm:$0xff]
    %v1187 = vld [vmem:[#allocation3 + $0x22d8] sm:$0xff]
    %v1188 = vld [vmem:[#allocation3 + $0x22e0] sm:$0xff]
    %v1189 = vld [vmem:[#allocation3 + $0x22e8] sm:$0xff]
    %v1190 = vld [vmem:[#allocation3 + $0x22f0] sm:$0xff]
    %v1191 = vld [vmem:[#allocation3 + $0x22f8] sm:$0xff]
    %v1192 = vld [vmem:[#allocation3 + $0x2300] sm:$0xff]
    %v1193 = vld [vmem:[#allocation3 + $0x2308] sm:$0xff]
    %v1194 = vld [vmem:[#allocation3 + $0x2310] sm:$0xff]
    %v1195 = vld [vmem:[#allocation3 + $0x2318] sm:$0xff]
    %v1196 = vld [vmem:[#allocation3 + $0x2320] sm:$0xff]
    %v1197 = vld [vmem:[#allocation3 + $0x2328] sm:$0xff]
    %v1198 = vld [vmem:[#allocation3 + $0x2330] sm:$0xff]
    %v1199 = vld [vmem:[#allocation3 + $0x2338] sm:$0xff]
    %v1200 = vld [vmem:[#allocation3 + $0x2340] sm:$0xff]
    %v1201 = vld [vmem:[#allocation3 + $0x2348] sm:$0xff]
    %v1202 = vld [vmem:[#allocation3 + $0x2350] sm:$0xff]
    %v1203 = vld [vmem:[#allocation3 + $0x2358] sm:$0xff]
    %v1204 = vld [vmem:[#allocation3 + $0x2360] sm:$0xff]
    %v1205 = vld [vmem:[#allocation3 + $0x2368] sm:$0xff]
    %v1206 = vld [vmem:[#allocation3 + $0x2370] sm:$0xff]
    %v1207 = vld [vmem:[#allocation3 + $0x2378] sm:$0xff]
    %v1208 = vld [vmem:[#allocation3 + $0x2380] sm:$0xff]
    %v1209 = vld [vmem:[#allocation3 + $0x2388] sm:$0xff]
    %v1210 = vld [vmem:[#allocation3 + $0x2390] sm:$0xff]
    %v1211 = vld [vmem:[#allocation3 + $0x2398] sm:$0xff]
    %v1212 = vld [vmem:[#allocation3 + $0x23a0] sm:$0xff]
    %v1213 = vld [vmem:[#allocation3 + $0x23a8] sm:$0xff]
    %v1214 = vld [vmem:[#allocation3 + $0x23b0] sm:$0xff]
    %v1215 = vld [vmem:[#allocation3 + $0x23b8] sm:$0xff]
    %v1216 = vld [vmem:[#allocation3 + $0x23c0] sm:$0xff]
    %v1217 = vld [vmem:[#allocation3 + $0x23c8] sm:$0xff]
    %v1218 = vld [vmem:[#allocation3 + $0x23d0] sm:$0xff]
    %v1219 = vld [vmem:[#allocation3 + $0x23d8] sm:$0xff]
    %v1220 = vld [vmem:[#allocation3 + $0x23e0] sm:$0xff]
    %v1221 = vld [vmem:[#allocation3 + $0x23e8] sm:$0xff]
    %v1222 = vld [vmem:[#allocation3 + $0x23f0] sm:$0xff]
    %v1223 = vld [vmem:[#allocation3 + $0x23f8] sm:$0xff]
    %v1227 = vcombine.high %v67, %v67
    %v1229 = vunpack.c.l.s4 1966171168
    %v1230 = vunpack.c.0.s8 %v1229
    %v1231 = vlaneseq
    %v1232 = vshrl.u32 %v1231, 7
    %v1233 = vsub.s32 %v1230, %v1232
    %v1234 = vrot.slane %v67, %v1233
    %v1236 = vunpack.c.l.s4 1966171168
    %v1237 = vunpack.c.0.s8 %v1236
    %v1238 = vlaneseq
    %v1239 = vshrl.u32 %v1238, 7
    %v1240 = vsub.s32 %v1237, %v1239
    %v1241 = vrot.slane %v1227, %v1240
    %v1242 = vcombine.high %v1234, %v1234
    %v1243 = vcombine.high %v1241, %v1241
    %v1245 = vunpack.c.l.s4 1966171168
    %v1246 = vunpack.c.0.s8 %v1245
    %v1247 = vlaneseq
    %v1248 = vshrl.u32 %v1247, 7
    %v1249 = vsub.s32 %v1246, %v1248
    %v1250 = vrot.slane %v1234, %v1249
    %v1252 = vunpack.c.l.s4 1966171168
    %v1253 = vunpack.c.0.s8 %v1252
    %v1254 = vlaneseq
    %v1255 = vshrl.u32 %v1254, 7
    %v1256 = vsub.s32 %v1253, %v1255
    %v1257 = vrot.slane %v1241, %v1256
    %v1259 = vunpack.c.l.s4 1966171168
    %v1260 = vunpack.c.0.s8 %v1259
    %v1261 = vlaneseq
    %v1262 = vshrl.u32 %v1261, 7
    %v1263 = vsub.s32 %v1260, %v1262
    %v1264 = vrot.slane %v1242, %v1263
    %v1266 = vunpack.c.l.s4 1966171168
    %v1267 = vunpack.c.0.s8 %v1266
    %v1268 = vlaneseq
    %v1269 = vshrl.u32 %v1268, 7
    %v1270 = vsub.s32 %v1267, %v1269
    %v1271 = vrot.slane %v1243, %v1270
    %v1272 = vcombine.high %v1250, %v1250
    %v1273 = vcombine.high %v1257, %v1257
    %v1274 = vcombine.high %v1264, %v1264
    %v1275 = vcombine.high %v1271, %v1271
    %v1276 = vcombine.high %v68, %v68
    %v1278 = vunpack.c.l.s4 1966171168
    %v1279 = vunpack.c.0.s8 %v1278
    %v1280 = vlaneseq
    %v1281 = vshrl.u32 %v1280, 7
    %v1282 = vsub.s32 %v1279, %v1281
    %v1283 = vrot.slane %v68, %v1282
    %v1285 = vunpack.c.l.s4 1966171168
    %v1286 = vunpack.c.0.s8 %v1285
    %v1287 = vlaneseq
    %v1288 = vshrl.u32 %v1287, 7
    %v1289 = vsub.s32 %v1286, %v1288
    %v1290 = vrot.slane %v1276, %v1289
    %v1291 = vcombine.high %v1283, %v1283
    %v1292 = vcombine.high %v1290, %v1290
    %v1294 = vunpack.c.l.s4 1966171168
    %v1295 = vunpack.c.0.s8 %v1294
    %v1296 = vlaneseq
    %v1297 = vshrl.u32 %v1296, 7
    %v1298 = vsub.s32 %v1295, %v1297
    %v1299 = vrot.slane %v1283, %v1298
    %v1301 = vunpack.c.l.s4 1966171168
    %v1302 = vunpack.c.0.s8 %v1301
    %v1303 = vlaneseq
    %v1304 = vshrl.u32 %v1303, 7
    %v1305 = vsub.s32 %v1302, %v1304
    %v1306 = vrot.slane %v1290, %v1305
    %v1308 = vunpack.c.l.s4 1966171168
    %v1309 = vunpack.c.0.s8 %v1308
    %v1310 = vlaneseq
    %v1311 = vshrl.u32 %v1310, 7
    %v1312 = vsub.s32 %v1309, %v1311
    %v1313 = vrot.slane %v1291, %v1312
    %v1315 = vunpack.c.l.s4 1966171168
    %v1316 = vunpack.c.0.s8 %v1315
    %v1317 = vlaneseq
    %v1318 = vshrl.u32 %v1317, 7
    %v1319 = vsub.s32 %v1316, %v1318
    %v1320 = vrot.slane %v1292, %v1319
    %v1321 = vcombine.high %v1299, %v1299
    %v1322 = vcombine.high %v1306, %v1306
    %v1323 = vcombine.high %v1313, %v1313
    %v1324 = vcombine.high %v1320, %v1320
    %v1325 = vcombine.high %v69, %v69
    %v1327 = vunpack.c.l.s4 1966171168
    %v1328 = vunpack.c.0.s8 %v1327
    %v1329 = vlaneseq
    %v1330 = vshrl.u32 %v1329, 7
    %v1331 = vsub.s32 %v1328, %v1330
    %v1332 = vrot.slane %v69, %v1331
    %v1334 = vunpack.c.l.s4 1966171168
    %v1335 = vunpack.c.0.s8 %v1334
    %v1336 = vlaneseq
    %v1337 = vshrl.u32 %v1336, 7
    %v1338 = vsub.s32 %v1335, %v1337
    %v1339 = vrot.slane %v1325, %v1338
    %v1340 = vcombine.high %v1332, %v1332
    %v1341 = vcombine.high %v1339, %v1339
    %v1343 = vunpack.c.l.s4 1966171168
    %v1344 = vunpack.c.0.s8 %v1343
    %v1345 = vlaneseq
    %v1346 = vshrl.u32 %v1345, 7
    %v1347 = vsub.s32 %v1344, %v1346
    %v1348 = vrot.slane %v1332, %v1347
    %v1350 = vunpack.c.l.s4 1966171168
    %v1351 = vunpack.c.0.s8 %v1350
    %v1352 = vlaneseq
    %v1353 = vshrl.u32 %v1352, 7
    %v1354 = vsub.s32 %v1351, %v1353
    %v1355 = vrot.slane %v1339, %v1354
    %v1357 = vunpack.c.l.s4 1966171168
    %v1358 = vunpack.c.0.s8 %v1357
    %v1359 = vlaneseq
    %v1360 = vshrl.u32 %v1359, 7
    %v1361 = vsub.s32 %v1358, %v1360
    %v1362 = vrot.slane %v1340, %v1361
    %v1364 = vunpack.c.l.s4 1966171168
    %v1365 = vunpack.c.0.s8 %v1364
    %v1366 = vlaneseq
    %v1367 = vshrl.u32 %v1366, 7
    %v1368 = vsub.s32 %v1365, %v1367
    %v1369 = vrot.slane %v1341, %v1368
    %v1370 = vcombine.high %v1348, %v1348
    %v1371 = vcombine.high %v1355, %v1355
    %v1372 = vcombine.high %v1362, %v1362
    %v1373 = vcombine.high %v1369, %v1369
    %v2550 = vunpack.c.l.b16 %v72
    %v2551 = vunpack.c.h.b16 %v72
    %v2552 = vunpack.c.l.b16 %v73
    %v2553 = vunpack.c.h.b16 %v73
    %v2554 = vunpack.c.l.b16 %v74
    %v2555 = vunpack.c.h.b16 %v74
    %v2556 = vunpack.c.l.b16 %v75
    %v2557 = vunpack.c.h.b16 %v75
    %v2558 = vunpack.c.l.b16 %v76
    %v2559 = vunpack.c.h.b16 %v76
    %v2560 = vunpack.c.l.b16 %v77
    %v2561 = vunpack.c.h.b16 %v77
    %v2562 = vunpack.c.l.b16 %v78
    %v2563 = vunpack.c.h.b16 %v78
    %v2564 = vunpack.c.l.b16 %v79
    %v2565 = vunpack.c.h.b16 %v79
    %v2566 = vunpack.c.l.b16 %v80
    %v2567 = vunpack.c.h.b16 %v80
    %v2568 = vunpack.c.l.b16 %v81
    %v2569 = vunpack.c.h.b16 %v81
    %v2570 = vunpack.c.l.b16 %v82
    %v2571 = vunpack.c.h.b16 %v82
    %v2572 = vunpack.c.l.b16 %v83
    %v2573 = vunpack.c.h.b16 %v83
    %v2574 = vunpack.c.l.b16 %v84
    %v2575 = vunpack.c.h.b16 %v84
    %v2576 = vunpack.c.l.b16 %v85
    %v2577 = vunpack.c.h.b16 %v85
    %v2578 = vunpack.c.l.b16 %v86
    %v2579 = vunpack.c.h.b16 %v86
    %v2580 = vunpack.c.l.b16 %v87
    %v2581 = vunpack.c.h.b16 %v87
    %v2582 = vunpack.c.l.b16 %v88
    %v2583 = vunpack.c.h.b16 %v88
    %v2584 = vunpack.c.l.b16 %v89
    %v2585 = vunpack.c.h.b16 %v89
    %v2586 = vunpack.c.l.b16 %v90
    %v2587 = vunpack.c.h.b16 %v90
    %v2588 = vunpack.c.l.b16 %v91
    %v2589 = vunpack.c.h.b16 %v91
    %v2590 = vunpack.c.l.b16 %v92
    %v2591 = vunpack.c.h.b16 %v92
    %v2592 = vunpack.c.l.b16 %v93
    %v2593 = vunpack.c.h.b16 %v93
    %v2594 = vunpack.c.l.b16 %v94
    %v2595 = vunpack.c.h.b16 %v94
    %v2596 = vunpack.c.l.b16 %v95
    %v2597 = vunpack.c.h.b16 %v95
    %v2598 = vunpack.c.l.b16 %v96
    %v2599 = vunpack.c.h.b16 %v96
    %v2600 = vunpack.c.l.b16 %v97
    %v2601 = vunpack.c.h.b16 %v97
    %v2602 = vunpack.c.l.b16 %v98
    %v2603 = vunpack.c.h.b16 %v98
    %v2604 = vunpack.c.l.b16 %v99
    %v2605 = vunpack.c.h.b16 %v99
    %v2606 = vunpack.c.l.b16 %v100
    %v2607 = vunpack.c.h.b16 %v100
    %v2608 = vunpack.c.l.b16 %v101
    %v2609 = vunpack.c.h.b16 %v101
    %v2610 = vunpack.c.l.b16 %v102
    %v2611 = vunpack.c.h.b16 %v102
    %v2612 = vunpack.c.l.b16 %v103
    %v2613 = vunpack.c.h.b16 %v103
    %v2614 = vunpack.c.l.b16 %v104
    %v2615 = vunpack.c.h.b16 %v104
    %v2616 = vunpack.c.l.b16 %v105
    %v2617 = vunpack.c.h.b16 %v105
    %v2618 = vunpack.c.l.b16 %v106
    %v2619 = vunpack.c.h.b16 %v106
    %v2620 = vunpack.c.l.b16 %v107
    %v2621 = vunpack.c.h.b16 %v107
    %v2622 = vunpack.c.l.b16 %v108
    %v2623 = vunpack.c.h.b16 %v108
    %v2624 = vunpack.c.l.b16 %v109
    %v2625 = vunpack.c.h.b16 %v109
    %v2626 = vunpack.c.l.b16 %v110
    %v2627 = vunpack.c.h.b16 %v110
    %v2628 = vunpack.c.l.b16 %v111
    %v2629 = vunpack.c.h.b16 %v111
    %v2630 = vunpack.c.l.b16 %v112
    %v2631 = vunpack.c.h.b16 %v112
    %v2632 = vunpack.c.l.b16 %v113
    %v2633 = vunpack.c.h.b16 %v113
    %v2634 = vunpack.c.l.b16 %v114
    %v2635 = vunpack.c.h.b16 %v114
    %v2636 = vunpack.c.l.b16 %v115
    %v2637 = vunpack.c.h.b16 %v115
    %v2638 = vunpack.c.l.b16 %v116
    %v2639 = vunpack.c.h.b16 %v116
    %v2640 = vunpack.c.l.b16 %v117
    %v2641 = vunpack.c.h.b16 %v117
    %v2642 = vunpack.c.l.b16 %v118
    %v2643 = vunpack.c.h.b16 %v118
    %v2644 = vunpack.c.l.b16 %v119
    %v2645 = vunpack.c.h.b16 %v119
    %v2646 = vunpack.c.l.b16 %v120
    %v2647 = vunpack.c.h.b16 %v120
    %v2648 = vunpack.c.l.b16 %v121
    %v2649 = vunpack.c.h.b16 %v121
    %v2650 = vunpack.c.l.b16 %v122
    %v2651 = vunpack.c.h.b16 %v122
    %v2652 = vunpack.c.l.b16 %v123
    %v2653 = vunpack.c.h.b16 %v123
    %v2654 = vunpack.c.l.b16 %v124
    %v2655 = vunpack.c.h.b16 %v124
    %v2656 = vunpack.c.l.b16 %v125
    %v2657 = vunpack.c.h.b16 %v125
    %v2658 = vunpack.c.l.b16 %v126
    %v2659 = vunpack.c.h.b16 %v126
    %v2660 = vunpack.c.l.b16 %v127
    %v2661 = vunpack.c.h.b16 %v127
    %v2662 = vunpack.c.l.b16 %v128
    %v2663 = vunpack.c.h.b16 %v128
    %v2664 = vunpack.c.l.b16 %v129
    %v2665 = vunpack.c.h.b16 %v129
    %v2666 = vunpack.c.l.b16 %v130
    %v2667 = vunpack.c.h.b16 %v130
    %v2668 = vunpack.c.l.b16 %v131
    %v2669 = vunpack.c.h.b16 %v131
    %v2670 = vunpack.c.l.b16 %v132
    %v2671 = vunpack.c.h.b16 %v132
    %v2672 = vunpack.c.l.b16 %v133
    %v2673 = vunpack.c.h.b16 %v133
    %v2674 = vunpack.c.l.b16 %v134
    %v2675 = vunpack.c.h.b16 %v134
    %v2676 = vunpack.c.l.b16 %v135
    %v2677 = vunpack.c.h.b16 %v135
    %v2678 = vunpack.c.l.b16 %v136
    %v2679 = vunpack.c.h.b16 %v136
    %v2680 = vunpack.c.l.b16 %v137
    %v2681 = vunpack.c.h.b16 %v137
    %v2682 = vunpack.c.l.b16 %v138
    %v2683 = vunpack.c.h.b16 %v138
    %v2684 = vunpack.c.l.b16 %v139
    %v2685 = vunpack.c.h.b16 %v139
    %v2686 = vunpack.c.l.b16 %v140
    %v2687 = vunpack.c.h.b16 %v140
    %v2688 = vunpack.c.l.b16 %v141
    %v2689 = vunpack.c.h.b16 %v141
    %v2690 = vunpack.c.l.b16 %v142
    %v2691 = vunpack.c.h.b16 %v142
    %v2692 = vunpack.c.l.b16 %v143
    %v2693 = vunpack.c.h.b16 %v143
    %v2694 = vunpack.c.l.b16 %v144
    %v2695 = vunpack.c.h.b16 %v144
    %v2696 = vunpack.c.l.b16 %v145
    %v2697 = vunpack.c.h.b16 %v145
    %v2698 = vunpack.c.l.b16 %v146
    %v2699 = vunpack.c.h.b16 %v146
    %v2700 = vunpack.c.l.b16 %v147
    %v2701 = vunpack.c.h.b16 %v147
    %v2702 = vunpack.c.l.b16 %v148
    %v2703 = vunpack.c.h.b16 %v148
    %v2704 = vunpack.c.l.b16 %v149
    %v2705 = vunpack.c.h.b16 %v149
    %v2706 = vunpack.c.l.b16 %v150
    %v2707 = vunpack.c.h.b16 %v150
    %v2708 = vunpack.c.l.b16 %v151
    %v2709 = vunpack.c.h.b16 %v151
    %v2710 = vunpack.c.l.b16 %v152
    %v2711 = vunpack.c.h.b16 %v152
    %v2712 = vunpack.c.l.b16 %v153
    %v2713 = vunpack.c.h.b16 %v153
    %v2714 = vunpack.c.l.b16 %v154
    %v2715 = vunpack.c.h.b16 %v154
    %v2716 = vunpack.c.l.b16 %v155
    %v2717 = vunpack.c.h.b16 %v155
    %v2718 = vunpack.c.l.b16 %v156
    %v2719 = vunpack.c.h.b16 %v156
    %v2720 = vunpack.c.l.b16 %v157
    %v2721 = vunpack.c.h.b16 %v157
    %v2722 = vunpack.c.l.b16 %v158
    %v2723 = vunpack.c.h.b16 %v158
    %v2724 = vunpack.c.l.b16 %v159
    %v2725 = vunpack.c.h.b16 %v159
    %v2726 = vunpack.c.l.b16 %v160
    %v2727 = vunpack.c.h.b16 %v160
    %v2728 = vunpack.c.l.b16 %v161
    %v2729 = vunpack.c.h.b16 %v161
    %v2730 = vunpack.c.l.b16 %v162
    %v2731 = vunpack.c.h.b16 %v162
    %v2732 = vunpack.c.l.b16 %v163
    %v2733 = vunpack.c.h.b16 %v163
    %v2734 = vunpack.c.l.b16 %v164
    %v2735 = vunpack.c.h.b16 %v164
    %v2736 = vunpack.c.l.b16 %v165
    %v2737 = vunpack.c.h.b16 %v165
    %v2738 = vunpack.c.l.b16 %v166
    %v2739 = vunpack.c.h.b16 %v166
    %v2740 = vunpack.c.l.b16 %v167
    %v2741 = vunpack.c.h.b16 %v167
    %v2742 = vunpack.c.l.b16 %v168
    %v2743 = vunpack.c.h.b16 %v168
    %v2744 = vunpack.c.l.b16 %v169
    %v2745 = vunpack.c.h.b16 %v169
    %v2746 = vunpack.c.l.b16 %v170
    %v2747 = vunpack.c.h.b16 %v170
    %v2748 = vunpack.c.l.b16 %v171
    %v2749 = vunpack.c.h.b16 %v171
    %v2750 = vunpack.c.l.b16 %v172
    %v2751 = vunpack.c.h.b16 %v172
    %v2752 = vunpack.c.l.b16 %v173
    %v2753 = vunpack.c.h.b16 %v173
    %v2754 = vunpack.c.l.b16 %v174
    %v2755 = vunpack.c.h.b16 %v174
    %v2756 = vunpack.c.l.b16 %v175
    %v2757 = vunpack.c.h.b16 %v175
    %v2758 = vunpack.c.l.b16 %v176
    %v2759 = vunpack.c.h.b16 %v176
    %v2760 = vunpack.c.l.b16 %v177
    %v2761 = vunpack.c.h.b16 %v177
    %v2762 = vunpack.c.l.b16 %v178
    %v2763 = vunpack.c.h.b16 %v178
    %v2764 = vunpack.c.l.b16 %v179
    %v2765 = vunpack.c.h.b16 %v179
    %v2766 = vunpack.c.l.b16 %v180
    %v2767 = vunpack.c.h.b16 %v180
    %v2768 = vunpack.c.l.b16 %v181
    %v2769 = vunpack.c.h.b16 %v181
    %v2770 = vunpack.c.l.b16 %v182
    %v2771 = vunpack.c.h.b16 %v182
    %v2772 = vunpack.c.l.b16 %v183
    %v2773 = vunpack.c.h.b16 %v183
    %v2774 = vunpack.c.l.b16 %v184
    %v2775 = vunpack.c.h.b16 %v184
    %v2776 = vunpack.c.l.b16 %v185
    %v2777 = vunpack.c.h.b16 %v185
    %v2778 = vunpack.c.l.b16 %v186
    %v2779 = vunpack.c.h.b16 %v186
    %v2780 = vunpack.c.l.b16 %v187
    %v2781 = vunpack.c.h.b16 %v187
    %v2782 = vunpack.c.l.b16 %v188
    %v2783 = vunpack.c.h.b16 %v188
    %v2784 = vunpack.c.l.b16 %v189
    %v2785 = vunpack.c.h.b16 %v189
    %v2786 = vunpack.c.l.b16 %v190
    %v2787 = vunpack.c.h.b16 %v190
    %v2788 = vunpack.c.l.b16 %v191
    %v2789 = vunpack.c.h.b16 %v191
    %v2790 = vunpack.c.l.b16 %v192
    %v2791 = vunpack.c.h.b16 %v192
    %v2792 = vunpack.c.l.b16 %v193
    %v2793 = vunpack.c.h.b16 %v193
    %v2794 = vunpack.c.l.b16 %v194
    %v2795 = vunpack.c.h.b16 %v194
    %v2796 = vunpack.c.l.b16 %v195
    %v2797 = vunpack.c.h.b16 %v195
    %v2798 = vunpack.c.l.b16 %v196
    %v2799 = vunpack.c.h.b16 %v196
    %v2800 = vunpack.c.l.b16 %v197
    %v2801 = vunpack.c.h.b16 %v197
    %v2802 = vunpack.c.l.b16 %v198
    %v2803 = vunpack.c.h.b16 %v198
    %v2804 = vunpack.c.l.b16 %v199
    %v2805 = vunpack.c.h.b16 %v199
    %v2806 = vunpack.c.l.b16 %v200
    %v2807 = vunpack.c.h.b16 %v200
    %v2808 = vunpack.c.l.b16 %v201
    %v2809 = vunpack.c.h.b16 %v201
    %v2810 = vunpack.c.l.b16 %v202
    %v2811 = vunpack.c.h.b16 %v202
    %v2812 = vunpack.c.l.b16 %v203
    %v2813 = vunpack.c.h.b16 %v203
    %v2814 = vunpack.c.l.b16 %v204
    %v2815 = vunpack.c.h.b16 %v204
    %v2816 = vunpack.c.l.b16 %v205
    %v2817 = vunpack.c.h.b16 %v205
    %v2818 = vunpack.c.l.b16 %v206
    %v2819 = vunpack.c.h.b16 %v206
    %v2820 = vunpack.c.l.b16 %v207
    %v2821 = vunpack.c.h.b16 %v207
    %v2822 = vunpack.c.l.b16 %v208
    %v2823 = vunpack.c.h.b16 %v208
    %v2824 = vunpack.c.l.b16 %v209
    %v2825 = vunpack.c.h.b16 %v209
    %v2826 = vunpack.c.l.b16 %v210
    %v2827 = vunpack.c.h.b16 %v210
    %v2828 = vunpack.c.l.b16 %v211
    %v2829 = vunpack.c.h.b16 %v211
    %v2830 = vunpack.c.l.b16 %v212
    %v2831 = vunpack.c.h.b16 %v212
    %v2832 = vunpack.c.l.b16 %v213
    %v2833 = vunpack.c.h.b16 %v213
    %v2834 = vunpack.c.l.b16 %v214
    %v2835 = vunpack.c.h.b16 %v214
    %v2836 = vunpack.c.l.b16 %v215
    %v2837 = vunpack.c.h.b16 %v215
    %v2838 = vunpack.c.l.b16 %v216
    %v2839 = vunpack.c.h.b16 %v216
    %v2840 = vunpack.c.l.b16 %v217
    %v2841 = vunpack.c.h.b16 %v217
    %v2842 = vunpack.c.l.b16 %v218
    %v2843 = vunpack.c.h.b16 %v218
    %v2844 = vunpack.c.l.b16 %v219
    %v2845 = vunpack.c.h.b16 %v219
    %v2846 = vunpack.c.l.b16 %v220
    %v2847 = vunpack.c.h.b16 %v220
    %v2848 = vunpack.c.l.b16 %v221
    %v2849 = vunpack.c.h.b16 %v221
    %v2850 = vunpack.c.l.b16 %v222
    %v2851 = vunpack.c.h.b16 %v222
    %v2852 = vunpack.c.l.b16 %v223
    %v2853 = vunpack.c.h.b16 %v223
    %v2854 = vunpack.c.l.b16 %v224
    %v2855 = vunpack.c.h.b16 %v224
    %v2856 = vunpack.c.l.b16 %v225
    %v2857 = vunpack.c.h.b16 %v225
    %v2858 = vunpack.c.l.b16 %v226
    %v2859 = vunpack.c.h.b16 %v226
    %v2860 = vunpack.c.l.b16 %v227
    %v2861 = vunpack.c.h.b16 %v227
    %v2862 = vunpack.c.l.b16 %v228
    %v2863 = vunpack.c.h.b16 %v228
    %v2864 = vunpack.c.l.b16 %v229
    %v2865 = vunpack.c.h.b16 %v229
    %v2866 = vunpack.c.l.b16 %v230
    %v2867 = vunpack.c.h.b16 %v230
    %v2868 = vunpack.c.l.b16 %v231
    %v2869 = vunpack.c.h.b16 %v231
    %v2870 = vunpack.c.l.b16 %v232
    %v2871 = vunpack.c.h.b16 %v232
    %v2872 = vunpack.c.l.b16 %v233
    %v2873 = vunpack.c.h.b16 %v233
    %v2874 = vunpack.c.l.b16 %v234
    %v2875 = vunpack.c.h.b16 %v234
    %v2876 = vunpack.c.l.b16 %v235
    %v2877 = vunpack.c.h.b16 %v235
    %v2878 = vunpack.c.l.b16 %v236
    %v2879 = vunpack.c.h.b16 %v236
    %v2880 = vunpack.c.l.b16 %v237
    %v2881 = vunpack.c.h.b16 %v237
    %v2882 = vunpack.c.l.b16 %v238
    %v2883 = vunpack.c.h.b16 %v238
    %v2884 = vunpack.c.l.b16 %v239
    %v2885 = vunpack.c.h.b16 %v239
    %v2886 = vunpack.c.l.b16 %v240
    %v2887 = vunpack.c.h.b16 %v240
    %v2888 = vunpack.c.l.b16 %v241
    %v2889 = vunpack.c.h.b16 %v241
    %v2890 = vunpack.c.l.b16 %v242
    %v2891 = vunpack.c.h.b16 %v242
    %v2892 = vunpack.c.l.b16 %v243
    %v2893 = vunpack.c.h.b16 %v243
    %v2894 = vunpack.c.l.b16 %v244
    %v2895 = vunpack.c.h.b16 %v244
    %v2896 = vunpack.c.l.b16 %v245
    %v2897 = vunpack.c.h.b16 %v245
    %v2898 = vunpack.c.l.b16 %v246
    %v2899 = vunpack.c.h.b16 %v246
    %v2900 = vunpack.c.l.b16 %v247
    %v2901 = vunpack.c.h.b16 %v247
    %v2902 = vunpack.c.l.b16 %v248
    %v2903 = vunpack.c.h.b16 %v248
    %v2904 = vunpack.c.l.b16 %v249
    %v2905 = vunpack.c.h.b16 %v249
    %v2906 = vunpack.c.l.b16 %v250
    %v2907 = vunpack.c.h.b16 %v250
    %v2908 = vunpack.c.l.b16 %v251
    %v2909 = vunpack.c.h.b16 %v251
    %v2910 = vunpack.c.l.b16 %v252
    %v2911 = vunpack.c.h.b16 %v252
    %v2912 = vunpack.c.l.b16 %v253
    %v2913 = vunpack.c.h.b16 %v253
    %v2914 = vunpack.c.l.b16 %v254
    %v2915 = vunpack.c.h.b16 %v254
    %v2916 = vunpack.c.l.b16 %v255
    %v2917 = vunpack.c.h.b16 %v255
    %v2918 = vunpack.c.l.b16 %v256
    %v2919 = vunpack.c.h.b16 %v256
    %v2920 = vunpack.c.l.b16 %v257
    %v2921 = vunpack.c.h.b16 %v257
    %v2922 = vunpack.c.l.b16 %v258
    %v2923 = vunpack.c.h.b16 %v258
    %v2924 = vunpack.c.l.b16 %v259
    %v2925 = vunpack.c.h.b16 %v259
    %v2926 = vunpack.c.l.b16 %v260
    %v2927 = vunpack.c.h.b16 %v260
    %v2928 = vunpack.c.l.b16 %v261
    %v2929 = vunpack.c.h.b16 %v261
    %v2930 = vunpack.c.l.b16 %v262
    %v2931 = vunpack.c.h.b16 %v262
    %v2932 = vunpack.c.l.b16 %v263
    %v2933 = vunpack.c.h.b16 %v263
    %v2934 = vunpack.c.l.b16 %v264
    %v2935 = vunpack.c.h.b16 %v264
    %v2936 = vunpack.c.l.b16 %v265
    %v2937 = vunpack.c.h.b16 %v265
    %v2938 = vunpack.c.l.b16 %v266
    %v2939 = vunpack.c.h.b16 %v266
    %v2940 = vunpack.c.l.b16 %v267
    %v2941 = vunpack.c.h.b16 %v267
    %v2942 = vunpack.c.l.b16 %v268
    %v2943 = vunpack.c.h.b16 %v268
    %v2944 = vunpack.c.l.b16 %v269
    %v2945 = vunpack.c.h.b16 %v269
    %v2946 = vunpack.c.l.b16 %v270
    %v2947 = vunpack.c.h.b16 %v270
    %v2948 = vunpack.c.l.b16 %v271
    %v2949 = vunpack.c.h.b16 %v271
    %v2950 = vunpack.c.l.b16 %v272
    %v2951 = vunpack.c.h.b16 %v272
    %v2952 = vunpack.c.l.b16 %v273
    %v2953 = vunpack.c.h.b16 %v273
    %v2954 = vunpack.c.l.b16 %v274
    %v2955 = vunpack.c.h.b16 %v274
    %v2956 = vunpack.c.l.b16 %v275
    %v2957 = vunpack.c.h.b16 %v275
    %v2958 = vunpack.c.l.b16 %v276
    %v2959 = vunpack.c.h.b16 %v276
    %v2960 = vunpack.c.l.b16 %v277
    %v2961 = vunpack.c.h.b16 %v277
    %v2962 = vunpack.c.l.b16 %v278
    %v2963 = vunpack.c.h.b16 %v278
    %v2964 = vunpack.c.l.b16 %v279
    %v2965 = vunpack.c.h.b16 %v279
    %v2966 = vunpack.c.l.b16 %v280
    %v2967 = vunpack.c.h.b16 %v280
    %v2968 = vunpack.c.l.b16 %v281
    %v2969 = vunpack.c.h.b16 %v281
    %v2970 = vunpack.c.l.b16 %v282
    %v2971 = vunpack.c.h.b16 %v282
    %v2972 = vunpack.c.l.b16 %v283
    %v2973 = vunpack.c.h.b16 %v283
    %v2974 = vunpack.c.l.b16 %v284
    %v2975 = vunpack.c.h.b16 %v284
    %v2976 = vunpack.c.l.b16 %v285
    %v2977 = vunpack.c.h.b16 %v285
    %v2978 = vunpack.c.l.b16 %v286
    %v2979 = vunpack.c.h.b16 %v286
    %v2980 = vunpack.c.l.b16 %v287
    %v2981 = vunpack.c.h.b16 %v287
    %v2982 = vunpack.c.l.b16 %v288
    %v2983 = vunpack.c.h.b16 %v288
    %v2984 = vunpack.c.l.b16 %v289
    %v2985 = vunpack.c.h.b16 %v289
    %v2986 = vunpack.c.l.b16 %v290
    %v2987 = vunpack.c.h.b16 %v290
    %v2988 = vunpack.c.l.b16 %v291
    %v2989 = vunpack.c.h.b16 %v291
    %v2990 = vunpack.c.l.b16 %v292
    %v2991 = vunpack.c.h.b16 %v292
    %v2992 = vunpack.c.l.b16 %v293
    %v2993 = vunpack.c.h.b16 %v293
    %v2994 = vunpack.c.l.b16 %v294
    %v2995 = vunpack.c.h.b16 %v294
    %v2996 = vunpack.c.l.b16 %v295
    %v2997 = vunpack.c.h.b16 %v295
    %v2998 = vunpack.c.l.b16 %v296
    %v2999 = vunpack.c.h.b16 %v296
    %v3000 = vunpack.c.l.b16 %v297
    %v3001 = vunpack.c.h.b16 %v297
    %v3002 = vunpack.c.l.b16 %v298
    %v3003 = vunpack.c.h.b16 %v298
    %v3004 = vunpack.c.l.b16 %v299
    %v3005 = vunpack.c.h.b16 %v299
    %v3006 = vunpack.c.l.b16 %v300
    %v3007 = vunpack.c.h.b16 %v300
    %v3008 = vunpack.c.l.b16 %v301
    %v3009 = vunpack.c.h.b16 %v301
    %v3010 = vunpack.c.l.b16 %v302
    %v3011 = vunpack.c.h.b16 %v302
    %v3012 = vunpack.c.l.b16 %v303
    %v3013 = vunpack.c.h.b16 %v303
    %v3014 = vunpack.c.l.b16 %v304
    %v3015 = vunpack.c.h.b16 %v304
    %v3016 = vunpack.c.l.b16 %v305
    %v3017 = vunpack.c.h.b16 %v305
    %v3018 = vunpack.c.l.b16 %v306
    %v3019 = vunpack.c.h.b16 %v306
    %v3020 = vunpack.c.l.b16 %v307
    %v3021 = vunpack.c.h.b16 %v307
    %v3022 = vunpack.c.l.b16 %v308
    %v3023 = vunpack.c.h.b16 %v308
    %v3024 = vunpack.c.l.b16 %v309
    %v3025 = vunpack.c.h.b16 %v309
    %v3026 = vunpack.c.l.b16 %v310
    %v3027 = vunpack.c.h.b16 %v310
    %v3028 = vunpack.c.l.b16 %v311
    %v3029 = vunpack.c.h.b16 %v311
    %v3030 = vunpack.c.l.b16 %v312
    %v3031 = vunpack.c.h.b16 %v312
    %v3032 = vunpack.c.l.b16 %v313
    %v3033 = vunpack.c.h.b16 %v313
    %v3034 = vunpack.c.l.b16 %v314
    %v3035 = vunpack.c.h.b16 %v314
    %v3036 = vunpack.c.l.b16 %v315
    %v3037 = vunpack.c.h.b16 %v315
    %v3038 = vunpack.c.l.b16 %v316
    %v3039 = vunpack.c.h.b16 %v316
    %v3040 = vunpack.c.l.b16 %v317
    %v3041 = vunpack.c.h.b16 %v317
    %v3042 = vunpack.c.l.b16 %v318
    %v3043 = vunpack.c.h.b16 %v318
    %v3044 = vunpack.c.l.b16 %v319
    %v3045 = vunpack.c.h.b16 %v319
    %v3046 = vunpack.c.l.b16 %v320
    %v3047 = vunpack.c.h.b16 %v320
    %v3048 = vunpack.c.l.b16 %v321
    %v3049 = vunpack.c.h.b16 %v321
    %v3050 = vunpack.c.l.b16 %v322
    %v3051 = vunpack.c.h.b16 %v322
    %v3052 = vunpack.c.l.b16 %v323
    %v3053 = vunpack.c.h.b16 %v323
    %v3054 = vunpack.c.l.b16 %v324
    %v3055 = vunpack.c.h.b16 %v324
    %v3056 = vunpack.c.l.b16 %v325
    %v3057 = vunpack.c.h.b16 %v325
    %v3058 = vunpack.c.l.b16 %v326
    %v3059 = vunpack.c.h.b16 %v326
    %v3060 = vunpack.c.l.b16 %v327
    %v3061 = vunpack.c.h.b16 %v327
    %v3062 = vunpack.c.l.b16 %v328
    %v3063 = vunpack.c.h.b16 %v328
    %v3064 = vunpack.c.l.b16 %v329
    %v3065 = vunpack.c.h.b16 %v329
    %v3066 = vunpack.c.l.b16 %v330
    %v3067 = vunpack.c.h.b16 %v330
    %v3068 = vunpack.c.l.b16 %v331
    %v3069 = vunpack.c.h.b16 %v331
    %v3070 = vunpack.c.l.b16 %v332
    %v3071 = vunpack.c.h.b16 %v332
    %v3072 = vunpack.c.l.b16 %v333
    %v3073 = vunpack.c.h.b16 %v333
    %v3074 = vunpack.c.l.b16 %v334
    %v3075 = vunpack.c.h.b16 %v334
    %v3076 = vunpack.c.l.b16 %v335
    %v3077 = vunpack.c.h.b16 %v335
    %v3078 = vunpack.c.l.b16 %v336
    %v3079 = vunpack.c.h.b16 %v336
    %v3080 = vunpack.c.l.b16 %v337
    %v3081 = vunpack.c.h.b16 %v337
    %v3082 = vunpack.c.l.b16 %v338
    %v3083 = vunpack.c.h.b16 %v338
    %v3084 = vunpack.c.l.b16 %v339
    %v3085 = vunpack.c.h.b16 %v339
    %v3086 = vunpack.c.l.b16 %v340
    %v3087 = vunpack.c.h.b16 %v340
    %v3088 = vunpack.c.l.b16 %v341
    %v3089 = vunpack.c.h.b16 %v341
    %v3090 = vunpack.c.l.b16 %v342
    %v3091 = vunpack.c.h.b16 %v342
    %v3092 = vunpack.c.l.b16 %v343
    %v3093 = vunpack.c.h.b16 %v343
    %v3094 = vunpack.c.l.b16 %v344
    %v3095 = vunpack.c.h.b16 %v344
    %v3096 = vunpack.c.l.b16 %v345
    %v3097 = vunpack.c.h.b16 %v345
    %v3098 = vunpack.c.l.b16 %v346
    %v3099 = vunpack.c.h.b16 %v346
    %v3100 = vunpack.c.l.b16 %v347
    %v3101 = vunpack.c.h.b16 %v347
    %v3102 = vunpack.c.l.b16 %v348
    %v3103 = vunpack.c.h.b16 %v348
    %v3104 = vunpack.c.l.b16 %v349
    %v3105 = vunpack.c.h.b16 %v349
    %v3106 = vunpack.c.l.b16 %v350
    %v3107 = vunpack.c.h.b16 %v350
    %v3108 = vunpack.c.l.b16 %v351
    %v3109 = vunpack.c.h.b16 %v351
    %v3110 = vunpack.c.l.b16 %v352
    %v3111 = vunpack.c.h.b16 %v352
    %v3112 = vunpack.c.l.b16 %v353
    %v3113 = vunpack.c.h.b16 %v353
    %v3114 = vunpack.c.l.b16 %v354
    %v3115 = vunpack.c.h.b16 %v354
    %v3116 = vunpack.c.l.b16 %v355
    %v3117 = vunpack.c.h.b16 %v355
    %v3118 = vunpack.c.l.b16 %v356
    %v3119 = vunpack.c.h.b16 %v356
    %v3120 = vunpack.c.l.b16 %v357
    %v3121 = vunpack.c.h.b16 %v357
    %v3122 = vunpack.c.l.b16 %v358
    %v3123 = vunpack.c.h.b16 %v358
    %v3124 = vunpack.c.l.b16 %v359
    %v3125 = vunpack.c.h.b16 %v359
    %v3126 = vunpack.c.l.b16 %v360
    %v3127 = vunpack.c.h.b16 %v360
    %v3128 = vunpack.c.l.b16 %v361
    %v3129 = vunpack.c.h.b16 %v361
    %v3130 = vunpack.c.l.b16 %v362
    %v3131 = vunpack.c.h.b16 %v362
    %v3132 = vunpack.c.l.b16 %v363
    %v3133 = vunpack.c.h.b16 %v363
    %v3134 = vunpack.c.l.b16 %v364
    %v3135 = vunpack.c.h.b16 %v364
    %v3136 = vunpack.c.l.b16 %v365
    %v3137 = vunpack.c.h.b16 %v365
    %v3138 = vunpack.c.l.b16 %v366
    %v3139 = vunpack.c.h.b16 %v366
    %v3140 = vunpack.c.l.b16 %v367
    %v3141 = vunpack.c.h.b16 %v367
    %v3142 = vunpack.c.l.b16 %v368
    %v3143 = vunpack.c.h.b16 %v368
    %v3144 = vunpack.c.l.b16 %v369
    %v3145 = vunpack.c.h.b16 %v369
    %v3146 = vunpack.c.l.b16 %v370
    %v3147 = vunpack.c.h.b16 %v370
    %v3148 = vunpack.c.l.b16 %v371
    %v3149 = vunpack.c.h.b16 %v371
    %v3150 = vunpack.c.l.b16 %v372
    %v3151 = vunpack.c.h.b16 %v372
    %v3152 = vunpack.c.l.b16 %v373
    %v3153 = vunpack.c.h.b16 %v373
    %v3154 = vunpack.c.l.b16 %v374
    %v3155 = vunpack.c.h.b16 %v374
    %v3156 = vunpack.c.l.b16 %v375
    %v3157 = vunpack.c.h.b16 %v375
    %v3158 = vunpack.c.l.b16 %v376
    %v3159 = vunpack.c.h.b16 %v376
    %v3160 = vunpack.c.l.b16 %v377
    %v3161 = vunpack.c.h.b16 %v377
    %v3162 = vunpack.c.l.b16 %v378
    %v3163 = vunpack.c.h.b16 %v378
    %v3164 = vunpack.c.l.b16 %v379
    %v3165 = vunpack.c.h.b16 %v379
    %v3166 = vunpack.c.l.b16 %v380
    %v3167 = vunpack.c.h.b16 %v380
    %v3168 = vunpack.c.l.b16 %v381
    %v3169 = vunpack.c.h.b16 %v381
    %v3170 = vunpack.c.l.b16 %v382
    %v3171 = vunpack.c.h.b16 %v382
    %v3172 = vunpack.c.l.b16 %v383
    %v3173 = vunpack.c.h.b16 %v383
    %v3174 = vunpack.c.l.b16 %v384
    %v3175 = vunpack.c.h.b16 %v384
    %v3176 = vunpack.c.l.b16 %v385
    %v3177 = vunpack.c.h.b16 %v385
    %v3178 = vunpack.c.l.b16 %v386
    %v3179 = vunpack.c.h.b16 %v386
    %v3180 = vunpack.c.l.b16 %v387
    %v3181 = vunpack.c.h.b16 %v387
    %v3182 = vunpack.c.l.b16 %v388
    %v3183 = vunpack.c.h.b16 %v388
    %v3184 = vunpack.c.l.b16 %v389
    %v3185 = vunpack.c.h.b16 %v389
    %v3186 = vunpack.c.l.b16 %v390
    %v3187 = vunpack.c.h.b16 %v390
    %v3188 = vunpack.c.l.b16 %v391
    %v3189 = vunpack.c.h.b16 %v391
    %v3190 = vunpack.c.l.b16 %v392
    %v3191 = vunpack.c.h.b16 %v392
    %v3192 = vunpack.c.l.b16 %v393
    %v3193 = vunpack.c.h.b16 %v393
    %v3194 = vunpack.c.l.b16 %v394
    %v3195 = vunpack.c.h.b16 %v394
    %v3196 = vunpack.c.l.b16 %v395
    %v3197 = vunpack.c.h.b16 %v395
    %v3198 = vunpack.c.l.b16 %v396
    %v3199 = vunpack.c.h.b16 %v396
    %v3200 = vunpack.c.l.b16 %v397
    %v3201 = vunpack.c.h.b16 %v397
    %v3202 = vunpack.c.l.b16 %v398
    %v3203 = vunpack.c.h.b16 %v398
    %v3204 = vunpack.c.l.b16 %v399
    %v3205 = vunpack.c.h.b16 %v399
    %v3206 = vunpack.c.l.b16 %v400
    %v3207 = vunpack.c.h.b16 %v400
    %v3208 = vunpack.c.l.b16 %v401
    %v3209 = vunpack.c.h.b16 %v401
    %v3210 = vunpack.c.l.b16 %v402
    %v3211 = vunpack.c.h.b16 %v402
    %v3212 = vunpack.c.l.b16 %v403
    %v3213 = vunpack.c.h.b16 %v403
    %v3214 = vunpack.c.l.b16 %v404
    %v3215 = vunpack.c.h.b16 %v404
    %v3216 = vunpack.c.l.b16 %v405
    %v3217 = vunpack.c.h.b16 %v405
    %v3218 = vunpack.c.l.b16 %v406
    %v3219 = vunpack.c.h.b16 %v406
    %v3220 = vunpack.c.l.b16 %v407
    %v3221 = vunpack.c.h.b16 %v407
    %v3222 = vunpack.c.l.b16 %v408
    %v3223 = vunpack.c.h.b16 %v408
    %v3224 = vunpack.c.l.b16 %v409
    %v3225 = vunpack.c.h.b16 %v409
    %v3226 = vunpack.c.l.b16 %v410
    %v3227 = vunpack.c.h.b16 %v410
    %v3228 = vunpack.c.l.b16 %v411
    %v3229 = vunpack.c.h.b16 %v411
    %v3230 = vunpack.c.l.b16 %v412
    %v3231 = vunpack.c.h.b16 %v412
    %v3232 = vunpack.c.l.b16 %v413
    %v3233 = vunpack.c.h.b16 %v413
    %v3234 = vunpack.c.l.b16 %v414
    %v3235 = vunpack.c.h.b16 %v414
    %v3236 = vunpack.c.l.b16 %v415
    %v3237 = vunpack.c.h.b16 %v415
    %v3238 = vunpack.c.l.b16 %v416
    %v3239 = vunpack.c.h.b16 %v416
    %v3240 = vunpack.c.l.b16 %v417
    %v3241 = vunpack.c.h.b16 %v417
    %v3242 = vunpack.c.l.b16 %v418
    %v3243 = vunpack.c.h.b16 %v418
    %v3244 = vunpack.c.l.b16 %v419
    %v3245 = vunpack.c.h.b16 %v419
    %v3246 = vunpack.c.l.b16 %v420
    %v3247 = vunpack.c.h.b16 %v420
    %v3248 = vunpack.c.l.b16 %v421
    %v3249 = vunpack.c.h.b16 %v421
    %v3250 = vunpack.c.l.b16 %v422
    %v3251 = vunpack.c.h.b16 %v422
    %v3252 = vunpack.c.l.b16 %v423
    %v3253 = vunpack.c.h.b16 %v423
    %v3254 = vunpack.c.l.b16 %v424
    %v3255 = vunpack.c.h.b16 %v424
    %v3256 = vunpack.c.l.b16 %v425
    %v3257 = vunpack.c.h.b16 %v425
    %v3258 = vunpack.c.l.b16 %v426
    %v3259 = vunpack.c.h.b16 %v426
    %v3260 = vunpack.c.l.b16 %v427
    %v3261 = vunpack.c.h.b16 %v427
    %v3262 = vunpack.c.l.b16 %v428
    %v3263 = vunpack.c.h.b16 %v428
    %v3264 = vunpack.c.l.b16 %v429
    %v3265 = vunpack.c.h.b16 %v429
    %v3266 = vunpack.c.l.b16 %v430
    %v3267 = vunpack.c.h.b16 %v430
    %v3268 = vunpack.c.l.b16 %v431
    %v3269 = vunpack.c.h.b16 %v431
    %v3270 = vunpack.c.l.b16 %v432
    %v3271 = vunpack.c.h.b16 %v432
    %v3272 = vunpack.c.l.b16 %v433
    %v3273 = vunpack.c.h.b16 %v433
    %v3274 = vunpack.c.l.b16 %v434
    %v3275 = vunpack.c.h.b16 %v434
    %v3276 = vunpack.c.l.b16 %v435
    %v3277 = vunpack.c.h.b16 %v435
    %v3278 = vunpack.c.l.b16 %v436
    %v3279 = vunpack.c.h.b16 %v436
    %v3280 = vunpack.c.l.b16 %v437
    %v3281 = vunpack.c.h.b16 %v437
    %v3282 = vunpack.c.l.b16 %v438
    %v3283 = vunpack.c.h.b16 %v438
    %v3284 = vunpack.c.l.b16 %v439
    %v3285 = vunpack.c.h.b16 %v439
    %v3286 = vunpack.c.l.b16 %v440
    %v3287 = vunpack.c.h.b16 %v440
    %v3288 = vunpack.c.l.b16 %v441
    %v3289 = vunpack.c.h.b16 %v441
    %v3290 = vunpack.c.l.b16 %v442
    %v3291 = vunpack.c.h.b16 %v442
    %v3292 = vunpack.c.l.b16 %v443
    %v3293 = vunpack.c.h.b16 %v443
    %v3294 = vunpack.c.l.b16 %v444
    %v3295 = vunpack.c.h.b16 %v444
    %v3296 = vunpack.c.l.b16 %v445
    %v3297 = vunpack.c.h.b16 %v445
    %v3298 = vunpack.c.l.b16 %v446
    %v3299 = vunpack.c.h.b16 %v446
    %v3300 = vunpack.c.l.b16 %v447
    %v3301 = vunpack.c.h.b16 %v447
    %v3302 = vunpack.c.l.b16 %v448
    %v3303 = vunpack.c.h.b16 %v448
    %v3304 = vunpack.c.l.b16 %v449
    %v3305 = vunpack.c.h.b16 %v449
    %v3306 = vunpack.c.l.b16 %v450
    %v3307 = vunpack.c.h.b16 %v450
    %v3308 = vunpack.c.l.b16 %v451
    %v3309 = vunpack.c.h.b16 %v451
    %v3310 = vunpack.c.l.b16 %v452
    %v3311 = vunpack.c.h.b16 %v452
    %v3312 = vunpack.c.l.b16 %v453
    %v3313 = vunpack.c.h.b16 %v453
    %v3314 = vunpack.c.l.b16 %v454
    %v3315 = vunpack.c.h.b16 %v454
    %v3316 = vunpack.c.l.b16 %v455
    %v3317 = vunpack.c.h.b16 %v455
    %v3318 = vunpack.c.l.b16 %v456
    %v3319 = vunpack.c.h.b16 %v456
    %v3320 = vunpack.c.l.b16 %v457
    %v3321 = vunpack.c.h.b16 %v457
    %v3322 = vunpack.c.l.b16 %v458
    %v3323 = vunpack.c.h.b16 %v458
    %v3324 = vunpack.c.l.b16 %v459
    %v3325 = vunpack.c.h.b16 %v459
    %v3326 = vunpack.c.l.b16 %v460
    %v3327 = vunpack.c.h.b16 %v460
    %v3328 = vunpack.c.l.b16 %v461
    %v3329 = vunpack.c.h.b16 %v461
    %v3330 = vunpack.c.l.b16 %v462
    %v3331 = vunpack.c.h.b16 %v462
    %v3332 = vunpack.c.l.b16 %v463
    %v3333 = vunpack.c.h.b16 %v463
    %v3334 = vunpack.c.l.b16 %v464
    %v3335 = vunpack.c.h.b16 %v464
    %v3336 = vunpack.c.l.b16 %v465
    %v3337 = vunpack.c.h.b16 %v465
    %v3338 = vunpack.c.l.b16 %v466
    %v3339 = vunpack.c.h.b16 %v466
    %v3340 = vunpack.c.l.b16 %v467
    %v3341 = vunpack.c.h.b16 %v467
    %v3342 = vunpack.c.l.b16 %v468
    %v3343 = vunpack.c.h.b16 %v468
    %v3344 = vunpack.c.l.b16 %v469
    %v3345 = vunpack.c.h.b16 %v469
    %v3346 = vunpack.c.l.b16 %v470
    %v3347 = vunpack.c.h.b16 %v470
    %v3348 = vunpack.c.l.b16 %v471
    %v3349 = vunpack.c.h.b16 %v471
    %v3350 = vunpack.c.l.b16 %v472
    %v3351 = vunpack.c.h.b16 %v472
    %v3352 = vunpack.c.l.b16 %v473
    %v3353 = vunpack.c.h.b16 %v473
    %v3354 = vunpack.c.l.b16 %v474
    %v3355 = vunpack.c.h.b16 %v474
    %v3356 = vunpack.c.l.b16 %v475
    %v3357 = vunpack.c.h.b16 %v475
    %v3358 = vunpack.c.l.b16 %v476
    %v3359 = vunpack.c.h.b16 %v476
    %v3360 = vunpack.c.l.b16 %v477
    %v3361 = vunpack.c.h.b16 %v477
    %v3362 = vunpack.c.l.b16 %v478
    %v3363 = vunpack.c.h.b16 %v478
    %v3364 = vunpack.c.l.b16 %v479
    %v3365 = vunpack.c.h.b16 %v479
    %v3366 = vunpack.c.l.b16 %v480
    %v3367 = vunpack.c.h.b16 %v480
    %v3368 = vunpack.c.l.b16 %v481
    %v3369 = vunpack.c.h.b16 %v481
    %v3370 = vunpack.c.l.b16 %v482
    %v3371 = vunpack.c.h.b16 %v482
    %v3372 = vunpack.c.l.b16 %v483
    %v3373 = vunpack.c.h.b16 %v483
    %v3374 = vunpack.c.l.b16 %v484
    %v3375 = vunpack.c.h.b16 %v484
    %v3376 = vunpack.c.l.b16 %v485
    %v3377 = vunpack.c.h.b16 %v485
    %v3378 = vunpack.c.l.b16 %v486
    %v3379 = vunpack.c.h.b16 %v486
    %v3380 = vunpack.c.l.b16 %v487
    %v3381 = vunpack.c.h.b16 %v487
    %v3382 = vunpack.c.l.b16 %v488
    %v3383 = vunpack.c.h.b16 %v488
    %v3384 = vunpack.c.l.b16 %v489
    %v3385 = vunpack.c.h.b16 %v489
    %v3386 = vunpack.c.l.b16 %v490
    %v3387 = vunpack.c.h.b16 %v490
    %v3388 = vunpack.c.l.b16 %v491
    %v3389 = vunpack.c.h.b16 %v491
    %v3390 = vunpack.c.l.b16 %v492
    %v3391 = vunpack.c.h.b16 %v492
    %v3392 = vunpack.c.l.b16 %v493
    %v3393 = vunpack.c.h.b16 %v493
    %v3394 = vunpack.c.l.b16 %v494
    %v3395 = vunpack.c.h.b16 %v494
    %v3396 = vunpack.c.l.b16 %v495
    %v3397 = vunpack.c.h.b16 %v495
    %v3398 = vunpack.c.l.b16 %v496
    %v3399 = vunpack.c.h.b16 %v496
    %v3400 = vunpack.c.l.b16 %v497
    %v3401 = vunpack.c.h.b16 %v497
    %v3402 = vunpack.c.l.b16 %v498
    %v3403 = vunpack.c.h.b16 %v498
    %v3404 = vunpack.c.l.b16 %v499
    %v3405 = vunpack.c.h.b16 %v499
    %v3406 = vunpack.c.l.b16 %v500
    %v3407 = vunpack.c.h.b16 %v500
    %v3408 = vunpack.c.l.b16 %v501
    %v3409 = vunpack.c.h.b16 %v501
    %v3410 = vunpack.c.l.b16 %v502
    %v3411 = vunpack.c.h.b16 %v502
    %v3412 = vunpack.c.l.b16 %v503
    %v3413 = vunpack.c.h.b16 %v503
    %v3414 = vunpack.c.l.b16 %v504
    %v3415 = vunpack.c.h.b16 %v504
    %v3416 = vunpack.c.l.b16 %v505
    %v3417 = vunpack.c.h.b16 %v505
    %v3418 = vunpack.c.l.b16 %v506
    %v3419 = vunpack.c.h.b16 %v506
    %v3420 = vunpack.c.l.b16 %v507
    %v3421 = vunpack.c.h.b16 %v507
    %v3422 = vunpack.c.l.b16 %v508
    %v3423 = vunpack.c.h.b16 %v508
    %v3424 = vunpack.c.l.b16 %v509
    %v3425 = vunpack.c.h.b16 %v509
    %v3426 = vunpack.c.l.b16 %v510
    %v3427 = vunpack.c.h.b16 %v510
    %v3428 = vunpack.c.l.b16 %v511
    %v3429 = vunpack.c.h.b16 %v511
    %v3430 = vunpack.c.l.b16 %v512
    %v3431 = vunpack.c.h.b16 %v512
    %v3432 = vunpack.c.l.b16 %v513
    %v3433 = vunpack.c.h.b16 %v513
    %v3434 = vunpack.c.l.b16 %v514
    %v3435 = vunpack.c.h.b16 %v514
    %v3436 = vunpack.c.l.b16 %v515
    %v3437 = vunpack.c.h.b16 %v515
    %v3438 = vunpack.c.l.b16 %v516
    %v3439 = vunpack.c.h.b16 %v516
    %v3440 = vunpack.c.l.b16 %v517
    %v3441 = vunpack.c.h.b16 %v517
    %v3442 = vunpack.c.l.b16 %v518
    %v3443 = vunpack.c.h.b16 %v518
    %v3444 = vunpack.c.l.b16 %v519
    %v3445 = vunpack.c.h.b16 %v519
    %v3446 = vunpack.c.l.b16 %v520
    %v3447 = vunpack.c.h.b16 %v520
    %v3448 = vunpack.c.l.b16 %v521
    %v3449 = vunpack.c.h.b16 %v521
    %v3450 = vunpack.c.l.b16 %v522
    %v3451 = vunpack.c.h.b16 %v522
    %v3452 = vunpack.c.l.b16 %v523
    %v3453 = vunpack.c.h.b16 %v523
    %v3454 = vunpack.c.l.b16 %v524
    %v3455 = vunpack.c.h.b16 %v524
    %v3456 = vunpack.c.l.b16 %v525
    %v3457 = vunpack.c.h.b16 %v525
    %v3458 = vunpack.c.l.b16 %v526
    %v3459 = vunpack.c.h.b16 %v526
    %v3460 = vunpack.c.l.b16 %v527
    %v3461 = vunpack.c.h.b16 %v527
    %v3462 = vunpack.c.l.b16 %v528
    %v3463 = vunpack.c.h.b16 %v528
    %v3464 = vunpack.c.l.b16 %v529
    %v3465 = vunpack.c.h.b16 %v529
    %v3466 = vunpack.c.l.b16 %v530
    %v3467 = vunpack.c.h.b16 %v530
    %v3468 = vunpack.c.l.b16 %v531
    %v3469 = vunpack.c.h.b16 %v531
    %v3470 = vunpack.c.l.b16 %v532
    %v3471 = vunpack.c.h.b16 %v532
    %v3472 = vunpack.c.l.b16 %v533
    %v3473 = vunpack.c.h.b16 %v533
    %v3474 = vunpack.c.l.b16 %v534
    %v3475 = vunpack.c.h.b16 %v534
    %v3476 = vunpack.c.l.b16 %v535
    %v3477 = vunpack.c.h.b16 %v535
    %v3478 = vunpack.c.l.b16 %v536
    %v3479 = vunpack.c.h.b16 %v536
    %v3480 = vunpack.c.l.b16 %v537
    %v3481 = vunpack.c.h.b16 %v537
    %v3482 = vunpack.c.l.b16 %v538
    %v3483 = vunpack.c.h.b16 %v538
    %v3484 = vunpack.c.l.b16 %v539
    %v3485 = vunpack.c.h.b16 %v539
    %v3486 = vunpack.c.l.b16 %v540
    %v3487 = vunpack.c.h.b16 %v540
    %v3488 = vunpack.c.l.b16 %v541
    %v3489 = vunpack.c.h.b16 %v541
    %v3490 = vunpack.c.l.b16 %v542
    %v3491 = vunpack.c.h.b16 %v542
    %v3492 = vunpack.c.l.b16 %v543
    %v3493 = vunpack.c.h.b16 %v543
    %v3494 = vunpack.c.l.b16 %v544
    %v3495 = vunpack.c.h.b16 %v544
    %v3496 = vunpack.c.l.b16 %v545
    %v3497 = vunpack.c.h.b16 %v545
    %v3498 = vunpack.c.l.b16 %v546
    %v3499 = vunpack.c.h.b16 %v546
    %v3500 = vunpack.c.l.b16 %v547
    %v3501 = vunpack.c.h.b16 %v547
    %v3502 = vunpack.c.l.b16 %v548
    %v3503 = vunpack.c.h.b16 %v548
    %v3504 = vunpack.c.l.b16 %v549
    %v3505 = vunpack.c.h.b16 %v549
    %v3506 = vunpack.c.l.b16 %v550
    %v3507 = vunpack.c.h.b16 %v550
    %v3508 = vunpack.c.l.b16 %v551
    %v3509 = vunpack.c.h.b16 %v551
    %v3510 = vunpack.c.l.b16 %v552
    %v3511 = vunpack.c.h.b16 %v552
    %v3512 = vunpack.c.l.b16 %v553
    %v3513 = vunpack.c.h.b16 %v553
    %v3514 = vunpack.c.l.b16 %v554
    %v3515 = vunpack.c.h.b16 %v554
    %v3516 = vunpack.c.l.b16 %v555
    %v3517 = vunpack.c.h.b16 %v555
    %v3518 = vunpack.c.l.b16 %v556
    %v3519 = vunpack.c.h.b16 %v556
    %v3520 = vunpack.c.l.b16 %v557
    %v3521 = vunpack.c.h.b16 %v557
    %v3522 = vunpack.c.l.b16 %v558
    %v3523 = vunpack.c.h.b16 %v558
    %v3524 = vunpack.c.l.b16 %v559
    %v3525 = vunpack.c.h.b16 %v559
    %v3526 = vunpack.c.l.b16 %v560
    %v3527 = vunpack.c.h.b16 %v560
    %v3528 = vunpack.c.l.b16 %v561
    %v3529 = vunpack.c.h.b16 %v561
    %v3530 = vunpack.c.l.b16 %v562
    %v3531 = vunpack.c.h.b16 %v562
    %v3532 = vunpack.c.l.b16 %v563
    %v3533 = vunpack.c.h.b16 %v563
    %v3534 = vunpack.c.l.b16 %v564
    %v3535 = vunpack.c.h.b16 %v564
    %v3536 = vunpack.c.l.b16 %v565
    %v3537 = vunpack.c.h.b16 %v565
    %v3538 = vunpack.c.l.b16 %v566
    %v3539 = vunpack.c.h.b16 %v566
    %v3540 = vunpack.c.l.b16 %v567
    %v3541 = vunpack.c.h.b16 %v567
    %v3542 = vunpack.c.l.b16 %v568
    %v3543 = vunpack.c.h.b16 %v568
    %v3544 = vunpack.c.l.b16 %v569
    %v3545 = vunpack.c.h.b16 %v569
    %v3546 = vunpack.c.l.b16 %v570
    %v3547 = vunpack.c.h.b16 %v570
    %v3548 = vunpack.c.l.b16 %v571
    %v3549 = vunpack.c.h.b16 %v571
    %v3550 = vunpack.c.l.b16 %v572
    %v3551 = vunpack.c.h.b16 %v572
    %v3552 = vunpack.c.l.b16 %v573
    %v3553 = vunpack.c.h.b16 %v573
    %v3554 = vunpack.c.l.b16 %v574
    %v3555 = vunpack.c.h.b16 %v574
    %v3556 = vunpack.c.l.b16 %v575
    %v3557 = vunpack.c.h.b16 %v575
    %v3558 = vunpack.c.l.b16 %v576
    %v3559 = vunpack.c.h.b16 %v576
    %v3560 = vunpack.c.l.b16 %v577
    %v3561 = vunpack.c.h.b16 %v577
    %v3562 = vunpack.c.l.b16 %v578
    %v3563 = vunpack.c.h.b16 %v578
    %v3564 = vunpack.c.l.b16 %v579
    %v3565 = vunpack.c.h.b16 %v579
    %v3566 = vunpack.c.l.b16 %v580
    %v3567 = vunpack.c.h.b16 %v580
    %v3568 = vunpack.c.l.b16 %v581
    %v3569 = vunpack.c.h.b16 %v581
    %v3570 = vunpack.c.l.b16 %v582
    %v3571 = vunpack.c.h.b16 %v582
    %v3572 = vunpack.c.l.b16 %v583
    %v3573 = vunpack.c.h.b16 %v583
    %v3574 = vunpack.c.l.b16 %v584
    %v3575 = vunpack.c.h.b16 %v584
    %v3576 = vunpack.c.l.b16 %v585
    %v3577 = vunpack.c.h.b16 %v585
    %v3578 = vunpack.c.l.b16 %v586
    %v3579 = vunpack.c.h.b16 %v586
    %v3580 = vunpack.c.l.b16 %v587
    %v3581 = vunpack.c.h.b16 %v587
    %v3582 = vunpack.c.l.b16 %v588
    %v3583 = vunpack.c.h.b16 %v588
    %v3584 = vunpack.c.l.b16 %v589
    %v3585 = vunpack.c.h.b16 %v589
    %v3586 = vunpack.c.l.b16 %v590
    %v3587 = vunpack.c.h.b16 %v590
    %v3588 = vunpack.c.l.b16 %v591
    %v3589 = vunpack.c.h.b16 %v591
    %v3590 = vunpack.c.l.b16 %v592
    %v3591 = vunpack.c.h.b16 %v592
    %v3592 = vunpack.c.l.b16 %v593
    %v3593 = vunpack.c.h.b16 %v593
    %v3594 = vunpack.c.l.b16 %v594
    %v3595 = vunpack.c.h.b16 %v594
    %v3596 = vunpack.c.l.b16 %v595
    %v3597 = vunpack.c.h.b16 %v595
    %v3598 = vunpack.c.l.b16 %v596
    %v3599 = vunpack.c.h.b16 %v596
    %v3600 = vunpack.c.l.b16 %v597
    %v3601 = vunpack.c.h.b16 %v597
    %v3602 = vunpack.c.l.b16 %v598
    %v3603 = vunpack.c.h.b16 %v598
    %v3604 = vunpack.c.l.b16 %v599
    %v3605 = vunpack.c.h.b16 %v599
    %v3606 = vunpack.c.l.b16 %v600
    %v3607 = vunpack.c.h.b16 %v600
    %v3608 = vunpack.c.l.b16 %v601
    %v3609 = vunpack.c.h.b16 %v601
    %v3610 = vunpack.c.l.b16 %v602
    %v3611 = vunpack.c.h.b16 %v602
    %v3612 = vunpack.c.l.b16 %v603
    %v3613 = vunpack.c.h.b16 %v603
    %v3614 = vunpack.c.l.b16 %v604
    %v3615 = vunpack.c.h.b16 %v604
    %v3616 = vunpack.c.l.b16 %v605
    %v3617 = vunpack.c.h.b16 %v605
    %v3618 = vunpack.c.l.b16 %v606
    %v3619 = vunpack.c.h.b16 %v606
    %v3620 = vunpack.c.l.b16 %v607
    %v3621 = vunpack.c.h.b16 %v607
    %v3622 = vunpack.c.l.b16 %v608
    %v3623 = vunpack.c.h.b16 %v608
    %v3624 = vunpack.c.l.b16 %v609
    %v3625 = vunpack.c.h.b16 %v609
    %v3626 = vunpack.c.l.b16 %v610
    %v3627 = vunpack.c.h.b16 %v610
    %v3628 = vunpack.c.l.b16 %v611
    %v3629 = vunpack.c.h.b16 %v611
    %v3630 = vunpack.c.l.b16 %v612
    %v3631 = vunpack.c.h.b16 %v612
    %v3632 = vunpack.c.l.b16 %v613
    %v3633 = vunpack.c.h.b16 %v613
    %v3634 = vunpack.c.l.b16 %v614
    %v3635 = vunpack.c.h.b16 %v614
    %v3636 = vunpack.c.l.b16 %v615
    %v3637 = vunpack.c.h.b16 %v615
    %v3638 = vunpack.c.l.b16 %v616
    %v3639 = vunpack.c.h.b16 %v616
    %v3640 = vunpack.c.l.b16 %v617
    %v3641 = vunpack.c.h.b16 %v617
    %v3642 = vunpack.c.l.b16 %v618
    %v3643 = vunpack.c.h.b16 %v618
    %v3644 = vunpack.c.l.b16 %v619
    %v3645 = vunpack.c.h.b16 %v619
    %v3646 = vunpack.c.l.b16 %v620
    %v3647 = vunpack.c.h.b16 %v620
    %v3648 = vunpack.c.l.b16 %v621
    %v3649 = vunpack.c.h.b16 %v621
    %v3650 = vunpack.c.l.b16 %v622
    %v3651 = vunpack.c.h.b16 %v622
    %v3652 = vunpack.c.l.b16 %v623
    %v3653 = vunpack.c.h.b16 %v623
    %v3654 = vunpack.c.l.b16 %v624
    %v3655 = vunpack.c.h.b16 %v624
    %v3656 = vunpack.c.l.b16 %v625
    %v3657 = vunpack.c.h.b16 %v625
    %v3658 = vunpack.c.l.b16 %v626
    %v3659 = vunpack.c.h.b16 %v626
    %v3660 = vunpack.c.l.b16 %v627
    %v3661 = vunpack.c.h.b16 %v627
    %v3662 = vunpack.c.l.b16 %v628
    %v3663 = vunpack.c.h.b16 %v628
    %v3664 = vunpack.c.l.b16 %v629
    %v3665 = vunpack.c.h.b16 %v629
    %v3666 = vunpack.c.l.b16 %v630
    %v3667 = vunpack.c.h.b16 %v630
    %v3668 = vunpack.c.l.b16 %v631
    %v3669 = vunpack.c.h.b16 %v631
    %v3670 = vunpack.c.l.b16 %v632
    %v3671 = vunpack.c.h.b16 %v632
    %v3672 = vunpack.c.l.b16 %v633
    %v3673 = vunpack.c.h.b16 %v633
    %v3674 = vunpack.c.l.b16 %v634
    %v3675 = vunpack.c.h.b16 %v634
    %v3676 = vunpack.c.l.b16 %v635
    %v3677 = vunpack.c.h.b16 %v635
    %v3678 = vunpack.c.l.b16 %v636
    %v3679 = vunpack.c.h.b16 %v636
    %v3680 = vunpack.c.l.b16 %v637
    %v3681 = vunpack.c.h.b16 %v637
    %v3682 = vunpack.c.l.b16 %v638
    %v3683 = vunpack.c.h.b16 %v638
    %v3684 = vunpack.c.l.b16 %v639
    %v3685 = vunpack.c.h.b16 %v639
    %v3686 = vunpack.c.l.b16 %v640
    %v3687 = vunpack.c.h.b16 %v640
    %v3688 = vunpack.c.l.b16 %v641
    %v3689 = vunpack.c.h.b16 %v641
    %v3690 = vunpack.c.l.b16 %v642
    %v3691 = vunpack.c.h.b16 %v642
    %v3692 = vunpack.c.l.b16 %v643
    %v3693 = vunpack.c.h.b16 %v643
    %v3694 = vunpack.c.l.b16 %v644
    %v3695 = vunpack.c.h.b16 %v644
    %v3696 = vunpack.c.l.b16 %v645
    %v3697 = vunpack.c.h.b16 %v645
    %v3698 = vunpack.c.l.b16 %v646
    %v3699 = vunpack.c.h.b16 %v646
    %v3700 = vunpack.c.l.b16 %v647
    %v3701 = vunpack.c.h.b16 %v647
    %v3702 = vunpack.c.l.b16 %v648
    %v3703 = vunpack.c.h.b16 %v648
    %v3704 = vunpack.c.l.b16 %v649
    %v3705 = vunpack.c.h.b16 %v649
    %v3706 = vunpack.c.l.b16 %v650
    %v3707 = vunpack.c.h.b16 %v650
    %v3708 = vunpack.c.l.b16 %v651
    %v3709 = vunpack.c.h.b16 %v651
    %v3710 = vunpack.c.l.b16 %v652
    %v3711 = vunpack.c.h.b16 %v652
    %v3712 = vunpack.c.l.b16 %v653
    %v3713 = vunpack.c.h.b16 %v653
    %v3714 = vunpack.c.l.b16 %v654
    %v3715 = vunpack.c.h.b16 %v654
    %v3716 = vunpack.c.l.b16 %v655
    %v3717 = vunpack.c.h.b16 %v655
    %v3718 = vunpack.c.l.b16 %v656
    %v3719 = vunpack.c.h.b16 %v656
    %v3720 = vunpack.c.l.b16 %v657
    %v3721 = vunpack.c.h.b16 %v657
    %v3722 = vunpack.c.l.b16 %v658
    %v3723 = vunpack.c.h.b16 %v658
    %v3724 = vunpack.c.l.b16 %v659
    %v3725 = vunpack.c.h.b16 %v659
    %v3726 = vunpack.c.l.b16 %v660
    %v3727 = vunpack.c.h.b16 %v660
    %v3728 = vunpack.c.l.b16 %v661
    %v3729 = vunpack.c.h.b16 %v661
    %v3730 = vunpack.c.l.b16 %v662
    %v3731 = vunpack.c.h.b16 %v662
    %v3732 = vunpack.c.l.b16 %v663
    %v3733 = vunpack.c.h.b16 %v663
    %v3734 = vunpack.c.l.b16 %v664
    %v3735 = vunpack.c.h.b16 %v664
    %v3736 = vunpack.c.l.b16 %v665
    %v3737 = vunpack.c.h.b16 %v665
    %v3738 = vunpack.c.l.b16 %v666
    %v3739 = vunpack.c.h.b16 %v666
    %v3740 = vunpack.c.l.b16 %v667
    %v3741 = vunpack.c.h.b16 %v667
    %v3742 = vunpack.c.l.b16 %v668
    %v3743 = vunpack.c.h.b16 %v668
    %v3744 = vunpack.c.l.b16 %v669
    %v3745 = vunpack.c.h.b16 %v669
    %v3746 = vunpack.c.l.b16 %v670
    %v3747 = vunpack.c.h.b16 %v670
    %v3748 = vunpack.c.l.b16 %v671
    %v3749 = vunpack.c.h.b16 %v671
    %v3750 = vunpack.c.l.b16 %v672
    %v3751 = vunpack.c.h.b16 %v672
    %v3752 = vunpack.c.l.b16 %v673
    %v3753 = vunpack.c.h.b16 %v673
    %v3754 = vunpack.c.l.b16 %v674
    %v3755 = vunpack.c.h.b16 %v674
    %v3756 = vunpack.c.l.b16 %v675
    %v3757 = vunpack.c.h.b16 %v675
    %v3758 = vunpack.c.l.b16 %v676
    %v3759 = vunpack.c.h.b16 %v676
    %v3760 = vunpack.c.l.b16 %v677
    %v3761 = vunpack.c.h.b16 %v677
    %v3762 = vunpack.c.l.b16 %v678
    %v3763 = vunpack.c.h.b16 %v678
    %v3764 = vunpack.c.l.b16 %v679
    %v3765 = vunpack.c.h.b16 %v679
    %v3766 = vunpack.c.l.b16 %v680
    %v3767 = vunpack.c.h.b16 %v680
    %v3768 = vunpack.c.l.b16 %v681
    %v3769 = vunpack.c.h.b16 %v681
    %v3770 = vunpack.c.l.b16 %v682
    %v3771 = vunpack.c.h.b16 %v682
    %v3772 = vunpack.c.l.b16 %v683
    %v3773 = vunpack.c.h.b16 %v683
    %v3774 = vunpack.c.l.b16 %v684
    %v3775 = vunpack.c.h.b16 %v684
    %v3776 = vunpack.c.l.b16 %v685
    %v3777 = vunpack.c.h.b16 %v685
    %v3778 = vunpack.c.l.b16 %v686
    %v3779 = vunpack.c.h.b16 %v686
    %v3780 = vunpack.c.l.b16 %v687
    %v3781 = vunpack.c.h.b16 %v687
    %v3782 = vunpack.c.l.b16 %v688
    %v3783 = vunpack.c.h.b16 %v688
    %v3784 = vunpack.c.l.b16 %v689
    %v3785 = vunpack.c.h.b16 %v689
    %v3786 = vunpack.c.l.b16 %v690
    %v3787 = vunpack.c.h.b16 %v690
    %v3788 = vunpack.c.l.b16 %v691
    %v3789 = vunpack.c.h.b16 %v691
    %v3790 = vunpack.c.l.b16 %v692
    %v3791 = vunpack.c.h.b16 %v692
    %v3792 = vunpack.c.l.b16 %v693
    %v3793 = vunpack.c.h.b16 %v693
    %v3794 = vunpack.c.l.b16 %v694
    %v3795 = vunpack.c.h.b16 %v694
    %v3796 = vunpack.c.l.b16 %v695
    %v3797 = vunpack.c.h.b16 %v695
    %v3798 = vunpack.c.l.b16 %v696
    %v3799 = vunpack.c.h.b16 %v696
    %v3800 = vunpack.c.l.b16 %v697
    %v3801 = vunpack.c.h.b16 %v697
    %v3802 = vunpack.c.l.b16 %v698
    %v3803 = vunpack.c.h.b16 %v698
    %v3804 = vunpack.c.l.b16 %v699
    %v3805 = vunpack.c.h.b16 %v699
    %v3806 = vunpack.c.l.b16 %v700
    %v3807 = vunpack.c.h.b16 %v700
    %v3808 = vunpack.c.l.b16 %v701
    %v3809 = vunpack.c.h.b16 %v701
    %v3810 = vunpack.c.l.b16 %v702
    %v3811 = vunpack.c.h.b16 %v702
    %v3812 = vunpack.c.l.b16 %v703
    %v3813 = vunpack.c.h.b16 %v703
    %v3814 = vunpack.c.l.b16 %v704
    %v3815 = vunpack.c.h.b16 %v704
    %v3816 = vunpack.c.l.b16 %v705
    %v3817 = vunpack.c.h.b16 %v705
    %v3818 = vunpack.c.l.b16 %v706
    %v3819 = vunpack.c.h.b16 %v706
    %v3820 = vunpack.c.l.b16 %v707
    %v3821 = vunpack.c.h.b16 %v707
    %v3822 = vunpack.c.l.b16 %v708
    %v3823 = vunpack.c.h.b16 %v708
    %v3824 = vunpack.c.l.b16 %v709
    %v3825 = vunpack.c.h.b16 %v709
    %v3826 = vunpack.c.l.b16 %v710
    %v3827 = vunpack.c.h.b16 %v710
    %v3828 = vunpack.c.l.b16 %v711
    %v3829 = vunpack.c.h.b16 %v711
    %v3830 = vunpack.c.l.b16 %v712
    %v3831 = vunpack.c.h.b16 %v712
    %v3832 = vunpack.c.l.b16 %v713
    %v3833 = vunpack.c.h.b16 %v713
    %v3834 = vunpack.c.l.b16 %v714
    %v3835 = vunpack.c.h.b16 %v714
    %v3836 = vunpack.c.l.b16 %v715
    %v3837 = vunpack.c.h.b16 %v715
    %v3838 = vunpack.c.l.b16 %v716
    %v3839 = vunpack.c.h.b16 %v716
    %v3840 = vunpack.c.l.b16 %v717
    %v3841 = vunpack.c.h.b16 %v717
    %v3842 = vunpack.c.l.b16 %v718
    %v3843 = vunpack.c.h.b16 %v718
    %v3844 = vunpack.c.l.b16 %v719
    %v3845 = vunpack.c.h.b16 %v719
    %v3846 = vunpack.c.l.b16 %v720
    %v3847 = vunpack.c.h.b16 %v720
    %v3848 = vunpack.c.l.b16 %v721
    %v3849 = vunpack.c.h.b16 %v721
    %v3850 = vunpack.c.l.b16 %v722
    %v3851 = vunpack.c.h.b16 %v722
    %v3852 = vunpack.c.l.b16 %v723
    %v3853 = vunpack.c.h.b16 %v723
    %v3854 = vunpack.c.l.b16 %v724
    %v3855 = vunpack.c.h.b16 %v724
    %v3856 = vunpack.c.l.b16 %v725
    %v3857 = vunpack.c.h.b16 %v725
    %v3858 = vunpack.c.l.b16 %v726
    %v3859 = vunpack.c.h.b16 %v726
    %v3860 = vunpack.c.l.b16 %v727
    %v3861 = vunpack.c.h.b16 %v727
    %v3862 = vunpack.c.l.b16 %v728
    %v3863 = vunpack.c.h.b16 %v728
    %v3864 = vunpack.c.l.b16 %v729
    %v3865 = vunpack.c.h.b16 %v729
    %v3866 = vunpack.c.l.b16 %v730
    %v3867 = vunpack.c.h.b16 %v730
    %v3868 = vunpack.c.l.b16 %v731
    %v3869 = vunpack.c.h.b16 %v731
    %v3870 = vunpack.c.l.b16 %v732
    %v3871 = vunpack.c.h.b16 %v732
    %v3872 = vunpack.c.l.b16 %v733
    %v3873 = vunpack.c.h.b16 %v733
    %v3874 = vunpack.c.l.b16 %v734
    %v3875 = vunpack.c.h.b16 %v734
    %v3876 = vunpack.c.l.b16 %v735
    %v3877 = vunpack.c.h.b16 %v735
    %v3878 = vunpack.c.l.b16 %v736
    %v3879 = vunpack.c.h.b16 %v736
    %v3880 = vunpack.c.l.b16 %v737
    %v3881 = vunpack.c.h.b16 %v737
    %v3882 = vunpack.c.l.b16 %v738
    %v3883 = vunpack.c.h.b16 %v738
    %v3884 = vunpack.c.l.b16 %v739
    %v3885 = vunpack.c.h.b16 %v739
    %v3886 = vunpack.c.l.b16 %v740
    %v3887 = vunpack.c.h.b16 %v740
    %v3888 = vunpack.c.l.b16 %v741
    %v3889 = vunpack.c.h.b16 %v741
    %v3890 = vunpack.c.l.b16 %v742
    %v3891 = vunpack.c.h.b16 %v742
    %v3892 = vunpack.c.l.b16 %v743
    %v3893 = vunpack.c.h.b16 %v743
    %v3894 = vunpack.c.l.b16 %v744
    %v3895 = vunpack.c.h.b16 %v744
    %v3896 = vunpack.c.l.b16 %v745
    %v3897 = vunpack.c.h.b16 %v745
    %v3898 = vunpack.c.l.b16 %v746
    %v3899 = vunpack.c.h.b16 %v746
    %v3900 = vunpack.c.l.b16 %v747
    %v3901 = vunpack.c.h.b16 %v747
    %v3902 = vunpack.c.l.b16 %v748
    %v3903 = vunpack.c.h.b16 %v748
    %v3904 = vunpack.c.l.b16 %v749
    %v3905 = vunpack.c.h.b16 %v749
    %v3906 = vunpack.c.l.b16 %v750
    %v3907 = vunpack.c.h.b16 %v750
    %v3908 = vunpack.c.l.b16 %v751
    %v3909 = vunpack.c.h.b16 %v751
    %v3910 = vunpack.c.l.b16 %v752
    %v3911 = vunpack.c.h.b16 %v752
    %v3912 = vunpack.c.l.b16 %v753
    %v3913 = vunpack.c.h.b16 %v753
    %v3914 = vunpack.c.l.b16 %v754
    %v3915 = vunpack.c.h.b16 %v754
    %v3916 = vunpack.c.l.b16 %v755
    %v3917 = vunpack.c.h.b16 %v755
    %v3918 = vunpack.c.l.b16 %v756
    %v3919 = vunpack.c.h.b16 %v756
    %v3920 = vunpack.c.l.b16 %v757
    %v3921 = vunpack.c.h.b16 %v757
    %v3922 = vunpack.c.l.b16 %v758
    %v3923 = vunpack.c.h.b16 %v758
    %v3924 = vunpack.c.l.b16 %v759
    %v3925 = vunpack.c.h.b16 %v759
    %v3926 = vunpack.c.l.b16 %v760
    %v3927 = vunpack.c.h.b16 %v760
    %v3928 = vunpack.c.l.b16 %v761
    %v3929 = vunpack.c.h.b16 %v761
    %v3930 = vunpack.c.l.b16 %v762
    %v3931 = vunpack.c.h.b16 %v762
    %v3932 = vunpack.c.l.b16 %v763
    %v3933 = vunpack.c.h.b16 %v763
    %v3934 = vunpack.c.l.b16 %v764
    %v3935 = vunpack.c.h.b16 %v764
    %v3936 = vunpack.c.l.b16 %v765
    %v3937 = vunpack.c.h.b16 %v765
    %v3938 = vunpack.c.l.b16 %v766
    %v3939 = vunpack.c.h.b16 %v766
    %v3940 = vunpack.c.l.b16 %v767
    %v3941 = vunpack.c.h.b16 %v767
    %v3942 = vunpack.c.l.b16 %v768
    %v3943 = vunpack.c.h.b16 %v768
    %v3944 = vunpack.c.l.b16 %v769
    %v3945 = vunpack.c.h.b16 %v769
    %v3946 = vunpack.c.l.b16 %v770
    %v3947 = vunpack.c.h.b16 %v770
    %v3948 = vunpack.c.l.b16 %v771
    %v3949 = vunpack.c.h.b16 %v771
    %v3950 = vunpack.c.l.b16 %v772
    %v3951 = vunpack.c.h.b16 %v772
    %v3952 = vunpack.c.l.b16 %v773
    %v3953 = vunpack.c.h.b16 %v773
    %v3954 = vunpack.c.l.b16 %v774
    %v3955 = vunpack.c.h.b16 %v774
    %v3956 = vunpack.c.l.b16 %v775
    %v3957 = vunpack.c.h.b16 %v775
    %v3958 = vunpack.c.l.b16 %v776
    %v3959 = vunpack.c.h.b16 %v776
    %v3960 = vunpack.c.l.b16 %v777
    %v3961 = vunpack.c.h.b16 %v777
    %v3962 = vunpack.c.l.b16 %v778
    %v3963 = vunpack.c.h.b16 %v778
    %v3964 = vunpack.c.l.b16 %v779
    %v3965 = vunpack.c.h.b16 %v779
    %v3966 = vunpack.c.l.b16 %v780
    %v3967 = vunpack.c.h.b16 %v780
    %v3968 = vunpack.c.l.b16 %v781
    %v3969 = vunpack.c.h.b16 %v781
    %v3970 = vunpack.c.l.b16 %v782
    %v3971 = vunpack.c.h.b16 %v782
    %v3972 = vunpack.c.l.b16 %v783
    %v3973 = vunpack.c.h.b16 %v783
    %v3974 = vunpack.c.l.b16 %v784
    %v3975 = vunpack.c.h.b16 %v784
    %v3976 = vunpack.c.l.b16 %v785
    %v3977 = vunpack.c.h.b16 %v785
    %v3978 = vunpack.c.l.b16 %v786
    %v3979 = vunpack.c.h.b16 %v786
    %v3980 = vunpack.c.l.b16 %v787
    %v3981 = vunpack.c.h.b16 %v787
    %v3982 = vunpack.c.l.b16 %v788
    %v3983 = vunpack.c.h.b16 %v788
    %v3984 = vunpack.c.l.b16 %v789
    %v3985 = vunpack.c.h.b16 %v789
    %v3986 = vunpack.c.l.b16 %v790
    %v3987 = vunpack.c.h.b16 %v790
    %v3988 = vunpack.c.l.b16 %v791
    %v3989 = vunpack.c.h.b16 %v791
    %v3990 = vunpack.c.l.b16 %v792
    %v3991 = vunpack.c.h.b16 %v792
    %v3992 = vunpack.c.l.b16 %v793
    %v3993 = vunpack.c.h.b16 %v793
    %v3994 = vunpack.c.l.b16 %v794
    %v3995 = vunpack.c.h.b16 %v794
    %v3996 = vunpack.c.l.b16 %v795
    %v3997 = vunpack.c.h.b16 %v795
    %v3998 = vunpack.c.l.b16 %v796
    %v3999 = vunpack.c.h.b16 %v796
    %v4000 = vunpack.c.l.b16 %v797
    %v4001 = vunpack.c.h.b16 %v797
    %v4002 = vunpack.c.l.b16 %v798
    %v4003 = vunpack.c.h.b16 %v798
    %v4004 = vunpack.c.l.b16 %v799
    %v4005 = vunpack.c.h.b16 %v799
    %v4006 = vunpack.c.l.b16 %v800
    %v4007 = vunpack.c.h.b16 %v800
    %v4008 = vunpack.c.l.b16 %v801
    %v4009 = vunpack.c.h.b16 %v801
    %v4010 = vunpack.c.l.b16 %v802
    %v4011 = vunpack.c.h.b16 %v802
    %v4012 = vunpack.c.l.b16 %v803
    %v4013 = vunpack.c.h.b16 %v803
    %v4014 = vunpack.c.l.b16 %v804
    %v4015 = vunpack.c.h.b16 %v804
    %v4016 = vunpack.c.l.b16 %v805
    %v4017 = vunpack.c.h.b16 %v805
    %v4018 = vunpack.c.l.b16 %v806
    %v4019 = vunpack.c.h.b16 %v806
    %v4020 = vunpack.c.l.b16 %v807
    %v4021 = vunpack.c.h.b16 %v807
    %v4022 = vunpack.c.l.b16 %v808
    %v4023 = vunpack.c.h.b16 %v808
    %v4024 = vunpack.c.l.b16 %v809
    %v4025 = vunpack.c.h.b16 %v809
    %v4026 = vunpack.c.l.b16 %v810
    %v4027 = vunpack.c.h.b16 %v810
    %v4028 = vunpack.c.l.b16 %v811
    %v4029 = vunpack.c.h.b16 %v811
    %v4030 = vunpack.c.l.b16 %v812
    %v4031 = vunpack.c.h.b16 %v812
    %v4032 = vunpack.c.l.b16 %v813
    %v4033 = vunpack.c.h.b16 %v813
    %v4034 = vunpack.c.l.b16 %v814
    %v4035 = vunpack.c.h.b16 %v814
    %v4036 = vunpack.c.l.b16 %v815
    %v4037 = vunpack.c.h.b16 %v815
    %v4038 = vunpack.c.l.b16 %v816
    %v4039 = vunpack.c.h.b16 %v816
    %v4040 = vunpack.c.l.b16 %v817
    %v4041 = vunpack.c.h.b16 %v817
    %v4042 = vunpack.c.l.b16 %v818
    %v4043 = vunpack.c.h.b16 %v818
    %v4044 = vunpack.c.l.b16 %v819
    %v4045 = vunpack.c.h.b16 %v819
    %v4046 = vunpack.c.l.b16 %v820
    %v4047 = vunpack.c.h.b16 %v820
    %v4048 = vunpack.c.l.b16 %v821
    %v4049 = vunpack.c.h.b16 %v821
    %v4050 = vunpack.c.l.b16 %v822
    %v4051 = vunpack.c.h.b16 %v822
    %v4052 = vunpack.c.l.b16 %v823
    %v4053 = vunpack.c.h.b16 %v823
    %v4054 = vunpack.c.l.b16 %v824
    %v4055 = vunpack.c.h.b16 %v824
    %v4056 = vunpack.c.l.b16 %v825
    %v4057 = vunpack.c.h.b16 %v825
    %v4058 = vunpack.c.l.b16 %v826
    %v4059 = vunpack.c.h.b16 %v826
    %v4060 = vunpack.c.l.b16 %v827
    %v4061 = vunpack.c.h.b16 %v827
    %v4062 = vunpack.c.l.b16 %v828
    %v4063 = vunpack.c.h.b16 %v828
    %v4064 = vunpack.c.l.b16 %v829
    %v4065 = vunpack.c.h.b16 %v829
    %v4066 = vunpack.c.l.b16 %v830
    %v4067 = vunpack.c.h.b16 %v830
    %v4068 = vunpack.c.l.b16 %v831
    %v4069 = vunpack.c.h.b16 %v831
    %v4070 = vunpack.c.l.b16 %v832
    %v4071 = vunpack.c.h.b16 %v832
    %v4072 = vunpack.c.l.b16 %v833
    %v4073 = vunpack.c.h.b16 %v833
    %v4074 = vunpack.c.l.b16 %v834
    %v4075 = vunpack.c.h.b16 %v834
    %v4076 = vunpack.c.l.b16 %v835
    %v4077 = vunpack.c.h.b16 %v835
    %v4078 = vunpack.c.l.b16 %v836
    %v4079 = vunpack.c.h.b16 %v836
    %v4080 = vunpack.c.l.b16 %v837
    %v4081 = vunpack.c.h.b16 %v837
    %v4082 = vunpack.c.l.b16 %v838
    %v4083 = vunpack.c.h.b16 %v838
    %v4084 = vunpack.c.l.b16 %v839
    %v4085 = vunpack.c.h.b16 %v839
    %v4086 = vunpack.c.l.b16 %v840
    %v4087 = vunpack.c.h.b16 %v840
    %v4088 = vunpack.c.l.b16 %v841
    %v4089 = vunpack.c.h.b16 %v841
    %v4090 = vunpack.c.l.b16 %v842
    %v4091 = vunpack.c.h.b16 %v842
    %v4092 = vunpack.c.l.b16 %v843
    %v4093 = vunpack.c.h.b16 %v843
    %v4094 = vunpack.c.l.b16 %v844
    %v4095 = vunpack.c.h.b16 %v844
    %v4096 = vunpack.c.l.b16 %v845
    %v4097 = vunpack.c.h.b16 %v845
    %v4098 = vunpack.c.l.b16 %v846
    %v4099 = vunpack.c.h.b16 %v846
    %v4100 = vunpack.c.l.b16 %v847
    %v4101 = vunpack.c.h.b16 %v847
    %v4102 = vunpack.c.l.b16 %v848
    %v4103 = vunpack.c.h.b16 %v848
    %v4104 = vunpack.c.l.b16 %v849
    %v4105 = vunpack.c.h.b16 %v849
    %v4106 = vunpack.c.l.b16 %v850
    %v4107 = vunpack.c.h.b16 %v850
    %v4108 = vunpack.c.l.b16 %v851
    %v4109 = vunpack.c.h.b16 %v851
    %v4110 = vunpack.c.l.b16 %v852
    %v4111 = vunpack.c.h.b16 %v852
    %v4112 = vunpack.c.l.b16 %v853
    %v4113 = vunpack.c.h.b16 %v853
    %v4114 = vunpack.c.l.b16 %v854
    %v4115 = vunpack.c.h.b16 %v854
    %v4116 = vunpack.c.l.b16 %v855
    %v4117 = vunpack.c.h.b16 %v855
    %v4118 = vunpack.c.l.b16 %v856
    %v4119 = vunpack.c.h.b16 %v856
    %v4120 = vunpack.c.l.b16 %v857
    %v4121 = vunpack.c.h.b16 %v857
    %v4122 = vunpack.c.l.b16 %v858
    %v4123 = vunpack.c.h.b16 %v858
    %v4124 = vunpack.c.l.b16 %v859
    %v4125 = vunpack.c.h.b16 %v859
    %v4126 = vunpack.c.l.b16 %v860
    %v4127 = vunpack.c.h.b16 %v860
    %v4128 = vunpack.c.l.b16 %v861
    %v4129 = vunpack.c.h.b16 %v861
    %v4130 = vunpack.c.l.b16 %v862
    %v4131 = vunpack.c.h.b16 %v862
    %v4132 = vunpack.c.l.b16 %v863
    %v4133 = vunpack.c.h.b16 %v863
    %v4134 = vunpack.c.l.b16 %v864
    %v4135 = vunpack.c.h.b16 %v864
    %v4136 = vunpack.c.l.b16 %v865
    %v4137 = vunpack.c.h.b16 %v865
    %v4138 = vunpack.c.l.b16 %v866
    %v4139 = vunpack.c.h.b16 %v866
    %v4140 = vunpack.c.l.b16 %v867
    %v4141 = vunpack.c.h.b16 %v867
    %v4142 = vunpack.c.l.b16 %v868
    %v4143 = vunpack.c.h.b16 %v868
    %v4144 = vunpack.c.l.b16 %v869
    %v4145 = vunpack.c.h.b16 %v869
    %v4146 = vunpack.c.l.b16 %v870
    %v4147 = vunpack.c.h.b16 %v870
    %v4148 = vunpack.c.l.b16 %v871
    %v4149 = vunpack.c.h.b16 %v871
    %v4150 = vunpack.c.l.b16 %v872
    %v4151 = vunpack.c.h.b16 %v872
    %v4152 = vunpack.c.l.b16 %v873
    %v4153 = vunpack.c.h.b16 %v873
    %v4154 = vunpack.c.l.b16 %v874
    %v4155 = vunpack.c.h.b16 %v874
    %v4156 = vunpack.c.l.b16 %v875
    %v4157 = vunpack.c.h.b16 %v875
    %v4158 = vunpack.c.l.b16 %v876
    %v4159 = vunpack.c.h.b16 %v876
    %v4160 = vunpack.c.l.b16 %v877
    %v4161 = vunpack.c.h.b16 %v877
    %v4162 = vunpack.c.l.b16 %v878
    %v4163 = vunpack.c.h.b16 %v878
    %v4164 = vunpack.c.l.b16 %v879
    %v4165 = vunpack.c.h.b16 %v879
    %v4166 = vunpack.c.l.b16 %v880
    %v4167 = vunpack.c.h.b16 %v880
    %v4168 = vunpack.c.l.b16 %v881
    %v4169 = vunpack.c.h.b16 %v881
    %v4170 = vunpack.c.l.b16 %v882
    %v4171 = vunpack.c.h.b16 %v882
    %v4172 = vunpack.c.l.b16 %v883
    %v4173 = vunpack.c.h.b16 %v883
    %v4174 = vunpack.c.l.b16 %v884
    %v4175 = vunpack.c.h.b16 %v884
    %v4176 = vunpack.c.l.b16 %v885
    %v4177 = vunpack.c.h.b16 %v885
    %v4178 = vunpack.c.l.b16 %v886
    %v4179 = vunpack.c.h.b16 %v886
    %v4180 = vunpack.c.l.b16 %v887
    %v4181 = vunpack.c.h.b16 %v887
    %v4182 = vunpack.c.l.b16 %v888
    %v4183 = vunpack.c.h.b16 %v888
    %v4184 = vunpack.c.l.b16 %v889
    %v4185 = vunpack.c.h.b16 %v889
    %v4186 = vunpack.c.l.b16 %v890
    %v4187 = vunpack.c.h.b16 %v890
    %v4188 = vunpack.c.l.b16 %v891
    %v4189 = vunpack.c.h.b16 %v891
    %v4190 = vunpack.c.l.b16 %v892
    %v4191 = vunpack.c.h.b16 %v892
    %v4192 = vunpack.c.l.b16 %v893
    %v4193 = vunpack.c.h.b16 %v893
    %v4194 = vunpack.c.l.b16 %v894
    %v4195 = vunpack.c.h.b16 %v894
    %v4196 = vunpack.c.l.b16 %v895
    %v4197 = vunpack.c.h.b16 %v895
    %v4198 = vunpack.c.l.b16 %v896
    %v4199 = vunpack.c.h.b16 %v896
    %v4200 = vunpack.c.l.b16 %v897
    %v4201 = vunpack.c.h.b16 %v897
    %v4202 = vunpack.c.l.b16 %v898
    %v4203 = vunpack.c.h.b16 %v898
    %v4204 = vunpack.c.l.b16 %v899
    %v4205 = vunpack.c.h.b16 %v899
    %v4206 = vunpack.c.l.b16 %v900
    %v4207 = vunpack.c.h.b16 %v900
    %v4208 = vunpack.c.l.b16 %v901
    %v4209 = vunpack.c.h.b16 %v901
    %v4210 = vunpack.c.l.b16 %v902
    %v4211 = vunpack.c.h.b16 %v902
    %v4212 = vunpack.c.l.b16 %v903
    %v4213 = vunpack.c.h.b16 %v903
    %v4214 = vunpack.c.l.b16 %v904
    %v4215 = vunpack.c.h.b16 %v904
    %v4216 = vunpack.c.l.b16 %v905
    %v4217 = vunpack.c.h.b16 %v905
    %v4218 = vunpack.c.l.b16 %v906
    %v4219 = vunpack.c.h.b16 %v906
    %v4220 = vunpack.c.l.b16 %v907
    %v4221 = vunpack.c.h.b16 %v907
    %v4222 = vunpack.c.l.b16 %v908
    %v4223 = vunpack.c.h.b16 %v908
    %v4224 = vunpack.c.l.b16 %v909
    %v4225 = vunpack.c.h.b16 %v909
    %v4226 = vunpack.c.l.b16 %v910
    %v4227 = vunpack.c.h.b16 %v910
    %v4228 = vunpack.c.l.b16 %v911
    %v4229 = vunpack.c.h.b16 %v911
    %v4230 = vunpack.c.l.b16 %v912
    %v4231 = vunpack.c.h.b16 %v912
    %v4232 = vunpack.c.l.b16 %v913
    %v4233 = vunpack.c.h.b16 %v913
    %v4234 = vunpack.c.l.b16 %v914
    %v4235 = vunpack.c.h.b16 %v914
    %v4236 = vunpack.c.l.b16 %v915
    %v4237 = vunpack.c.h.b16 %v915
    %v4238 = vunpack.c.l.b16 %v916
    %v4239 = vunpack.c.h.b16 %v916
    %v4240 = vunpack.c.l.b16 %v917
    %v4241 = vunpack.c.h.b16 %v917
    %v4242 = vunpack.c.l.b16 %v918
    %v4243 = vunpack.c.h.b16 %v918
    %v4244 = vunpack.c.l.b16 %v919
    %v4245 = vunpack.c.h.b16 %v919
    %v4246 = vunpack.c.l.b16 %v920
    %v4247 = vunpack.c.h.b16 %v920
    %v4248 = vunpack.c.l.b16 %v921
    %v4249 = vunpack.c.h.b16 %v921
    %v4250 = vunpack.c.l.b16 %v922
    %v4251 = vunpack.c.h.b16 %v922
    %v4252 = vunpack.c.l.b16 %v923
    %v4253 = vunpack.c.h.b16 %v923
    %v4254 = vunpack.c.l.b16 %v924
    %v4255 = vunpack.c.h.b16 %v924
    %v4256 = vunpack.c.l.b16 %v925
    %v4257 = vunpack.c.h.b16 %v925
    %v4258 = vunpack.c.l.b16 %v926
    %v4259 = vunpack.c.h.b16 %v926
    %v4260 = vunpack.c.l.b16 %v927
    %v4261 = vunpack.c.h.b16 %v927
    %v4262 = vunpack.c.l.b16 %v928
    %v4263 = vunpack.c.h.b16 %v928
    %v4264 = vunpack.c.l.b16 %v929
    %v4265 = vunpack.c.h.b16 %v929
    %v4266 = vunpack.c.l.b16 %v930
    %v4267 = vunpack.c.h.b16 %v930
    %v4268 = vunpack.c.l.b16 %v931
    %v4269 = vunpack.c.h.b16 %v931
    %v4270 = vunpack.c.l.b16 %v932
    %v4271 = vunpack.c.h.b16 %v932
    %v4272 = vunpack.c.l.b16 %v933
    %v4273 = vunpack.c.h.b16 %v933
    %v4274 = vunpack.c.l.b16 %v934
    %v4275 = vunpack.c.h.b16 %v934
    %v4276 = vunpack.c.l.b16 %v935
    %v4277 = vunpack.c.h.b16 %v935
    %v4278 = vunpack.c.l.b16 %v936
    %v4279 = vunpack.c.h.b16 %v936
    %v4280 = vunpack.c.l.b16 %v937
    %v4281 = vunpack.c.h.b16 %v937
    %v4282 = vunpack.c.l.b16 %v938
    %v4283 = vunpack.c.h.b16 %v938
    %v4284 = vunpack.c.l.b16 %v939
    %v4285 = vunpack.c.h.b16 %v939
    %v4286 = vunpack.c.l.b16 %v940
    %v4287 = vunpack.c.h.b16 %v940
    %v4288 = vunpack.c.l.b16 %v941
    %v4289 = vunpack.c.h.b16 %v941
    %v4290 = vunpack.c.l.b16 %v942
    %v4291 = vunpack.c.h.b16 %v942
    %v4292 = vunpack.c.l.b16 %v943
    %v4293 = vunpack.c.h.b16 %v943
    %v4294 = vunpack.c.l.b16 %v944
    %v4295 = vunpack.c.h.b16 %v944
    %v4296 = vunpack.c.l.b16 %v945
    %v4297 = vunpack.c.h.b16 %v945
    %v4298 = vunpack.c.l.b16 %v946
    %v4299 = vunpack.c.h.b16 %v946
    %v4300 = vunpack.c.l.b16 %v947
    %v4301 = vunpack.c.h.b16 %v947
    %v4302 = vunpack.c.l.b16 %v948
    %v4303 = vunpack.c.h.b16 %v948
    %v4304 = vunpack.c.l.b16 %v949
    %v4305 = vunpack.c.h.b16 %v949
    %v4306 = vunpack.c.l.b16 %v950
    %v4307 = vunpack.c.h.b16 %v950
    %v4308 = vunpack.c.l.b16 %v951
    %v4309 = vunpack.c.h.b16 %v951
    %v4310 = vunpack.c.l.b16 %v952
    %v4311 = vunpack.c.h.b16 %v952
    %v4312 = vunpack.c.l.b16 %v953
    %v4313 = vunpack.c.h.b16 %v953
    %v4314 = vunpack.c.l.b16 %v954
    %v4315 = vunpack.c.h.b16 %v954
    %v4316 = vunpack.c.l.b16 %v955
    %v4317 = vunpack.c.h.b16 %v955
    %v4318 = vunpack.c.l.b16 %v956
    %v4319 = vunpack.c.h.b16 %v956
    %v4320 = vunpack.c.l.b16 %v957
    %v4321 = vunpack.c.h.b16 %v957
    %v4322 = vunpack.c.l.b16 %v958
    %v4323 = vunpack.c.h.b16 %v958
    %v4324 = vunpack.c.l.b16 %v959
    %v4325 = vunpack.c.h.b16 %v959
    %v4326 = vunpack.c.l.b16 %v960
    %v4327 = vunpack.c.h.b16 %v960
    %v4328 = vunpack.c.l.b16 %v961
    %v4329 = vunpack.c.h.b16 %v961
    %v4330 = vunpack.c.l.b16 %v962
    %v4331 = vunpack.c.h.b16 %v962
    %v4332 = vunpack.c.l.b16 %v963
    %v4333 = vunpack.c.h.b16 %v963
    %v4334 = vunpack.c.l.b16 %v964
    %v4335 = vunpack.c.h.b16 %v964
    %v4336 = vunpack.c.l.b16 %v965
    %v4337 = vunpack.c.h.b16 %v965
    %v4338 = vunpack.c.l.b16 %v966
    %v4339 = vunpack.c.h.b16 %v966
    %v4340 = vunpack.c.l.b16 %v967
    %v4341 = vunpack.c.h.b16 %v967
    %v4342 = vunpack.c.l.b16 %v968
    %v4343 = vunpack.c.h.b16 %v968
    %v4344 = vunpack.c.l.b16 %v969
    %v4345 = vunpack.c.h.b16 %v969
    %v4346 = vunpack.c.l.b16 %v970
    %v4347 = vunpack.c.h.b16 %v970
    %v4348 = vunpack.c.l.b16 %v971
    %v4349 = vunpack.c.h.b16 %v971
    %v4350 = vunpack.c.l.b16 %v972
    %v4351 = vunpack.c.h.b16 %v972
    %v4352 = vunpack.c.l.b16 %v973
    %v4353 = vunpack.c.h.b16 %v973
    %v4354 = vunpack.c.l.b16 %v974
    %v4355 = vunpack.c.h.b16 %v974
    %v4356 = vunpack.c.l.b16 %v975
    %v4357 = vunpack.c.h.b16 %v975
    %v4358 = vunpack.c.l.b16 %v976
    %v4359 = vunpack.c.h.b16 %v976
    %v4360 = vunpack.c.l.b16 %v977
    %v4361 = vunpack.c.h.b16 %v977
    %v4362 = vunpack.c.l.b16 %v978
    %v4363 = vunpack.c.h.b16 %v978
    %v4364 = vunpack.c.l.b16 %v979
    %v4365 = vunpack.c.h.b16 %v979
    %v4366 = vunpack.c.l.b16 %v980
    %v4367 = vunpack.c.h.b16 %v980
    %v4368 = vunpack.c.l.b16 %v981
    %v4369 = vunpack.c.h.b16 %v981
    %v4370 = vunpack.c.l.b16 %v982
    %v4371 = vunpack.c.h.b16 %v982
    %v4372 = vunpack.c.l.b16 %v983
    %v4373 = vunpack.c.h.b16 %v983
    %v4374 = vunpack.c.l.b16 %v984
    %v4375 = vunpack.c.h.b16 %v984
    %v4376 = vunpack.c.l.b16 %v985
    %v4377 = vunpack.c.h.b16 %v985
    %v4378 = vunpack.c.l.b16 %v986
    %v4379 = vunpack.c.h.b16 %v986
    %v4380 = vunpack.c.l.b16 %v987
    %v4381 = vunpack.c.h.b16 %v987
    %v4382 = vunpack.c.l.b16 %v988
    %v4383 = vunpack.c.h.b16 %v988
    %v4384 = vunpack.c.l.b16 %v989
    %v4385 = vunpack.c.h.b16 %v989
    %v4386 = vunpack.c.l.b16 %v990
    %v4387 = vunpack.c.h.b16 %v990
    %v4388 = vunpack.c.l.b16 %v991
    %v4389 = vunpack.c.h.b16 %v991
    %v4390 = vunpack.c.l.b16 %v992
    %v4391 = vunpack.c.h.b16 %v992
    %v4392 = vunpack.c.l.b16 %v993
    %v4393 = vunpack.c.h.b16 %v993
    %v4394 = vunpack.c.l.b16 %v994
    %v4395 = vunpack.c.h.b16 %v994
    %v4396 = vunpack.c.l.b16 %v995
    %v4397 = vunpack.c.h.b16 %v995
    %v4398 = vunpack.c.l.b16 %v996
    %v4399 = vunpack.c.h.b16 %v996
    %v4400 = vunpack.c.l.b16 %v997
    %v4401 = vunpack.c.h.b16 %v997
    %v4402 = vunpack.c.l.b16 %v998
    %v4403 = vunpack.c.h.b16 %v998
    %v4404 = vunpack.c.l.b16 %v999
    %v4405 = vunpack.c.h.b16 %v999
    %v4406 = vunpack.c.l.b16 %v1000
    %v4407 = vunpack.c.h.b16 %v1000
    %v4408 = vunpack.c.l.b16 %v1001
    %v4409 = vunpack.c.h.b16 %v1001
    %v4410 = vunpack.c.l.b16 %v1002
    %v4411 = vunpack.c.h.b16 %v1002
    %v4412 = vunpack.c.l.b16 %v1003
    %v4413 = vunpack.c.h.b16 %v1003
    %v4414 = vunpack.c.l.b16 %v1004
    %v4415 = vunpack.c.h.b16 %v1004
    %v4416 = vunpack.c.l.b16 %v1005
    %v4417 = vunpack.c.h.b16 %v1005
    %v4418 = vunpack.c.l.b16 %v1006
    %v4419 = vunpack.c.h.b16 %v1006
    %v4420 = vunpack.c.l.b16 %v1007
    %v4421 = vunpack.c.h.b16 %v1007
    %v4422 = vunpack.c.l.b16 %v1008
    %v4423 = vunpack.c.h.b16 %v1008
    %v4424 = vunpack.c.l.b16 %v1009
    %v4425 = vunpack.c.h.b16 %v1009
    %v4426 = vunpack.c.l.b16 %v1010
    %v4427 = vunpack.c.h.b16 %v1010
    %v4428 = vunpack.c.l.b16 %v1011
    %v4429 = vunpack.c.h.b16 %v1011
    %v4430 = vunpack.c.l.b16 %v1012
    %v4431 = vunpack.c.h.b16 %v1012
    %v4432 = vunpack.c.l.b16 %v1013
    %v4433 = vunpack.c.h.b16 %v1013
    %v4434 = vunpack.c.l.b16 %v1014
    %v4435 = vunpack.c.h.b16 %v1014
    %v4436 = vunpack.c.l.b16 %v1015
    %v4437 = vunpack.c.h.b16 %v1015
    %v4438 = vunpack.c.l.b16 %v1016
    %v4439 = vunpack.c.h.b16 %v1016
    %v4440 = vunpack.c.l.b16 %v1017
    %v4441 = vunpack.c.h.b16 %v1017
    %v4442 = vunpack.c.l.b16 %v1018
    %v4443 = vunpack.c.h.b16 %v1018
    %v4444 = vunpack.c.l.b16 %v1019
    %v4445 = vunpack.c.h.b16 %v1019
    %v4446 = vunpack.c.l.b16 %v1020
    %v4447 = vunpack.c.h.b16 %v1020
    %v4448 = vunpack.c.l.b16 %v1021
    %v4449 = vunpack.c.h.b16 %v1021
    %v4450 = vunpack.c.l.b16 %v1022
    %v4451 = vunpack.c.h.b16 %v1022
    %v4452 = vunpack.c.l.b16 %v1023
    %v4453 = vunpack.c.h.b16 %v1023
    %v4454 = vunpack.c.l.b16 %v1024
    %v4455 = vunpack.c.h.b16 %v1024
    %v4456 = vunpack.c.l.b16 %v1025
    %v4457 = vunpack.c.h.b16 %v1025
    %v4458 = vunpack.c.l.b16 %v1026
    %v4459 = vunpack.c.h.b16 %v1026
    %v4460 = vunpack.c.l.b16 %v1027
    %v4461 = vunpack.c.h.b16 %v1027
    %v4462 = vunpack.c.l.b16 %v1028
    %v4463 = vunpack.c.h.b16 %v1028
    %v4464 = vunpack.c.l.b16 %v1029
    %v4465 = vunpack.c.h.b16 %v1029
    %v4466 = vunpack.c.l.b16 %v1030
    %v4467 = vunpack.c.h.b16 %v1030
    %v4468 = vunpack.c.l.b16 %v1031
    %v4469 = vunpack.c.h.b16 %v1031
    %v4470 = vunpack.c.l.b16 %v1032
    %v4471 = vunpack.c.h.b16 %v1032
    %v4472 = vunpack.c.l.b16 %v1033
    %v4473 = vunpack.c.h.b16 %v1033
    %v4474 = vunpack.c.l.b16 %v1034
    %v4475 = vunpack.c.h.b16 %v1034
    %v4476 = vunpack.c.l.b16 %v1035
    %v4477 = vunpack.c.h.b16 %v1035
    %v4478 = vunpack.c.l.b16 %v1036
    %v4479 = vunpack.c.h.b16 %v1036
    %v4480 = vunpack.c.l.b16 %v1037
    %v4481 = vunpack.c.h.b16 %v1037
    %v4482 = vunpack.c.l.b16 %v1038
    %v4483 = vunpack.c.h.b16 %v1038
    %v4484 = vunpack.c.l.b16 %v1039
    %v4485 = vunpack.c.h.b16 %v1039
    %v4486 = vunpack.c.l.b16 %v1040
    %v4487 = vunpack.c.h.b16 %v1040
    %v4488 = vunpack.c.l.b16 %v1041
    %v4489 = vunpack.c.h.b16 %v1041
    %v4490 = vunpack.c.l.b16 %v1042
    %v4491 = vunpack.c.h.b16 %v1042
    %v4492 = vunpack.c.l.b16 %v1043
    %v4493 = vunpack.c.h.b16 %v1043
    %v4494 = vunpack.c.l.b16 %v1044
    %v4495 = vunpack.c.h.b16 %v1044
    %v4496 = vunpack.c.l.b16 %v1045
    %v4497 = vunpack.c.h.b16 %v1045
    %v4498 = vunpack.c.l.b16 %v1046
    %v4499 = vunpack.c.h.b16 %v1046
    %v4500 = vunpack.c.l.b16 %v1047
    %v4501 = vunpack.c.h.b16 %v1047
    %v4502 = vunpack.c.l.b16 %v1048
    %v4503 = vunpack.c.h.b16 %v1048
    %v4504 = vunpack.c.l.b16 %v1049
    %v4505 = vunpack.c.h.b16 %v1049
    %v4506 = vunpack.c.l.b16 %v1050
    %v4507 = vunpack.c.h.b16 %v1050
    %v4508 = vunpack.c.l.b16 %v1051
    %v4509 = vunpack.c.h.b16 %v1051
    %v4510 = vunpack.c.l.b16 %v1052
    %v4511 = vunpack.c.h.b16 %v1052
    %v4512 = vunpack.c.l.b16 %v1053
    %v4513 = vunpack.c.h.b16 %v1053
    %v4514 = vunpack.c.l.b16 %v1054
    %v4515 = vunpack.c.h.b16 %v1054
    %v4516 = vunpack.c.l.b16 %v1055
    %v4517 = vunpack.c.h.b16 %v1055
    %v4518 = vunpack.c.l.b16 %v1056
    %v4519 = vunpack.c.h.b16 %v1056
    %v4520 = vunpack.c.l.b16 %v1057
    %v4521 = vunpack.c.h.b16 %v1057
    %v4522 = vunpack.c.l.b16 %v1058
    %v4523 = vunpack.c.h.b16 %v1058
    %v4524 = vunpack.c.l.b16 %v1059
    %v4525 = vunpack.c.h.b16 %v1059
    %v4526 = vunpack.c.l.b16 %v1060
    %v4527 = vunpack.c.h.b16 %v1060
    %v4528 = vunpack.c.l.b16 %v1061
    %v4529 = vunpack.c.h.b16 %v1061
    %v4530 = vunpack.c.l.b16 %v1062
    %v4531 = vunpack.c.h.b16 %v1062
    %v4532 = vunpack.c.l.b16 %v1063
    %v4533 = vunpack.c.h.b16 %v1063
    %v4534 = vunpack.c.l.b16 %v1064
    %v4535 = vunpack.c.h.b16 %v1064
    %v4536 = vunpack.c.l.b16 %v1065
    %v4537 = vunpack.c.h.b16 %v1065
    %v4538 = vunpack.c.l.b16 %v1066
    %v4539 = vunpack.c.h.b16 %v1066
    %v4540 = vunpack.c.l.b16 %v1067
    %v4541 = vunpack.c.h.b16 %v1067
    %v4542 = vunpack.c.l.b16 %v1068
    %v4543 = vunpack.c.h.b16 %v1068
    %v4544 = vunpack.c.l.b16 %v1069
    %v4545 = vunpack.c.h.b16 %v1069
    %v4546 = vunpack.c.l.b16 %v1070
    %v4547 = vunpack.c.h.b16 %v1070
    %v4548 = vunpack.c.l.b16 %v1071
    %v4549 = vunpack.c.h.b16 %v1071
    %v4550 = vunpack.c.l.b16 %v1072
    %v4551 = vunpack.c.h.b16 %v1072
    %v4552 = vunpack.c.l.b16 %v1073
    %v4553 = vunpack.c.h.b16 %v1073
    %v4554 = vunpack.c.l.b16 %v1074
    %v4555 = vunpack.c.h.b16 %v1074
    %v4556 = vunpack.c.l.b16 %v1075
    %v4557 = vunpack.c.h.b16 %v1075
    %v4558 = vunpack.c.l.b16 %v1076
    %v4559 = vunpack.c.h.b16 %v1076
    %v4560 = vunpack.c.l.b16 %v1077
    %v4561 = vunpack.c.h.b16 %v1077
    %v4562 = vunpack.c.l.b16 %v1078
    %v4563 = vunpack.c.h.b16 %v1078
    %v4564 = vunpack.c.l.b16 %v1079
    %v4565 = vunpack.c.h.b16 %v1079
    %v4566 = vunpack.c.l.b16 %v1080
    %v4567 = vunpack.c.h.b16 %v1080
    %v4568 = vunpack.c.l.b16 %v1081
    %v4569 = vunpack.c.h.b16 %v1081
    %v4570 = vunpack.c.l.b16 %v1082
    %v4571 = vunpack.c.h.b16 %v1082
    %v4572 = vunpack.c.l.b16 %v1083
    %v4573 = vunpack.c.h.b16 %v1083
    %v4574 = vunpack.c.l.b16 %v1084
    %v4575 = vunpack.c.h.b16 %v1084
    %v4576 = vunpack.c.l.b16 %v1085
    %v4577 = vunpack.c.h.b16 %v1085
    %v4578 = vunpack.c.l.b16 %v1086
    %v4579 = vunpack.c.h.b16 %v1086
    %v4580 = vunpack.c.l.b16 %v1087
    %v4581 = vunpack.c.h.b16 %v1087
    %v4582 = vunpack.c.l.b16 %v1088
    %v4583 = vunpack.c.h.b16 %v1088
    %v4584 = vunpack.c.l.b16 %v1089
    %v4585 = vunpack.c.h.b16 %v1089
    %v4586 = vunpack.c.l.b16 %v1090
    %v4587 = vunpack.c.h.b16 %v1090
    %v4588 = vunpack.c.l.b16 %v1091
    %v4589 = vunpack.c.h.b16 %v1091
    %v4590 = vunpack.c.l.b16 %v1092
    %v4591 = vunpack.c.h.b16 %v1092
    %v4592 = vunpack.c.l.b16 %v1093
    %v4593 = vunpack.c.h.b16 %v1093
    %v4594 = vunpack.c.l.b16 %v1094
    %v4595 = vunpack.c.h.b16 %v1094
    %v4596 = vunpack.c.l.b16 %v1095
    %v4597 = vunpack.c.h.b16 %v1095
    %v4598 = vunpack.c.l.b16 %v1096
    %v4599 = vunpack.c.h.b16 %v1096
    %v4600 = vunpack.c.l.b16 %v1097
    %v4601 = vunpack.c.h.b16 %v1097
    %v4602 = vunpack.c.l.b16 %v1098
    %v4603 = vunpack.c.h.b16 %v1098
    %v4604 = vunpack.c.l.b16 %v1099
    %v4605 = vunpack.c.h.b16 %v1099
    %v4606 = vunpack.c.l.b16 %v1100
    %v4607 = vunpack.c.h.b16 %v1100
    %v4608 = vunpack.c.l.b16 %v1101
    %v4609 = vunpack.c.h.b16 %v1101
    %v4610 = vunpack.c.l.b16 %v1102
    %v4611 = vunpack.c.h.b16 %v1102
    %v4612 = vunpack.c.l.b16 %v1103
    %v4613 = vunpack.c.h.b16 %v1103
    %v4614 = vunpack.c.l.b16 %v1104
    %v4615 = vunpack.c.h.b16 %v1104
    %v4616 = vunpack.c.l.b16 %v1105
    %v4617 = vunpack.c.h.b16 %v1105
    %v4618 = vunpack.c.l.b16 %v1106
    %v4619 = vunpack.c.h.b16 %v1106
    %v4620 = vunpack.c.l.b16 %v1107
    %v4621 = vunpack.c.h.b16 %v1107
    %v4622 = vunpack.c.l.b16 %v1108
    %v4623 = vunpack.c.h.b16 %v1108
    %v4624 = vunpack.c.l.b16 %v1109
    %v4625 = vunpack.c.h.b16 %v1109
    %v4626 = vunpack.c.l.b16 %v1110
    %v4627 = vunpack.c.h.b16 %v1110
    %v4628 = vunpack.c.l.b16 %v1111
    %v4629 = vunpack.c.h.b16 %v1111
    %v4630 = vunpack.c.l.b16 %v1112
    %v4631 = vunpack.c.h.b16 %v1112
    %v4632 = vunpack.c.l.b16 %v1113
    %v4633 = vunpack.c.h.b16 %v1113
    %v4634 = vunpack.c.l.b16 %v1114
    %v4635 = vunpack.c.h.b16 %v1114
    %v4636 = vunpack.c.l.b16 %v1115
    %v4637 = vunpack.c.h.b16 %v1115
    %v4638 = vunpack.c.l.b16 %v1116
    %v4639 = vunpack.c.h.b16 %v1116
    %v4640 = vunpack.c.l.b16 %v1117
    %v4641 = vunpack.c.h.b16 %v1117
    %v4642 = vunpack.c.l.b16 %v1118
    %v4643 = vunpack.c.h.b16 %v1118
    %v4644 = vunpack.c.l.b16 %v1119
    %v4645 = vunpack.c.h.b16 %v1119
    %v4646 = vunpack.c.l.b16 %v1120
    %v4647 = vunpack.c.h.b16 %v1120
    %v4648 = vunpack.c.l.b16 %v1121
    %v4649 = vunpack.c.h.b16 %v1121
    %v4650 = vunpack.c.l.b16 %v1122
    %v4651 = vunpack.c.h.b16 %v1122
    %v4652 = vunpack.c.l.b16 %v1123
    %v4653 = vunpack.c.h.b16 %v1123
    %v4654 = vunpack.c.l.b16 %v1124
    %v4655 = vunpack.c.h.b16 %v1124
    %v4656 = vunpack.c.l.b16 %v1125
    %v4657 = vunpack.c.h.b16 %v1125
    %v4658 = vunpack.c.l.b16 %v1126
    %v4659 = vunpack.c.h.b16 %v1126
    %v4660 = vunpack.c.l.b16 %v1127
    %v4661 = vunpack.c.h.b16 %v1127
    %v4662 = vunpack.c.l.b16 %v1128
    %v4663 = vunpack.c.h.b16 %v1128
    %v4664 = vunpack.c.l.b16 %v1129
    %v4665 = vunpack.c.h.b16 %v1129
    %v4666 = vunpack.c.l.b16 %v1130
    %v4667 = vunpack.c.h.b16 %v1130
    %v4668 = vunpack.c.l.b16 %v1131
    %v4669 = vunpack.c.h.b16 %v1131
    %v4670 = vunpack.c.l.b16 %v1132
    %v4671 = vunpack.c.h.b16 %v1132
    %v4672 = vunpack.c.l.b16 %v1133
    %v4673 = vunpack.c.h.b16 %v1133
    %v4674 = vunpack.c.l.b16 %v1134
    %v4675 = vunpack.c.h.b16 %v1134
    %v4676 = vunpack.c.l.b16 %v1135
    %v4677 = vunpack.c.h.b16 %v1135
    %v4678 = vunpack.c.l.b16 %v1136
    %v4679 = vunpack.c.h.b16 %v1136
    %v4680 = vunpack.c.l.b16 %v1137
    %v4681 = vunpack.c.h.b16 %v1137
    %v4682 = vunpack.c.l.b16 %v1138
    %v4683 = vunpack.c.h.b16 %v1138
    %v4684 = vunpack.c.l.b16 %v1139
    %v4685 = vunpack.c.h.b16 %v1139
    %v4686 = vunpack.c.l.b16 %v1140
    %v4687 = vunpack.c.h.b16 %v1140
    %v4688 = vunpack.c.l.b16 %v1141
    %v4689 = vunpack.c.h.b16 %v1141
    %v4690 = vunpack.c.l.b16 %v1142
    %v4691 = vunpack.c.h.b16 %v1142
    %v4692 = vunpack.c.l.b16 %v1143
    %v4693 = vunpack.c.h.b16 %v1143
    %v4694 = vunpack.c.l.b16 %v1144
    %v4695 = vunpack.c.h.b16 %v1144
    %v4696 = vunpack.c.l.b16 %v1145
    %v4697 = vunpack.c.h.b16 %v1145
    %v4698 = vunpack.c.l.b16 %v1146
    %v4699 = vunpack.c.h.b16 %v1146
    %v4700 = vunpack.c.l.b16 %v1147
    %v4701 = vunpack.c.h.b16 %v1147
    %v4702 = vunpack.c.l.b16 %v1148
    %v4703 = vunpack.c.h.b16 %v1148
    %v4704 = vunpack.c.l.b16 %v1149
    %v4705 = vunpack.c.h.b16 %v1149
    %v4706 = vunpack.c.l.b16 %v1150
    %v4707 = vunpack.c.h.b16 %v1150
    %v4708 = vunpack.c.l.b16 %v1151
    %v4709 = vunpack.c.h.b16 %v1151
    %v4710 = vunpack.c.l.b16 %v1152
    %v4711 = vunpack.c.h.b16 %v1152
    %v4712 = vunpack.c.l.b16 %v1153
    %v4713 = vunpack.c.h.b16 %v1153
    %v4714 = vunpack.c.l.b16 %v1154
    %v4715 = vunpack.c.h.b16 %v1154
    %v4716 = vunpack.c.l.b16 %v1155
    %v4717 = vunpack.c.h.b16 %v1155
    %v4718 = vunpack.c.l.b16 %v1156
    %v4719 = vunpack.c.h.b16 %v1156
    %v4720 = vunpack.c.l.b16 %v1157
    %v4721 = vunpack.c.h.b16 %v1157
    %v4722 = vunpack.c.l.b16 %v1158
    %v4723 = vunpack.c.h.b16 %v1158
    %v4724 = vunpack.c.l.b16 %v1159
    %v4725 = vunpack.c.h.b16 %v1159
    %v4726 = vunpack.c.l.b16 %v1160
    %v4727 = vunpack.c.h.b16 %v1160
    %v4728 = vunpack.c.l.b16 %v1161
    %v4729 = vunpack.c.h.b16 %v1161
    %v4730 = vunpack.c.l.b16 %v1162
    %v4731 = vunpack.c.h.b16 %v1162
    %v4732 = vunpack.c.l.b16 %v1163
    %v4733 = vunpack.c.h.b16 %v1163
    %v4734 = vunpack.c.l.b16 %v1164
    %v4735 = vunpack.c.h.b16 %v1164
    %v4736 = vunpack.c.l.b16 %v1165
    %v4737 = vunpack.c.h.b16 %v1165
    %v4738 = vunpack.c.l.b16 %v1166
    %v4739 = vunpack.c.h.b16 %v1166
    %v4740 = vunpack.c.l.b16 %v1167
    %v4741 = vunpack.c.h.b16 %v1167
    %v4742 = vunpack.c.l.b16 %v1168
    %v4743 = vunpack.c.h.b16 %v1168
    %v4744 = vunpack.c.l.b16 %v1169
    %v4745 = vunpack.c.h.b16 %v1169
    %v4746 = vunpack.c.l.b16 %v1170
    %v4747 = vunpack.c.h.b16 %v1170
    %v4748 = vunpack.c.l.b16 %v1171
    %v4749 = vunpack.c.h.b16 %v1171
    %v4750 = vunpack.c.l.b16 %v1172
    %v4751 = vunpack.c.h.b16 %v1172
    %v4752 = vunpack.c.l.b16 %v1173
    %v4753 = vunpack.c.h.b16 %v1173
    %v4754 = vunpack.c.l.b16 %v1174
    %v4755 = vunpack.c.h.b16 %v1174
    %v4756 = vunpack.c.l.b16 %v1175
    %v4757 = vunpack.c.h.b16 %v1175
    %v4758 = vunpack.c.l.b16 %v1176
    %v4759 = vunpack.c.h.b16 %v1176
    %v4760 = vunpack.c.l.b16 %v1177
    %v4761 = vunpack.c.h.b16 %v1177
    %v4762 = vunpack.c.l.b16 %v1178
    %v4763 = vunpack.c.h.b16 %v1178
    %v4764 = vunpack.c.l.b16 %v1179
    %v4765 = vunpack.c.h.b16 %v1179
    %v4766 = vunpack.c.l.b16 %v1180
    %v4767 = vunpack.c.h.b16 %v1180
    %v4768 = vunpack.c.l.b16 %v1181
    %v4769 = vunpack.c.h.b16 %v1181
    %v4770 = vunpack.c.l.b16 %v1182
    %v4771 = vunpack.c.h.b16 %v1182
    %v4772 = vunpack.c.l.b16 %v1183
    %v4773 = vunpack.c.h.b16 %v1183
    %v4774 = vunpack.c.l.b16 %v1184
    %v4775 = vunpack.c.h.b16 %v1184
    %v4776 = vunpack.c.l.b16 %v1185
    %v4777 = vunpack.c.h.b16 %v1185
    %v4778 = vunpack.c.l.b16 %v1186
    %v4779 = vunpack.c.h.b16 %v1186
    %v4780 = vunpack.c.l.b16 %v1187
    %v4781 = vunpack.c.h.b16 %v1187
    %v4782 = vunpack.c.l.b16 %v1188
    %v4783 = vunpack.c.h.b16 %v1188
    %v4784 = vunpack.c.l.b16 %v1189
    %v4785 = vunpack.c.h.b16 %v1189
    %v4786 = vunpack.c.l.b16 %v1190
    %v4787 = vunpack.c.h.b16 %v1190
    %v4788 = vunpack.c.l.b16 %v1191
    %v4789 = vunpack.c.h.b16 %v1191
    %v4790 = vunpack.c.l.b16 %v1192
    %v4791 = vunpack.c.h.b16 %v1192
    %v4792 = vunpack.c.l.b16 %v1193
    %v4793 = vunpack.c.h.b16 %v1193
    %v4794 = vunpack.c.l.b16 %v1194
    %v4795 = vunpack.c.h.b16 %v1194
    %v4796 = vunpack.c.l.b16 %v1195
    %v4797 = vunpack.c.h.b16 %v1195
    %v4798 = vunpack.c.l.b16 %v1196
    %v4799 = vunpack.c.h.b16 %v1196
    %v4800 = vunpack.c.l.b16 %v1197
    %v4801 = vunpack.c.h.b16 %v1197
    %v4802 = vunpack.c.l.b16 %v1198
    %v4803 = vunpack.c.h.b16 %v1198
    %v4804 = vunpack.c.l.b16 %v1199
    %v4805 = vunpack.c.h.b16 %v1199
    %v4806 = vunpack.c.l.b16 %v1200
    %v4807 = vunpack.c.h.b16 %v1200
    %v4808 = vunpack.c.l.b16 %v1201
    %v4809 = vunpack.c.h.b16 %v1201
    %v4810 = vunpack.c.l.b16 %v1202
    %v4811 = vunpack.c.h.b16 %v1202
    %v4812 = vunpack.c.l.b16 %v1203
    %v4813 = vunpack.c.h.b16 %v1203
    %v4814 = vunpack.c.l.b16 %v1204
    %v4815 = vunpack.c.h.b16 %v1204
    %v4816 = vunpack.c.l.b16 %v1205
    %v4817 = vunpack.c.h.b16 %v1205
    %v4818 = vunpack.c.l.b16 %v1206
    %v4819 = vunpack.c.h.b16 %v1206
    %v4820 = vunpack.c.l.b16 %v1207
    %v4821 = vunpack.c.h.b16 %v1207
    %v4822 = vunpack.c.l.b16 %v1208
    %v4823 = vunpack.c.h.b16 %v1208
    %v4824 = vunpack.c.l.b16 %v1209
    %v4825 = vunpack.c.h.b16 %v1209
    %v4826 = vunpack.c.l.b16 %v1210
    %v4827 = vunpack.c.h.b16 %v1210
    %v4828 = vunpack.c.l.b16 %v1211
    %v4829 = vunpack.c.h.b16 %v1211
    %v4830 = vunpack.c.l.b16 %v1212
    %v4831 = vunpack.c.h.b16 %v1212
    %v4832 = vunpack.c.l.b16 %v1213
    %v4833 = vunpack.c.h.b16 %v1213
    %v4834 = vunpack.c.l.b16 %v1214
    %v4835 = vunpack.c.h.b16 %v1214
    %v4836 = vunpack.c.l.b16 %v1215
    %v4837 = vunpack.c.h.b16 %v1215
    %v4838 = vunpack.c.l.b16 %v1216
    %v4839 = vunpack.c.h.b16 %v1216
    %v4840 = vunpack.c.l.b16 %v1217
    %v4841 = vunpack.c.h.b16 %v1217
    %v4842 = vunpack.c.l.b16 %v1218
    %v4843 = vunpack.c.h.b16 %v1218
    %v4844 = vunpack.c.l.b16 %v1219
    %v4845 = vunpack.c.h.b16 %v1219
    %v4846 = vunpack.c.l.b16 %v1220
    %v4847 = vunpack.c.h.b16 %v1220
    %v4848 = vunpack.c.l.b16 %v1221
    %v4849 = vunpack.c.h.b16 %v1221
    %v4850 = vunpack.c.l.b16 %v1222
    %v4851 = vunpack.c.h.b16 %v1222
    %v4852 = vunpack.c.l.b16 %v1223
    %v4853 = vunpack.c.h.b16 %v1223
    %v4854 = vpack.c.b16 %v2556, %v2550
    %v4855 = vpack.c.b16 %v2557, %v2551
    %v4856 = vpack.c.b16 %v2558, %v2552
    %v4857 = vpack.c.b16 %v2559, %v2553
    %v4858 = vpack.c.b16 %v2560, %v2554
    %v4859 = vpack.c.b16 %v2561, %v2555
    %v4860 = vpack.c.b16 %v2568, %v2562
    %v4861 = vpack.c.b16 %v2569, %v2563
    %v4862 = vpack.c.b16 %v2570, %v2564
    %v4863 = vpack.c.b16 %v2571, %v2565
    %v4864 = vpack.c.b16 %v2572, %v2566
    %v4865 = vpack.c.b16 %v2573, %v2567
    %v4866 = vpack.c.b16 %v2580, %v2574
    %v4867 = vpack.c.b16 %v2581, %v2575
    %v4868 = vpack.c.b16 %v2582, %v2576
    %v4869 = vpack.c.b16 %v2583, %v2577
    %v4870 = vpack.c.b16 %v2584, %v2578
    %v4871 = vpack.c.b16 %v2585, %v2579
    %v4872 = vpack.c.b16 %v2592, %v2586
    %v4873 = vpack.c.b16 %v2593, %v2587
    %v4874 = vpack.c.b16 %v2594, %v2588
    %v4875 = vpack.c.b16 %v2595, %v2589
    %v4876 = vpack.c.b16 %v2596, %v2590
    %v4877 = vpack.c.b16 %v2597, %v2591
    %v4878 = vpack.c.b16 %v2604, %v2598
    %v4879 = vpack.c.b16 %v2605, %v2599
    %v4880 = vpack.c.b16 %v2606, %v2600
    %v4881 = vpack.c.b16 %v2607, %v2601
    %v4882 = vpack.c.b16 %v2608, %v2602
    %v4883 = vpack.c.b16 %v2609, %v2603
    %v4884 = vpack.c.b16 %v2616, %v2610
    %v4885 = vpack.c.b16 %v2617, %v2611
    %v4886 = vpack.c.b16 %v2618, %v2612
    %v4887 = vpack.c.b16 %v2619, %v2613
    %v4888 = vpack.c.b16 %v2620, %v2614
    %v4889 = vpack.c.b16 %v2621, %v2615
    %v4890 = vpack.c.b16 %v2628, %v2622
    %v4891 = vpack.c.b16 %v2629, %v2623
    %v4892 = vpack.c.b16 %v2630, %v2624
    %v4893 = vpack.c.b16 %v2631, %v2625
    %v4894 = vpack.c.b16 %v2632, %v2626
    %v4895 = vpack.c.b16 %v2633, %v2627
    %v4896 = vpack.c.b16 %v2640, %v2634
    %v4897 = vpack.c.b16 %v2641, %v2635
    %v4898 = vpack.c.b16 %v2642, %v2636
    %v4899 = vpack.c.b16 %v2643, %v2637
    %v4900 = vpack.c.b16 %v2644, %v2638
    %v4901 = vpack.c.b16 %v2645, %v2639
    %v4902 = vpack.c.b16 %v2652, %v2646
    %v4903 = vpack.c.b16 %v2653, %v2647
    %v4904 = vpack.c.b16 %v2654, %v2648
    %v4905 = vpack.c.b16 %v2655, %v2649
    %v4906 = vpack.c.b16 %v2656, %v2650
    %v4907 = vpack.c.b16 %v2657, %v2651
    %v4908 = vpack.c.b16 %v2664, %v2658
    %v4909 = vpack.c.b16 %v2665, %v2659
    %v4910 = vpack.c.b16 %v2666, %v2660
    %v4911 = vpack.c.b16 %v2667, %v2661
    %v4912 = vpack.c.b16 %v2668, %v2662
    %v4913 = vpack.c.b16 %v2669, %v2663
    %v4914 = vpack.c.b16 %v2676, %v2670
    %v4915 = vpack.c.b16 %v2677, %v2671
    %v4916 = vpack.c.b16 %v2678, %v2672
    %v4917 = vpack.c.b16 %v2679, %v2673
    %v4918 = vpack.c.b16 %v2680, %v2674
    %v4919 = vpack.c.b16 %v2681, %v2675
    %v4920 = vpack.c.b16 %v2688, %v2682
    %v4921 = vpack.c.b16 %v2689, %v2683
    %v4922 = vpack.c.b16 %v2690, %v2684
    %v4923 = vpack.c.b16 %v2691, %v2685
    %v4924 = vpack.c.b16 %v2692, %v2686
    %v4925 = vpack.c.b16 %v2693, %v2687
    %v4926 = vpack.c.b16 %v2700, %v2694
    %v4927 = vpack.c.b16 %v2701, %v2695
    %v4928 = vpack.c.b16 %v2702, %v2696
    %v4929 = vpack.c.b16 %v2703, %v2697
    %v4930 = vpack.c.b16 %v2704, %v2698
    %v4931 = vpack.c.b16 %v2705, %v2699
    %v4932 = vpack.c.b16 %v2712, %v2706
    %v4933 = vpack.c.b16 %v2713, %v2707
    %v4934 = vpack.c.b16 %v2714, %v2708
    %v4935 = vpack.c.b16 %v2715, %v2709
    %v4936 = vpack.c.b16 %v2716, %v2710
    %v4937 = vpack.c.b16 %v2717, %v2711
    %v4938 = vpack.c.b16 %v2724, %v2718
    %v4939 = vpack.c.b16 %v2725, %v2719
    %v4940 = vpack.c.b16 %v2726, %v2720
    %v4941 = vpack.c.b16 %v2727, %v2721
    %v4942 = vpack.c.b16 %v2728, %v2722
    %v4943 = vpack.c.b16 %v2729, %v2723
    %v4944 = vpack.c.b16 %v2736, %v2730
    %v4945 = vpack.c.b16 %v2737, %v2731
    %v4946 = vpack.c.b16 %v2738, %v2732
    %v4947 = vpack.c.b16 %v2739, %v2733
    %v4948 = vpack.c.b16 %v2740, %v2734
    %v4949 = vpack.c.b16 %v2741, %v2735
    %v4950 = vpack.c.b16 %v2748, %v2742
    %v4951 = vpack.c.b16 %v2749, %v2743
    %v4952 = vpack.c.b16 %v2750, %v2744
    %v4953 = vpack.c.b16 %v2751, %v2745
    %v4954 = vpack.c.b16 %v2752, %v2746
    %v4955 = vpack.c.b16 %v2753, %v2747
    %v4956 = vpack.c.b16 %v2760, %v2754
    %v4957 = vpack.c.b16 %v2761, %v2755
    %v4958 = vpack.c.b16 %v2762, %v2756
    %v4959 = vpack.c.b16 %v2763, %v2757
    %v4960 = vpack.c.b16 %v2764, %v2758
    %v4961 = vpack.c.b16 %v2765, %v2759
    %v4962 = vpack.c.b16 %v2772, %v2766
    %v4963 = vpack.c.b16 %v2773, %v2767
    %v4964 = vpack.c.b16 %v2774, %v2768
    %v4965 = vpack.c.b16 %v2775, %v2769
    %v4966 = vpack.c.b16 %v2776, %v2770
    %v4967 = vpack.c.b16 %v2777, %v2771
    %v4968 = vpack.c.b16 %v2784, %v2778
    %v4969 = vpack.c.b16 %v2785, %v2779
    %v4970 = vpack.c.b16 %v2786, %v2780
    %v4971 = vpack.c.b16 %v2787, %v2781
    %v4972 = vpack.c.b16 %v2788, %v2782
    %v4973 = vpack.c.b16 %v2789, %v2783
    %v4974 = vpack.c.b16 %v2796, %v2790
    %v4975 = vpack.c.b16 %v2797, %v2791
    %v4976 = vpack.c.b16 %v2798, %v2792
    %v4977 = vpack.c.b16 %v2799, %v2793
    %v4978 = vpack.c.b16 %v2800, %v2794
    %v4979 = vpack.c.b16 %v2801, %v2795
    %v4980 = vpack.c.b16 %v2808, %v2802
    %v4981 = vpack.c.b16 %v2809, %v2803
    %v4982 = vpack.c.b16 %v2810, %v2804
    %v4983 = vpack.c.b16 %v2811, %v2805
    %v4984 = vpack.c.b16 %v2812, %v2806
    %v4985 = vpack.c.b16 %v2813, %v2807
    %v4986 = vpack.c.b16 %v2820, %v2814
    %v4987 = vpack.c.b16 %v2821, %v2815
    %v4988 = vpack.c.b16 %v2822, %v2816
    %v4989 = vpack.c.b16 %v2823, %v2817
    %v4990 = vpack.c.b16 %v2824, %v2818
    %v4991 = vpack.c.b16 %v2825, %v2819
    %v4992 = vpack.c.b16 %v2832, %v2826
    %v4993 = vpack.c.b16 %v2833, %v2827
    %v4994 = vpack.c.b16 %v2834, %v2828
    %v4995 = vpack.c.b16 %v2835, %v2829
    %v4996 = vpack.c.b16 %v2836, %v2830
    %v4997 = vpack.c.b16 %v2837, %v2831
    %v4998 = vpack.c.b16 %v2844, %v2838
    %v4999 = vpack.c.b16 %v2845, %v2839
    %v5000 = vpack.c.b16 %v2846, %v2840
    %v5001 = vpack.c.b16 %v2847, %v2841
    %v5002 = vpack.c.b16 %v2848, %v2842
    %v5003 = vpack.c.b16 %v2849, %v2843
    %v5004 = vpack.c.b16 %v2856, %v2850
    %v5005 = vpack.c.b16 %v2857, %v2851
    %v5006 = vpack.c.b16 %v2858, %v2852
    %v5007 = vpack.c.b16 %v2859, %v2853
    %v5008 = vpack.c.b16 %v2860, %v2854
    %v5009 = vpack.c.b16 %v2861, %v2855
    %v5010 = vpack.c.b16 %v2868, %v2862
    %v5011 = vpack.c.b16 %v2869, %v2863
    %v5012 = vpack.c.b16 %v2870, %v2864
    %v5013 = vpack.c.b16 %v2871, %v2865
    %v5014 = vpack.c.b16 %v2872, %v2866
    %v5015 = vpack.c.b16 %v2873, %v2867
    %v5016 = vpack.c.b16 %v2880, %v2874
    %v5017 = vpack.c.b16 %v2881, %v2875
    %v5018 = vpack.c.b16 %v2882, %v2876
    %v5019 = vpack.c.b16 %v2883, %v2877
    %v5020 = vpack.c.b16 %v2884, %v2878
    %v5021 = vpack.c.b16 %v2885, %v2879
    %v5022 = vpack.c.b16 %v2892, %v2886
    %v5023 = vpack.c.b16 %v2893, %v2887
    %v5024 = vpack.c.b16 %v2894, %v2888
    %v5025 = vpack.c.b16 %v2895, %v2889
    %v5026 = vpack.c.b16 %v2896, %v2890
    %v5027 = vpack.c.b16 %v2897, %v2891
    %v5028 = vpack.c.b16 %v2904, %v2898
    %v5029 = vpack.c.b16 %v2905, %v2899
    %v5030 = vpack.c.b16 %v2906, %v2900
    %v5031 = vpack.c.b16 %v2907, %v2901
    %v5032 = vpack.c.b16 %v2908, %v2902
    %v5033 = vpack.c.b16 %v2909, %v2903
    %v5034 = vpack.c.b16 %v2916, %v2910
    %v5035 = vpack.c.b16 %v2917, %v2911
    %v5036 = vpack.c.b16 %v2918, %v2912
    %v5037 = vpack.c.b16 %v2919, %v2913
    %v5038 = vpack.c.b16 %v2920, %v2914
    %v5039 = vpack.c.b16 %v2921, %v2915
    %v5040 = vpack.c.b16 %v2928, %v2922
    %v5041 = vpack.c.b16 %v2929, %v2923
    %v5042 = vpack.c.b16 %v2930, %v2924
    %v5043 = vpack.c.b16 %v2931, %v2925
    %v5044 = vpack.c.b16 %v2932, %v2926
    %v5045 = vpack.c.b16 %v2933, %v2927
    %v5046 = vpack.c.b16 %v2940, %v2934
    %v5047 = vpack.c.b16 %v2941, %v2935
    %v5048 = vpack.c.b16 %v2942, %v2936
    %v5049 = vpack.c.b16 %v2943, %v2937
    %v5050 = vpack.c.b16 %v2944, %v2938
    %v5051 = vpack.c.b16 %v2945, %v2939
    %v5052 = vpack.c.b16 %v2952, %v2946
    %v5053 = vpack.c.b16 %v2953, %v2947
    %v5054 = vpack.c.b16 %v2954, %v2948
    %v5055 = vpack.c.b16 %v2955, %v2949
    %v5056 = vpack.c.b16 %v2956, %v2950
    %v5057 = vpack.c.b16 %v2957, %v2951
    %v5058 = vpack.c.b16 %v2964, %v2958
    %v5059 = vpack.c.b16 %v2965, %v2959
    %v5060 = vpack.c.b16 %v2966, %v2960
    %v5061 = vpack.c.b16 %v2967, %v2961
    %v5062 = vpack.c.b16 %v2968, %v2962
    %v5063 = vpack.c.b16 %v2969, %v2963
    %v5064 = vpack.c.b16 %v2976, %v2970
    %v5065 = vpack.c.b16 %v2977, %v2971
    %v5066 = vpack.c.b16 %v2978, %v2972
    %v5067 = vpack.c.b16 %v2979, %v2973
    %v5068 = vpack.c.b16 %v2980, %v2974
    %v5069 = vpack.c.b16 %v2981, %v2975
    %v5070 = vpack.c.b16 %v2988, %v2982
    %v5071 = vpack.c.b16 %v2989, %v2983
    %v5072 = vpack.c.b16 %v2990, %v2984
    %v5073 = vpack.c.b16 %v2991, %v2985
    %v5074 = vpack.c.b16 %v2992, %v2986
    %v5075 = vpack.c.b16 %v2993, %v2987
    %v5076 = vpack.c.b16 %v3000, %v2994
    %v5077 = vpack.c.b16 %v3001, %v2995
    %v5078 = vpack.c.b16 %v3002, %v2996
    %v5079 = vpack.c.b16 %v3003, %v2997
    %v5080 = vpack.c.b16 %v3004, %v2998
    %v5081 = vpack.c.b16 %v3005, %v2999
    %v5082 = vpack.c.b16 %v3012, %v3006
    %v5083 = vpack.c.b16 %v3013, %v3007
    %v5084 = vpack.c.b16 %v3014, %v3008
    %v5085 = vpack.c.b16 %v3015, %v3009
    %v5086 = vpack.c.b16 %v3016, %v3010
    %v5087 = vpack.c.b16 %v3017, %v3011
    %v5088 = vpack.c.b16 %v3024, %v3018
    %v5089 = vpack.c.b16 %v3025, %v3019
    %v5090 = vpack.c.b16 %v3026, %v3020
    %v5091 = vpack.c.b16 %v3027, %v3021
    %v5092 = vpack.c.b16 %v3028, %v3022
    %v5093 = vpack.c.b16 %v3029, %v3023
    %v5094 = vpack.c.b16 %v3036, %v3030
    %v5095 = vpack.c.b16 %v3037, %v3031
    %v5096 = vpack.c.b16 %v3038, %v3032
    %v5097 = vpack.c.b16 %v3039, %v3033
    %v5098 = vpack.c.b16 %v3040, %v3034
    %v5099 = vpack.c.b16 %v3041, %v3035
    %v5100 = vpack.c.b16 %v3048, %v3042
    %v5101 = vpack.c.b16 %v3049, %v3043
    %v5102 = vpack.c.b16 %v3050, %v3044
    %v5103 = vpack.c.b16 %v3051, %v3045
    %v5104 = vpack.c.b16 %v3052, %v3046
    %v5105 = vpack.c.b16 %v3053, %v3047
    %v5106 = vpack.c.b16 %v3060, %v3054
    %v5107 = vpack.c.b16 %v3061, %v3055
    %v5108 = vpack.c.b16 %v3062, %v3056
    %v5109 = vpack.c.b16 %v3063, %v3057
    %v5110 = vpack.c.b16 %v3064, %v3058
    %v5111 = vpack.c.b16 %v3065, %v3059
    %v5112 = vpack.c.b16 %v3072, %v3066
    %v5113 = vpack.c.b16 %v3073, %v3067
    %v5114 = vpack.c.b16 %v3074, %v3068
    %v5115 = vpack.c.b16 %v3075, %v3069
    %v5116 = vpack.c.b16 %v3076, %v3070
    %v5117 = vpack.c.b16 %v3077, %v3071
    %v5118 = vpack.c.b16 %v3084, %v3078
    %v5119 = vpack.c.b16 %v3085, %v3079
    %v5120 = vpack.c.b16 %v3086, %v3080
    %v5121 = vpack.c.b16 %v3087, %v3081
    %v5122 = vpack.c.b16 %v3088, %v3082
    %v5123 = vpack.c.b16 %v3089, %v3083
    %v5124 = vpack.c.b16 %v3096, %v3090
    %v5125 = vpack.c.b16 %v3097, %v3091
    %v5126 = vpack.c.b16 %v3098, %v3092
    %v5127 = vpack.c.b16 %v3099, %v3093
    %v5128 = vpack.c.b16 %v3100, %v3094
    %v5129 = vpack.c.b16 %v3101, %v3095
    %v5130 = vpack.c.b16 %v3108, %v3102
    %v5131 = vpack.c.b16 %v3109, %v3103
    %v5132 = vpack.c.b16 %v3110, %v3104
    %v5133 = vpack.c.b16 %v3111, %v3105
    %v5134 = vpack.c.b16 %v3112, %v3106
    %v5135 = vpack.c.b16 %v3113, %v3107
    %v5136 = vpack.c.b16 %v3120, %v3114
    %v5137 = vpack.c.b16 %v3121, %v3115
    %v5138 = vpack.c.b16 %v3122, %v3116
    %v5139 = vpack.c.b16 %v3123, %v3117
    %v5140 = vpack.c.b16 %v3124, %v3118
    %v5141 = vpack.c.b16 %v3125, %v3119
    %v5142 = vpack.c.b16 %v3132, %v3126
    %v5143 = vpack.c.b16 %v3133, %v3127
    %v5144 = vpack.c.b16 %v3134, %v3128
    %v5145 = vpack.c.b16 %v3135, %v3129
    %v5146 = vpack.c.b16 %v3136, %v3130
    %v5147 = vpack.c.b16 %v3137, %v3131
    %v5148 = vpack.c.b16 %v3144, %v3138
    %v5149 = vpack.c.b16 %v3145, %v3139
    %v5150 = vpack.c.b16 %v3146, %v3140
    %v5151 = vpack.c.b16 %v3147, %v3141
    %v5152 = vpack.c.b16 %v3148, %v3142
    %v5153 = vpack.c.b16 %v3149, %v3143
    %v5154 = vpack.c.b16 %v3156, %v3150
    %v5155 = vpack.c.b16 %v3157, %v3151
    %v5156 = vpack.c.b16 %v3158, %v3152
    %v5157 = vpack.c.b16 %v3159, %v3153
    %v5158 = vpack.c.b16 %v3160, %v3154
    %v5159 = vpack.c.b16 %v3161, %v3155
    %v5160 = vpack.c.b16 %v3168, %v3162
    %v5161 = vpack.c.b16 %v3169, %v3163
    %v5162 = vpack.c.b16 %v3170, %v3164
    %v5163 = vpack.c.b16 %v3171, %v3165
    %v5164 = vpack.c.b16 %v3172, %v3166
    %v5165 = vpack.c.b16 %v3173, %v3167
    %v5166 = vpack.c.b16 %v3180, %v3174
    %v5167 = vpack.c.b16 %v3181, %v3175
    %v5168 = vpack.c.b16 %v3182, %v3176
    %v5169 = vpack.c.b16 %v3183, %v3177
    %v5170 = vpack.c.b16 %v3184, %v3178
    %v5171 = vpack.c.b16 %v3185, %v3179
    %v5172 = vpack.c.b16 %v3192, %v3186
    %v5173 = vpack.c.b16 %v3193, %v3187
    %v5174 = vpack.c.b16 %v3194, %v3188
    %v5175 = vpack.c.b16 %v3195, %v3189
    %v5176 = vpack.c.b16 %v3196, %v3190
    %v5177 = vpack.c.b16 %v3197, %v3191
    %v5178 = vpack.c.b16 %v3204, %v3198
    %v5179 = vpack.c.b16 %v3205, %v3199
    %v5180 = vpack.c.b16 %v3206, %v3200
    %v5181 = vpack.c.b16 %v3207, %v3201
    %v5182 = vpack.c.b16 %v3208, %v3202
    %v5183 = vpack.c.b16 %v3209, %v3203
    %v5184 = vpack.c.b16 %v3216, %v3210
    %v5185 = vpack.c.b16 %v3217, %v3211
    %v5186 = vpack.c.b16 %v3218, %v3212
    %v5187 = vpack.c.b16 %v3219, %v3213
    %v5188 = vpack.c.b16 %v3220, %v3214
    %v5189 = vpack.c.b16 %v3221, %v3215
    %v5190 = vpack.c.b16 %v3228, %v3222
    %v5191 = vpack.c.b16 %v3229, %v3223
    %v5192 = vpack.c.b16 %v3230, %v3224
    %v5193 = vpack.c.b16 %v3231, %v3225
    %v5194 = vpack.c.b16 %v3232, %v3226
    %v5195 = vpack.c.b16 %v3233, %v3227
    %v5196 = vpack.c.b16 %v3240, %v3234
    %v5197 = vpack.c.b16 %v3241, %v3235
    %v5198 = vpack.c.b16 %v3242, %v3236
    %v5199 = vpack.c.b16 %v3243, %v3237
    %v5200 = vpack.c.b16 %v3244, %v3238
    %v5201 = vpack.c.b16 %v3245, %v3239
    %v5202 = vpack.c.b16 %v3252, %v3246
    %v5203 = vpack.c.b16 %v3253, %v3247
    %v5204 = vpack.c.b16 %v3254, %v3248
    %v5205 = vpack.c.b16 %v3255, %v3249
    %v5206 = vpack.c.b16 %v3256, %v3250
    %v5207 = vpack.c.b16 %v3257, %v3251
    %v5208 = vpack.c.b16 %v3264, %v3258
    %v5209 = vpack.c.b16 %v3265, %v3259
    %v5210 = vpack.c.b16 %v3266, %v3260
    %v5211 = vpack.c.b16 %v3267, %v3261
    %v5212 = vpack.c.b16 %v3268, %v3262
    %v5213 = vpack.c.b16 %v3269, %v3263
    %v5214 = vpack.c.b16 %v3276, %v3270
    %v5215 = vpack.c.b16 %v3277, %v3271
    %v5216 = vpack.c.b16 %v3278, %v3272
    %v5217 = vpack.c.b16 %v3279, %v3273
    %v5218 = vpack.c.b16 %v3280, %v3274
    %v5219 = vpack.c.b16 %v3281, %v3275
    %v5220 = vpack.c.b16 %v3288, %v3282
    %v5221 = vpack.c.b16 %v3289, %v3283
    %v5222 = vpack.c.b16 %v3290, %v3284
    %v5223 = vpack.c.b16 %v3291, %v3285
    %v5224 = vpack.c.b16 %v3292, %v3286
    %v5225 = vpack.c.b16 %v3293, %v3287
    %v5226 = vpack.c.b16 %v3300, %v3294
    %v5227 = vpack.c.b16 %v3301, %v3295
    %v5228 = vpack.c.b16 %v3302, %v3296
    %v5229 = vpack.c.b16 %v3303, %v3297
    %v5230 = vpack.c.b16 %v3304, %v3298
    %v5231 = vpack.c.b16 %v3305, %v3299
    %v5232 = vpack.c.b16 %v3312, %v3306
    %v5233 = vpack.c.b16 %v3313, %v3307
    %v5234 = vpack.c.b16 %v3314, %v3308
    %v5235 = vpack.c.b16 %v3315, %v3309
    %v5236 = vpack.c.b16 %v3316, %v3310
    %v5237 = vpack.c.b16 %v3317, %v3311
    %v5238 = vpack.c.b16 %v3324, %v3318
    %v5239 = vpack.c.b16 %v3325, %v3319
    %v5240 = vpack.c.b16 %v3326, %v3320
    %v5241 = vpack.c.b16 %v3327, %v3321
    %v5242 = vpack.c.b16 %v3328, %v3322
    %v5243 = vpack.c.b16 %v3329, %v3323
    %v5244 = vpack.c.b16 %v3336, %v3330
    %v5245 = vpack.c.b16 %v3337, %v3331
    %v5246 = vpack.c.b16 %v3338, %v3332
    %v5247 = vpack.c.b16 %v3339, %v3333
    %v5248 = vpack.c.b16 %v3340, %v3334
    %v5249 = vpack.c.b16 %v3341, %v3335
    %v5250 = vpack.c.b16 %v3348, %v3342
    %v5251 = vpack.c.b16 %v3349, %v3343
    %v5252 = vpack.c.b16 %v3350, %v3344
    %v5253 = vpack.c.b16 %v3351, %v3345
    %v5254 = vpack.c.b16 %v3352, %v3346
    %v5255 = vpack.c.b16 %v3353, %v3347
    %v5256 = vpack.c.b16 %v3360, %v3354
    %v5257 = vpack.c.b16 %v3361, %v3355
    %v5258 = vpack.c.b16 %v3362, %v3356
    %v5259 = vpack.c.b16 %v3363, %v3357
    %v5260 = vpack.c.b16 %v3364, %v3358
    %v5261 = vpack.c.b16 %v3365, %v3359
    %v5262 = vpack.c.b16 %v3372, %v3366
    %v5263 = vpack.c.b16 %v3373, %v3367
    %v5264 = vpack.c.b16 %v3374, %v3368
    %v5265 = vpack.c.b16 %v3375, %v3369
    %v5266 = vpack.c.b16 %v3376, %v3370
    %v5267 = vpack.c.b16 %v3377, %v3371
    %v5268 = vpack.c.b16 %v3384, %v3378
    %v5269 = vpack.c.b16 %v3385, %v3379
    %v5270 = vpack.c.b16 %v3386, %v3380
    %v5271 = vpack.c.b16 %v3387, %v3381
    %v5272 = vpack.c.b16 %v3388, %v3382
    %v5273 = vpack.c.b16 %v3389, %v3383
    %v5274 = vpack.c.b16 %v3396, %v3390
    %v5275 = vpack.c.b16 %v3397, %v3391
    %v5276 = vpack.c.b16 %v3398, %v3392
    %v5277 = vpack.c.b16 %v3399, %v3393
    %v5278 = vpack.c.b16 %v3400, %v3394
    %v5279 = vpack.c.b16 %v3401, %v3395
    %v5280 = vpack.c.b16 %v3408, %v3402
    %v5281 = vpack.c.b16 %v3409, %v3403
    %v5282 = vpack.c.b16 %v3410, %v3404
    %v5283 = vpack.c.b16 %v3411, %v3405
    %v5284 = vpack.c.b16 %v3412, %v3406
    %v5285 = vpack.c.b16 %v3413, %v3407
    %v5286 = vpack.c.b16 %v3420, %v3414
    %v5287 = vpack.c.b16 %v3421, %v3415
    %v5288 = vpack.c.b16 %v3422, %v3416
    %v5289 = vpack.c.b16 %v3423, %v3417
    %v5290 = vpack.c.b16 %v3424, %v3418
    %v5291 = vpack.c.b16 %v3425, %v3419
    %v5292 = vpack.c.b16 %v3432, %v3426
    %v5293 = vpack.c.b16 %v3433, %v3427
    %v5294 = vpack.c.b16 %v3434, %v3428
    %v5295 = vpack.c.b16 %v3435, %v3429
    %v5296 = vpack.c.b16 %v3436, %v3430
    %v5297 = vpack.c.b16 %v3437, %v3431
    %v5298 = vpack.c.b16 %v3444, %v3438
    %v5299 = vpack.c.b16 %v3445, %v3439
    %v5300 = vpack.c.b16 %v3446, %v3440
    %v5301 = vpack.c.b16 %v3447, %v3441
    %v5302 = vpack.c.b16 %v3448, %v3442
    %v5303 = vpack.c.b16 %v3449, %v3443
    %v5304 = vpack.c.b16 %v3456, %v3450
    %v5305 = vpack.c.b16 %v3457, %v3451
    %v5306 = vpack.c.b16 %v3458, %v3452
    %v5307 = vpack.c.b16 %v3459, %v3453
    %v5308 = vpack.c.b16 %v3460, %v3454
    %v5309 = vpack.c.b16 %v3461, %v3455
    %v5310 = vpack.c.b16 %v3468, %v3462
    %v5311 = vpack.c.b16 %v3469, %v3463
    %v5312 = vpack.c.b16 %v3470, %v3464
    %v5313 = vpack.c.b16 %v3471, %v3465
    %v5314 = vpack.c.b16 %v3472, %v3466
    %v5315 = vpack.c.b16 %v3473, %v3467
    %v5316 = vpack.c.b16 %v3480, %v3474
    %v5317 = vpack.c.b16 %v3481, %v3475
    %v5318 = vpack.c.b16 %v3482, %v3476
    %v5319 = vpack.c.b16 %v3483, %v3477
    %v5320 = vpack.c.b16 %v3484, %v3478
    %v5321 = vpack.c.b16 %v3485, %v3479
    %v5322 = vpack.c.b16 %v3492, %v3486
    %v5323 = vpack.c.b16 %v3493, %v3487
    %v5324 = vpack.c.b16 %v3494, %v3488
    %v5325 = vpack.c.b16 %v3495, %v3489
    %v5326 = vpack.c.b16 %v3496, %v3490
    %v5327 = vpack.c.b16 %v3497, %v3491
    %v5328 = vpack.c.b16 %v3504, %v3498
    %v5329 = vpack.c.b16 %v3505, %v3499
    %v5330 = vpack.c.b16 %v3506, %v3500
    %v5331 = vpack.c.b16 %v3507, %v3501
    %v5332 = vpack.c.b16 %v3508, %v3502
    %v5333 = vpack.c.b16 %v3509, %v3503
    %v5334 = vpack.c.b16 %v3516, %v3510
    %v5335 = vpack.c.b16 %v3517, %v3511
    %v5336 = vpack.c.b16 %v3518, %v3512
    %v5337 = vpack.c.b16 %v3519, %v3513
    %v5338 = vpack.c.b16 %v3520, %v3514
    %v5339 = vpack.c.b16 %v3521, %v3515
    %v5340 = vpack.c.b16 %v3528, %v3522
    %v5341 = vpack.c.b16 %v3529, %v3523
    %v5342 = vpack.c.b16 %v3530, %v3524
    %v5343 = vpack.c.b16 %v3531, %v3525
    %v5344 = vpack.c.b16 %v3532, %v3526
    %v5345 = vpack.c.b16 %v3533, %v3527
    %v5346 = vpack.c.b16 %v3540, %v3534
    %v5347 = vpack.c.b16 %v3541, %v3535
    %v5348 = vpack.c.b16 %v3542, %v3536
    %v5349 = vpack.c.b16 %v3543, %v3537
    %v5350 = vpack.c.b16 %v3544, %v3538
    %v5351 = vpack.c.b16 %v3545, %v3539
    %v5352 = vpack.c.b16 %v3552, %v3546
    %v5353 = vpack.c.b16 %v3553, %v3547
    %v5354 = vpack.c.b16 %v3554, %v3548
    %v5355 = vpack.c.b16 %v3555, %v3549
    %v5356 = vpack.c.b16 %v3556, %v3550
    %v5357 = vpack.c.b16 %v3557, %v3551
    %v5358 = vpack.c.b16 %v3564, %v3558
    %v5359 = vpack.c.b16 %v3565, %v3559
    %v5360 = vpack.c.b16 %v3566, %v3560
    %v5361 = vpack.c.b16 %v3567, %v3561
    %v5362 = vpack.c.b16 %v3568, %v3562
    %v5363 = vpack.c.b16 %v3569, %v3563
    %v5364 = vpack.c.b16 %v3576, %v3570
    %v5365 = vpack.c.b16 %v3577, %v3571
    %v5366 = vpack.c.b16 %v3578, %v3572
    %v5367 = vpack.c.b16 %v3579, %v3573
    %v5368 = vpack.c.b16 %v3580, %v3574
    %v5369 = vpack.c.b16 %v3581, %v3575
    %v5370 = vpack.c.b16 %v3588, %v3582
    %v5371 = vpack.c.b16 %v3589, %v3583
    %v5372 = vpack.c.b16 %v3590, %v3584
    %v5373 = vpack.c.b16 %v3591, %v3585
    %v5374 = vpack.c.b16 %v3592, %v3586
    %v5375 = vpack.c.b16 %v3593, %v3587
    %v5376 = vpack.c.b16 %v3600, %v3594
    %v5377 = vpack.c.b16 %v3601, %v3595
    %v5378 = vpack.c.b16 %v3602, %v3596
    %v5379 = vpack.c.b16 %v3603, %v3597
    %v5380 = vpack.c.b16 %v3604, %v3598
    %v5381 = vpack.c.b16 %v3605, %v3599
    %v5382 = vpack.c.b16 %v3612, %v3606
    %v5383 = vpack.c.b16 %v3613, %v3607
    %v5384 = vpack.c.b16 %v3614, %v3608
    %v5385 = vpack.c.b16 %v3615, %v3609
    %v5386 = vpack.c.b16 %v3616, %v3610
    %v5387 = vpack.c.b16 %v3617, %v3611
    %v5388 = vpack.c.b16 %v3624, %v3618
    %v5389 = vpack.c.b16 %v3625, %v3619
    %v5390 = vpack.c.b16 %v3626, %v3620
    %v5391 = vpack.c.b16 %v3627, %v3621
    %v5392 = vpack.c.b16 %v3628, %v3622
    %v5393 = vpack.c.b16 %v3629, %v3623
    %v5394 = vpack.c.b16 %v3636, %v3630
    %v5395 = vpack.c.b16 %v3637, %v3631
    %v5396 = vpack.c.b16 %v3638, %v3632
    %v5397 = vpack.c.b16 %v3639, %v3633
    %v5398 = vpack.c.b16 %v3640, %v3634
    %v5399 = vpack.c.b16 %v3641, %v3635
    %v5400 = vpack.c.b16 %v3648, %v3642
    %v5401 = vpack.c.b16 %v3649, %v3643
    %v5402 = vpack.c.b16 %v3650, %v3644
    %v5403 = vpack.c.b16 %v3651, %v3645
    %v5404 = vpack.c.b16 %v3652, %v3646
    %v5405 = vpack.c.b16 %v3653, %v3647
    %v5406 = vpack.c.b16 %v3660, %v3654
    %v5407 = vpack.c.b16 %v3661, %v3655
    %v5408 = vpack.c.b16 %v3662, %v3656
    %v5409 = vpack.c.b16 %v3663, %v3657
    %v5410 = vpack.c.b16 %v3664, %v3658
    %v5411 = vpack.c.b16 %v3665, %v3659
    %v5412 = vpack.c.b16 %v3672, %v3666
    %v5413 = vpack.c.b16 %v3673, %v3667
    %v5414 = vpack.c.b16 %v3674, %v3668
    %v5415 = vpack.c.b16 %v3675, %v3669
    %v5416 = vpack.c.b16 %v3676, %v3670
    %v5417 = vpack.c.b16 %v3677, %v3671
    %v5418 = vpack.c.b16 %v3684, %v3678
    %v5419 = vpack.c.b16 %v3685, %v3679
    %v5420 = vpack.c.b16 %v3686, %v3680
    %v5421 = vpack.c.b16 %v3687, %v3681
    %v5422 = vpack.c.b16 %v3688, %v3682
    %v5423 = vpack.c.b16 %v3689, %v3683
    %v5424 = vpack.c.b16 %v3696, %v3690
    %v5425 = vpack.c.b16 %v3697, %v3691
    %v5426 = vpack.c.b16 %v3698, %v3692
    %v5427 = vpack.c.b16 %v3699, %v3693
    %v5428 = vpack.c.b16 %v3700, %v3694
    %v5429 = vpack.c.b16 %v3701, %v3695
    %v5430 = vpack.c.b16 %v3708, %v3702
    %v5431 = vpack.c.b16 %v3709, %v3703
    %v5432 = vpack.c.b16 %v3710, %v3704
    %v5433 = vpack.c.b16 %v3711, %v3705
    %v5434 = vpack.c.b16 %v3712, %v3706
    %v5435 = vpack.c.b16 %v3713, %v3707
    %v5436 = vpack.c.b16 %v3720, %v3714
    %v5437 = vpack.c.b16 %v3721, %v3715
    %v5438 = vpack.c.b16 %v3722, %v3716
    %v5439 = vpack.c.b16 %v3723, %v3717
    %v5440 = vpack.c.b16 %v3724, %v3718
    %v5441 = vpack.c.b16 %v3725, %v3719
    %v5442 = vpack.c.b16 %v3732, %v3726
    %v5443 = vpack.c.b16 %v3733, %v3727
    %v5444 = vpack.c.b16 %v3734, %v3728
    %v5445 = vpack.c.b16 %v3735, %v3729
    %v5446 = vpack.c.b16 %v3736, %v3730
    %v5447 = vpack.c.b16 %v3737, %v3731
    %v5448 = vpack.c.b16 %v3744, %v3738
    %v5449 = vpack.c.b16 %v3745, %v3739
    %v5450 = vpack.c.b16 %v3746, %v3740
    %v5451 = vpack.c.b16 %v3747, %v3741
    %v5452 = vpack.c.b16 %v3748, %v3742
    %v5453 = vpack.c.b16 %v3749, %v3743
    %v5454 = vpack.c.b16 %v3756, %v3750
    %v5455 = vpack.c.b16 %v3757, %v3751
    %v5456 = vpack.c.b16 %v3758, %v3752
    %v5457 = vpack.c.b16 %v3759, %v3753
    %v5458 = vpack.c.b16 %v3760, %v3754
    %v5459 = vpack.c.b16 %v3761, %v3755
    %v5460 = vpack.c.b16 %v3768, %v3762
    %v5461 = vpack.c.b16 %v3769, %v3763
    %v5462 = vpack.c.b16 %v3770, %v3764
    %v5463 = vpack.c.b16 %v3771, %v3765
    %v5464 = vpack.c.b16 %v3772, %v3766
    %v5465 = vpack.c.b16 %v3773, %v3767
    %v5466 = vpack.c.b16 %v3780, %v3774
    %v5467 = vpack.c.b16 %v3781, %v3775
    %v5468 = vpack.c.b16 %v3782, %v3776
    %v5469 = vpack.c.b16 %v3783, %v3777
    %v5470 = vpack.c.b16 %v3784, %v3778
    %v5471 = vpack.c.b16 %v3785, %v3779
    %v5472 = vpack.c.b16 %v3792, %v3786
    %v5473 = vpack.c.b16 %v3793, %v3787
    %v5474 = vpack.c.b16 %v3794, %v3788
    %v5475 = vpack.c.b16 %v3795, %v3789
    %v5476 = vpack.c.b16 %v3796, %v3790
    %v5477 = vpack.c.b16 %v3797, %v3791
    %v5478 = vpack.c.b16 %v3804, %v3798
    %v5479 = vpack.c.b16 %v3805, %v3799
    %v5480 = vpack.c.b16 %v3806, %v3800
    %v5481 = vpack.c.b16 %v3807, %v3801
    %v5482 = vpack.c.b16 %v3808, %v3802
    %v5483 = vpack.c.b16 %v3809, %v3803
    %v5484 = vpack.c.b16 %v3816, %v3810
    %v5485 = vpack.c.b16 %v3817, %v3811
    %v5486 = vpack.c.b16 %v3818, %v3812
    %v5487 = vpack.c.b16 %v3819, %v3813
    %v5488 = vpack.c.b16 %v3820, %v3814
    %v5489 = vpack.c.b16 %v3821, %v3815
    %v5490 = vpack.c.b16 %v3828, %v3822
    %v5491 = vpack.c.b16 %v3829, %v3823
    %v5492 = vpack.c.b16 %v3830, %v3824
    %v5493 = vpack.c.b16 %v3831, %v3825
    %v5494 = vpack.c.b16 %v3832, %v3826
    %v5495 = vpack.c.b16 %v3833, %v3827
    %v5496 = vpack.c.b16 %v3840, %v3834
    %v5497 = vpack.c.b16 %v3841, %v3835
    %v5498 = vpack.c.b16 %v3842, %v3836
    %v5499 = vpack.c.b16 %v3843, %v3837
    %v5500 = vpack.c.b16 %v3844, %v3838
    %v5501 = vpack.c.b16 %v3845, %v3839
    %v5502 = vpack.c.b16 %v3852, %v3846
    %v5503 = vpack.c.b16 %v3853, %v3847
    %v5504 = vpack.c.b16 %v3854, %v3848
    %v5505 = vpack.c.b16 %v3855, %v3849
    %v5506 = vpack.c.b16 %v3856, %v3850
    %v5507 = vpack.c.b16 %v3857, %v3851
    %v5508 = vpack.c.b16 %v3864, %v3858
    %v5509 = vpack.c.b16 %v3865, %v3859
    %v5510 = vpack.c.b16 %v3866, %v3860
    %v5511 = vpack.c.b16 %v3867, %v3861
    %v5512 = vpack.c.b16 %v3868, %v3862
    %v5513 = vpack.c.b16 %v3869, %v3863
    %v5514 = vpack.c.b16 %v3876, %v3870
    %v5515 = vpack.c.b16 %v3877, %v3871
    %v5516 = vpack.c.b16 %v3878, %v3872
    %v5517 = vpack.c.b16 %v3879, %v3873
    %v5518 = vpack.c.b16 %v3880, %v3874
    %v5519 = vpack.c.b16 %v3881, %v3875
    %v5520 = vpack.c.b16 %v3888, %v3882
    %v5521 = vpack.c.b16 %v3889, %v3883
    %v5522 = vpack.c.b16 %v3890, %v3884
    %v5523 = vpack.c.b16 %v3891, %v3885
    %v5524 = vpack.c.b16 %v3892, %v3886
    %v5525 = vpack.c.b16 %v3893, %v3887
    %v5526 = vpack.c.b16 %v3900, %v3894
    %v5527 = vpack.c.b16 %v3901, %v3895
    %v5528 = vpack.c.b16 %v3902, %v3896
    %v5529 = vpack.c.b16 %v3903, %v3897
    %v5530 = vpack.c.b16 %v3904, %v3898
    %v5531 = vpack.c.b16 %v3905, %v3899
    %v5532 = vpack.c.b16 %v3912, %v3906
    %v5533 = vpack.c.b16 %v3913, %v3907
    %v5534 = vpack.c.b16 %v3914, %v3908
    %v5535 = vpack.c.b16 %v3915, %v3909
    %v5536 = vpack.c.b16 %v3916, %v3910
    %v5537 = vpack.c.b16 %v3917, %v3911
    %v5538 = vpack.c.b16 %v3924, %v3918
    %v5539 = vpack.c.b16 %v3925, %v3919
    %v5540 = vpack.c.b16 %v3926, %v3920
    %v5541 = vpack.c.b16 %v3927, %v3921
    %v5542 = vpack.c.b16 %v3928, %v3922
    %v5543 = vpack.c.b16 %v3929, %v3923
    %v5544 = vpack.c.b16 %v3936, %v3930
    %v5545 = vpack.c.b16 %v3937, %v3931
    %v5546 = vpack.c.b16 %v3938, %v3932
    %v5547 = vpack.c.b16 %v3939, %v3933
    %v5548 = vpack.c.b16 %v3940, %v3934
    %v5549 = vpack.c.b16 %v3941, %v3935
    %v5550 = vpack.c.b16 %v3948, %v3942
    %v5551 = vpack.c.b16 %v3949, %v3943
    %v5552 = vpack.c.b16 %v3950, %v3944
    %v5553 = vpack.c.b16 %v3951, %v3945
    %v5554 = vpack.c.b16 %v3952, %v3946
    %v5555 = vpack.c.b16 %v3953, %v3947
    %v5556 = vpack.c.b16 %v3960, %v3954
    %v5557 = vpack.c.b16 %v3961, %v3955
    %v5558 = vpack.c.b16 %v3962, %v3956
    %v5559 = vpack.c.b16 %v3963, %v3957
    %v5560 = vpack.c.b16 %v3964, %v3958
    %v5561 = vpack.c.b16 %v3965, %v3959
    %v5562 = vpack.c.b16 %v3972, %v3966
    %v5563 = vpack.c.b16 %v3973, %v3967
    %v5564 = vpack.c.b16 %v3974, %v3968
    %v5565 = vpack.c.b16 %v3975, %v3969
    %v5566 = vpack.c.b16 %v3976, %v3970
    %v5567 = vpack.c.b16 %v3977, %v3971
    %v5568 = vpack.c.b16 %v3984, %v3978
    %v5569 = vpack.c.b16 %v3985, %v3979
    %v5570 = vpack.c.b16 %v3986, %v3980
    %v5571 = vpack.c.b16 %v3987, %v3981
    %v5572 = vpack.c.b16 %v3988, %v3982
    %v5573 = vpack.c.b16 %v3989, %v3983
    %v5574 = vpack.c.b16 %v3996, %v3990
    %v5575 = vpack.c.b16 %v3997, %v3991
    %v5576 = vpack.c.b16 %v3998, %v3992
    %v5577 = vpack.c.b16 %v3999, %v3993
    %v5578 = vpack.c.b16 %v4000, %v3994
    %v5579 = vpack.c.b16 %v4001, %v3995
    %v5580 = vpack.c.b16 %v4008, %v4002
    %v5581 = vpack.c.b16 %v4009, %v4003
    %v5582 = vpack.c.b16 %v4010, %v4004
    %v5583 = vpack.c.b16 %v4011, %v4005
    %v5584 = vpack.c.b16 %v4012, %v4006
    %v5585 = vpack.c.b16 %v4013, %v4007
    %v5586 = vpack.c.b16 %v4020, %v4014
    %v5587 = vpack.c.b16 %v4021, %v4015
    %v5588 = vpack.c.b16 %v4022, %v4016
    %v5589 = vpack.c.b16 %v4023, %v4017
    %v5590 = vpack.c.b16 %v4024, %v4018
    %v5591 = vpack.c.b16 %v4025, %v4019
    %v5592 = vpack.c.b16 %v4032, %v4026
    %v5593 = vpack.c.b16 %v4033, %v4027
    %v5594 = vpack.c.b16 %v4034, %v4028
    %v5595 = vpack.c.b16 %v4035, %v4029
    %v5596 = vpack.c.b16 %v4036, %v4030
    %v5597 = vpack.c.b16 %v4037, %v4031
    %v5598 = vpack.c.b16 %v4044, %v4038
    %v5599 = vpack.c.b16 %v4045, %v4039
    %v5600 = vpack.c.b16 %v4046, %v4040
    %v5601 = vpack.c.b16 %v4047, %v4041
    %v5602 = vpack.c.b16 %v4048, %v4042
    %v5603 = vpack.c.b16 %v4049, %v4043
    %v5604 = vpack.c.b16 %v4056, %v4050
    %v5605 = vpack.c.b16 %v4057, %v4051
    %v5606 = vpack.c.b16 %v4058, %v4052
    %v5607 = vpack.c.b16 %v4059, %v4053
    %v5608 = vpack.c.b16 %v4060, %v4054
    %v5609 = vpack.c.b16 %v4061, %v4055
    %v5610 = vpack.c.b16 %v4068, %v4062
    %v5611 = vpack.c.b16 %v4069, %v4063
    %v5612 = vpack.c.b16 %v4070, %v4064
    %v5613 = vpack.c.b16 %v4071, %v4065
    %v5614 = vpack.c.b16 %v4072, %v4066
    %v5615 = vpack.c.b16 %v4073, %v4067
    %v5616 = vpack.c.b16 %v4080, %v4074
    %v5617 = vpack.c.b16 %v4081, %v4075
    %v5618 = vpack.c.b16 %v4082, %v4076
    %v5619 = vpack.c.b16 %v4083, %v4077
    %v5620 = vpack.c.b16 %v4084, %v4078
    %v5621 = vpack.c.b16 %v4085, %v4079
    %v5622 = vpack.c.b16 %v4092, %v4086
    %v5623 = vpack.c.b16 %v4093, %v4087
    %v5624 = vpack.c.b16 %v4094, %v4088
    %v5625 = vpack.c.b16 %v4095, %v4089
    %v5626 = vpack.c.b16 %v4096, %v4090
    %v5627 = vpack.c.b16 %v4097, %v4091
    %v5628 = vpack.c.b16 %v4104, %v4098
    %v5629 = vpack.c.b16 %v4105, %v4099
    %v5630 = vpack.c.b16 %v4106, %v4100
    %v5631 = vpack.c.b16 %v4107, %v4101
    %v5632 = vpack.c.b16 %v4108, %v4102
    %v5633 = vpack.c.b16 %v4109, %v4103
    %v5634 = vpack.c.b16 %v4116, %v4110
    %v5635 = vpack.c.b16 %v4117, %v4111
    %v5636 = vpack.c.b16 %v4118, %v4112
    %v5637 = vpack.c.b16 %v4119, %v4113
    %v5638 = vpack.c.b16 %v4120, %v4114
    %v5639 = vpack.c.b16 %v4121, %v4115
    %v5640 = vpack.c.b16 %v4128, %v4122
    %v5641 = vpack.c.b16 %v4129, %v4123
    %v5642 = vpack.c.b16 %v4130, %v4124
    %v5643 = vpack.c.b16 %v4131, %v4125
    %v5644 = vpack.c.b16 %v4132, %v4126
    %v5645 = vpack.c.b16 %v4133, %v4127
    %v5646 = vpack.c.b16 %v4140, %v4134
    %v5647 = vpack.c.b16 %v4141, %v4135
    %v5648 = vpack.c.b16 %v4142, %v4136
    %v5649 = vpack.c.b16 %v4143, %v4137
    %v5650 = vpack.c.b16 %v4144, %v4138
    %v5651 = vpack.c.b16 %v4145, %v4139
    %v5652 = vpack.c.b16 %v4152, %v4146
    %v5653 = vpack.c.b16 %v4153, %v4147
    %v5654 = vpack.c.b16 %v4154, %v4148
    %v5655 = vpack.c.b16 %v4155, %v4149
    %v5656 = vpack.c.b16 %v4156, %v4150
    %v5657 = vpack.c.b16 %v4157, %v4151
    %v5658 = vpack.c.b16 %v4164, %v4158
    %v5659 = vpack.c.b16 %v4165, %v4159
    %v5660 = vpack.c.b16 %v4166, %v4160
    %v5661 = vpack.c.b16 %v4167, %v4161
    %v5662 = vpack.c.b16 %v4168, %v4162
    %v5663 = vpack.c.b16 %v4169, %v4163
    %v5664 = vpack.c.b16 %v4176, %v4170
    %v5665 = vpack.c.b16 %v4177, %v4171
    %v5666 = vpack.c.b16 %v4178, %v4172
    %v5667 = vpack.c.b16 %v4179, %v4173
    %v5668 = vpack.c.b16 %v4180, %v4174
    %v5669 = vpack.c.b16 %v4181, %v4175
    %v5670 = vpack.c.b16 %v4188, %v4182
    %v5671 = vpack.c.b16 %v4189, %v4183
    %v5672 = vpack.c.b16 %v4190, %v4184
    %v5673 = vpack.c.b16 %v4191, %v4185
    %v5674 = vpack.c.b16 %v4192, %v4186
    %v5675 = vpack.c.b16 %v4193, %v4187
    %v5676 = vpack.c.b16 %v4200, %v4194
    %v5677 = vpack.c.b16 %v4201, %v4195
    %v5678 = vpack.c.b16 %v4202, %v4196
    %v5679 = vpack.c.b16 %v4203, %v4197
    %v5680 = vpack.c.b16 %v4204, %v4198
    %v5681 = vpack.c.b16 %v4205, %v4199
    %v5682 = vpack.c.b16 %v4212, %v4206
    %v5683 = vpack.c.b16 %v4213, %v4207
    %v5684 = vpack.c.b16 %v4214, %v4208
    %v5685 = vpack.c.b16 %v4215, %v4209
    %v5686 = vpack.c.b16 %v4216, %v4210
    %v5687 = vpack.c.b16 %v4217, %v4211
    %v5688 = vpack.c.b16 %v4224, %v4218
    %v5689 = vpack.c.b16 %v4225, %v4219
    %v5690 = vpack.c.b16 %v4226, %v4220
    %v5691 = vpack.c.b16 %v4227, %v4221
    %v5692 = vpack.c.b16 %v4228, %v4222
    %v5693 = vpack.c.b16 %v4229, %v4223
    %v5694 = vpack.c.b16 %v4236, %v4230
    %v5695 = vpack.c.b16 %v4237, %v4231
    %v5696 = vpack.c.b16 %v4238, %v4232
    %v5697 = vpack.c.b16 %v4239, %v4233
    %v5698 = vpack.c.b16 %v4240, %v4234
    %v5699 = vpack.c.b16 %v4241, %v4235
    %v5700 = vpack.c.b16 %v4248, %v4242
    %v5701 = vpack.c.b16 %v4249, %v4243
    %v5702 = vpack.c.b16 %v4250, %v4244
    %v5703 = vpack.c.b16 %v4251, %v4245
    %v5704 = vpack.c.b16 %v4252, %v4246
    %v5705 = vpack.c.b16 %v4253, %v4247
    %v5706 = vpack.c.b16 %v4260, %v4254
    %v5707 = vpack.c.b16 %v4261, %v4255
    %v5708 = vpack.c.b16 %v4262, %v4256
    %v5709 = vpack.c.b16 %v4263, %v4257
    %v5710 = vpack.c.b16 %v4264, %v4258
    %v5711 = vpack.c.b16 %v4265, %v4259
    %v5712 = vpack.c.b16 %v4272, %v4266
    %v5713 = vpack.c.b16 %v4273, %v4267
    %v5714 = vpack.c.b16 %v4274, %v4268
    %v5715 = vpack.c.b16 %v4275, %v4269
    %v5716 = vpack.c.b16 %v4276, %v4270
    %v5717 = vpack.c.b16 %v4277, %v4271
    %v5718 = vpack.c.b16 %v4284, %v4278
    %v5719 = vpack.c.b16 %v4285, %v4279
    %v5720 = vpack.c.b16 %v4286, %v4280
    %v5721 = vpack.c.b16 %v4287, %v4281
    %v5722 = vpack.c.b16 %v4288, %v4282
    %v5723 = vpack.c.b16 %v4289, %v4283
    %v5724 = vpack.c.b16 %v4296, %v4290
    %v5725 = vpack.c.b16 %v4297, %v4291
    %v5726 = vpack.c.b16 %v4298, %v4292
    %v5727 = vpack.c.b16 %v4299, %v4293
    %v5728 = vpack.c.b16 %v4300, %v4294
    %v5729 = vpack.c.b16 %v4301, %v4295
    %v5730 = vpack.c.b16 %v4308, %v4302
    %v5731 = vpack.c.b16 %v4309, %v4303
    %v5732 = vpack.c.b16 %v4310, %v4304
    %v5733 = vpack.c.b16 %v4311, %v4305
    %v5734 = vpack.c.b16 %v4312, %v4306
    %v5735 = vpack.c.b16 %v4313, %v4307
    %v5736 = vpack.c.b16 %v4320, %v4314
    %v5737 = vpack.c.b16 %v4321, %v4315
    %v5738 = vpack.c.b16 %v4322, %v4316
    %v5739 = vpack.c.b16 %v4323, %v4317
    %v5740 = vpack.c.b16 %v4324, %v4318
    %v5741 = vpack.c.b16 %v4325, %v4319
    %v5742 = vpack.c.b16 %v4332, %v4326
    %v5743 = vpack.c.b16 %v4333, %v4327
    %v5744 = vpack.c.b16 %v4334, %v4328
    %v5745 = vpack.c.b16 %v4335, %v4329
    %v5746 = vpack.c.b16 %v4336, %v4330
    %v5747 = vpack.c.b16 %v4337, %v4331
    %v5748 = vpack.c.b16 %v4344, %v4338
    %v5749 = vpack.c.b16 %v4345, %v4339
    %v5750 = vpack.c.b16 %v4346, %v4340
    %v5751 = vpack.c.b16 %v4347, %v4341
    %v5752 = vpack.c.b16 %v4348, %v4342
    %v5753 = vpack.c.b16 %v4349, %v4343
    %v5754 = vpack.c.b16 %v4356, %v4350
    %v5755 = vpack.c.b16 %v4357, %v4351
    %v5756 = vpack.c.b16 %v4358, %v4352
    %v5757 = vpack.c.b16 %v4359, %v4353
    %v5758 = vpack.c.b16 %v4360, %v4354
    %v5759 = vpack.c.b16 %v4361, %v4355
    %v5760 = vpack.c.b16 %v4368, %v4362
    %v5761 = vpack.c.b16 %v4369, %v4363
    %v5762 = vpack.c.b16 %v4370, %v4364
    %v5763 = vpack.c.b16 %v4371, %v4365
    %v5764 = vpack.c.b16 %v4372, %v4366
    %v5765 = vpack.c.b16 %v4373, %v4367
    %v5766 = vpack.c.b16 %v4380, %v4374
    %v5767 = vpack.c.b16 %v4381, %v4375
    %v5768 = vpack.c.b16 %v4382, %v4376
    %v5769 = vpack.c.b16 %v4383, %v4377
    %v5770 = vpack.c.b16 %v4384, %v4378
    %v5771 = vpack.c.b16 %v4385, %v4379
    %v5772 = vpack.c.b16 %v4392, %v4386
    %v5773 = vpack.c.b16 %v4393, %v4387
    %v5774 = vpack.c.b16 %v4394, %v4388
    %v5775 = vpack.c.b16 %v4395, %v4389
    %v5776 = vpack.c.b16 %v4396, %v4390
    %v5777 = vpack.c.b16 %v4397, %v4391
    %v5778 = vpack.c.b16 %v4404, %v4398
    %v5779 = vpack.c.b16 %v4405, %v4399
    %v5780 = vpack.c.b16 %v4406, %v4400
    %v5781 = vpack.c.b16 %v4407, %v4401
    %v5782 = vpack.c.b16 %v4408, %v4402
    %v5783 = vpack.c.b16 %v4409, %v4403
    %v5784 = vpack.c.b16 %v4416, %v4410
    %v5785 = vpack.c.b16 %v4417, %v4411
    %v5786 = vpack.c.b16 %v4418, %v4412
    %v5787 = vpack.c.b16 %v4419, %v4413
    %v5788 = vpack.c.b16 %v4420, %v4414
    %v5789 = vpack.c.b16 %v4421, %v4415
    %v5790 = vpack.c.b16 %v4428, %v4422
    %v5791 = vpack.c.b16 %v4429, %v4423
    %v5792 = vpack.c.b16 %v4430, %v4424
    %v5793 = vpack.c.b16 %v4431, %v4425
    %v5794 = vpack.c.b16 %v4432, %v4426
    %v5795 = vpack.c.b16 %v4433, %v4427
    %v5796 = vpack.c.b16 %v4440, %v4434
    %v5797 = vpack.c.b16 %v4441, %v4435
    %v5798 = vpack.c.b16 %v4442, %v4436
    %v5799 = vpack.c.b16 %v4443, %v4437
    %v5800 = vpack.c.b16 %v4444, %v4438
    %v5801 = vpack.c.b16 %v4445, %v4439
    %v5802 = vpack.c.b16 %v4452, %v4446
    %v5803 = vpack.c.b16 %v4453, %v4447
    %v5804 = vpack.c.b16 %v4454, %v4448
    %v5805 = vpack.c.b16 %v4455, %v4449
    %v5806 = vpack.c.b16 %v4456, %v4450
    %v5807 = vpack.c.b16 %v4457, %v4451
    %v5808 = vpack.c.b16 %v4464, %v4458
    %v5809 = vpack.c.b16 %v4465, %v4459
    %v5810 = vpack.c.b16 %v4466, %v4460
    %v5811 = vpack.c.b16 %v4467, %v4461
    %v5812 = vpack.c.b16 %v4468, %v4462
    %v5813 = vpack.c.b16 %v4469, %v4463
    %v5814 = vpack.c.b16 %v4476, %v4470
    %v5815 = vpack.c.b16 %v4477, %v4471
    %v5816 = vpack.c.b16 %v4478, %v4472
    %v5817 = vpack.c.b16 %v4479, %v4473
    %v5818 = vpack.c.b16 %v4480, %v4474
    %v5819 = vpack.c.b16 %v4481, %v4475
    %v5820 = vpack.c.b16 %v4488, %v4482
    %v5821 = vpack.c.b16 %v4489, %v4483
    %v5822 = vpack.c.b16 %v4490, %v4484
    %v5823 = vpack.c.b16 %v4491, %v4485
    %v5824 = vpack.c.b16 %v4492, %v4486
    %v5825 = vpack.c.b16 %v4493, %v4487
    %v5826 = vpack.c.b16 %v4500, %v4494
    %v5827 = vpack.c.b16 %v4501, %v4495
    %v5828 = vpack.c.b16 %v4502, %v4496
    %v5829 = vpack.c.b16 %v4503, %v4497
    %v5830 = vpack.c.b16 %v4504, %v4498
    %v5831 = vpack.c.b16 %v4505, %v4499
    %v5832 = vpack.c.b16 %v4512, %v4506
    %v5833 = vpack.c.b16 %v4513, %v4507
    %v5834 = vpack.c.b16 %v4514, %v4508
    %v5835 = vpack.c.b16 %v4515, %v4509
    %v5836 = vpack.c.b16 %v4516, %v4510
    %v5837 = vpack.c.b16 %v4517, %v4511
    %v5838 = vpack.c.b16 %v4524, %v4518
    %v5839 = vpack.c.b16 %v4525, %v4519
    %v5840 = vpack.c.b16 %v4526, %v4520
    %v5841 = vpack.c.b16 %v4527, %v4521
    %v5842 = vpack.c.b16 %v4528, %v4522
    %v5843 = vpack.c.b16 %v4529, %v4523
    %v5844 = vpack.c.b16 %v4536, %v4530
    %v5845 = vpack.c.b16 %v4537, %v4531
    %v5846 = vpack.c.b16 %v4538, %v4532
    %v5847 = vpack.c.b16 %v4539, %v4533
    %v5848 = vpack.c.b16 %v4540, %v4534
    %v5849 = vpack.c.b16 %v4541, %v4535
    %v5850 = vpack.c.b16 %v4548, %v4542
    %v5851 = vpack.c.b16 %v4549, %v4543
    %v5852 = vpack.c.b16 %v4550, %v4544
    %v5853 = vpack.c.b16 %v4551, %v4545
    %v5854 = vpack.c.b16 %v4552, %v4546
    %v5855 = vpack.c.b16 %v4553, %v4547
    %v5856 = vpack.c.b16 %v4560, %v4554
    %v5857 = vpack.c.b16 %v4561, %v4555
    %v5858 = vpack.c.b16 %v4562, %v4556
    %v5859 = vpack.c.b16 %v4563, %v4557
    %v5860 = vpack.c.b16 %v4564, %v4558
    %v5861 = vpack.c.b16 %v4565, %v4559
    %v5862 = vpack.c.b16 %v4572, %v4566
    %v5863 = vpack.c.b16 %v4573, %v4567
    %v5864 = vpack.c.b16 %v4574, %v4568
    %v5865 = vpack.c.b16 %v4575, %v4569
    %v5866 = vpack.c.b16 %v4576, %v4570
    %v5867 = vpack.c.b16 %v4577, %v4571
    %v5868 = vpack.c.b16 %v4584, %v4578
    %v5869 = vpack.c.b16 %v4585, %v4579
    %v5870 = vpack.c.b16 %v4586, %v4580
    %v5871 = vpack.c.b16 %v4587, %v4581
    %v5872 = vpack.c.b16 %v4588, %v4582
    %v5873 = vpack.c.b16 %v4589, %v4583
    %v5874 = vpack.c.b16 %v4596, %v4590
    %v5875 = vpack.c.b16 %v4597, %v4591
    %v5876 = vpack.c.b16 %v4598, %v4592
    %v5877 = vpack.c.b16 %v4599, %v4593
    %v5878 = vpack.c.b16 %v4600, %v4594
    %v5879 = vpack.c.b16 %v4601, %v4595
    %v5880 = vpack.c.b16 %v4608, %v4602
    %v5881 = vpack.c.b16 %v4609, %v4603
    %v5882 = vpack.c.b16 %v4610, %v4604
    %v5883 = vpack.c.b16 %v4611, %v4605
    %v5884 = vpack.c.b16 %v4612, %v4606
    %v5885 = vpack.c.b16 %v4613, %v4607
    %v5886 = vpack.c.b16 %v4620, %v4614
    %v5887 = vpack.c.b16 %v4621, %v4615
    %v5888 = vpack.c.b16 %v4622, %v4616
    %v5889 = vpack.c.b16 %v4623, %v4617
    %v5890 = vpack.c.b16 %v4624, %v4618
    %v5891 = vpack.c.b16 %v4625, %v4619
    %v5892 = vpack.c.b16 %v4632, %v4626
    %v5893 = vpack.c.b16 %v4633, %v4627
    %v5894 = vpack.c.b16 %v4634, %v4628
    %v5895 = vpack.c.b16 %v4635, %v4629
    %v5896 = vpack.c.b16 %v4636, %v4630
    %v5897 = vpack.c.b16 %v4637, %v4631
    %v5898 = vpack.c.b16 %v4644, %v4638
    %v5899 = vpack.c.b16 %v4645, %v4639
    %v5900 = vpack.c.b16 %v4646, %v4640
    %v5901 = vpack.c.b16 %v4647, %v4641
    %v5902 = vpack.c.b16 %v4648, %v4642
    %v5903 = vpack.c.b16 %v4649, %v4643
    %v5904 = vpack.c.b16 %v4656, %v4650
    %v5905 = vpack.c.b16 %v4657, %v4651
    %v5906 = vpack.c.b16 %v4658, %v4652
    %v5907 = vpack.c.b16 %v4659, %v4653
    %v5908 = vpack.c.b16 %v4660, %v4654
    %v5909 = vpack.c.b16 %v4661, %v4655
    %v5910 = vpack.c.b16 %v4668, %v4662
    %v5911 = vpack.c.b16 %v4669, %v4663
    %v5912 = vpack.c.b16 %v4670, %v4664
    %v5913 = vpack.c.b16 %v4671, %v4665
    %v5914 = vpack.c.b16 %v4672, %v4666
    %v5915 = vpack.c.b16 %v4673, %v4667
    %v5916 = vpack.c.b16 %v4680, %v4674
    %v5917 = vpack.c.b16 %v4681, %v4675
    %v5918 = vpack.c.b16 %v4682, %v4676
    %v5919 = vpack.c.b16 %v4683, %v4677
    %v5920 = vpack.c.b16 %v4684, %v4678
    %v5921 = vpack.c.b16 %v4685, %v4679
    %v5922 = vpack.c.b16 %v4692, %v4686
    %v5923 = vpack.c.b16 %v4693, %v4687
    %v5924 = vpack.c.b16 %v4694, %v4688
    %v5925 = vpack.c.b16 %v4695, %v4689
    %v5926 = vpack.c.b16 %v4696, %v4690
    %v5927 = vpack.c.b16 %v4697, %v4691
    %v5928 = vpack.c.b16 %v4704, %v4698
    %v5929 = vpack.c.b16 %v4705, %v4699
    %v5930 = vpack.c.b16 %v4706, %v4700
    %v5931 = vpack.c.b16 %v4707, %v4701
    %v5932 = vpack.c.b16 %v4708, %v4702
    %v5933 = vpack.c.b16 %v4709, %v4703
    %v5934 = vpack.c.b16 %v4716, %v4710
    %v5935 = vpack.c.b16 %v4717, %v4711
    %v5936 = vpack.c.b16 %v4718, %v4712
    %v5937 = vpack.c.b16 %v4719, %v4713
    %v5938 = vpack.c.b16 %v4720, %v4714
    %v5939 = vpack.c.b16 %v4721, %v4715
    %v5940 = vpack.c.b16 %v4728, %v4722
    %v5941 = vpack.c.b16 %v4729, %v4723
    %v5942 = vpack.c.b16 %v4730, %v4724
    %v5943 = vpack.c.b16 %v4731, %v4725
    %v5944 = vpack.c.b16 %v4732, %v4726
    %v5945 = vpack.c.b16 %v4733, %v4727
    %v5946 = vpack.c.b16 %v4740, %v4734
    %v5947 = vpack.c.b16 %v4741, %v4735
    %v5948 = vpack.c.b16 %v4742, %v4736
    %v5949 = vpack.c.b16 %v4743, %v4737
    %v5950 = vpack.c.b16 %v4744, %v4738
    %v5951 = vpack.c.b16 %v4745, %v4739
    %v5952 = vpack.c.b16 %v4752, %v4746
    %v5953 = vpack.c.b16 %v4753, %v4747
    %v5954 = vpack.c.b16 %v4754, %v4748
    %v5955 = vpack.c.b16 %v4755, %v4749
    %v5956 = vpack.c.b16 %v4756, %v4750
    %v5957 = vpack.c.b16 %v4757, %v4751
    %v5958 = vpack.c.b16 %v4764, %v4758
    %v5959 = vpack.c.b16 %v4765, %v4759
    %v5960 = vpack.c.b16 %v4766, %v4760
    %v5961 = vpack.c.b16 %v4767, %v4761
    %v5962 = vpack.c.b16 %v4768, %v4762
    %v5963 = vpack.c.b16 %v4769, %v4763
    %v5964 = vpack.c.b16 %v4776, %v4770
    %v5965 = vpack.c.b16 %v4777, %v4771
    %v5966 = vpack.c.b16 %v4778, %v4772
    %v5967 = vpack.c.b16 %v4779, %v4773
    %v5968 = vpack.c.b16 %v4780, %v4774
    %v5969 = vpack.c.b16 %v4781, %v4775
    %v5970 = vpack.c.b16 %v4788, %v4782
    %v5971 = vpack.c.b16 %v4789, %v4783
    %v5972 = vpack.c.b16 %v4790, %v4784
    %v5973 = vpack.c.b16 %v4791, %v4785
    %v5974 = vpack.c.b16 %v4792, %v4786
    %v5975 = vpack.c.b16 %v4793, %v4787
    %v5976 = vpack.c.b16 %v4800, %v4794
    %v5977 = vpack.c.b16 %v4801, %v4795
    %v5978 = vpack.c.b16 %v4802, %v4796
    %v5979 = vpack.c.b16 %v4803, %v4797
    %v5980 = vpack.c.b16 %v4804, %v4798
    %v5981 = vpack.c.b16 %v4805, %v4799
    %v5982 = vpack.c.b16 %v4812, %v4806
    %v5983 = vpack.c.b16 %v4813, %v4807
    %v5984 = vpack.c.b16 %v4814, %v4808
    %v5985 = vpack.c.b16 %v4815, %v4809
    %v5986 = vpack.c.b16 %v4816, %v4810
    %v5987 = vpack.c.b16 %v4817, %v4811
    %v5988 = vpack.c.b16 %v4824, %v4818
    %v5989 = vpack.c.b16 %v4825, %v4819
    %v5990 = vpack.c.b16 %v4826, %v4820
    %v5991 = vpack.c.b16 %v4827, %v4821
    %v5992 = vpack.c.b16 %v4828, %v4822
    %v5993 = vpack.c.b16 %v4829, %v4823
    %v5994 = vpack.c.b16 %v4836, %v4830
    %v5995 = vpack.c.b16 %v4837, %v4831
    %v5996 = vpack.c.b16 %v4838, %v4832
    %v5997 = vpack.c.b16 %v4839, %v4833
    %v5998 = vpack.c.b16 %v4840, %v4834
    %v5999 = vpack.c.b16 %v4841, %v4835
    %v6000 = vpack.c.b16 %v4848, %v4842
    %v6001 = vpack.c.b16 %v4849, %v4843
    %v6002 = vpack.c.b16 %v4850, %v4844
    %v6003 = vpack.c.b16 %v4851, %v4845
    %v6004 = vpack.c.b16 %v4852, %v4846
    %v6005 = vpack.c.b16 %v4853, %v4847
    %7158 = vmatprep.subr.bf16.mxu0 %v4897
    %7159 = vmatpush1.bf16.msra.mxu0 %v4896
    %7160 = vmatprep.subr.bf16.mxu0 %v4891
    %7161 = vmatpush1.bf16.msra.mxu0 %v4890
    %7162 = vmatprep.subr.bf16.mxu0 %v4885
    %7163 = vmatpush1.bf16.msra.mxu0 %v4884
    %7164 = vmatprep.subr.bf16.mxu0 %v4879
    %7165 = vmatpush1.bf16.msra.mxu0 %v4878
    %7166 = vmatprep.subr.bf16.mxu0 %v4873
    %7167 = vmatpush1.bf16.msra.mxu0 %v4872
    %7168 = vmatprep.subr.bf16.mxu0 %v4867
    %7169 = vmatpush1.bf16.msra.mxu0 %v4866
    %7170 = vmatprep.subr.bf16.mxu0 %v4861
    %7171 = vmatpush1.bf16.msra.mxu0 %v4860
    %7172 = vmatprep.subr.bf16.mxu0 %v4855
    %7173 = vmatpush1.bf16.msra.mxu0 %v4854
    %7174 = vmatprep.subr.bf16.mxu0 %v4945
    %7175 = vmatpush2.bf16.msra.mxu0 %v4944
    %7176 = vmatprep.subr.bf16.mxu0 %v4939
    %7177 = vmatpush2.bf16.msra.mxu0 %v4938
    %7178 = vmatprep.subr.bf16.mxu0 %v4933
    %7179 = vmatpush2.bf16.msra.mxu0 %v4932
    %7180 = vmatprep.subr.bf16.mxu0 %v4927
    %7181 = vmatpush2.bf16.msra.mxu0 %v4926
    %7182 = vmatprep.subr.bf16.mxu0 %v4921
    %7183 = vmatpush2.bf16.msra.mxu0 %v4920
    %7184 = vmatprep.subr.bf16.mxu0 %v4915
    %7185 = vmatpush2.bf16.msra.mxu0 %v4914
    %7186 = vmatprep.subr.bf16.mxu0 %v4909
    %7187 = vmatpush2.bf16.msra.mxu0 %v4908
    %7188 = vmatprep.subr.bf16.mxu0 %v4903
    %7189 = vmatpush2.bf16.msra.mxu0 %v4902
    %7190 = vmatprep.mubr.bf16.mxu0 %v1264
    %7191 = vmatmul.mubr.bf16.gmra.mxu0 %v1250
    %v7192 = vpop.f32.mrf.mxu0
    %v7193 = vadd.f32 0.0, %v7192
    %v7194 = vpop.f32.mrf.mxu0
    %v7195 = vadd.f32 0.0, %v7194
    %v7196 = vpop.f32.mrf.mxu0
    %v7197 = vpop.f32.mrf.mxu0
    %7198 = vdwg.mxu0
    %7199 = vmatprep.subr.bf16.mxu0 %v4993
    %7200 = vmatpush1.bf16.msra.mxu0 %v4992
    %7201 = vmatprep.subr.bf16.mxu0 %v4987
    %7202 = vmatpush1.bf16.msra.mxu0 %v4986
    %7203 = vmatprep.subr.bf16.mxu0 %v4981
    %7204 = vmatpush1.bf16.msra.mxu0 %v4980
    %7205 = vmatprep.subr.bf16.mxu0 %v4975
    %7206 = vmatpush1.bf16.msra.mxu0 %v4974
    %7207 = vmatprep.subr.bf16.mxu0 %v4969
    %7208 = vmatpush1.bf16.msra.mxu0 %v4968
    %7209 = vmatprep.subr.bf16.mxu0 %v4963
    %7210 = vmatpush1.bf16.msra.mxu0 %v4962
    %7211 = vmatprep.subr.bf16.mxu0 %v4957
    %7212 = vmatpush1.bf16.msra.mxu0 %v4956
    %7213 = vmatprep.subr.bf16.mxu0 %v4951
    %7214 = vmatpush1.bf16.msra.mxu0 %v4950
    %7215 = vmatprep.subr.bf16.mxu0 %v5041
    %7216 = vmatpush2.bf16.msra.mxu0 %v5040
    %7217 = vmatprep.subr.bf16.mxu0 %v5035
    %7218 = vmatpush2.bf16.msra.mxu0 %v5034
    %7219 = vmatprep.subr.bf16.mxu0 %v5029
    %7220 = vmatpush2.bf16.msra.mxu0 %v5028
    %7221 = vmatprep.subr.bf16.mxu0 %v5023
    %7222 = vmatpush2.bf16.msra.mxu0 %v5022
    %7223 = vmatprep.subr.bf16.mxu0 %v5017
    %7224 = vmatpush2.bf16.msra.mxu0 %v5016
    %7225 = vmatprep.subr.bf16.mxu0 %v5011
    %7226 = vmatpush2.bf16.msra.mxu0 %v5010
    %7227 = vmatprep.subr.bf16.mxu0 %v5005
    %7228 = vmatpush2.bf16.msra.mxu0 %v5004
    %7229 = vmatprep.subr.bf16.mxu0 %v4999
    %7230 = vmatpush2.bf16.msra.mxu0 %v4998
    %7231 = vmatprep.mubr.bf16.mxu0 %v1274
    %7232 = vmatmul.mubr.bf16.gmra.mxu0 %v1272
    %v7233 = vpop.f32.mrf.mxu0
    %v7234 = vadd.f32 %v7193, %v7233
    %v7235 = vpop.f32.mrf.mxu0
    %v7236 = vadd.f32 %v7195, %v7235
    %v7237 = vpop.f32.mrf.mxu0
    %v7238 = vpop.f32.mrf.mxu0
    %7239 = vdwg.mxu0
    %7240 = vmatprep.subr.bf16.mxu0 %v5089
    %7241 = vmatpush1.bf16.msra.mxu0 %v5088
    %7242 = vmatprep.subr.bf16.mxu0 %v5083
    %7243 = vmatpush1.bf16.msra.mxu0 %v5082
    %7244 = vmatprep.subr.bf16.mxu0 %v5077
    %7245 = vmatpush1.bf16.msra.mxu0 %v5076
    %7246 = vmatprep.subr.bf16.mxu0 %v5071
    %7247 = vmatpush1.bf16.msra.mxu0 %v5070
    %7248 = vmatprep.subr.bf16.mxu0 %v5065
    %7249 = vmatpush1.bf16.msra.mxu0 %v5064
    %7250 = vmatprep.subr.bf16.mxu0 %v5059
    %7251 = vmatpush1.bf16.msra.mxu0 %v5058
    %7252 = vmatprep.subr.bf16.mxu0 %v5053
    %7253 = vmatpush1.bf16.msra.mxu0 %v5052
    %7254 = vmatprep.subr.bf16.mxu0 %v5047
    %7255 = vmatpush1.bf16.msra.mxu0 %v5046
    %7256 = vmatprep.subr.bf16.mxu0 %v5137
    %7257 = vmatpush2.bf16.msra.mxu0 %v5136
    %7258 = vmatprep.subr.bf16.mxu0 %v5131
    %7259 = vmatpush2.bf16.msra.mxu0 %v5130
    %7260 = vmatprep.subr.bf16.mxu0 %v5125
    %7261 = vmatpush2.bf16.msra.mxu0 %v5124
    %7262 = vmatprep.subr.bf16.mxu0 %v5119
    %7263 = vmatpush2.bf16.msra.mxu0 %v5118
    %7264 = vmatprep.subr.bf16.mxu0 %v5113
    %7265 = vmatpush2.bf16.msra.mxu0 %v5112
    %7266 = vmatprep.subr.bf16.mxu0 %v5107
    %7267 = vmatpush2.bf16.msra.mxu0 %v5106
    %7268 = vmatprep.subr.bf16.mxu0 %v5101
    %7269 = vmatpush2.bf16.msra.mxu0 %v5100
    %7270 = vmatprep.subr.bf16.mxu0 %v5095
    %7271 = vmatpush2.bf16.msra.mxu0 %v5094
    %7272 = vmatprep.mubr.bf16.mxu0 %v1271
    %7273 = vmatmul.mubr.bf16.gmra.mxu0 %v1257
    %v7274 = vpop.f32.mrf.mxu0
    %v7275 = vadd.f32 %v7234, %v7274
    %v7276 = vpop.f32.mrf.mxu0
    %v7277 = vadd.f32 %v7236, %v7276
    %v7278 = vpop.f32.mrf.mxu0
    %v7279 = vpop.f32.mrf.mxu0
    %7280 = vdwg.mxu0
    %7281 = vmatprep.subr.bf16.mxu0 %v5185
    %7282 = vmatpush1.bf16.msra.mxu0 %v5184
    %7283 = vmatprep.subr.bf16.mxu0 %v5179
    %7284 = vmatpush1.bf16.msra.mxu0 %v5178
    %7285 = vmatprep.subr.bf16.mxu0 %v5173
    %7286 = vmatpush1.bf16.msra.mxu0 %v5172
    %7287 = vmatprep.subr.bf16.mxu0 %v5167
    %7288 = vmatpush1.bf16.msra.mxu0 %v5166
    %7289 = vmatprep.subr.bf16.mxu0 %v5161
    %7290 = vmatpush1.bf16.msra.mxu0 %v5160
    %7291 = vmatprep.subr.bf16.mxu0 %v5155
    %7292 = vmatpush1.bf16.msra.mxu0 %v5154
    %7293 = vmatprep.subr.bf16.mxu0 %v5149
    %7294 = vmatpush1.bf16.msra.mxu0 %v5148
    %7295 = vmatprep.subr.bf16.mxu0 %v5143
    %7296 = vmatpush1.bf16.msra.mxu0 %v5142
    %7297 = vmatprep.subr.bf16.mxu0 %v5233
    %7298 = vmatpush2.bf16.msra.mxu0 %v5232
    %7299 = vmatprep.subr.bf16.mxu0 %v5227
    %7300 = vmatpush2.bf16.msra.mxu0 %v5226
    %7301 = vmatprep.subr.bf16.mxu0 %v5221
    %7302 = vmatpush2.bf16.msra.mxu0 %v5220
    %7303 = vmatprep.subr.bf16.mxu0 %v5215
    %7304 = vmatpush2.bf16.msra.mxu0 %v5214
    %7305 = vmatprep.subr.bf16.mxu0 %v5209
    %7306 = vmatpush2.bf16.msra.mxu0 %v5208
    %7307 = vmatprep.subr.bf16.mxu0 %v5203
    %7308 = vmatpush2.bf16.msra.mxu0 %v5202
    %7309 = vmatprep.subr.bf16.mxu0 %v5197
    %7310 = vmatpush2.bf16.msra.mxu0 %v5196
    %7311 = vmatprep.subr.bf16.mxu0 %v5191
    %7312 = vmatpush2.bf16.msra.mxu0 %v5190
    %7313 = vmatprep.mubr.bf16.mxu0 %v1275
    %7314 = vmatmul.mubr.bf16.gmra.mxu0 %v1273
    %v7315 = vpop.f32.mrf.mxu0
    %v7316 = vadd.f32 %v7275, %v7315
    %v7317 = vpop.f32.mrf.mxu0
    %v7318 = vadd.f32 %v7277, %v7317
    %v7319 = vpop.f32.mrf.mxu0
    %v7320 = vpop.f32.mrf.mxu0
    %7321 = vdwg.mxu0
    %7322 = vmatprep.subr.bf16.mxu0 %v5281
    %7323 = vmatpush1.bf16.msra.mxu0 %v5280
    %7324 = vmatprep.subr.bf16.mxu0 %v5275
    %7325 = vmatpush1.bf16.msra.mxu0 %v5274
    %7326 = vmatprep.subr.bf16.mxu0 %v5269
    %7327 = vmatpush1.bf16.msra.mxu0 %v5268
    %7328 = vmatprep.subr.bf16.mxu0 %v5263
    %7329 = vmatpush1.bf16.msra.mxu0 %v5262
    %7330 = vmatprep.subr.bf16.mxu0 %v5257
    %7331 = vmatpush1.bf16.msra.mxu0 %v5256
    %7332 = vmatprep.subr.bf16.mxu0 %v5251
    %7333 = vmatpush1.bf16.msra.mxu0 %v5250
    %7334 = vmatprep.subr.bf16.mxu0 %v5245
    %7335 = vmatpush1.bf16.msra.mxu0 %v5244
    %7336 = vmatprep.subr.bf16.mxu0 %v5239
    %7337 = vmatpush1.bf16.msra.mxu0 %v5238
    %7338 = vmatprep.subr.bf16.mxu0 %v5329
    %7339 = vmatpush2.bf16.msra.mxu0 %v5328
    %7340 = vmatprep.subr.bf16.mxu0 %v5323
    %7341 = vmatpush2.bf16.msra.mxu0 %v5322
    %7342 = vmatprep.subr.bf16.mxu0 %v5317
    %7343 = vmatpush2.bf16.msra.mxu0 %v5316
    %7344 = vmatprep.subr.bf16.mxu0 %v5311
    %7345 = vmatpush2.bf16.msra.mxu0 %v5310
    %7346 = vmatprep.subr.bf16.mxu0 %v5305
    %7347 = vmatpush2.bf16.msra.mxu0 %v5304
    %7348 = vmatprep.subr.bf16.mxu0 %v5299
    %7349 = vmatpush2.bf16.msra.mxu0 %v5298
    %7350 = vmatprep.subr.bf16.mxu0 %v5293
    %7351 = vmatpush2.bf16.msra.mxu0 %v5292
    %7352 = vmatprep.subr.bf16.mxu0 %v5287
    %7353 = vmatpush2.bf16.msra.mxu0 %v5286
    %7354 = vmatprep.mubr.bf16.mxu0 %v1313
    %7355 = vmatmul.mubr.bf16.gmra.mxu0 %v1299
    %v7356 = vpop.f32.mrf.mxu0
    %v7357 = vadd.f32 %v7316, %v7356
    %v7358 = vpop.f32.mrf.mxu0
    %v7359 = vadd.f32 %v7318, %v7358
    %v7360 = vpop.f32.mrf.mxu0
    %v7361 = vpop.f32.mrf.mxu0
    %7362 = vdwg.mxu0
    %7363 = vmatprep.subr.bf16.mxu0 %v5377
    %7364 = vmatpush1.bf16.msra.mxu0 %v5376
    %7365 = vmatprep.subr.bf16.mxu0 %v5371
    %7366 = vmatpush1.bf16.msra.mxu0 %v5370
    %7367 = vmatprep.subr.bf16.mxu0 %v5365
    %7368 = vmatpush1.bf16.msra.mxu0 %v5364
    %7369 = vmatprep.subr.bf16.mxu0 %v5359
    %7370 = vmatpush1.bf16.msra.mxu0 %v5358
    %7371 = vmatprep.subr.bf16.mxu0 %v5353
    %7372 = vmatpush1.bf16.msra.mxu0 %v5352
    %7373 = vmatprep.subr.bf16.mxu0 %v5347
    %7374 = vmatpush1.bf16.msra.mxu0 %v5346
    %7375 = vmatprep.subr.bf16.mxu0 %v5341
    %7376 = vmatpush1.bf16.msra.mxu0 %v5340
    %7377 = vmatprep.subr.bf16.mxu0 %v5335
    %7378 = vmatpush1.bf16.msra.mxu0 %v5334
    %7379 = vmatprep.subr.bf16.mxu0 %v5425
    %7380 = vmatpush2.bf16.msra.mxu0 %v5424
    %7381 = vmatprep.subr.bf16.mxu0 %v5419
    %7382 = vmatpush2.bf16.msra.mxu0 %v5418
    %7383 = vmatprep.subr.bf16.mxu0 %v5413
    %7384 = vmatpush2.bf16.msra.mxu0 %v5412
    %7385 = vmatprep.subr.bf16.mxu0 %v5407
    %7386 = vmatpush2.bf16.msra.mxu0 %v5406
    %7387 = vmatprep.subr.bf16.mxu0 %v5401
    %7388 = vmatpush2.bf16.msra.mxu0 %v5400
    %7389 = vmatprep.subr.bf16.mxu0 %v5395
    %7390 = vmatpush2.bf16.msra.mxu0 %v5394
    %7391 = vmatprep.subr.bf16.mxu0 %v5389
    %7392 = vmatpush2.bf16.msra.mxu0 %v5388
    %7393 = vmatprep.subr.bf16.mxu0 %v5383
    %7394 = vmatpush2.bf16.msra.mxu0 %v5382
    %7395 = vmatprep.mubr.bf16.mxu0 %v1323
    %7396 = vmatmul.mubr.bf16.gmra.mxu0 %v1321
    %v7397 = vpop.f32.mrf.mxu0
    %v7398 = vadd.f32 %v7357, %v7397
    %v7399 = vpop.f32.mrf.mxu0
    %v7400 = vadd.f32 %v7359, %v7399
    %v7401 = vpop.f32.mrf.mxu0
    %v7402 = vpop.f32.mrf.mxu0
    %7403 = vdwg.mxu0
    %7404 = vmatprep.subr.bf16.mxu0 %v5473
    %7405 = vmatpush1.bf16.msra.mxu0 %v5472
    %7406 = vmatprep.subr.bf16.mxu0 %v5467
    %7407 = vmatpush1.bf16.msra.mxu0 %v5466
    %7408 = vmatprep.subr.bf16.mxu0 %v5461
    %7409 = vmatpush1.bf16.msra.mxu0 %v5460
    %7410 = vmatprep.subr.bf16.mxu0 %v5455
    %7411 = vmatpush1.bf16.msra.mxu0 %v5454
    %7412 = vmatprep.subr.bf16.mxu0 %v5449
    %7413 = vmatpush1.bf16.msra.mxu0 %v5448
    %7414 = vmatprep.subr.bf16.mxu0 %v5443
    %7415 = vmatpush1.bf16.msra.mxu0 %v5442
    %7416 = vmatprep.subr.bf16.mxu0 %v5437
    %7417 = vmatpush1.bf16.msra.mxu0 %v5436
    %7418 = vmatprep.subr.bf16.mxu0 %v5431
    %7419 = vmatpush1.bf16.msra.mxu0 %v5430
    %7420 = vmatprep.subr.bf16.mxu0 %v5521
    %7421 = vmatpush2.bf16.msra.mxu0 %v5520
    %7422 = vmatprep.subr.bf16.mxu0 %v5515
    %7423 = vmatpush2.bf16.msra.mxu0 %v5514
    %7424 = vmatprep.subr.bf16.mxu0 %v5509
    %7425 = vmatpush2.bf16.msra.mxu0 %v5508
    %7426 = vmatprep.subr.bf16.mxu0 %v5503
    %7427 = vmatpush2.bf16.msra.mxu0 %v5502
    %7428 = vmatprep.subr.bf16.mxu0 %v5497
    %7429 = vmatpush2.bf16.msra.mxu0 %v5496
    %7430 = vmatprep.subr.bf16.mxu0 %v5491
    %7431 = vmatpush2.bf16.msra.mxu0 %v5490
    %7432 = vmatprep.subr.bf16.mxu0 %v5485
    %7433 = vmatpush2.bf16.msra.mxu0 %v5484
    %7434 = vmatprep.subr.bf16.mxu0 %v5479
    %7435 = vmatpush2.bf16.msra.mxu0 %v5478
    %7436 = vmatprep.mubr.bf16.mxu0 %v1320
    %7437 = vmatmul.mubr.bf16.gmra.mxu0 %v1306
    %v7438 = vpop.f32.mrf.mxu0
    %v7439 = vadd.f32 %v7398, %v7438
    %v7440 = vpop.f32.mrf.mxu0
    %v7441 = vadd.f32 %v7400, %v7440
    %v7442 = vpop.f32.mrf.mxu0
    %v7443 = vpop.f32.mrf.mxu0
    %7444 = vdwg.mxu0
    %7445 = vmatprep.subr.bf16.mxu0 %v5569
    %7446 = vmatpush1.bf16.msra.mxu0 %v5568
    %7447 = vmatprep.subr.bf16.mxu0 %v5563
    %7448 = vmatpush1.bf16.msra.mxu0 %v5562
    %7449 = vmatprep.subr.bf16.mxu0 %v5557
    %7450 = vmatpush1.bf16.msra.mxu0 %v5556
    %7451 = vmatprep.subr.bf16.mxu0 %v5551
    %7452 = vmatpush1.bf16.msra.mxu0 %v5550
    %7453 = vmatprep.subr.bf16.mxu0 %v5545
    %7454 = vmatpush1.bf16.msra.mxu0 %v5544
    %7455 = vmatprep.subr.bf16.mxu0 %v5539
    %7456 = vmatpush1.bf16.msra.mxu0 %v5538
    %7457 = vmatprep.subr.bf16.mxu0 %v5533
    %7458 = vmatpush1.bf16.msra.mxu0 %v5532
    %7459 = vmatprep.subr.bf16.mxu0 %v5527
    %7460 = vmatpush1.bf16.msra.mxu0 %v5526
    %7461 = vmatprep.subr.bf16.mxu0 %v5617
    %7462 = vmatpush2.bf16.msra.mxu0 %v5616
    %7463 = vmatprep.subr.bf16.mxu0 %v5611
    %7464 = vmatpush2.bf16.msra.mxu0 %v5610
    %7465 = vmatprep.subr.bf16.mxu0 %v5605
    %7466 = vmatpush2.bf16.msra.mxu0 %v5604
    %7467 = vmatprep.subr.bf16.mxu0 %v5599
    %7468 = vmatpush2.bf16.msra.mxu0 %v5598
    %7469 = vmatprep.subr.bf16.mxu0 %v5593
    %7470 = vmatpush2.bf16.msra.mxu0 %v5592
    %7471 = vmatprep.subr.bf16.mxu0 %v5587
    %7472 = vmatpush2.bf16.msra.mxu0 %v5586
    %7473 = vmatprep.subr.bf16.mxu0 %v5581
    %7474 = vmatpush2.bf16.msra.mxu0 %v5580
    %7475 = vmatprep.subr.bf16.mxu0 %v5575
    %7476 = vmatpush2.bf16.msra.mxu0 %v5574
    %7477 = vmatprep.mubr.bf16.mxu0 %v1324
    %7478 = vmatmul.mubr.bf16.gmra.mxu0 %v1322
    %v7479 = vpop.f32.mrf.mxu0
    %v7480 = vadd.f32 %v7439, %v7479
    %v7481 = vpop.f32.mrf.mxu0
    %v7482 = vadd.f32 %v7441, %v7481
    %v7483 = vpop.f32.mrf.mxu0
    %v7484 = vpop.f32.mrf.mxu0
    %7485 = vdwg.mxu0
    %7486 = vmatprep.subr.bf16.mxu0 %v5665
    %7487 = vmatpush1.bf16.msra.mxu0 %v5664
    %7488 = vmatprep.subr.bf16.mxu0 %v5659
    %7489 = vmatpush1.bf16.msra.mxu0 %v5658
    %7490 = vmatprep.subr.bf16.mxu0 %v5653
    %7491 = vmatpush1.bf16.msra.mxu0 %v5652
    %7492 = vmatprep.subr.bf16.mxu0 %v5647
    %7493 = vmatpush1.bf16.msra.mxu0 %v5646
    %7494 = vmatprep.subr.bf16.mxu0 %v5641
    %7495 = vmatpush1.bf16.msra.mxu0 %v5640
    %7496 = vmatprep.subr.bf16.mxu0 %v5635
    %7497 = vmatpush1.bf16.msra.mxu0 %v5634
    %7498 = vmatprep.subr.bf16.mxu0 %v5629
    %7499 = vmatpush1.bf16.msra.mxu0 %v5628
    %7500 = vmatprep.subr.bf16.mxu0 %v5623
    %7501 = vmatpush1.bf16.msra.mxu0 %v5622
    %7502 = vmatprep.subr.bf16.mxu0 %v5713
    %7503 = vmatpush2.bf16.msra.mxu0 %v5712
    %7504 = vmatprep.subr.bf16.mxu0 %v5707
    %7505 = vmatpush2.bf16.msra.mxu0 %v5706
    %7506 = vmatprep.subr.bf16.mxu0 %v5701
    %7507 = vmatpush2.bf16.msra.mxu0 %v5700
    %7508 = vmatprep.subr.bf16.mxu0 %v5695
    %7509 = vmatpush2.bf16.msra.mxu0 %v5694
    %7510 = vmatprep.subr.bf16.mxu0 %v5689
    %7511 = vmatpush2.bf16.msra.mxu0 %v5688
    %7512 = vmatprep.subr.bf16.mxu0 %v5683
    %7513 = vmatpush2.bf16.msra.mxu0 %v5682
    %7514 = vmatprep.subr.bf16.mxu0 %v5677
    %7515 = vmatpush2.bf16.msra.mxu0 %v5676
    %7516 = vmatprep.subr.bf16.mxu0 %v5671
    %7517 = vmatpush2.bf16.msra.mxu0 %v5670
    %7518 = vmatprep.mubr.bf16.mxu0 %v1362
    %7519 = vmatmul.mubr.bf16.gmra.mxu0 %v1348
    %v7520 = vpop.f32.mrf.mxu0
    %v7521 = vadd.f32 %v7480, %v7520
    %v7522 = vpop.f32.mrf.mxu0
    %v7523 = vadd.f32 %v7482, %v7522
    %v7524 = vpop.f32.mrf.mxu0
    %v7525 = vpop.f32.mrf.mxu0
    %7526 = vdwg.mxu0
    %7527 = vmatprep.subr.bf16.mxu0 %v5761
    %7528 = vmatpush1.bf16.msra.mxu0 %v5760
    %7529 = vmatprep.subr.bf16.mxu0 %v5755
    %7530 = vmatpush1.bf16.msra.mxu0 %v5754
    %7531 = vmatprep.subr.bf16.mxu0 %v5749
    %7532 = vmatpush1.bf16.msra.mxu0 %v5748
    %7533 = vmatprep.subr.bf16.mxu0 %v5743
    %7534 = vmatpush1.bf16.msra.mxu0 %v5742
    %7535 = vmatprep.subr.bf16.mxu0 %v5737
    %7536 = vmatpush1.bf16.msra.mxu0 %v5736
    %7537 = vmatprep.subr.bf16.mxu0 %v5731
    %7538 = vmatpush1.bf16.msra.mxu0 %v5730
    %7539 = vmatprep.subr.bf16.mxu0 %v5725
    %7540 = vmatpush1.bf16.msra.mxu0 %v5724
    %7541 = vmatprep.subr.bf16.mxu0 %v5719
    %7542 = vmatpush1.bf16.msra.mxu0 %v5718
    %7543 = vmatprep.subr.bf16.mxu0 %v5809
    %7544 = vmatpush2.bf16.msra.mxu0 %v5808
    %7545 = vmatprep.subr.bf16.mxu0 %v5803
    %7546 = vmatpush2.bf16.msra.mxu0 %v5802
    %7547 = vmatprep.subr.bf16.mxu0 %v5797
    %7548 = vmatpush2.bf16.msra.mxu0 %v5796
    %7549 = vmatprep.subr.bf16.mxu0 %v5791
    %7550 = vmatpush2.bf16.msra.mxu0 %v5790
    %7551 = vmatprep.subr.bf16.mxu0 %v5785
    %7552 = vmatpush2.bf16.msra.mxu0 %v5784
    %7553 = vmatprep.subr.bf16.mxu0 %v5779
    %7554 = vmatpush2.bf16.msra.mxu0 %v5778
    %7555 = vmatprep.subr.bf16.mxu0 %v5773
    %7556 = vmatpush2.bf16.msra.mxu0 %v5772
    %7557 = vmatprep.subr.bf16.mxu0 %v5767
    %7558 = vmatpush2.bf16.msra.mxu0 %v5766
    %7559 = vmatprep.mubr.bf16.mxu0 %v1372
    %7560 = vmatmul.mubr.bf16.gmra.mxu0 %v1370
    %v7561 = vpop.f32.mrf.mxu0
    %v7562 = vadd.f32 %v7521, %v7561
    %v7563 = vpop.f32.mrf.mxu0
    %v7564 = vadd.f32 %v7523, %v7563
    %v7565 = vpop.f32.mrf.mxu0
    %v7566 = vpop.f32.mrf.mxu0
    %7567 = vdwg.mxu0
    %7568 = vmatprep.subr.bf16.mxu0 %v5857
    %7569 = vmatpush1.bf16.msra.mxu0 %v5856
    %7570 = vmatprep.subr.bf16.mxu0 %v5851
    %7571 = vmatpush1.bf16.msra.mxu0 %v5850
    %7572 = vmatprep.subr.bf16.mxu0 %v5845
    %7573 = vmatpush1.bf16.msra.mxu0 %v5844
    %7574 = vmatprep.subr.bf16.mxu0 %v5839
    %7575 = vmatpush1.bf16.msra.mxu0 %v5838
    %7576 = vmatprep.subr.bf16.mxu0 %v5833
    %7577 = vmatpush1.bf16.msra.mxu0 %v5832
    %7578 = vmatprep.subr.bf16.mxu0 %v5827
    %7579 = vmatpush1.bf16.msra.mxu0 %v5826
    %7580 = vmatprep.subr.bf16.mxu0 %v5821
    %7581 = vmatpush1.bf16.msra.mxu0 %v5820
    %7582 = vmatprep.subr.bf16.mxu0 %v5815
    %7583 = vmatpush1.bf16.msra.mxu0 %v5814
    %7584 = vmatprep.subr.bf16.mxu0 %v5905
    %7585 = vmatpush2.bf16.msra.mxu0 %v5904
    %7586 = vmatprep.subr.bf16.mxu0 %v5899
    %7587 = vmatpush2.bf16.msra.mxu0 %v5898
    %7588 = vmatprep.subr.bf16.mxu0 %v5893
    %7589 = vmatpush2.bf16.msra.mxu0 %v5892
    %7590 = vmatprep.subr.bf16.mxu0 %v5887
    %7591 = vmatpush2.bf16.msra.mxu0 %v5886
    %7592 = vmatprep.subr.bf16.mxu0 %v5881
    %7593 = vmatpush2.bf16.msra.mxu0 %v5880
    %7594 = vmatprep.subr.bf16.mxu0 %v5875
    %7595 = vmatpush2.bf16.msra.mxu0 %v5874
    %7596 = vmatprep.subr.bf16.mxu0 %v5869
    %7597 = vmatpush2.bf16.msra.mxu0 %v5868
    %7598 = vmatprep.subr.bf16.mxu0 %v5863
    %7599 = vmatpush2.bf16.msra.mxu0 %v5862
    %7600 = vmatprep.mubr.bf16.mxu0 %v1369
    %7601 = vmatmul.mubr.bf16.gmra.mxu0 %v1355
    %v7602 = vpop.f32.mrf.mxu0
    %v7603 = vadd.f32 %v7562, %v7602
    %v7604 = vpop.f32.mrf.mxu0
    %v7605 = vadd.f32 %v7564, %v7604
    %v7606 = vpop.f32.mrf.mxu0
    %v7607 = vpop.f32.mrf.mxu0
    %7608 = vdwg.mxu0
    %7609 = vmatprep.subr.bf16.mxu0 %v5953
    %7610 = vmatpush1.bf16.msra.mxu0 %v5952
    %7611 = vmatprep.subr.bf16.mxu0 %v5947
    %7612 = vmatpush1.bf16.msra.mxu0 %v5946
    %7613 = vmatprep.subr.bf16.mxu0 %v5941
    %7614 = vmatpush1.bf16.msra.mxu0 %v5940
    %7615 = vmatprep.subr.bf16.mxu0 %v5935
    %7616 = vmatpush1.bf16.msra.mxu0 %v5934
    %7617 = vmatprep.subr.bf16.mxu0 %v5929
    %7618 = vmatpush1.bf16.msra.mxu0 %v5928
    %7619 = vmatprep.subr.bf16.mxu0 %v5923
    %7620 = vmatpush1.bf16.msra.mxu0 %v5922
    %7621 = vmatprep.subr.bf16.mxu0 %v5917
    %7622 = vmatpush1.bf16.msra.mxu0 %v5916
    %7623 = vmatprep.subr.bf16.mxu0 %v5911
    %7624 = vmatpush1.bf16.msra.mxu0 %v5910
    %7625 = vmatprep.subr.bf16.mxu0 %v6001
    %7626 = vmatpush2.bf16.msra.mxu0 %v6000
    %7627 = vmatprep.subr.bf16.mxu0 %v5995
    %7628 = vmatpush2.bf16.msra.mxu0 %v5994
    %7629 = vmatprep.subr.bf16.mxu0 %v5989
    %7630 = vmatpush2.bf16.msra.mxu0 %v5988
    %7631 = vmatprep.subr.bf16.mxu0 %v5983
    %7632 = vmatpush2.bf16.msra.mxu0 %v5982
    %7633 = vmatprep.subr.bf16.mxu0 %v5977
    %7634 = vmatpush2.bf16.msra.mxu0 %v5976
    %7635 = vmatprep.subr.bf16.mxu0 %v5971
    %7636 = vmatpush2.bf16.msra.mxu0 %v5970
    %7637 = vmatprep.subr.bf16.mxu0 %v5965
    %7638 = vmatpush2.bf16.msra.mxu0 %v5964
    %7639 = vmatprep.subr.bf16.mxu0 %v5959
    %7640 = vmatpush2.bf16.msra.mxu0 %v5958
    %7641 = vmatprep.mubr.bf16.mxu0 %v1373
    %7642 = vmatmul.mubr.bf16.gmra.mxu0 %v1371
    %v7643 = vpop.f32.mrf.mxu0
    %v7644 = vadd.f32 %v7603, %v7643
    %v7645 = vpop.f32.mrf.mxu0
    %v7646 = vadd.f32 %v7605, %v7645
    %v7647 = vpop.f32.mrf.mxu0
    %v7648 = vpop.f32.mrf.mxu0
    %7649 = vdwg.mxu0
    %7650 = vmatprep.subr.bf16.mxu0 %v4899
    %7651 = vmatpush1.bf16.msra.mxu0 %v4898
    %7652 = vmatprep.subr.bf16.mxu0 %v4893
    %7653 = vmatpush1.bf16.msra.mxu0 %v4892
    %7654 = vmatprep.subr.bf16.mxu0 %v4887
    %7655 = vmatpush1.bf16.msra.mxu0 %v4886
    %7656 = vmatprep.subr.bf16.mxu0 %v4881
    %7657 = vmatpush1.bf16.msra.mxu0 %v4880
    %7658 = vmatprep.subr.bf16.mxu0 %v4875
    %7659 = vmatpush1.bf16.msra.mxu0 %v4874
    %7660 = vmatprep.subr.bf16.mxu0 %v4869
    %7661 = vmatpush1.bf16.msra.mxu0 %v4868
    %7662 = vmatprep.subr.bf16.mxu0 %v4863
    %7663 = vmatpush1.bf16.msra.mxu0 %v4862
    %7664 = vmatprep.subr.bf16.mxu0 %v4857
    %7665 = vmatpush1.bf16.msra.mxu0 %v4856
    %7666 = vmatprep.subr.bf16.mxu0 %v4947
    %7667 = vmatpush2.bf16.msra.mxu0 %v4946
    %7668 = vmatprep.subr.bf16.mxu0 %v4941
    %7669 = vmatpush2.bf16.msra.mxu0 %v4940
    %7670 = vmatprep.subr.bf16.mxu0 %v4935
    %7671 = vmatpush2.bf16.msra.mxu0 %v4934
    %7672 = vmatprep.subr.bf16.mxu0 %v4929
    %7673 = vmatpush2.bf16.msra.mxu0 %v4928
    %7674 = vmatprep.subr.bf16.mxu0 %v4923
    %7675 = vmatpush2.bf16.msra.mxu0 %v4922
    %7676 = vmatprep.subr.bf16.mxu0 %v4917
    %7677 = vmatpush2.bf16.msra.mxu0 %v4916
    %7678 = vmatprep.subr.bf16.mxu0 %v4911
    %7679 = vmatpush2.bf16.msra.mxu0 %v4910
    %7680 = vmatprep.subr.bf16.mxu0 %v4905
    %7681 = vmatpush2.bf16.msra.mxu0 %v4904
    %7682 = vmatprep.mubr.bf16.mxu0 %v1264
    %7683 = vmatmul.mubr.bf16.gmra.mxu0 %v1250
    %v7684 = vpop.f32.mrf.mxu0
    %v7685 = vadd.f32 0.0, %v7684
    %v7686 = vpop.f32.mrf.mxu0
    %v7687 = vadd.f32 0.0, %v7686
    %v7688 = vpop.f32.mrf.mxu0
    %v7689 = vpop.f32.mrf.mxu0
    %7690 = vdwg.mxu0
    %7691 = vmatprep.subr.bf16.mxu0 %v4995
    %7692 = vmatpush1.bf16.msra.mxu0 %v4994
    %7693 = vmatprep.subr.bf16.mxu0 %v4989
    %7694 = vmatpush1.bf16.msra.mxu0 %v4988
    %7695 = vmatprep.subr.bf16.mxu0 %v4983
    %7696 = vmatpush1.bf16.msra.mxu0 %v4982
    %7697 = vmatprep.subr.bf16.mxu0 %v4977
    %7698 = vmatpush1.bf16.msra.mxu0 %v4976
    %7699 = vmatprep.subr.bf16.mxu0 %v4971
    %7700 = vmatpush1.bf16.msra.mxu0 %v4970
    %7701 = vmatprep.subr.bf16.mxu0 %v4965
    %7702 = vmatpush1.bf16.msra.mxu0 %v4964
    %7703 = vmatprep.subr.bf16.mxu0 %v4959
    %7704 = vmatpush1.bf16.msra.mxu0 %v4958
    %7705 = vmatprep.subr.bf16.mxu0 %v4953
    %7706 = vmatpush1.bf16.msra.mxu0 %v4952
    %7707 = vmatprep.subr.bf16.mxu0 %v5043
    %7708 = vmatpush2.bf16.msra.mxu0 %v5042
    %7709 = vmatprep.subr.bf16.mxu0 %v5037
    %7710 = vmatpush2.bf16.msra.mxu0 %v5036
    %7711 = vmatprep.subr.bf16.mxu0 %v5031
    %7712 = vmatpush2.bf16.msra.mxu0 %v5030
    %7713 = vmatprep.subr.bf16.mxu0 %v5025
    %7714 = vmatpush2.bf16.msra.mxu0 %v5024
    %7715 = vmatprep.subr.bf16.mxu0 %v5019
    %7716 = vmatpush2.bf16.msra.mxu0 %v5018
    %7717 = vmatprep.subr.bf16.mxu0 %v5013
    %7718 = vmatpush2.bf16.msra.mxu0 %v5012
    %7719 = vmatprep.subr.bf16.mxu0 %v5007
    %7720 = vmatpush2.bf16.msra.mxu0 %v5006
    %7721 = vmatprep.subr.bf16.mxu0 %v5001
    %7722 = vmatpush2.bf16.msra.mxu0 %v5000
    %7723 = vmatprep.mubr.bf16.mxu0 %v1274
    %7724 = vmatmul.mubr.bf16.gmra.mxu0 %v1272
    %v7725 = vpop.f32.mrf.mxu0
    %v7726 = vadd.f32 %v7685, %v7725
    %v7727 = vpop.f32.mrf.mxu0
    %v7728 = vadd.f32 %v7687, %v7727
    %v7729 = vpop.f32.mrf.mxu0
    %v7730 = vpop.f32.mrf.mxu0
    %7731 = vdwg.mxu0
    %7732 = vmatprep.subr.bf16.mxu0 %v5091
    %7733 = vmatpush1.bf16.msra.mxu0 %v5090
    %7734 = vmatprep.subr.bf16.mxu0 %v5085
    %7735 = vmatpush1.bf16.msra.mxu0 %v5084
    %7736 = vmatprep.subr.bf16.mxu0 %v5079
    %7737 = vmatpush1.bf16.msra.mxu0 %v5078
    %7738 = vmatprep.subr.bf16.mxu0 %v5073
    %7739 = vmatpush1.bf16.msra.mxu0 %v5072
    %7740 = vmatprep.subr.bf16.mxu0 %v5067
    %7741 = vmatpush1.bf16.msra.mxu0 %v5066
    %7742 = vmatprep.subr.bf16.mxu0 %v5061
    %7743 = vmatpush1.bf16.msra.mxu0 %v5060
    %7744 = vmatprep.subr.bf16.mxu0 %v5055
    %7745 = vmatpush1.bf16.msra.mxu0 %v5054
    %7746 = vmatprep.subr.bf16.mxu0 %v5049
    %7747 = vmatpush1.bf16.msra.mxu0 %v5048
    %7748 = vmatprep.subr.bf16.mxu0 %v5139
    %7749 = vmatpush2.bf16.msra.mxu0 %v5138
    %7750 = vmatprep.subr.bf16.mxu0 %v5133
    %7751 = vmatpush2.bf16.msra.mxu0 %v5132
    %7752 = vmatprep.subr.bf16.mxu0 %v5127
    %7753 = vmatpush2.bf16.msra.mxu0 %v5126
    %7754 = vmatprep.subr.bf16.mxu0 %v5121
    %7755 = vmatpush2.bf16.msra.mxu0 %v5120
    %7756 = vmatprep.subr.bf16.mxu0 %v5115
    %7757 = vmatpush2.bf16.msra.mxu0 %v5114
    %7758 = vmatprep.subr.bf16.mxu0 %v5109
    %7759 = vmatpush2.bf16.msra.mxu0 %v5108
    %7760 = vmatprep.subr.bf16.mxu0 %v5103
    %7761 = vmatpush2.bf16.msra.mxu0 %v5102
    %7762 = vmatprep.subr.bf16.mxu0 %v5097
    %7763 = vmatpush2.bf16.msra.mxu0 %v5096
    %7764 = vmatprep.mubr.bf16.mxu0 %v1271
    %7765 = vmatmul.mubr.bf16.gmra.mxu0 %v1257
    %v7766 = vpop.f32.mrf.mxu0
    %v7767 = vadd.f32 %v7726, %v7766
    %v7768 = vpop.f32.mrf.mxu0
    %v7769 = vadd.f32 %v7728, %v7768
    %v7770 = vpop.f32.mrf.mxu0
    %v7771 = vpop.f32.mrf.mxu0
    %7772 = vdwg.mxu0
    %7773 = vmatprep.subr.bf16.mxu0 %v5187
    %7774 = vmatpush1.bf16.msra.mxu0 %v5186
    %7775 = vmatprep.subr.bf16.mxu0 %v5181
    %7776 = vmatpush1.bf16.msra.mxu0 %v5180
    %7777 = vmatprep.subr.bf16.mxu0 %v5175
    %7778 = vmatpush1.bf16.msra.mxu0 %v5174
    %7779 = vmatprep.subr.bf16.mxu0 %v5169
    %7780 = vmatpush1.bf16.msra.mxu0 %v5168
    %7781 = vmatprep.subr.bf16.mxu0 %v5163
    %7782 = vmatpush1.bf16.msra.mxu0 %v5162
    %7783 = vmatprep.subr.bf16.mxu0 %v5157
    %7784 = vmatpush1.bf16.msra.mxu0 %v5156
    %7785 = vmatprep.subr.bf16.mxu0 %v5151
    %7786 = vmatpush1.bf16.msra.mxu0 %v5150
    %7787 = vmatprep.subr.bf16.mxu0 %v5145
    %7788 = vmatpush1.bf16.msra.mxu0 %v5144
    %7789 = vmatprep.subr.bf16.mxu0 %v5235
    %7790 = vmatpush2.bf16.msra.mxu0 %v5234
    %7791 = vmatprep.subr.bf16.mxu0 %v5229
    %7792 = vmatpush2.bf16.msra.mxu0 %v5228
    %7793 = vmatprep.subr.bf16.mxu0 %v5223
    %7794 = vmatpush2.bf16.msra.mxu0 %v5222
    %7795 = vmatprep.subr.bf16.mxu0 %v5217
    %7796 = vmatpush2.bf16.msra.mxu0 %v5216
    %7797 = vmatprep.subr.bf16.mxu0 %v5211
    %7798 = vmatpush2.bf16.msra.mxu0 %v5210
    %7799 = vmatprep.subr.bf16.mxu0 %v5205
    %7800 = vmatpush2.bf16.msra.mxu0 %v5204
    %7801 = vmatprep.subr.bf16.mxu0 %v5199
    %7802 = vmatpush2.bf16.msra.mxu0 %v5198
    %7803 = vmatprep.subr.bf16.mxu0 %v5193
    %7804 = vmatpush2.bf16.msra.mxu0 %v5192
    %7805 = vmatprep.mubr.bf16.mxu0 %v1275
    %7806 = vmatmul.mubr.bf16.gmra.mxu0 %v1273
    %v7807 = vpop.f32.mrf.mxu0
    %v7808 = vadd.f32 %v7767, %v7807
    %v7809 = vpop.f32.mrf.mxu0
    %v7810 = vadd.f32 %v7769, %v7809
    %v7811 = vpop.f32.mrf.mxu0
    %v7812 = vpop.f32.mrf.mxu0
    %7813 = vdwg.mxu0
    %7814 = vmatprep.subr.bf16.mxu0 %v5283
    %7815 = vmatpush1.bf16.msra.mxu0 %v5282
    %7816 = vmatprep.subr.bf16.mxu0 %v5277
    %7817 = vmatpush1.bf16.msra.mxu0 %v5276
    %7818 = vmatprep.subr.bf16.mxu0 %v5271
    %7819 = vmatpush1.bf16.msra.mxu0 %v5270
    %7820 = vmatprep.subr.bf16.mxu0 %v5265
    %7821 = vmatpush1.bf16.msra.mxu0 %v5264
    %7822 = vmatprep.subr.bf16.mxu0 %v5259
    %7823 = vmatpush1.bf16.msra.mxu0 %v5258
    %7824 = vmatprep.subr.bf16.mxu0 %v5253
    %7825 = vmatpush1.bf16.msra.mxu0 %v5252
    %7826 = vmatprep.subr.bf16.mxu0 %v5247
    %7827 = vmatpush1.bf16.msra.mxu0 %v5246
    %7828 = vmatprep.subr.bf16.mxu0 %v5241
    %7829 = vmatpush1.bf16.msra.mxu0 %v5240
    %7830 = vmatprep.subr.bf16.mxu0 %v5331
    %7831 = vmatpush2.bf16.msra.mxu0 %v5330
    %7832 = vmatprep.subr.bf16.mxu0 %v5325
    %7833 = vmatpush2.bf16.msra.mxu0 %v5324
    %7834 = vmatprep.subr.bf16.mxu0 %v5319
    %7835 = vmatpush2.bf16.msra.mxu0 %v5318
    %7836 = vmatprep.subr.bf16.mxu0 %v5313
    %7837 = vmatpush2.bf16.msra.mxu0 %v5312
    %7838 = vmatprep.subr.bf16.mxu0 %v5307
    %7839 = vmatpush2.bf16.msra.mxu0 %v5306
    %7840 = vmatprep.subr.bf16.mxu0 %v5301
    %7841 = vmatpush2.bf16.msra.mxu0 %v5300
    %7842 = vmatprep.subr.bf16.mxu0 %v5295
    %7843 = vmatpush2.bf16.msra.mxu0 %v5294
    %7844 = vmatprep.subr.bf16.mxu0 %v5289
    %7845 = vmatpush2.bf16.msra.mxu0 %v5288
    %7846 = vmatprep.mubr.bf16.mxu0 %v1313
    %7847 = vmatmul.mubr.bf16.gmra.mxu0 %v1299
    %v7848 = vpop.f32.mrf.mxu0
    %v7849 = vadd.f32 %v7808, %v7848
    %v7850 = vpop.f32.mrf.mxu0
    %v7851 = vadd.f32 %v7810, %v7850
    %v7852 = vpop.f32.mrf.mxu0
    %v7853 = vpop.f32.mrf.mxu0
    %7854 = vdwg.mxu0
    %7855 = vmatprep.subr.bf16.mxu0 %v5379
    %7856 = vmatpush1.bf16.msra.mxu0 %v5378
    %7857 = vmatprep.subr.bf16.mxu0 %v5373
    %7858 = vmatpush1.bf16.msra.mxu0 %v5372
    %7859 = vmatprep.subr.bf16.mxu0 %v5367
    %7860 = vmatpush1.bf16.msra.mxu0 %v5366
    %7861 = vmatprep.subr.bf16.mxu0 %v5361
    %7862 = vmatpush1.bf16.msra.mxu0 %v5360
    %7863 = vmatprep.subr.bf16.mxu0 %v5355
    %7864 = vmatpush1.bf16.msra.mxu0 %v5354
    %7865 = vmatprep.subr.bf16.mxu0 %v5349
    %7866 = vmatpush1.bf16.msra.mxu0 %v5348
    %7867 = vmatprep.subr.bf16.mxu0 %v5343
    %7868 = vmatpush1.bf16.msra.mxu0 %v5342
    %7869 = vmatprep.subr.bf16.mxu0 %v5337
    %7870 = vmatpush1.bf16.msra.mxu0 %v5336
    %7871 = vmatprep.subr.bf16.mxu0 %v5427
    %7872 = vmatpush2.bf16.msra.mxu0 %v5426
    %7873 = vmatprep.subr.bf16.mxu0 %v5421
    %7874 = vmatpush2.bf16.msra.mxu0 %v5420
    %7875 = vmatprep.subr.bf16.mxu0 %v5415
    %7876 = vmatpush2.bf16.msra.mxu0 %v5414
    %7877 = vmatprep.subr.bf16.mxu0 %v5409
    %7878 = vmatpush2.bf16.msra.mxu0 %v5408
    %7879 = vmatprep.subr.bf16.mxu0 %v5403
    %7880 = vmatpush2.bf16.msra.mxu0 %v5402
    %7881 = vmatprep.subr.bf16.mxu0 %v5397
    %7882 = vmatpush2.bf16.msra.mxu0 %v5396
    %7883 = vmatprep.subr.bf16.mxu0 %v5391
    %7884 = vmatpush2.bf16.msra.mxu0 %v5390
    %7885 = vmatprep.subr.bf16.mxu0 %v5385
    %7886 = vmatpush2.bf16.msra.mxu0 %v5384
    %7887 = vmatprep.mubr.bf16.mxu0 %v1323
    %7888 = vmatmul.mubr.bf16.gmra.mxu0 %v1321
    %v7889 = vpop.f32.mrf.mxu0
    %v7890 = vadd.f32 %v7849, %v7889
    %v7891 = vpop.f32.mrf.mxu0
    %v7892 = vadd.f32 %v7851, %v7891
    %v7893 = vpop.f32.mrf.mxu0
    %v7894 = vpop.f32.mrf.mxu0
    %7895 = vdwg.mxu0
    %7896 = vmatprep.subr.bf16.mxu0 %v5475
    %7897 = vmatpush1.bf16.msra.mxu0 %v5474
    %7898 = vmatprep.subr.bf16.mxu0 %v5469
    %7899 = vmatpush1.bf16.msra.mxu0 %v5468
    %7900 = vmatprep.subr.bf16.mxu0 %v5463
    %7901 = vmatpush1.bf16.msra.mxu0 %v5462
    %7902 = vmatprep.subr.bf16.mxu0 %v5457
    %7903 = vmatpush1.bf16.msra.mxu0 %v5456
    %7904 = vmatprep.subr.bf16.mxu0 %v5451
    %7905 = vmatpush1.bf16.msra.mxu0 %v5450
    %7906 = vmatprep.subr.bf16.mxu0 %v5445
    %7907 = vmatpush1.bf16.msra.mxu0 %v5444
    %7908 = vmatprep.subr.bf16.mxu0 %v5439
    %7909 = vmatpush1.bf16.msra.mxu0 %v5438
    %7910 = vmatprep.subr.bf16.mxu0 %v5433
    %7911 = vmatpush1.bf16.msra.mxu0 %v5432
    %7912 = vmatprep.subr.bf16.mxu0 %v5523
    %7913 = vmatpush2.bf16.msra.mxu0 %v5522
    %7914 = vmatprep.subr.bf16.mxu0 %v5517
    %7915 = vmatpush2.bf16.msra.mxu0 %v5516
    %7916 = vmatprep.subr.bf16.mxu0 %v5511
    %7917 = vmatpush2.bf16.msra.mxu0 %v5510
    %7918 = vmatprep.subr.bf16.mxu0 %v5505
    %7919 = vmatpush2.bf16.msra.mxu0 %v5504
    %7920 = vmatprep.subr.bf16.mxu0 %v5499
    %7921 = vmatpush2.bf16.msra.mxu0 %v5498
    %7922 = vmatprep.subr.bf16.mxu0 %v5493
    %7923 = vmatpush2.bf16.msra.mxu0 %v5492
    %7924 = vmatprep.subr.bf16.mxu0 %v5487
    %7925 = vmatpush2.bf16.msra.mxu0 %v5486
    %7926 = vmatprep.subr.bf16.mxu0 %v5481
    %7927 = vmatpush2.bf16.msra.mxu0 %v5480
    %7928 = vmatprep.mubr.bf16.mxu0 %v1320
    %7929 = vmatmul.mubr.bf16.gmra.mxu0 %v1306
    %v7930 = vpop.f32.mrf.mxu0
    %v7931 = vadd.f32 %v7890, %v7930
    %v7932 = vpop.f32.mrf.mxu0
    %v7933 = vadd.f32 %v7892, %v7932
    %v7934 = vpop.f32.mrf.mxu0
    %v7935 = vpop.f32.mrf.mxu0
    %7936 = vdwg.mxu0
    %7937 = vmatprep.subr.bf16.mxu0 %v5571
    %7938 = vmatpush1.bf16.msra.mxu0 %v5570
    %7939 = vmatprep.subr.bf16.mxu0 %v5565
    %7940 = vmatpush1.bf16.msra.mxu0 %v5564
    %7941 = vmatprep.subr.bf16.mxu0 %v5559
    %7942 = vmatpush1.bf16.msra.mxu0 %v5558
    %7943 = vmatprep.subr.bf16.mxu0 %v5553
    %7944 = vmatpush1.bf16.msra.mxu0 %v5552
    %7945 = vmatprep.subr.bf16.mxu0 %v5547
    %7946 = vmatpush1.bf16.msra.mxu0 %v5546
    %7947 = vmatprep.subr.bf16.mxu0 %v5541
    %7948 = vmatpush1.bf16.msra.mxu0 %v5540
    %7949 = vmatprep.subr.bf16.mxu0 %v5535
    %7950 = vmatpush1.bf16.msra.mxu0 %v5534
    %7951 = vmatprep.subr.bf16.mxu0 %v5529
    %7952 = vmatpush1.bf16.msra.mxu0 %v5528
    %7953 = vmatprep.subr.bf16.mxu0 %v5619
    %7954 = vmatpush2.bf16.msra.mxu0 %v5618
    %7955 = vmatprep.subr.bf16.mxu0 %v5613
    %7956 = vmatpush2.bf16.msra.mxu0 %v5612
    %7957 = vmatprep.subr.bf16.mxu0 %v5607
    %7958 = vmatpush2.bf16.msra.mxu0 %v5606
    %7959 = vmatprep.subr.bf16.mxu0 %v5601
    %7960 = vmatpush2.bf16.msra.mxu0 %v5600
    %7961 = vmatprep.subr.bf16.mxu0 %v5595
    %7962 = vmatpush2.bf16.msra.mxu0 %v5594
    %7963 = vmatprep.subr.bf16.mxu0 %v5589
    %7964 = vmatpush2.bf16.msra.mxu0 %v5588
    %7965 = vmatprep.subr.bf16.mxu0 %v5583
    %7966 = vmatpush2.bf16.msra.mxu0 %v5582
    %7967 = vmatprep.subr.bf16.mxu0 %v5577
    %7968 = vmatpush2.bf16.msra.mxu0 %v5576
    %7969 = vmatprep.mubr.bf16.mxu0 %v1324
    %7970 = vmatmul.mubr.bf16.gmra.mxu0 %v1322
    %v7971 = vpop.f32.mrf.mxu0
    %v7972 = vadd.f32 %v7931, %v7971
    %v7973 = vpop.f32.mrf.mxu0
    %v7974 = vadd.f32 %v7933, %v7973
    %v7975 = vpop.f32.mrf.mxu0
    %v7976 = vpop.f32.mrf.mxu0
    %7977 = vdwg.mxu0
    %7978 = vmatprep.subr.bf16.mxu0 %v5667
    %7979 = vmatpush1.bf16.msra.mxu0 %v5666
    %7980 = vmatprep.subr.bf16.mxu0 %v5661
    %7981 = vmatpush1.bf16.msra.mxu0 %v5660
    %7982 = vmatprep.subr.bf16.mxu0 %v5655
    %7983 = vmatpush1.bf16.msra.mxu0 %v5654
    %7984 = vmatprep.subr.bf16.mxu0 %v5649
    %7985 = vmatpush1.bf16.msra.mxu0 %v5648
    %7986 = vmatprep.subr.bf16.mxu0 %v5643
    %7987 = vmatpush1.bf16.msra.mxu0 %v5642
    %7988 = vmatprep.subr.bf16.mxu0 %v5637
    %7989 = vmatpush1.bf16.msra.mxu0 %v5636
    %7990 = vmatprep.subr.bf16.mxu0 %v5631
    %7991 = vmatpush1.bf16.msra.mxu0 %v5630
    %7992 = vmatprep.subr.bf16.mxu0 %v5625
    %7993 = vmatpush1.bf16.msra.mxu0 %v5624
    %7994 = vmatprep.subr.bf16.mxu0 %v5715
    %7995 = vmatpush2.bf16.msra.mxu0 %v5714
    %7996 = vmatprep.subr.bf16.mxu0 %v5709
    %7997 = vmatpush2.bf16.msra.mxu0 %v5708
    %7998 = vmatprep.subr.bf16.mxu0 %v5703
    %7999 = vmatpush2.bf16.msra.mxu0 %v5702
    %8000 = vmatprep.subr.bf16.mxu0 %v5697
    %8001 = vmatpush2.bf16.msra.mxu0 %v5696
    %8002 = vmatprep.subr.bf16.mxu0 %v5691
    %8003 = vmatpush2.bf16.msra.mxu0 %v5690
    %8004 = vmatprep.subr.bf16.mxu0 %v5685
    %8005 = vmatpush2.bf16.msra.mxu0 %v5684
    %8006 = vmatprep.subr.bf16.mxu0 %v5679
    %8007 = vmatpush2.bf16.msra.mxu0 %v5678
    %8008 = vmatprep.subr.bf16.mxu0 %v5673
    %8009 = vmatpush2.bf16.msra.mxu0 %v5672
    %8010 = vmatprep.mubr.bf16.mxu0 %v1362
    %8011 = vmatmul.mubr.bf16.gmra.mxu0 %v1348
    %v8012 = vpop.f32.mrf.mxu0
    %v8013 = vadd.f32 %v7972, %v8012
    %v8014 = vpop.f32.mrf.mxu0
    %v8015 = vadd.f32 %v7974, %v8014
    %v8016 = vpop.f32.mrf.mxu0
    %v8017 = vpop.f32.mrf.mxu0
    %8018 = vdwg.mxu0
    %8019 = vmatprep.subr.bf16.mxu0 %v5763
    %8020 = vmatpush1.bf16.msra.mxu0 %v5762
    %8021 = vmatprep.subr.bf16.mxu0 %v5757
    %8022 = vmatpush1.bf16.msra.mxu0 %v5756
    %8023 = vmatprep.subr.bf16.mxu0 %v5751
    %8024 = vmatpush1.bf16.msra.mxu0 %v5750
    %8025 = vmatprep.subr.bf16.mxu0 %v5745
    %8026 = vmatpush1.bf16.msra.mxu0 %v5744
    %8027 = vmatprep.subr.bf16.mxu0 %v5739
    %8028 = vmatpush1.bf16.msra.mxu0 %v5738
    %8029 = vmatprep.subr.bf16.mxu0 %v5733
    %8030 = vmatpush1.bf16.msra.mxu0 %v5732
    %8031 = vmatprep.subr.bf16.mxu0 %v5727
    %8032 = vmatpush1.bf16.msra.mxu0 %v5726
    %8033 = vmatprep.subr.bf16.mxu0 %v5721
    %8034 = vmatpush1.bf16.msra.mxu0 %v5720
    %8035 = vmatprep.subr.bf16.mxu0 %v5811
    %8036 = vmatpush2.bf16.msra.mxu0 %v5810
    %8037 = vmatprep.subr.bf16.mxu0 %v5805
    %8038 = vmatpush2.bf16.msra.mxu0 %v5804
    %8039 = vmatprep.subr.bf16.mxu0 %v5799
    %8040 = vmatpush2.bf16.msra.mxu0 %v5798
    %8041 = vmatprep.subr.bf16.mxu0 %v5793
    %8042 = vmatpush2.bf16.msra.mxu0 %v5792
    %8043 = vmatprep.subr.bf16.mxu0 %v5787
    %8044 = vmatpush2.bf16.msra.mxu0 %v5786
    %8045 = vmatprep.subr.bf16.mxu0 %v5781
    %8046 = vmatpush2.bf16.msra.mxu0 %v5780
    %8047 = vmatprep.subr.bf16.mxu0 %v5775
    %8048 = vmatpush2.bf16.msra.mxu0 %v5774
    %8049 = vmatprep.subr.bf16.mxu0 %v5769
    %8050 = vmatpush2.bf16.msra.mxu0 %v5768
    %8051 = vmatprep.mubr.bf16.mxu0 %v1372
    %8052 = vmatmul.mubr.bf16.gmra.mxu0 %v1370
    %v8053 = vpop.f32.mrf.mxu0
    %v8054 = vadd.f32 %v8013, %v8053
    %v8055 = vpop.f32.mrf.mxu0
    %v8056 = vadd.f32 %v8015, %v8055
    %v8057 = vpop.f32.mrf.mxu0
    %v8058 = vpop.f32.mrf.mxu0
    %8059 = vdwg.mxu0
    %8060 = vmatprep.subr.bf16.mxu0 %v5859
    %8061 = vmatpush1.bf16.msra.mxu0 %v5858
    %8062 = vmatprep.subr.bf16.mxu0 %v5853
    %8063 = vmatpush1.bf16.msra.mxu0 %v5852
    %8064 = vmatprep.subr.bf16.mxu0 %v5847
    %8065 = vmatpush1.bf16.msra.mxu0 %v5846
    %8066 = vmatprep.subr.bf16.mxu0 %v5841
    %8067 = vmatpush1.bf16.msra.mxu0 %v5840
    %8068 = vmatprep.subr.bf16.mxu0 %v5835
    %8069 = vmatpush1.bf16.msra.mxu0 %v5834
    %8070 = vmatprep.subr.bf16.mxu0 %v5829
    %8071 = vmatpush1.bf16.msra.mxu0 %v5828
    %8072 = vmatprep.subr.bf16.mxu0 %v5823
    %8073 = vmatpush1.bf16.msra.mxu0 %v5822
    %8074 = vmatprep.subr.bf16.mxu0 %v5817
    %8075 = vmatpush1.bf16.msra.mxu0 %v5816
    %8076 = vmatprep.subr.bf16.mxu0 %v5907
    %8077 = vmatpush2.bf16.msra.mxu0 %v5906
    %8078 = vmatprep.subr.bf16.mxu0 %v5901
    %8079 = vmatpush2.bf16.msra.mxu0 %v5900
    %8080 = vmatprep.subr.bf16.mxu0 %v5895
    %8081 = vmatpush2.bf16.msra.mxu0 %v5894
    %8082 = vmatprep.subr.bf16.mxu0 %v5889
    %8083 = vmatpush2.bf16.msra.mxu0 %v5888
    %8084 = vmatprep.subr.bf16.mxu0 %v5883
    %8085 = vmatpush2.bf16.msra.mxu0 %v5882
    %8086 = vmatprep.subr.bf16.mxu0 %v5877
    %8087 = vmatpush2.bf16.msra.mxu0 %v5876
    %8088 = vmatprep.subr.bf16.mxu0 %v5871
    %8089 = vmatpush2.bf16.msra.mxu0 %v5870
    %8090 = vmatprep.subr.bf16.mxu0 %v5865
    %8091 = vmatpush2.bf16.msra.mxu0 %v5864
    %8092 = vmatprep.mubr.bf16.mxu0 %v1369
    %8093 = vmatmul.mubr.bf16.gmra.mxu0 %v1355
    %v8094 = vpop.f32.mrf.mxu0
    %v8095 = vadd.f32 %v8054, %v8094
    %v8096 = vpop.f32.mrf.mxu0
    %v8097 = vadd.f32 %v8056, %v8096
    %v8098 = vpop.f32.mrf.mxu0
    %v8099 = vpop.f32.mrf.mxu0
    %8100 = vdwg.mxu0
    %8101 = vmatprep.subr.bf16.mxu0 %v5955
    %8102 = vmatpush1.bf16.msra.mxu0 %v5954
    %8103 = vmatprep.subr.bf16.mxu0 %v5949
    %8104 = vmatpush1.bf16.msra.mxu0 %v5948
    %8105 = vmatprep.subr.bf16.mxu0 %v5943
    %8106 = vmatpush1.bf16.msra.mxu0 %v5942
    %8107 = vmatprep.subr.bf16.mxu0 %v5937
    %8108 = vmatpush1.bf16.msra.mxu0 %v5936
    %8109 = vmatprep.subr.bf16.mxu0 %v5931
    %8110 = vmatpush1.bf16.msra.mxu0 %v5930
    %8111 = vmatprep.subr.bf16.mxu0 %v5925
    %8112 = vmatpush1.bf16.msra.mxu0 %v5924
    %8113 = vmatprep.subr.bf16.mxu0 %v5919
    %8114 = vmatpush1.bf16.msra.mxu0 %v5918
    %8115 = vmatprep.subr.bf16.mxu0 %v5913
    %8116 = vmatpush1.bf16.msra.mxu0 %v5912
    %8117 = vmatprep.subr.bf16.mxu0 %v6003
    %8118 = vmatpush2.bf16.msra.mxu0 %v6002
    %8119 = vmatprep.subr.bf16.mxu0 %v5997
    %8120 = vmatpush2.bf16.msra.mxu0 %v5996
    %8121 = vmatprep.subr.bf16.mxu0 %v5991
    %8122 = vmatpush2.bf16.msra.mxu0 %v5990
    %8123 = vmatprep.subr.bf16.mxu0 %v5985
    %8124 = vmatpush2.bf16.msra.mxu0 %v5984
    %8125 = vmatprep.subr.bf16.mxu0 %v5979
    %8126 = vmatpush2.bf16.msra.mxu0 %v5978
    %8127 = vmatprep.subr.bf16.mxu0 %v5973
    %8128 = vmatpush2.bf16.msra.mxu0 %v5972
    %8129 = vmatprep.subr.bf16.mxu0 %v5967
    %8130 = vmatpush2.bf16.msra.mxu0 %v5966
    %8131 = vmatprep.subr.bf16.mxu0 %v5961
    %8132 = vmatpush2.bf16.msra.mxu0 %v5960
    %8133 = vmatprep.mubr.bf16.mxu0 %v1373
    %8134 = vmatmul.mubr.bf16.gmra.mxu0 %v1371
    %v8135 = vpop.f32.mrf.mxu0
    %v8136 = vadd.f32 %v8095, %v8135
    %v8137 = vpop.f32.mrf.mxu0
    %v8138 = vadd.f32 %v8097, %v8137
    %v8139 = vpop.f32.mrf.mxu0
    %v8140 = vpop.f32.mrf.mxu0
    %8141 = vdwg.mxu0
    %8142 = vmatprep.subr.bf16.mxu0 %v4901
    %8143 = vmatpush1.bf16.msra.mxu0 %v4900
    %8144 = vmatprep.subr.bf16.mxu0 %v4895
    %8145 = vmatpush1.bf16.msra.mxu0 %v4894
    %8146 = vmatprep.subr.bf16.mxu0 %v4889
    %8147 = vmatpush1.bf16.msra.mxu0 %v4888
    %8148 = vmatprep.subr.bf16.mxu0 %v4883
    %8149 = vmatpush1.bf16.msra.mxu0 %v4882
    %8150 = vmatprep.subr.bf16.mxu0 %v4877
    %8151 = vmatpush1.bf16.msra.mxu0 %v4876
    %8152 = vmatprep.subr.bf16.mxu0 %v4871
    %8153 = vmatpush1.bf16.msra.mxu0 %v4870
    %8154 = vmatprep.subr.bf16.mxu0 %v4865
    %8155 = vmatpush1.bf16.msra.mxu0 %v4864
    %8156 = vmatprep.subr.bf16.mxu0 %v4859
    %8157 = vmatpush1.bf16.msra.mxu0 %v4858
    %8158 = vmatprep.subr.bf16.mxu0 %v4949
    %8159 = vmatpush2.bf16.msra.mxu0 %v4948
    %8160 = vmatprep.subr.bf16.mxu0 %v4943
    %8161 = vmatpush2.bf16.msra.mxu0 %v4942
    %8162 = vmatprep.subr.bf16.mxu0 %v4937
    %8163 = vmatpush2.bf16.msra.mxu0 %v4936
    %8164 = vmatprep.subr.bf16.mxu0 %v4931
    %8165 = vmatpush2.bf16.msra.mxu0 %v4930
    %8166 = vmatprep.subr.bf16.mxu0 %v4925
    %8167 = vmatpush2.bf16.msra.mxu0 %v4924
    %8168 = vmatprep.subr.bf16.mxu0 %v4919
    %8169 = vmatpush2.bf16.msra.mxu0 %v4918
    %8170 = vmatprep.subr.bf16.mxu0 %v4913
    %8171 = vmatpush2.bf16.msra.mxu0 %v4912
    %8172 = vmatprep.subr.bf16.mxu0 %v4907
    %8173 = vmatpush2.bf16.msra.mxu0 %v4906
    %8174 = vmatprep.mubr.bf16.mxu0 %v1264
    %8175 = vmatmul.mubr.bf16.gmra.mxu0 %v1250
    %v8176 = vpop.f32.mrf.mxu0
    %v8177 = vadd.f32 0.0, %v8176
    %v8178 = vpop.f32.mrf.mxu0
    %v8179 = vadd.f32 0.0, %v8178
    %v8180 = vpop.f32.mrf.mxu0
    %v8181 = vpop.f32.mrf.mxu0
    %8182 = vdwg.mxu0
    %8183 = vmatprep.subr.bf16.mxu0 %v4997
    %8184 = vmatpush1.bf16.msra.mxu0 %v4996
    %8185 = vmatprep.subr.bf16.mxu0 %v4991
    %8186 = vmatpush1.bf16.msra.mxu0 %v4990
    %8187 = vmatprep.subr.bf16.mxu0 %v4985
    %8188 = vmatpush1.bf16.msra.mxu0 %v4984
    %8189 = vmatprep.subr.bf16.mxu0 %v4979
    %8190 = vmatpush1.bf16.msra.mxu0 %v4978
    %8191 = vmatprep.subr.bf16.mxu0 %v4973
    %8192 = vmatpush1.bf16.msra.mxu0 %v4972
    %8193 = vmatprep.subr.bf16.mxu0 %v4967
    %8194 = vmatpush1.bf16.msra.mxu0 %v4966
    %8195 = vmatprep.subr.bf16.mxu0 %v4961
    %8196 = vmatpush1.bf16.msra.mxu0 %v4960
    %8197 = vmatprep.subr.bf16.mxu0 %v4955
    %8198 = vmatpush1.bf16.msra.mxu0 %v4954
    %8199 = vmatprep.subr.bf16.mxu0 %v5045
    %8200 = vmatpush2.bf16.msra.mxu0 %v5044
    %8201 = vmatprep.subr.bf16.mxu0 %v5039
    %8202 = vmatpush2.bf16.msra.mxu0 %v5038
    %8203 = vmatprep.subr.bf16.mxu0 %v5033
    %8204 = vmatpush2.bf16.msra.mxu0 %v5032
    %8205 = vmatprep.subr.bf16.mxu0 %v5027
    %8206 = vmatpush2.bf16.msra.mxu0 %v5026
    %8207 = vmatprep.subr.bf16.mxu0 %v5021
    %8208 = vmatpush2.bf16.msra.mxu0 %v5020
    %8209 = vmatprep.subr.bf16.mxu0 %v5015
    %8210 = vmatpush2.bf16.msra.mxu0 %v5014
    %8211 = vmatprep.subr.bf16.mxu0 %v5009
    %8212 = vmatpush2.bf16.msra.mxu0 %v5008
    %8213 = vmatprep.subr.bf16.mxu0 %v5003
    %8214 = vmatpush2.bf16.msra.mxu0 %v5002
    %8215 = vmatprep.mubr.bf16.mxu0 %v1274
    %8216 = vmatmul.mubr.bf16.gmra.mxu0 %v1272
    %v8217 = vpop.f32.mrf.mxu0
    %v8218 = vadd.f32 %v8177, %v8217
    %v8219 = vpop.f32.mrf.mxu0
    %v8220 = vadd.f32 %v8179, %v8219
    %v8221 = vpop.f32.mrf.mxu0
    %v8222 = vpop.f32.mrf.mxu0
    %8223 = vdwg.mxu0
    %8224 = vmatprep.subr.bf16.mxu0 %v5093
    %8225 = vmatpush1.bf16.msra.mxu0 %v5092
    %8226 = vmatprep.subr.bf16.mxu0 %v5087
    %8227 = vmatpush1.bf16.msra.mxu0 %v5086
    %8228 = vmatprep.subr.bf16.mxu0 %v5081
    %8229 = vmatpush1.bf16.msra.mxu0 %v5080
    %8230 = vmatprep.subr.bf16.mxu0 %v5075
    %8231 = vmatpush1.bf16.msra.mxu0 %v5074
    %8232 = vmatprep.subr.bf16.mxu0 %v5069
    %8233 = vmatpush1.bf16.msra.mxu0 %v5068
    %8234 = vmatprep.subr.bf16.mxu0 %v5063
    %8235 = vmatpush1.bf16.msra.mxu0 %v5062
    %8236 = vmatprep.subr.bf16.mxu0 %v5057
    %8237 = vmatpush1.bf16.msra.mxu0 %v5056
    %8238 = vmatprep.subr.bf16.mxu0 %v5051
    %8239 = vmatpush1.bf16.msra.mxu0 %v5050
    %8240 = vmatprep.subr.bf16.mxu0 %v5141
    %8241 = vmatpush2.bf16.msra.mxu0 %v5140
    %8242 = vmatprep.subr.bf16.mxu0 %v5135
    %8243 = vmatpush2.bf16.msra.mxu0 %v5134
    %8244 = vmatprep.subr.bf16.mxu0 %v5129
    %8245 = vmatpush2.bf16.msra.mxu0 %v5128
    %8246 = vmatprep.subr.bf16.mxu0 %v5123
    %8247 = vmatpush2.bf16.msra.mxu0 %v5122
    %8248 = vmatprep.subr.bf16.mxu0 %v5117
    %8249 = vmatpush2.bf16.msra.mxu0 %v5116
    %8250 = vmatprep.subr.bf16.mxu0 %v5111
    %8251 = vmatpush2.bf16.msra.mxu0 %v5110
    %8252 = vmatprep.subr.bf16.mxu0 %v5105
    %8253 = vmatpush2.bf16.msra.mxu0 %v5104
    %8254 = vmatprep.subr.bf16.mxu0 %v5099
    %8255 = vmatpush2.bf16.msra.mxu0 %v5098
    %8256 = vmatprep.mubr.bf16.mxu0 %v1271
    %8257 = vmatmul.mubr.bf16.gmra.mxu0 %v1257
    %v8258 = vpop.f32.mrf.mxu0
    %v8259 = vadd.f32 %v8218, %v8258
    %v8260 = vpop.f32.mrf.mxu0
    %v8261 = vadd.f32 %v8220, %v8260
    %v8262 = vpop.f32.mrf.mxu0
    %v8263 = vpop.f32.mrf.mxu0
    %8264 = vdwg.mxu0
    %8265 = vmatprep.subr.bf16.mxu0 %v5189
    %8266 = vmatpush1.bf16.msra.mxu0 %v5188
    %8267 = vmatprep.subr.bf16.mxu0 %v5183
    %8268 = vmatpush1.bf16.msra.mxu0 %v5182
    %8269 = vmatprep.subr.bf16.mxu0 %v5177
    %8270 = vmatpush1.bf16.msra.mxu0 %v5176
    %8271 = vmatprep.subr.bf16.mxu0 %v5171
    %8272 = vmatpush1.bf16.msra.mxu0 %v5170
    %8273 = vmatprep.subr.bf16.mxu0 %v5165
    %8274 = vmatpush1.bf16.msra.mxu0 %v5164
    %8275 = vmatprep.subr.bf16.mxu0 %v5159
    %8276 = vmatpush1.bf16.msra.mxu0 %v5158
    %8277 = vmatprep.subr.bf16.mxu0 %v5153
    %8278 = vmatpush1.bf16.msra.mxu0 %v5152
    %8279 = vmatprep.subr.bf16.mxu0 %v5147
    %8280 = vmatpush1.bf16.msra.mxu0 %v5146
    %8281 = vmatprep.subr.bf16.mxu0 %v5237
    %8282 = vmatpush2.bf16.msra.mxu0 %v5236
    %8283 = vmatprep.subr.bf16.mxu0 %v5231
    %8284 = vmatpush2.bf16.msra.mxu0 %v5230
    %8285 = vmatprep.subr.bf16.mxu0 %v5225
    %8286 = vmatpush2.bf16.msra.mxu0 %v5224
    %8287 = vmatprep.subr.bf16.mxu0 %v5219
    %8288 = vmatpush2.bf16.msra.mxu0 %v5218
    %8289 = vmatprep.subr.bf16.mxu0 %v5213
    %8290 = vmatpush2.bf16.msra.mxu0 %v5212
    %8291 = vmatprep.subr.bf16.mxu0 %v5207
    %8292 = vmatpush2.bf16.msra.mxu0 %v5206
    %8293 = vmatprep.subr.bf16.mxu0 %v5201
    %8294 = vmatpush2.bf16.msra.mxu0 %v5200
    %8295 = vmatprep.subr.bf16.mxu0 %v5195
    %8296 = vmatpush2.bf16.msra.mxu0 %v5194
    %8297 = vmatprep.mubr.bf16.mxu0 %v1275
    %8298 = vmatmul.mubr.bf16.gmra.mxu0 %v1273
    %v8299 = vpop.f32.mrf.mxu0
    %v8300 = vadd.f32 %v8259, %v8299
    %v8301 = vpop.f32.mrf.mxu0
    %v8302 = vadd.f32 %v8261, %v8301
    %v8303 = vpop.f32.mrf.mxu0
    %v8304 = vpop.f32.mrf.mxu0
    %8305 = vdwg.mxu0
    %8306 = vmatprep.subr.bf16.mxu0 %v5285
    %8307 = vmatpush1.bf16.msra.mxu0 %v5284
    %8308 = vmatprep.subr.bf16.mxu0 %v5279
    %8309 = vmatpush1.bf16.msra.mxu0 %v5278
    %8310 = vmatprep.subr.bf16.mxu0 %v5273
    %8311 = vmatpush1.bf16.msra.mxu0 %v5272
    %8312 = vmatprep.subr.bf16.mxu0 %v5267
    %8313 = vmatpush1.bf16.msra.mxu0 %v5266
    %8314 = vmatprep.subr.bf16.mxu0 %v5261
    %8315 = vmatpush1.bf16.msra.mxu0 %v5260
    %8316 = vmatprep.subr.bf16.mxu0 %v5255
    %8317 = vmatpush1.bf16.msra.mxu0 %v5254
    %8318 = vmatprep.subr.bf16.mxu0 %v5249
    %8319 = vmatpush1.bf16.msra.mxu0 %v5248
    %8320 = vmatprep.subr.bf16.mxu0 %v5243
    %8321 = vmatpush1.bf16.msra.mxu0 %v5242
    %8322 = vmatprep.subr.bf16.mxu0 %v5333
    %8323 = vmatpush2.bf16.msra.mxu0 %v5332
    %8324 = vmatprep.subr.bf16.mxu0 %v5327
    %8325 = vmatpush2.bf16.msra.mxu0 %v5326
    %8326 = vmatprep.subr.bf16.mxu0 %v5321
    %8327 = vmatpush2.bf16.msra.mxu0 %v5320
    %8328 = vmatprep.subr.bf16.mxu0 %v5315
    %8329 = vmatpush2.bf16.msra.mxu0 %v5314
    %8330 = vmatprep.subr.bf16.mxu0 %v5309
    %8331 = vmatpush2.bf16.msra.mxu0 %v5308
    %8332 = vmatprep.subr.bf16.mxu0 %v5303
    %8333 = vmatpush2.bf16.msra.mxu0 %v5302
    %8334 = vmatprep.subr.bf16.mxu0 %v5297
    %8335 = vmatpush2.bf16.msra.mxu0 %v5296
    %8336 = vmatprep.subr.bf16.mxu0 %v5291
    %8337 = vmatpush2.bf16.msra.mxu0 %v5290
    %8338 = vmatprep.mubr.bf16.mxu0 %v1313
    %8339 = vmatmul.mubr.bf16.gmra.mxu0 %v1299
    %v8340 = vpop.f32.mrf.mxu0
    %v8341 = vadd.f32 %v8300, %v8340
    %v8342 = vpop.f32.mrf.mxu0
    %v8343 = vadd.f32 %v8302, %v8342
    %v8344 = vpop.f32.mrf.mxu0
    %v8345 = vpop.f32.mrf.mxu0
    %8346 = vdwg.mxu0
    %8347 = vmatprep.subr.bf16.mxu0 %v5381
    %8348 = vmatpush1.bf16.msra.mxu0 %v5380
    %8349 = vmatprep.subr.bf16.mxu0 %v5375
    %8350 = vmatpush1.bf16.msra.mxu0 %v5374
    %8351 = vmatprep.subr.bf16.mxu0 %v5369
    %8352 = vmatpush1.bf16.msra.mxu0 %v5368
    %8353 = vmatprep.subr.bf16.mxu0 %v5363
    %8354 = vmatpush1.bf16.msra.mxu0 %v5362
    %8355 = vmatprep.subr.bf16.mxu0 %v5357
    %8356 = vmatpush1.bf16.msra.mxu0 %v5356
    %8357 = vmatprep.subr.bf16.mxu0 %v5351
    %8358 = vmatpush1.bf16.msra.mxu0 %v5350
    %8359 = vmatprep.subr.bf16.mxu0 %v5345
    %8360 = vmatpush1.bf16.msra.mxu0 %v5344
    %8361 = vmatprep.subr.bf16.mxu0 %v5339
    %8362 = vmatpush1.bf16.msra.mxu0 %v5338
    %8363 = vmatprep.subr.bf16.mxu0 %v5429
    %8364 = vmatpush2.bf16.msra.mxu0 %v5428
    %8365 = vmatprep.subr.bf16.mxu0 %v5423
    %8366 = vmatpush2.bf16.msra.mxu0 %v5422
    %8367 = vmatprep.subr.bf16.mxu0 %v5417
    %8368 = vmatpush2.bf16.msra.mxu0 %v5416
    %8369 = vmatprep.subr.bf16.mxu0 %v5411
    %8370 = vmatpush2.bf16.msra.mxu0 %v5410
    %8371 = vmatprep.subr.bf16.mxu0 %v5405
    %8372 = vmatpush2.bf16.msra.mxu0 %v5404
    %8373 = vmatprep.subr.bf16.mxu0 %v5399
    %8374 = vmatpush2.bf16.msra.mxu0 %v5398
    %8375 = vmatprep.subr.bf16.mxu0 %v5393
    %8376 = vmatpush2.bf16.msra.mxu0 %v5392
    %8377 = vmatprep.subr.bf16.mxu0 %v5387
    %8378 = vmatpush2.bf16.msra.mxu0 %v5386
    %8379 = vmatprep.mubr.bf16.mxu0 %v1323
    %8380 = vmatmul.mubr.bf16.gmra.mxu0 %v1321
    %v8381 = vpop.f32.mrf.mxu0
    %v8382 = vadd.f32 %v8341, %v8381
    %v8383 = vpop.f32.mrf.mxu0
    %v8384 = vadd.f32 %v8343, %v8383
    %v8385 = vpop.f32.mrf.mxu0
    %v8386 = vpop.f32.mrf.mxu0
    %8387 = vdwg.mxu0
    %8388 = vmatprep.subr.bf16.mxu0 %v5477
    %8389 = vmatpush1.bf16.msra.mxu0 %v5476
    %8390 = vmatprep.subr.bf16.mxu0 %v5471
    %8391 = vmatpush1.bf16.msra.mxu0 %v5470
    %8392 = vmatprep.subr.bf16.mxu0 %v5465
    %8393 = vmatpush1.bf16.msra.mxu0 %v5464
    %8394 = vmatprep.subr.bf16.mxu0 %v5459
    %8395 = vmatpush1.bf16.msra.mxu0 %v5458
    %8396 = vmatprep.subr.bf16.mxu0 %v5453
    %8397 = vmatpush1.bf16.msra.mxu0 %v5452
    %8398 = vmatprep.subr.bf16.mxu0 %v5447
    %8399 = vmatpush1.bf16.msra.mxu0 %v5446
    %8400 = vmatprep.subr.bf16.mxu0 %v5441
    %8401 = vmatpush1.bf16.msra.mxu0 %v5440
    %8402 = vmatprep.subr.bf16.mxu0 %v5435
    %8403 = vmatpush1.bf16.msra.mxu0 %v5434
    %8404 = vmatprep.subr.bf16.mxu0 %v5525
    %8405 = vmatpush2.bf16.msra.mxu0 %v5524
    %8406 = vmatprep.subr.bf16.mxu0 %v5519
    %8407 = vmatpush2.bf16.msra.mxu0 %v5518
    %8408 = vmatprep.subr.bf16.mxu0 %v5513
    %8409 = vmatpush2.bf16.msra.mxu0 %v5512
    %8410 = vmatprep.subr.bf16.mxu0 %v5507
    %8411 = vmatpush2.bf16.msra.mxu0 %v5506
    %8412 = vmatprep.subr.bf16.mxu0 %v5501
    %8413 = vmatpush2.bf16.msra.mxu0 %v5500
    %8414 = vmatprep.subr.bf16.mxu0 %v5495
    %8415 = vmatpush2.bf16.msra.mxu0 %v5494
    %8416 = vmatprep.subr.bf16.mxu0 %v5489
    %8417 = vmatpush2.bf16.msra.mxu0 %v5488
    %8418 = vmatprep.subr.bf16.mxu0 %v5483
    %8419 = vmatpush2.bf16.msra.mxu0 %v5482
    %8420 = vmatprep.mubr.bf16.mxu0 %v1320
    %8421 = vmatmul.mubr.bf16.gmra.mxu0 %v1306
    %v8422 = vpop.f32.mrf.mxu0
    %v8423 = vadd.f32 %v8382, %v8422
    %v8424 = vpop.f32.mrf.mxu0
    %v8425 = vadd.f32 %v8384, %v8424
    %v8426 = vpop.f32.mrf.mxu0
    %v8427 = vpop.f32.mrf.mxu0
    %8428 = vdwg.mxu0
    %8429 = vmatprep.subr.bf16.mxu0 %v5573
    %8430 = vmatpush1.bf16.msra.mxu0 %v5572
    %8431 = vmatprep.subr.bf16.mxu0 %v5567
    %8432 = vmatpush1.bf16.msra.mxu0 %v5566
    %8433 = vmatprep.subr.bf16.mxu0 %v5561
    %8434 = vmatpush1.bf16.msra.mxu0 %v5560
    %8435 = vmatprep.subr.bf16.mxu0 %v5555
    %8436 = vmatpush1.bf16.msra.mxu0 %v5554
    %8437 = vmatprep.subr.bf16.mxu0 %v5549
    %8438 = vmatpush1.bf16.msra.mxu0 %v5548
    %8439 = vmatprep.subr.bf16.mxu0 %v5543
    %8440 = vmatpush1.bf16.msra.mxu0 %v5542
    %8441 = vmatprep.subr.bf16.mxu0 %v5537
    %8442 = vmatpush1.bf16.msra.mxu0 %v5536
    %8443 = vmatprep.subr.bf16.mxu0 %v5531
    %8444 = vmatpush1.bf16.msra.mxu0 %v5530
    %8445 = vmatprep.subr.bf16.mxu0 %v5621
    %8446 = vmatpush2.bf16.msra.mxu0 %v5620
    %8447 = vmatprep.subr.bf16.mxu0 %v5615
    %8448 = vmatpush2.bf16.msra.mxu0 %v5614
    %8449 = vmatprep.subr.bf16.mxu0 %v5609
    %8450 = vmatpush2.bf16.msra.mxu0 %v5608
    %8451 = vmatprep.subr.bf16.mxu0 %v5603
    %8452 = vmatpush2.bf16.msra.mxu0 %v5602
    %8453 = vmatprep.subr.bf16.mxu0 %v5597
    %8454 = vmatpush2.bf16.msra.mxu0 %v5596
    %8455 = vmatprep.subr.bf16.mxu0 %v5591
    %8456 = vmatpush2.bf16.msra.mxu0 %v5590
    %8457 = vmatprep.subr.bf16.mxu0 %v5585
    %8458 = vmatpush2.bf16.msra.mxu0 %v5584
    %8459 = vmatprep.subr.bf16.mxu0 %v5579
    %8460 = vmatpush2.bf16.msra.mxu0 %v5578
    %8461 = vmatprep.mubr.bf16.mxu0 %v1324
    %8462 = vmatmul.mubr.bf16.gmra.mxu0 %v1322
    %v8463 = vpop.f32.mrf.mxu0
    %v8464 = vadd.f32 %v8423, %v8463
    %v8465 = vpop.f32.mrf.mxu0
    %v8466 = vadd.f32 %v8425, %v8465
    %v8467 = vpop.f32.mrf.mxu0
    %v8468 = vpop.f32.mrf.mxu0
    %8469 = vdwg.mxu0
    %8470 = vmatprep.subr.bf16.mxu0 %v5669
    %8471 = vmatpush1.bf16.msra.mxu0 %v5668
    %8472 = vmatprep.subr.bf16.mxu0 %v5663
    %8473 = vmatpush1.bf16.msra.mxu0 %v5662
    %8474 = vmatprep.subr.bf16.mxu0 %v5657
    %8475 = vmatpush1.bf16.msra.mxu0 %v5656
    %8476 = vmatprep.subr.bf16.mxu0 %v5651
    %8477 = vmatpush1.bf16.msra.mxu0 %v5650
    %8478 = vmatprep.subr.bf16.mxu0 %v5645
    %8479 = vmatpush1.bf16.msra.mxu0 %v5644
    %8480 = vmatprep.subr.bf16.mxu0 %v5639
    %8481 = vmatpush1.bf16.msra.mxu0 %v5638
    %8482 = vmatprep.subr.bf16.mxu0 %v5633
    %8483 = vmatpush1.bf16.msra.mxu0 %v5632
    %8484 = vmatprep.subr.bf16.mxu0 %v5627
    %8485 = vmatpush1.bf16.msra.mxu0 %v5626
    %8486 = vmatprep.subr.bf16.mxu0 %v5717
    %8487 = vmatpush2.bf16.msra.mxu0 %v5716
    %8488 = vmatprep.subr.bf16.mxu0 %v5711
    %8489 = vmatpush2.bf16.msra.mxu0 %v5710
    %8490 = vmatprep.subr.bf16.mxu0 %v5705
    %8491 = vmatpush2.bf16.msra.mxu0 %v5704
    %8492 = vmatprep.subr.bf16.mxu0 %v5699
    %8493 = vmatpush2.bf16.msra.mxu0 %v5698
    %8494 = vmatprep.subr.bf16.mxu0 %v5693
    %8495 = vmatpush2.bf16.msra.mxu0 %v5692
    %8496 = vmatprep.subr.bf16.mxu0 %v5687
    %8497 = vmatpush2.bf16.msra.mxu0 %v5686
    %8498 = vmatprep.subr.bf16.mxu0 %v5681
    %8499 = vmatpush2.bf16.msra.mxu0 %v5680
    %8500 = vmatprep.subr.bf16.mxu0 %v5675
    %8501 = vmatpush2.bf16.msra.mxu0 %v5674
    %8502 = vmatprep.mubr.bf16.mxu0 %v1362
    %8503 = vmatmul.mubr.bf16.gmra.mxu0 %v1348
    %v8504 = vpop.f32.mrf.mxu0
    %v8505 = vadd.f32 %v8464, %v8504
    %v8506 = vpop.f32.mrf.mxu0
    %v8507 = vadd.f32 %v8466, %v8506
    %v8508 = vpop.f32.mrf.mxu0
    %v8509 = vpop.f32.mrf.mxu0
    %8510 = vdwg.mxu0
    %8511 = vmatprep.subr.bf16.mxu0 %v5765
    %8512 = vmatpush1.bf16.msra.mxu0 %v5764
    %8513 = vmatprep.subr.bf16.mxu0 %v5759
    %8514 = vmatpush1.bf16.msra.mxu0 %v5758
    %8515 = vmatprep.subr.bf16.mxu0 %v5753
    %8516 = vmatpush1.bf16.msra.mxu0 %v5752
    %8517 = vmatprep.subr.bf16.mxu0 %v5747
    %8518 = vmatpush1.bf16.msra.mxu0 %v5746
    %8519 = vmatprep.subr.bf16.mxu0 %v5741
    %8520 = vmatpush1.bf16.msra.mxu0 %v5740
    %8521 = vmatprep.subr.bf16.mxu0 %v5735
    %8522 = vmatpush1.bf16.msra.mxu0 %v5734
    %8523 = vmatprep.subr.bf16.mxu0 %v5729
    %8524 = vmatpush1.bf16.msra.mxu0 %v5728
    %8525 = vmatprep.subr.bf16.mxu0 %v5723
    %8526 = vmatpush1.bf16.msra.mxu0 %v5722
    %8527 = vmatprep.subr.bf16.mxu0 %v5813
    %8528 = vmatpush2.bf16.msra.mxu0 %v5812
    %8529 = vmatprep.subr.bf16.mxu0 %v5807
    %8530 = vmatpush2.bf16.msra.mxu0 %v5806
    %8531 = vmatprep.subr.bf16.mxu0 %v5801
    %8532 = vmatpush2.bf16.msra.mxu0 %v5800
    %8533 = vmatprep.subr.bf16.mxu0 %v5795
    %8534 = vmatpush2.bf16.msra.mxu0 %v5794
    %8535 = vmatprep.subr.bf16.mxu0 %v5789
    %8536 = vmatpush2.bf16.msra.mxu0 %v5788
    %8537 = vmatprep.subr.bf16.mxu0 %v5783
    %8538 = vmatpush2.bf16.msra.mxu0 %v5782
    %8539 = vmatprep.subr.bf16.mxu0 %v5777
    %8540 = vmatpush2.bf16.msra.mxu0 %v5776
    %8541 = vmatprep.subr.bf16.mxu0 %v5771
    %8542 = vmatpush2.bf16.msra.mxu0 %v5770
    %8543 = vmatprep.mubr.bf16.mxu0 %v1372
    %8544 = vmatmul.mubr.bf16.gmra.mxu0 %v1370
    %v8545 = vpop.f32.mrf.mxu0
    %v8546 = vadd.f32 %v8505, %v8545
    %v8547 = vpop.f32.mrf.mxu0
    %v8548 = vadd.f32 %v8507, %v8547
    %v8549 = vpop.f32.mrf.mxu0
    %v8550 = vpop.f32.mrf.mxu0
    %8551 = vdwg.mxu0
    %8552 = vmatprep.subr.bf16.mxu0 %v5861
    %8553 = vmatpush1.bf16.msra.mxu0 %v5860
    %8554 = vmatprep.subr.bf16.mxu0 %v5855
    %8555 = vmatpush1.bf16.msra.mxu0 %v5854
    %8556 = vmatprep.subr.bf16.mxu0 %v5849
    %8557 = vmatpush1.bf16.msra.mxu0 %v5848
    %8558 = vmatprep.subr.bf16.mxu0 %v5843
    %8559 = vmatpush1.bf16.msra.mxu0 %v5842
    %8560 = vmatprep.subr.bf16.mxu0 %v5837
    %8561 = vmatpush1.bf16.msra.mxu0 %v5836
    %8562 = vmatprep.subr.bf16.mxu0 %v5831
    %8563 = vmatpush1.bf16.msra.mxu0 %v5830
    %8564 = vmatprep.subr.bf16.mxu0 %v5825
    %8565 = vmatpush1.bf16.msra.mxu0 %v5824
    %8566 = vmatprep.subr.bf16.mxu0 %v5819
    %8567 = vmatpush1.bf16.msra.mxu0 %v5818
    %8568 = vmatprep.subr.bf16.mxu0 %v5909
    %8569 = vmatpush2.bf16.msra.mxu0 %v5908
    %8570 = vmatprep.subr.bf16.mxu0 %v5903
    %8571 = vmatpush2.bf16.msra.mxu0 %v5902
    %8572 = vmatprep.subr.bf16.mxu0 %v5897
    %8573 = vmatpush2.bf16.msra.mxu0 %v5896
    %8574 = vmatprep.subr.bf16.mxu0 %v5891
    %8575 = vmatpush2.bf16.msra.mxu0 %v5890
    %8576 = vmatprep.subr.bf16.mxu0 %v5885
    %8577 = vmatpush2.bf16.msra.mxu0 %v5884
    %8578 = vmatprep.subr.bf16.mxu0 %v5879
    %8579 = vmatpush2.bf16.msra.mxu0 %v5878
    %8580 = vmatprep.subr.bf16.mxu0 %v5873
    %8581 = vmatpush2.bf16.msra.mxu0 %v5872
    %8582 = vmatprep.subr.bf16.mxu0 %v5867
    %8583 = vmatpush2.bf16.msra.mxu0 %v5866
    %8584 = vmatprep.mubr.bf16.mxu0 %v1369
    %8585 = vmatmul.mubr.bf16.gmra.mxu0 %v1355
    %v8586 = vpop.f32.mrf.mxu0
    %v8587 = vadd.f32 %v8546, %v8586
    %v8588 = vpop.f32.mrf.mxu0
    %v8589 = vadd.f32 %v8548, %v8588
    %v8590 = vpop.f32.mrf.mxu0
    %v8591 = vpop.f32.mrf.mxu0
    %8592 = vdwg.mxu0
    %8593 = vmatprep.subr.bf16.mxu0 %v5957
    %8594 = vmatpush1.bf16.msra.mxu0 %v5956
    %8595 = vmatprep.subr.bf16.mxu0 %v5951
    %8596 = vmatpush1.bf16.msra.mxu0 %v5950
    %8597 = vmatprep.subr.bf16.mxu0 %v5945
    %8598 = vmatpush1.bf16.msra.mxu0 %v5944
    %8599 = vmatprep.subr.bf16.mxu0 %v5939
    %8600 = vmatpush1.bf16.msra.mxu0 %v5938
    %8601 = vmatprep.subr.bf16.mxu0 %v5933
    %8602 = vmatpush1.bf16.msra.mxu0 %v5932
    %8603 = vmatprep.subr.bf16.mxu0 %v5927
    %8604 = vmatpush1.bf16.msra.mxu0 %v5926
    %8605 = vmatprep.subr.bf16.mxu0 %v5921
    %8606 = vmatpush1.bf16.msra.mxu0 %v5920
    %8607 = vmatprep.subr.bf16.mxu0 %v5915
    %8608 = vmatpush1.bf16.msra.mxu0 %v5914
    %8609 = vmatprep.subr.bf16.mxu0 %v6005
    %8610 = vmatpush2.bf16.msra.mxu0 %v6004
    %8611 = vmatprep.subr.bf16.mxu0 %v5999
    %8612 = vmatpush2.bf16.msra.mxu0 %v5998
    %8613 = vmatprep.subr.bf16.mxu0 %v5993
    %8614 = vmatpush2.bf16.msra.mxu0 %v5992
    %8615 = vmatprep.subr.bf16.mxu0 %v5987
    %8616 = vmatpush2.bf16.msra.mxu0 %v5986
    %8617 = vmatprep.subr.bf16.mxu0 %v5981
    %8618 = vmatpush2.bf16.msra.mxu0 %v5980
    %8619 = vmatprep.subr.bf16.mxu0 %v5975
    %8620 = vmatpush2.bf16.msra.mxu0 %v5974
    %8621 = vmatprep.subr.bf16.mxu0 %v5969
    %8622 = vmatpush2.bf16.msra.mxu0 %v5968
    %8623 = vmatprep.subr.bf16.mxu0 %v5963
    %8624 = vmatpush2.bf16.msra.mxu0 %v5962
    %8625 = vmatprep.mubr.bf16.mxu0 %v1373
    %8626 = vmatmul.mubr.bf16.gmra.mxu0 %v1371
    %v8627 = vpop.f32.mrf.mxu0
    %v8628 = vadd.f32 %v8587, %v8627
    %v8629 = vpop.f32.mrf.mxu0
    %v8630 = vadd.f32 %v8589, %v8629
    %v8631 = vpop.f32.mrf.mxu0
    %v8632 = vpop.f32.mrf.mxu0
    %8633 = vdwg.mxu0
    %v8640 = vcombine.low %v7644, %v7646
    %v8641 = vcombine.low %v8136, %v8138
    %v8643 = vunpack.c.l.s4 1983009808
    %v8644 = vunpack.c.0.s8 %v8643
    %v8645 = vlaneseq
    %v8646 = vshrl.u32 %v8645, 7
    %v8647 = vsub.s32 %v8644, %v8646
    %v8648 = vrot.slane %v8640, %v8647
    %v8650 = vunpack.c.l.s4 1983009808
    %v8651 = vunpack.c.0.s8 %v8650
    %v8652 = vlaneseq
    %v8653 = vshrl.u32 %v8652, 7
    %v8654 = vsub.s32 %v8651, %v8653
    %v8655 = vrot.slane %v8641, %v8654
    %v8656 = vcombine.low %v8648, %v8655
    %v8657 = vcombine.low %v8628, %v8630
    %v8659 = vunpack.c.l.s4 1983009808
    %v8660 = vunpack.c.0.s8 %v8659
    %v8661 = vlaneseq
    %v8662 = vshrl.u32 %v8661, 7
    %v8663 = vsub.s32 %v8660, %v8662
    %v8664 = vrot.slane %v8657, %v8663
    %v8667 = vadd.f32 %v70, %v8656
    %v8668 = vadd.f32 %v71, %v8664
    %8669 = vst [vmem:[#allocation2] sm:$0xff] %v8667
    %8670 = vst [vmem:[#allocation2 + $0x8] sm:$0xf] %v8668
    // Predicated region
    $region34: #{image_clip_net_forward.1} parent=1 // pred_check
      %p8671 = pneg %p57
    $region35: #{image_clip_net_forward.1} parent=1 // pred_check_branch
      %8673 = sbr.rel (%p8671) target = $region37
    $region36: #{image_clip_net_forward.1} parent=1 // pred_region
      %v8674 = vld [vmem:[#allocation2] sm:$0xff]
      %v8675 = vld [vmem:[#allocation2 + $0x8] sm:$0xf]
      %v8676 = vld [vmem:[#allocation6] sm:$0x3f]
      %v8678 = vlaneseq
      %v8679 = vshrl.u32 %v8678, 7
      %v8680 = vsub.s32 0, %v8679
      %v8681 = vrot.slane %v8676, %v8680
      %v8682 = vlaneseq
      %v8683 = vshrl.u32 %v8682, 7
      %v8684 = vsub.s32 1, %v8683
      %v8685 = vrot.slane %v8676, %v8684
      %v8686 = vlaneseq
      %v8687 = vshrl.u32 %v8686, 7
      %v8688 = vsub.s32 2, %v8687
      %v8689 = vrot.slane %v8676, %v8688
      %v8690 = vlaneseq
      %v8691 = vshrl.u32 %v8690, 7
      %v8692 = vsub.s32 3, %v8691
      %v8693 = vrot.slane %v8676, %v8692
      %v8694 = vlaneseq
      %v8695 = vshrl.u32 %v8694, 7
      %v8696 = vsub.s32 4, %v8695
      %v8697 = vrot.slane %v8676, %v8696
      %v8698 = vlaneseq
      %v8699 = vshrl.u32 %v8698, 7
      %v8700 = vsub.s32 5, %v8699
      %v8701 = vrot.slane %v8676, %v8700
      %v8702 = vcombine.low %v8681, %v8685
      %v8703 = vcombine.low %v8689, %v8693
      %v8705 = vunpack.c.l.s4 1983009808
      %v8706 = vunpack.c.0.s8 %v8705
      %v8707 = vlaneseq
      %v8708 = vshrl.u32 %v8707, 7
      %v8709 = vsub.s32 %v8706, %v8708
      %v8710 = vrot.slane %v8702, %v8709
      %v8712 = vunpack.c.l.s4 1983009808
      %v8713 = vunpack.c.0.s8 %v8712
      %v8714 = vlaneseq
      %v8715 = vshrl.u32 %v8714, 7
      %v8716 = vsub.s32 %v8713, %v8715
      %v8717 = vrot.slane %v8703, %v8716
      %v8718 = vcombine.low %v8710, %v8717
      %v8719 = vcombine.low %v8697, %v8701
      %v8721 = vunpack.c.l.s4 1983009808
      %v8722 = vunpack.c.0.s8 %v8721
      %v8723 = vlaneseq
      %v8724 = vshrl.u32 %v8723, 7
      %v8725 = vsub.s32 %v8722, %v8724
      %v8726 = vrot.slane %v8719, %v8725
      %v8729 = vadd.f32 %v8674, %v8718
      %v8730 = vadd.f32 %v8675, %v8726
      %v8731 = vld [vmem:[#allocation8] sm:$0xff]
      %v8732 = vld [vmem:[#allocation8 + $0x8] sm:$0xff]
      %v8733 = vld [vmem:[#allocation8 + $0x10] sm:$0xff]
      %v8734 = vld [vmem:[#allocation8 + $0x18] sm:$0xff]
      %v8735 = vld [vmem:[#allocation8 + $0x20] sm:$0xff]
      %v8736 = vld [vmem:[#allocation8 + $0x28] sm:$0xff]
      %v8737 = vld [vmem:[#allocation8 + $0x30] sm:$0xff]
      %v8738 = vld [vmem:[#allocation8 + $0x38] sm:$0xff]
      %v8739 = vld [vmem:[#allocation8 + $0x40] sm:$0xff]
      %v8740 = vld [vmem:[#allocation8 + $0x48] sm:$0xff]
      %v8741 = vld [vmem:[#allocation8 + $0x50] sm:$0xff]
      %v8742 = vld [vmem:[#allocation8 + $0x58] sm:$0xff]
      %v8743 = vld [vmem:[#allocation8 + $0x60] sm:$0xff]
      %v8744 = vld [vmem:[#allocation8 + $0x68] sm:$0xff]
      %v8745 = vld [vmem:[#allocation8 + $0x70] sm:$0xff]
      %v8746 = vld [vmem:[#allocation8 + $0x78] sm:$0xff]
      %v8747 = vld [vmem:[#allocation8 + $0x80] sm:$0xff]
      %v8748 = vld [vmem:[#allocation8 + $0x88] sm:$0xff]
      %v8749 = vld [vmem:[#allocation8 + $0x90] sm:$0xff]
      %v8750 = vld [vmem:[#allocation8 + $0x98] sm:$0xff]
      %v8751 = vld [vmem:[#allocation8 + $0xa0] sm:$0xff]
      %v8752 = vld [vmem:[#allocation8 + $0xa8] sm:$0xff]
      %v8753 = vld [vmem:[#allocation8 + $0xb0] sm:$0xff]
      %v8754 = vld [vmem:[#allocation8 + $0xb8] sm:$0xff]
      %v8755 = vld [vmem:[#allocation8 + $0xc0] sm:$0xff]
      %v8756 = vld [vmem:[#allocation8 + $0xc8] sm:$0xff]
      %v8757 = vld [vmem:[#allocation8 + $0xd0] sm:$0xff]
      %v8758 = vld [vmem:[#allocation8 + $0xd8] sm:$0xff]
      %v8759 = vld [vmem:[#allocation8 + $0xe0] sm:$0xff]
      %v8760 = vld [vmem:[#allocation8 + $0xe8] sm:$0xff]
      %v8761 = vld [vmem:[#allocation8 + $0xf0] sm:$0xff]
      %v8762 = vld [vmem:[#allocation8 + $0xf8] sm:$0xff]
      %v8763 = vld [vmem:[#allocation8 + $0x100] sm:$0xff]
      %v8764 = vld [vmem:[#allocation8 + $0x108] sm:$0xff]
      %v8765 = vld [vmem:[#allocation8 + $0x110] sm:$0xff]
      %v8766 = vld [vmem:[#allocation8 + $0x118] sm:$0xff]
      %v8767 = vld [vmem:[#allocation8 + $0x120] sm:$0xff]
      %v8768 = vld [vmem:[#allocation8 + $0x128] sm:$0xff]
      %v8769 = vld [vmem:[#allocation8 + $0x130] sm:$0xff]
      %v8770 = vld [vmem:[#allocation8 + $0x138] sm:$0xff]
      %v8771 = vld [vmem:[#allocation8 + $0x140] sm:$0xff]
      %v8772 = vld [vmem:[#allocation8 + $0x148] sm:$0xff]
      %v8773 = vld [vmem:[#allocation8 + $0x150] sm:$0xff]
      %v8774 = vld [vmem:[#allocation8 + $0x158] sm:$0xff]
      %v8775 = vld [vmem:[#allocation8 + $0x160] sm:$0xff]
      %v8776 = vld [vmem:[#allocation8 + $0x168] sm:$0xff]
      %v8777 = vld [vmem:[#allocation8 + $0x170] sm:$0xff]
      %v8778 = vld [vmem:[#allocation8 + $0x178] sm:$0xff]
      %v8779 = vld [vmem:[#allocation8 + $0x180] sm:$0xff]
      %v8780 = vld [vmem:[#allocation8 + $0x188] sm:$0xff]
      %v8781 = vld [vmem:[#allocation8 + $0x190] sm:$0xff]
      %v8782 = vld [vmem:[#allocation8 + $0x198] sm:$0xff]
      %v8783 = vld [vmem:[#allocation8 + $0x1a0] sm:$0xff]
      %v8784 = vld [vmem:[#allocation8 + $0x1a8] sm:$0xff]
      %v8785 = vld [vmem:[#allocation8 + $0x1b0] sm:$0xff]
      %v8786 = vld [vmem:[#allocation8 + $0x1b8] sm:$0xff]
      %v8787 = vld [vmem:[#allocation8 + $0x1c0] sm:$0xff]
      %v8788 = vld [vmem:[#allocation8 + $0x1c8] sm:$0xff]
      %v8789 = vld [vmem:[#allocation8 + $0x1d0] sm:$0xff]
      %v8790 = vld [vmem:[#allocation8 + $0x1d8] sm:$0xff]
      %v8791 = vld [vmem:[#allocation8 + $0x1e0] sm:$0xff]
      %v8792 = vld [vmem:[#allocation8 + $0x1e8] sm:$0xff]
      %v8793 = vld [vmem:[#allocation8 + $0x1f0] sm:$0xff]
      %v8794 = vld [vmem:[#allocation8 + $0x1f8] sm:$0xff]
      %v8795 = vld [vmem:[#allocation8 + $0x200] sm:$0xff]
      %v8796 = vld [vmem:[#allocation8 + $0x208] sm:$0xff]
      %v8797 = vld [vmem:[#allocation8 + $0x210] sm:$0xff]
      %v8798 = vld [vmem:[#allocation8 + $0x218] sm:$0xff]
      %v8799 = vld [vmem:[#allocation8 + $0x220] sm:$0xff]
      %v8800 = vld [vmem:[#allocation8 + $0x228] sm:$0xff]
      %v8801 = vld [vmem:[#allocation8 + $0x230] sm:$0xff]
      %v8802 = vld [vmem:[#allocation8 + $0x238] sm:$0xff]
      %v8803 = vld [vmem:[#allocation8 + $0x240] sm:$0xff]
      %v8804 = vld [vmem:[#allocation8 + $0x248] sm:$0xff]
      %v8805 = vld [vmem:[#allocation8 + $0x250] sm:$0xff]
      %v8806 = vld [vmem:[#allocation8 + $0x258] sm:$0xff]
      %v8807 = vld [vmem:[#allocation8 + $0x260] sm:$0xff]
      %v8808 = vld [vmem:[#allocation8 + $0x268] sm:$0xff]
      %v8809 = vld [vmem:[#allocation8 + $0x270] sm:$0xff]
      %v8810 = vld [vmem:[#allocation8 + $0x278] sm:$0xff]
      %v8811 = vld [vmem:[#allocation8 + $0x280] sm:$0xff]
      %v8812 = vld [vmem:[#allocation8 + $0x288] sm:$0xff]
      %v8813 = vld [vmem:[#allocation8 + $0x290] sm:$0xff]
      %v8814 = vld [vmem:[#allocation8 + $0x298] sm:$0xff]
      %v8815 = vld [vmem:[#allocation8 + $0x2a0] sm:$0xff]
      %v8816 = vld [vmem:[#allocation8 + $0x2a8] sm:$0xff]
      %v8817 = vld [vmem:[#allocation8 + $0x2b0] sm:$0xff]
      %v8818 = vld [vmem:[#allocation8 + $0x2b8] sm:$0xff]
      %v8819 = vld [vmem:[#allocation8 + $0x2c0] sm:$0xff]
      %v8820 = vld [vmem:[#allocation8 + $0x2c8] sm:$0xff]
      %v8821 = vld [vmem:[#allocation8 + $0x2d0] sm:$0xff]
      %v8822 = vld [vmem:[#allocation8 + $0x2d8] sm:$0xff]
      %v8823 = vld [vmem:[#allocation8 + $0x2e0] sm:$0xff]
      %v8824 = vld [vmem:[#allocation8 + $0x2e8] sm:$0xff]
      %v8825 = vld [vmem:[#allocation8 + $0x2f0] sm:$0xff]
      %v8826 = vld [vmem:[#allocation8 + $0x2f8] sm:$0xff]
      %v8829 = vcombine.high %v8729, %v8729
      %v8831 = vunpack.c.l.s4 1983009808
      %v8832 = vunpack.c.0.s8 %v8831
      %v8833 = vlaneseq
      %v8834 = vshrl.u32 %v8833, 7
      %v8835 = vsub.s32 %v8832, %v8834
      %v8836 = vrot.slane %v8729, %v8835
      %v8838 = vunpack.c.l.s4 1983009808
      %v8839 = vunpack.c.0.s8 %v8838
      %v8840 = vlaneseq
      %v8841 = vshrl.u32 %v8840, 7
      %v8842 = vsub.s32 %v8839, %v8841
      %v8843 = vrot.slane %v8829, %v8842
      %v8844 = vcombine.high %v8836, %v8836
      %v8845 = vcombine.high %v8843, %v8843
      %v8847 = vunpack.c.l.s4 1983009808
      %v8848 = vunpack.c.0.s8 %v8847
      %v8849 = vlaneseq
      %v8850 = vshrl.u32 %v8849, 7
      %v8851 = vsub.s32 %v8848, %v8850
      %v8852 = vrot.slane %v8730, %v8851
      %v8853 = vcombine.high %v8852, %v8852
      %8860 = vmatprep.subr.mxu0 0.0
      %8861 = vmatpush1.msra.mxu0 %v8746
      %8862 = vmatprep.subr.mxu0 0.0
      %8863 = vmatpush1.msra.mxu0 %v8745
      %8864 = vmatprep.subr.mxu0 0.0
      %8865 = vmatpush1.msra.mxu0 %v8744
      %8866 = vmatprep.subr.mxu0 0.0
      %8867 = vmatpush1.msra.mxu0 %v8743
      %8868 = vmatprep.subr.mxu0 0.0
      %8869 = vmatpush1.msra.mxu0 %v8742
      %8870 = vmatprep.subr.mxu0 0.0
      %8871 = vmatpush1.msra.mxu0 %v8741
      %8872 = vmatprep.subr.mxu0 0.0
      %8873 = vmatpush1.msra.mxu0 %v8740
      %8874 = vmatprep.subr.mxu0 0.0
      %8875 = vmatpush1.msra.mxu0 %v8739
      %8876 = vmatprep.subr.mxu0 0.0
      %8877 = vmatpush1.msra.mxu0 %v8738
      %8878 = vmatprep.subr.mxu0 0.0
      %8879 = vmatpush1.msra.mxu0 %v8737
      %8880 = vmatprep.subr.mxu0 0.0
      %8881 = vmatpush1.msra.mxu0 %v8736
      %8882 = vmatprep.subr.mxu0 0.0
      %8883 = vmatpush1.msra.mxu0 %v8735
      %8884 = vmatprep.subr.mxu0 0.0
      %8885 = vmatpush1.msra.mxu0 %v8734
      %8886 = vmatprep.subr.mxu0 0.0
      %8887 = vmatpush1.msra.mxu0 %v8733
      %8888 = vmatprep.subr.mxu0 0.0
      %8889 = vmatpush1.msra.mxu0 %v8732
      %8890 = vmatprep.subr.mxu0 0.0
      %8891 = vmatpush1.msra.mxu0 %v8731
      %8892 = vmatprep.subr.mxu0 0.0
      %8893 = vmatpush2.msra.mxu0 %v8762
      %8894 = vmatprep.subr.mxu0 0.0
      %8895 = vmatpush2.msra.mxu0 %v8761
      %8896 = vmatprep.subr.mxu0 0.0
      %8897 = vmatpush2.msra.mxu0 %v8760
      %8898 = vmatprep.subr.mxu0 0.0
      %8899 = vmatpush2.msra.mxu0 %v8759
      %8900 = vmatprep.subr.mxu0 0.0
      %8901 = vmatpush2.msra.mxu0 %v8758
      %8902 = vmatprep.subr.mxu0 0.0
      %8903 = vmatpush2.msra.mxu0 %v8757
      %8904 = vmatprep.subr.mxu0 0.0
      %8905 = vmatpush2.msra.mxu0 %v8756
      %8906 = vmatprep.subr.mxu0 0.0
      %8907 = vmatpush2.msra.mxu0 %v8755
      %8908 = vmatprep.subr.mxu0 0.0
      %8909 = vmatpush2.msra.mxu0 %v8754
      %8910 = vmatprep.subr.mxu0 0.0
      %8911 = vmatpush2.msra.mxu0 %v8753
      %8912 = vmatprep.subr.mxu0 0.0
      %8913 = vmatpush2.msra.mxu0 %v8752
      %8914 = vmatprep.subr.mxu0 0.0
      %8915 = vmatpush2.msra.mxu0 %v8751
      %8916 = vmatprep.subr.mxu0 0.0
      %8917 = vmatpush2.msra.mxu0 %v8750
      %8918 = vmatprep.subr.mxu0 0.0
      %8919 = vmatpush2.msra.mxu0 %v8749
      %8920 = vmatprep.subr.mxu0 0.0
      %8921 = vmatpush2.msra.mxu0 %v8748
      %8922 = vmatprep.subr.mxu0 0.0
      %8923 = vmatpush2.msra.mxu0 %v8747
      %8924 = vmatprep.mubr.f32.mxu0 %v8844
      %8925 = vmatmul.mubr.f32.gmra.mxu0 %v8836
      %v8926 = vpop.f32.mrf.mxu0
      %v8927 = vadd.f32 0.0, %v8926
      %v8928 = vpop.f32.mrf.mxu0
      %8929 = vdwg.mxu0
      %8930 = vmatprep.subr.mxu0 0.0
      %8931 = vmatpush1.msra.mxu0 %v8778
      %8932 = vmatprep.subr.mxu0 0.0
      %8933 = vmatpush1.msra.mxu0 %v8777
      %8934 = vmatprep.subr.mxu0 0.0
      %8935 = vmatpush1.msra.mxu0 %v8776
      %8936 = vmatprep.subr.mxu0 0.0
      %8937 = vmatpush1.msra.mxu0 %v8775
      %8938 = vmatprep.subr.mxu0 0.0
      %8939 = vmatpush1.msra.mxu0 %v8774
      %8940 = vmatprep.subr.mxu0 0.0
      %8941 = vmatpush1.msra.mxu0 %v8773
      %8942 = vmatprep.subr.mxu0 0.0
      %8943 = vmatpush1.msra.mxu0 %v8772
      %8944 = vmatprep.subr.mxu0 0.0
      %8945 = vmatpush1.msra.mxu0 %v8771
      %8946 = vmatprep.subr.mxu0 0.0
      %8947 = vmatpush1.msra.mxu0 %v8770
      %8948 = vmatprep.subr.mxu0 0.0
      %8949 = vmatpush1.msra.mxu0 %v8769
      %8950 = vmatprep.subr.mxu0 0.0
      %8951 = vmatpush1.msra.mxu0 %v8768
      %8952 = vmatprep.subr.mxu0 0.0
      %8953 = vmatpush1.msra.mxu0 %v8767
      %8954 = vmatprep.subr.mxu0 0.0
      %8955 = vmatpush1.msra.mxu0 %v8766
      %8956 = vmatprep.subr.mxu0 0.0
      %8957 = vmatpush1.msra.mxu0 %v8765
      %8958 = vmatprep.subr.mxu0 0.0
      %8959 = vmatpush1.msra.mxu0 %v8764
      %8960 = vmatprep.subr.mxu0 0.0
      %8961 = vmatpush1.msra.mxu0 %v8763
      %8962 = vmatprep.subr.mxu0 0.0
      %8963 = vmatpush2.msra.mxu0 %v8794
      %8964 = vmatprep.subr.mxu0 0.0
      %8965 = vmatpush2.msra.mxu0 %v8793
      %8966 = vmatprep.subr.mxu0 0.0
      %8967 = vmatpush2.msra.mxu0 %v8792
      %8968 = vmatprep.subr.mxu0 0.0
      %8969 = vmatpush2.msra.mxu0 %v8791
      %8970 = vmatprep.subr.mxu0 0.0
      %8971 = vmatpush2.msra.mxu0 %v8790
      %8972 = vmatprep.subr.mxu0 0.0
      %8973 = vmatpush2.msra.mxu0 %v8789
      %8974 = vmatprep.subr.mxu0 0.0
      %8975 = vmatpush2.msra.mxu0 %v8788
      %8976 = vmatprep.subr.mxu0 0.0
      %8977 = vmatpush2.msra.mxu0 %v8787
      %8978 = vmatprep.subr.mxu0 0.0
      %8979 = vmatpush2.msra.mxu0 %v8786
      %8980 = vmatprep.subr.mxu0 0.0
      %8981 = vmatpush2.msra.mxu0 %v8785
      %8982 = vmatprep.subr.mxu0 0.0
      %8983 = vmatpush2.msra.mxu0 %v8784
      %8984 = vmatprep.subr.mxu0 0.0
      %8985 = vmatpush2.msra.mxu0 %v8783
      %8986 = vmatprep.subr.mxu0 0.0
      %8987 = vmatpush2.msra.mxu0 %v8782
      %8988 = vmatprep.subr.mxu0 0.0
      %8989 = vmatpush2.msra.mxu0 %v8781
      %8990 = vmatprep.subr.mxu0 0.0
      %8991 = vmatpush2.msra.mxu0 %v8780
      %8992 = vmatprep.subr.mxu0 0.0
      %8993 = vmatpush2.msra.mxu0 %v8779
      %8994 = vmatprep.mubr.f32.mxu0 %v8845
      %8995 = vmatmul.mubr.f32.gmra.mxu0 %v8843
      %v8996 = vpop.f32.mrf.mxu0
      %v8997 = vadd.f32 %v8927, %v8996
      %v8998 = vpop.f32.mrf.mxu0
      %8999 = vdwg.mxu0
      %9000 = vmatprep.subr.mxu0 0.0
      %9001 = vmatpush1.msra.mxu0 %v8810
      %9002 = vmatprep.subr.mxu0 0.0
      %9003 = vmatpush1.msra.mxu0 %v8809
      %9004 = vmatprep.subr.mxu0 0.0
      %9005 = vmatpush1.msra.mxu0 %v8808
      %9006 = vmatprep.subr.mxu0 0.0
      %9007 = vmatpush1.msra.mxu0 %v8807
      %9008 = vmatprep.subr.mxu0 0.0
      %9009 = vmatpush1.msra.mxu0 %v8806
      %9010 = vmatprep.subr.mxu0 0.0
      %9011 = vmatpush1.msra.mxu0 %v8805
      %9012 = vmatprep.subr.mxu0 0.0
      %9013 = vmatpush1.msra.mxu0 %v8804
      %9014 = vmatprep.subr.mxu0 0.0
      %9015 = vmatpush1.msra.mxu0 %v8803
      %9016 = vmatprep.subr.mxu0 0.0
      %9017 = vmatpush1.msra.mxu0 %v8802
      %9018 = vmatprep.subr.mxu0 0.0
      %9019 = vmatpush1.msra.mxu0 %v8801
      %9020 = vmatprep.subr.mxu0 0.0
      %9021 = vmatpush1.msra.mxu0 %v8800
      %9022 = vmatprep.subr.mxu0 0.0
      %9023 = vmatpush1.msra.mxu0 %v8799
      %9024 = vmatprep.subr.mxu0 0.0
      %9025 = vmatpush1.msra.mxu0 %v8798
      %9026 = vmatprep.subr.mxu0 0.0
      %9027 = vmatpush1.msra.mxu0 %v8797
      %9028 = vmatprep.subr.mxu0 0.0
      %9029 = vmatpush1.msra.mxu0 %v8796
      %9030 = vmatprep.subr.mxu0 0.0
      %9031 = vmatpush1.msra.mxu0 %v8795
      %9032 = vmatprep.subr.mxu0 0.0
      %9033 = vmatpush2.msra.mxu0 %v8826
      %9034 = vmatprep.subr.mxu0 0.0
      %9035 = vmatpush2.msra.mxu0 %v8825
      %9036 = vmatprep.subr.mxu0 0.0
      %9037 = vmatpush2.msra.mxu0 %v8824
      %9038 = vmatprep.subr.mxu0 0.0
      %9039 = vmatpush2.msra.mxu0 %v8823
      %9040 = vmatprep.subr.mxu0 0.0
      %9041 = vmatpush2.msra.mxu0 %v8822
      %9042 = vmatprep.subr.mxu0 0.0
      %9043 = vmatpush2.msra.mxu0 %v8821
      %9044 = vmatprep.subr.mxu0 0.0
      %9045 = vmatpush2.msra.mxu0 %v8820
      %9046 = vmatprep.subr.mxu0 0.0
      %9047 = vmatpush2.msra.mxu0 %v8819
      %9048 = vmatprep.subr.mxu0 0.0
      %9049 = vmatpush2.msra.mxu0 %v8818
      %9050 = vmatprep.subr.mxu0 0.0
      %9051 = vmatpush2.msra.mxu0 %v8817
      %9052 = vmatprep.subr.mxu0 0.0
      %9053 = vmatpush2.msra.mxu0 %v8816
      %9054 = vmatprep.subr.mxu0 0.0
      %9055 = vmatpush2.msra.mxu0 %v8815
      %9056 = vmatprep.subr.mxu0 0.0
      %9057 = vmatpush2.msra.mxu0 %v8814
      %9058 = vmatprep.subr.mxu0 0.0
      %9059 = vmatpush2.msra.mxu0 %v8813
      %9060 = vmatprep.subr.mxu0 0.0
      %9061 = vmatpush2.msra.mxu0 %v8812
      %9062 = vmatprep.subr.mxu0 0.0
      %9063 = vmatpush2.msra.mxu0 %v8811
      %9064 = vmatprep.mubr.f32.mxu0 %v8853
      %9065 = vmatmul.mubr.f32.gmra.mxu0 %v8852
      %v9066 = vpop.f32.mrf.mxu0
      %v9067 = vadd.f32 %v8997, %v9066
      %v9068 = vpop.f32.mrf.mxu0
      %9069 = vdwg.mxu0
      %v9070 = vmul.f32 %v9067, %v9067
      %vm9071 = vcmask 1041408
      %v9072 = vsel %vm9071, %v9070, 0.0
      %9073 = vadd.xlane.f32.xlu0 %v9072
      %v9074 = vpop.xlane.xlu0 %9073
      %v9075 = vrsqrt.pop %v9074
      %v9076 = vmul.f32 %v9074, %v9075
      %vm9077 = vcmp.eq.f32.partialorder %v9074, inf
      %v9078 = vsel %vm9077, %v9074, %v9076
      %vm9079 = vcmp.eq.f32.partialorder %v9074, 0.0
      %v9080 = vand.u32 %v9074, 2147483648
      %v9081 = vsel %vm9079, %v9080, %v9078
      %v9082 = vmax.f32 %v9081, 1e-12
      %v9083 = vrcp.pop %v9082
      %v9084 = vmul.f32 %v9067, %v9083
      %9085 = vst [vmem:[#allocation9] sm:$0x3] %v9084
    $region37: #{image_clip_net_forward.1} parent=1 // pred_fallthru
      _
    // Predicated region
    $region38: #{image_clip_net_forward.1} parent=1 // pred_check
      _
    $region39: #{image_clip_net_forward.1} parent=1 // pred_check_branch
      %9087 = sbr.rel (0) target = $region41
    $region40: #{image_clip_net_forward.1} parent=1 // pred_region
      %s9089 = ssub.s32 32, 32
      %9090 = vsyncadd [#allocation5], %s9089
      %s9092 = sshll.u32 [#allocation9], 4
      %s9093 = int_to_ptr.vmem [resolvable:$true] %s9092
      %9095 = dma.vmem_to_hbm [thread:$0]  %s9093, 32, %s4, [#allocation5]
    $region41: #{image_clip_net_forward.1} parent=1 // pred_fallthru
      _
    // Predicated region
    $region42: #{image_clip_net_forward.1} parent=1 // pred_check
      _
    $region43: #{image_clip_net_forward.1} parent=1 // pred_check_branch
      %9097 = sbr.rel (0) target = $region45
    $region44: #{image_clip_net_forward.1} parent=1 // pred_region
      %9098 = dma.done [#allocation5], 32
    $region45: #{image_clip_net_forward.1} parent=1 // pred_fallthru
      _
    %9099 = vsyncpa [#allocation4], 1
    %9100 = vsyncpa [#allocation7], 1
    %9101 = vsyncpa [#allocation5], 1

</llo_original>
